<compile_context>
chip_gen: v7x
topology: tpu7x:2x2x1
jax: 0.10.0
libtpu: 0.0.40
codegen_flags: <defaults>
</compile_context>

<pallas_src>
import math

import jax
import jax.numpy as jnp
from jax.experimental import pallas as pl
from jax.experimental.pallas import tpu as pltpu

BN_EPS = 1e-5        # torch.nn.BatchNorm1d eps
GN_EPS = 1e-5        # geom_nn.GraphNorm eps
LEAKY_SLOPE = 0.2    # GATConv negative_slope
POOL_RATIO = 0.5     # SAGPooling default ratio
NEG_INF = -1e30

# ---- packed per-block parameter slab row layout (width = GCO = 3*H) ----
_R_ASRC = 0          # rows 0..2   : att_src  (3, H)
_R_ADST = 3          # rows 3..5   : att_dst  (3, H)
_R_GBIAS = 6         # rows 6..8   : GAT bias (3, H)
_R_BNG = 9           # rows 9..11  : BatchNorm gamma (3, H)
_R_BNB = 12          # rows 12..14 : BatchNorm beta  (3, H)
_R_WSAG_REL = 15     # row 15      : SAG GraphConv lin_rel  (GCO,)
_R_WSAG_ROOT = 16    # row 16      : SAG GraphConv lin_root (GCO,)
_R_BSAG = 17         # row 17, col0: SAG lin_rel bias (scalar)
_R_GNW = 18          # row 18      : GraphNorm weight     (GCO,)
_R_GNB = 19          # row 19      : GraphNorm bias       (GCO,)
_R_GNMS = 20         # row 20      : GraphNorm mean_scale (GCO,)
_VEC_ROWS = 21

# ---- packed head parameter slab row layout (width = 4*H) ----
_HR_B1, _HR_BN1G, _HR_BN1B, _HR_B2, _HR_BN2G, _HR_BN2B = 0, 1, 2, 3, 4, 5
_HVEC_ROWS = 6


def _round_up(x, m):
    return ((x + m - 1) // m) * m


# ----------------------------- BlockSpec helpers -----------------------------

def _sspec(a):
    """BlockSpec selecting stream `s` of a stream-stacked array (leading dim = S)."""
    rest = tuple(int(d) for d in a.shape[1:])
    zeros = (0,) * len(rest)
    return pl.BlockSpec((1,) + rest, lambda s: (s,) + zeros)


def _full_spec(a):
    """Full-array single block (grid=(1,))."""
    nd = a.ndim
    return pl.BlockSpec(tuple(int(d) for d in a.shape), lambda i: (0,) * nd)


# ----------------------------- compiler-params helpers -----------------------------

def _mk_compiler_params(need_bytes, semantics):
    """Raise the scoped VMEM limit only when the working set needs it (cap: 3/4 chip VMEM)."""
    limit = None
    if need_bytes > 12 * 1024 * 1024:
        try:
            cap = int(pltpu.get_tpu_info().vmem_capacity_bytes)
        except Exception:          # pragma: no cover - conservative fallback (v7x-safe)
            cap = 64 * 1024 * 1024
        limit = int(min(max(2 * need_bytes, 32 * 1024 * 1024), (cap * 3) // 4))
    return pltpu.CompilerParams(dimension_semantics=semantics, vmem_limit_bytes=limit)


def _conv_block_params(B, N, Cin, H):
    GCO = 3 * H
    Cpad = _round_up(GCO + 1, 128)
    need = 4 * (2 * B * N * Cin          # x (double-buffered)
                + 2 * B * N * N          # adj (double-buffered)
                + 2 * B * N * Cpad       # output slab (double-buffered)
                + 4 * B * N * N          # live N^2 attention temporaries
                + 3 * B * N * GCO        # hc slab / aggregation temporaries
                + 2 * (Cin * H + 2 * H * H + _VEC_ROWS * GCO))
    return _mk_compiler_params(need, ("parallel",))


# ----------------------------- in-kernel building blocks -----------------------------

def _relu_bn(h, gamma, beta):
    """ReLU + BatchNorm1d (training-mode batch statistics) over rows of (M, C)."""
    h = jnp.maximum(h, 0.0)
    mu = jnp.mean(h, axis=0, keepdims=True)
    d = h - mu
    var = jnp.mean(d * d, axis=0, keepdims=True)
    return gamma * d * jax.lax.rsqrt(var + BN_EPS) + beta


def _pool_graphnorm(x, score, gnw, gnb, gnms):
    """SAGPooling score multiply followed by geom_nn.GraphNorm (per-graph stats).

    x: (B, k, C) selected node features; score: (B, k, 1) tanh'd SAG scores;
    gnw/gnb/gnms: (1, C).
    """
    xs = x * score
    mu = jnp.mean(xs, axis=1, keepdims=True)
    ctr = xs - mu * gnms[None]
    var = jnp.mean(ctr * ctr, axis=1, keepdims=True)
    return gnw[None] * ctr * jax.lax.rsqrt(var + GN_EPS) + gnb[None]


def _agg(p, v):
    """out[b,i,c] = sum_j p[b,i,j] * v[b,j,c].

    Small graphs (N < 128): VPU broadcast-mul + reduce (a per-graph NxN MXU pass would
    run at <4% utilization). Large graphs: bf16 batched MXU dot with f32 accumulation.
    """
    n = p.shape[-1]
    if n < 128:
        return jnp.sum(p[:, :, :, None] * v[:, None, :, :], axis=2)
    return jax.lax.dot_general(
        p.astype(jnp.bfloat16), v.astype(jnp.bfloat16),
        dimension_numbers=(((2,), (1,)), ((0,), (0,))),
        preferred_element_type=jnp.float32)


def _pad_lanes(h, width):
    """Zero-pad the last dim of `h` up to `width` (lane-dense output slab)."""
    pad = width - h.shape[-1]
    if pad <= 0:
        return h
    return jnp.concatenate([h, jnp.zeros(h.shape[:-1] + (pad,), h.dtype)], axis=-1)


def _gat_block_body(x, adj, w1, w23, vec):
    """Fused GraphConvolution block (+ SAGPooling scorer) for one stream.

    x: (B, N, Cin) f32, adj: (B, N, N) f32 data adjacency (no self loops),
    w1: (Cin, H) bf16, w23: (2, H, H) bf16, vec: (_VEC_ROWS, GCO) f32 packed params.
    Returns (jump-concat features (B, N, 3H) f32, tanh'd SAG score (B, N) f32).
    """
    B_, N_, Cin = x.shape
    H = w1.shape[-1]
    GCO = 3 * H
    BN = B_ * N_

    # self-loop-augmented neighbor mask, built once, applied inline (never densified)
    row = jax.lax.broadcasted_iota(jnp.int32, (N_, N_), 0)
    col = jax.lax.broadcasted_iota(jnp.int32, (N_, N_), 1)
    neigh = (adj > 0.0) | (row == col)[None]

    h2 = x.reshape(BN, Cin)
    feats = []
    for l in range(3):
        w = w1 if l == 0 else w23[l - 1]
        # GAT linear (no bias): bf16 operands, f32 accumulation
        xp2 = jnp.dot(h2.astype(jnp.bfloat16), w, preferred_element_type=jnp.float32)
        xp = xp2.reshape(B_, N_, H)

        # attention coefficients e[b,i,j] = <x'_i, att_dst> + <x'_j, att_src>
        # (VPU mul + lane reductions; no M=1 MXU passes)
        adst = vec[_R_ADST + l:_R_ADST + l + 1, :H]
        asrc = vec[_R_ASRC + l:_R_ASRC + l + 1, :H]
        a_dst = jnp.sum(xp * adst[None], axis=-1)            # (B, N)
        a_src = jnp.sum(xp * asrc[None], axis=-1)            # (B, N)
        e = a_dst[:, :, None] + a_src[:, None, :]            # (B, N, N)
        e = jnp.where(e > 0, e, LEAKY_SLOPE * e)              # leaky_relu(0.2)
        logits = jnp.where(neigh, e, NEG_INF)
        m = jnp.max(logits, axis=-1, keepdims=True)
        p = jnp.exp(logits - m)                                # unnormalized; masked -> 0
        denom = jnp.sum(p, axis=-1, keepdims=True)             # (B, N, 1)
        # deferred softmax normalization: aggregate first, scale once (EUP reciprocal)
        out = _agg(p, xp) * pl.reciprocal(denom, approx=True)  # (B, N, H)

        out2 = out.reshape(BN, H) + vec[_R_GBIAS + l:_R_GBIAS + l + 1, :H]
        h2 = _relu_bn(out2,
                      vec[_R_BNG + l:_R_BNG + l + 1, :H],
                      vec[_R_BNB + l:_R_BNB + l + 1, :H])
        feats.append(h2)

    hc2 = jnp.concatenate(feats, axis=-1)                      # (BN, 3H) jump concat
    hc = hc2.reshape(B_, N_, GCO)

    # SAGPooling scorer = GraphConv(GCO -> 1) + tanh (VPU mul + lane reductions)
    agg = _agg(adj, hc)
    s = (jnp.sum(agg * vec[_R_WSAG_REL:_R_WSAG_REL + 1, :][None], axis=-1)   # lin_rel
         + jnp.sum(hc * vec[_R_WSAG_ROOT:_R_WSAG_ROOT + 1, :][None], axis=-1)  # lin_root
         + vec[_R_BSAG:_R_BSAG + 1, 0:1])                                      # lin_rel bias
    return hc, jnp.tanh(s)


# ----------------------------- Pallas kernels -----------------------------

def _block_first_kernel(x_ref, adj_ref, w1_ref, w23_ref, vec_ref, out_ref):
    hc, sc = _gat_block_body(x_ref[0], adj_ref[0], w1_ref[0], w23_ref[0], vec_ref[0])
    # one lane-dense slab write: [hc | sc | zero pad] padded to a multiple of 128
    out_ref[0] = _pad_lanes(jnp.concatenate([hc, sc[..., None]], axis=-1),
                            out_ref.shape[-1])


def _block_next_kernel(x_ref, ps_ref, pvec_ref, adj_ref, w1_ref, w23_ref, vec_ref, out_ref):
    # prologue: previous block's SAG score multiply + GraphNorm (kept in VMEM)
    pvec = pvec_ref[0]
    xn = _pool_graphnorm(x_ref[0], ps_ref[0],
                         pvec[_R_GNW:_R_GNW + 1, :],
                         pvec[_R_GNB:_R_GNB + 1, :],
                         pvec[_R_GNMS:_R_GNMS + 1, :])
    hc, sc = _gat_block_body(xn, adj_ref[0], w1_ref[0], w23_ref[0], vec_ref[0])
    out_ref[0] = _pad_lanes(jnp.concatenate([hc, sc[..., None]], axis=-1),
                            out_ref.shape[-1])


def _stream_head_kernel(x_ref, ps_ref, pvec_ref, w1_ref, w2_ref, hvec_ref, o_ref):
    # score multiply + GraphNorm + global_mean_pool + per-stream MLP head
    pvec = pvec_ref[0]
    xn = _pool_graphnorm(x_ref[0], ps_ref[0],
                         pvec[_R_GNW:_R_GNW + 1, :],
                         pvec[_R_GNB:_R_GNB + 1, :],
                         pvec[_R_GNMS:_R_GNMS + 1, :])
    g = jnp.mean(xn, axis=1)                                   # (B, GCO)
    hv = hvec_ref[0]
    H4 = w1_ref.shape[-1]
    H2 = w2_ref.shape[-1]
    h = (jnp.dot(g.astype(jnp.bfloat16), w1_ref[0], preferred_element_type=jnp.float32)
         + hv[_HR_B1:_HR_B1 + 1, :H4])
    h = _relu_bn(h, hv[_HR_BN1G:_HR_BN1G + 1, :H4], hv[_HR_BN1B:_HR_BN1B + 1, :H4])
    h = (jnp.dot(h.astype(jnp.bfloat16), w2_ref[0], preferred_element_type=jnp.float32)
         + hv[_HR_B2:_HR_B2 + 1, :H2])
    h = _relu_bn(h, hv[_HR_BN2G:_HR_BN2G + 1, :H2], hv[_HR_BN2B:_HR_BN2B + 1, :H2])
    o_ref[0] = _pad_lanes(h, o_ref.shape[-1])                  # lane-dense padded write


def _final_head_kernel(g_ref, w1_ref, b1_ref, bng_ref, bnb_ref, w2_ref, b2_ref, o_ref):
    h = (jnp.dot(g_ref[...].astype(jnp.bfloat16), w1_ref[...],
                 preferred_element_type=jnp.float32) + b1_ref[...])
    h = _relu_bn(h, bng_ref[...], bnb_ref[...])
    o_ref[...] = (jnp.dot(h.astype(jnp.bfloat16), w2_ref[...],
                          preferred_element_type=jnp.float32) + b2_ref[...])


# ----------------------------- pallas_call wrappers -----------------------------

def graph_block_first(x, adj, bp, compiler_params):
    S_, B_, N_, _ = x.shape
    H = bp['W23'].shape[-1]
    GCO = 3 * H
    Cpad = _round_up(GCO + 1, 128)
    args = (x, adj, bp['W1'], bp['W23'], bp['vec'])
    slab = pl.pallas_call(
        _block_first_kernel,
        out_shape=jax.ShapeDtypeStruct((S_, B_, N_, Cpad), jnp.float32),
        grid=(S_,),
        in_specs=[_sspec(a) for a in args],
        out_specs=pl.BlockSpec((1, B_, N_, Cpad), lambda s: (s, 0, 0, 0)),
        compiler_params=compiler_params,
    )(*args)
    return slab[..., :GCO], slab[..., GCO]


def graph_block_next(x_sel, sel_score, adj, prev_vec, bp, compiler_params):
    S_, B_, K_, _ = x_sel.shape
    H = bp['W23'].shape[-1]
    GCO = 3 * H
    Cpad = _round_up(GCO + 1, 128)
    args = (x_sel, sel_score[..., None], prev_vec, adj, bp['W1'], bp['W23'], bp['vec'])
    slab = pl.pallas_call(
        _block_next_kernel,
        out_shape=jax.ShapeDtypeStruct((S_, B_, K_, Cpad), jnp.float32),
        grid=(S_,),
        in_specs=[_sspec(a) for a in args],
        out_specs=pl.BlockSpec((1, B_, K_, Cpad), lambda s: (s, 0, 0, 0)),
        compiler_params=compiler_params,
    )(*args)
    return slab[..., :GCO], slab[..., GCO]


def stream_head(x_sel, sel_score, prev_vec, hp):
    S_, B_, K_, _ = x_sel.shape
    H2 = hp['W2'].shape[-1]
    Hpad = _round_up(H2, 128)
    args = (x_sel, sel_score[..., None], prev_vec, hp['W1'], hp['W2'], hp['vec'])
    out = pl.pallas_call(
        _stream_head_kernel,
        out_shape=jax.ShapeDtypeStruct((S_, B_, Hpad), jnp.float32),
        grid=(S_,),
        in_specs=[_sspec(a) for a in args],
        out_specs=pl.BlockSpec((1, B_, Hpad), lambda s: (s, 0, 0)),
        compiler_params=pltpu.CompilerParams(dimension_semantics=("parallel",)),
    )(*args)
    return out[..., :H2]


def final_head(g, mp):
    B_ = g.shape[0]
    out_ch = mp['W2'].shape[-1]
    args = (g, mp['W1'], mp['b1'], mp['bn_g'], mp['bn_b'], mp['W2'], mp['b2'])
    return pl.pallas_call(
        _final_head_kernel,
        out_shape=jax.ShapeDtypeStruct((B_, out_ch), jnp.float32),
        grid=(1,),
        in_specs=[_full_spec(a) for a in args],
        out_specs=pl.BlockSpec((B_, out_ch), lambda i: (0, 0)),
    )(*args)


# ----------------------------- JAX glue: SAG top-k node selection -----------------------------

def topk_select(hc, score, adj):
    """Per-graph top-k (ratio=0.5) node selection + adjacency filtering (XLA glue).

    hc: (S,B,N,C), score: (S,B,N), adj: (S,B,N,N)
    """
    n = score.shape[-1]
    k = math.ceil(POOL_RATIO * n)
    idx = jnp.argsort(-score, axis=-1)[..., :k]                          # (S,B,k)
    sel_score = jnp.take_along_axis(score, idx, axis=-1)                 # (S,B,k)
    x_sel = jnp.take_along_axis(hc, idx[..., None], axis=2)              # (S,B,k,C)
    adj_rows = jnp.take_along_axis(adj, idx[..., None], axis=2)          # (S,B,k,N)
    adj_sel = jnp.take_along_axis(adj_rows, idx[..., None, :], axis=3)   # (S,B,k,k)
    return x_sel, sel_score, adj_sel


# ----------------------------- full forward -----------------------------

def multi_graph_convolution(params, x, adj):
    """x: (S=3, B, N, in_ch) node features; adj: (S, B, N, N) dense adjacency."""
    _, B_, N_, Cin = x.shape
    b0, b1 = params['blocks']
    H = b0['W23'].shape[-1]

    # block 1: fused 3x(GAT->ReLU->BN) jump-concat + SAG scorer, all 3 streams
    hc1, sc1 = graph_block_first(x, adj, b0, _conv_block_params(B_, N_, Cin, H))
    x1, s1, adj1 = topk_select(hc1, sc1, adj)

    # block 2: (block-1 GraphNorm prologue) + fused conv + SAG scorer
    K_ = x1.shape[2]
    hc2, sc2 = graph_block_next(x1, s1, adj1, b0['vec'], b1,
                                _conv_block_params(B_, K_, 3 * H, H))
    x2, s2, _ = topk_select(hc2, sc2, adj1)

    # per-stream head: block-2 GraphNorm + global_mean_pool + MLP(GCO->4H->2H)
    g = stream_head(x2, s2, b1['vec'], params['head'])                   # (S, B, 2H)
    gcat = jnp.transpose(g, (1, 0, 2)).reshape(B_, -1)                   # concat [o1,o2,o3]

    # final MLP(6H -> H -> out_channels)
    return final_head(gcat, params['mlp'])


# ----------------------------- deterministic parameter init -----------------------------

def init_params(key, in_ch, H, out_ch, S=3):
    GCO = 3 * H
    keys = iter(jax.random.split(key, 24))

    def nrm(shape, fan_in):
        # GEMM weights stored bf16 (MXU-native); accumulation stays f32 in-kernel
        return (jax.random.normal(next(keys), shape, jnp.float32)
                / math.sqrt(fan_in)).astype(jnp.bfloat16)

    blocks = []
    for i in range(2):                           # num_block = 2
        cin = in_ch if i == 0 else GCO
        vec = jnp.zeros((S, _VEC_ROWS, GCO), jnp.float32)
        vec = vec.at[:, _R_ASRC:_R_ASRC + 3, :H].set(
            jax.random.normal(next(keys), (S, 3, H), jnp.float32) * 0.2)
        vec = vec.at[:, _R_ADST:_R_ADST + 3, :H].set(
            jax.random.normal(next(keys), (S, 3, H), jnp.float32) * 0.2)
        # gat_bias (rows 6..8), bn_beta (12..14), bsag, gn_bias stay zero
        vec = vec.at[:, _R_BNG:_R_BNG + 3, :H].set(1.0)
        vec = vec.at[:, _R_WSAG_REL:_R_WSAG_REL + 2, :].set(
            jax.random.normal(next(keys), (S, 2, GCO), jnp.float32) / math.sqrt(GCO))
        vec = vec.at[:, _R_GNW, :].set(1.0)
        vec = vec.at[:, _R_GNMS, :].set(1.0)
        blocks.append({
            'W1': nrm((S, cin, H), cin),
            'W23': nrm((S, 2, H, H), H),
            'vec': vec,
        })

    head_vec = jnp.zeros((S, _HVEC_ROWS, 4 * H), jnp.float32)
    head_vec = head_vec.at[:, _HR_BN1G, :4 * H].set(1.0)
    head_vec = head_vec.at[:, _HR_BN2G, :2 * H].set(1.0)
    head = {
        'W1': nrm((S, GCO, 4 * H), GCO),
        'W2': nrm((S, 4 * H, 2 * H), 4 * H),
        'vec': head_vec,
    }
    mlp = {
        'W1': nrm((6 * H, H), 6 * H),
        'b1': jnp.zeros((1, H), jnp.float32),
        'bn_g': jnp.ones((1, H), jnp.float32),
        'bn_b': jnp.zeros((1, H), jnp.float32),
        'W2': nrm((H, out_ch), H),
        'b2': jnp.zeros((1, out_ch), jnp.float32),
    }
    return {'blocks': blocks, 'head': head, 'mlp': mlp}


# ----------------------------- demo -----------------------------

if __name__ == "__main__":
    S, B, N = 3, 4, 8                  # 3 omics streams, 4 graphs/batch, 8 nodes/graph
    IN_CH, HIDDEN, OUT_CH = 8, 16, 3

    key = jax.random.PRNGKey(0)
    kp, kx, ka = jax.random.split(key, 3)
    params = init_params(kp, IN_CH, HIDDEN, OUT_CH, S=S)

    x = jax.random.normal(kx, (S, B, N, IN_CH), jnp.float32)
    adj = jax.random.bernoulli(ka, 0.4, (S, B, N, N)).astype(jnp.float32)
    adj = adj * (1.0 - jnp.eye(N, dtype=jnp.float32))     # no self loops in the data

    fwd = jax.jit(multi_graph_convolution)
    out = fwd(params, x, adj)
    jax.block_until_ready(out)

    assert out.shape == (B, OUT_CH)
    assert bool(jnp.all(jnp.isfinite(out)))
    print("KERNEL_OK")
</pallas_src>

<mosaic_0001>
module attributes {stable_mosaic.version = 11 : i64} {
  func.func @_block_first_kernel(%arg0: i32, %arg1: memref<1x4x8x8xf32, #tpu.memory_space<vmem>>, %arg2: memref<1x4x8x8xf32, #tpu.memory_space<vmem>>, %arg3: memref<1x8x16xbf16, #tpu.memory_space<vmem>>, %arg4: memref<1x2x16x16xbf16, #tpu.memory_space<vmem>>, %arg5: memref<1x21x48xf32, #tpu.memory_space<vmem>>, %arg6: memref<1x4x8x128xf32, #tpu.memory_space<vmem>>) attributes {dimension_semantics = [#tpu.dimension_semantics<parallel>], iteration_bounds = array<i64: 3>, scalar_prefetch = 0 : i64, scratch_operands = 0 : i64, tpu.core_type = #tpu.core_type<tc>, window_params = [{transform_indices = @transform_0, window_bounds = array<i64: 1, 4, 8, 8>}, {transform_indices = @transform_1, window_bounds = array<i64: 1, 4, 8, 8>}, {transform_indices = @transform_2, window_bounds = array<i64: 1, 8, 16>}, {transform_indices = @transform_3, window_bounds = array<i64: 1, 2, 16, 16>}, {transform_indices = @transform_4, window_bounds = array<i64: 1, 21, 48>}, {transform_indices = @transform_5, window_bounds = array<i64: 1, 4, 8, 128>}]} {
    %c0 = arith.constant 0 : index
    %c0_0 = arith.constant 0 : index
    %c0_1 = arith.constant 0 : index
    %c0_2 = arith.constant 0 : index
    %0 = vector.load %arg1[%c0, %c0_0, %c0_1, %c0_2] : memref<1x4x8x8xf32, #tpu.memory_space<vmem>>, vector<1x4x8x8xf32>
    %1 = vector.shape_cast %0 : vector<1x4x8x8xf32> to vector<4x8x8xf32>
    %c0_3 = arith.constant 0 : index
    %c0_4 = arith.constant 0 : index
    %c0_5 = arith.constant 0 : index
    %c0_6 = arith.constant 0 : index
    %2 = vector.load %arg2[%c0_3, %c0_4, %c0_5, %c0_6] : memref<1x4x8x8xf32, #tpu.memory_space<vmem>>, vector<1x4x8x8xf32>
    %3 = vector.shape_cast %2 : vector<1x4x8x8xf32> to vector<4x8x8xf32>
    %c0_7 = arith.constant 0 : index
    %c0_8 = arith.constant 0 : index
    %c0_9 = arith.constant 0 : index
    %4 = vector.load %arg3[%c0_7, %c0_8, %c0_9] : memref<1x8x16xbf16, #tpu.memory_space<vmem>>, vector<1x8x16xbf16>
    %5 = vector.shape_cast %4 : vector<1x8x16xbf16> to vector<8x16xbf16>
    %c0_10 = arith.constant 0 : index
    %c0_11 = arith.constant 0 : index
    %c0_12 = arith.constant 0 : index
    %c0_13 = arith.constant 0 : index
    %6 = vector.load %arg4[%c0_10, %c0_11, %c0_12, %c0_13] : memref<1x2x16x16xbf16, #tpu.memory_space<vmem>>, vector<1x2x16x16xbf16>
    %7 = vector.shape_cast %6 : vector<1x2x16x16xbf16> to vector<2x16x16xbf16>
    %c0_14 = arith.constant 0 : index
    %c0_15 = arith.constant 0 : index
    %c0_16 = arith.constant 0 : index
    %8 = vector.load %arg5[%c0_14, %c0_15, %c0_16] : memref<1x21x48xf32, #tpu.memory_space<vmem>>, vector<1x21x48xf32>
    %9 = vector.shape_cast %8 : vector<1x21x48xf32> to vector<21x48xf32>
    %10 = tpu.iota {dimensions = array<i32: 0>} : vector<8x8xi32>
    %11 = tpu.iota {dimensions = array<i32: 1>} : vector<8x8xi32>
    %cst = arith.constant 0.000000e+00 : f32
    %12 = vector.broadcast %cst : f32 to vector<4x8x8xf32>
    %13 = arith.cmpf ogt, %3, %12 : vector<4x8x8xf32>
    %14 = arith.cmpi eq, %10, %11 : vector<8x8xi32>
    %15 = vector.shape_cast %14 : vector<8x8xi1> to vector<1x8x8xi1>
    %16 = vector.broadcast %15 : vector<1x8x8xi1> to vector<4x8x8xi1>
    %17 = arith.ori %13, %16 : vector<4x8x8xi1>
    %18 = vector.shape_cast %1 : vector<4x8x8xf32> to vector<32x8xf32>
    %19 = arith.truncf %18 : vector<32x8xf32> to vector<32x8xbf16>
    %cst_17 = arith.constant dense<0.000000e+00> : vector<32x16xf32>
    %20 = tpu.matmul %19, %5, %cst_17 {dimension_numbers = #tpu.dot_dimension_numbers<[1], [0], [0], [1], [0, 0, 1, 1], [], []>} : vector<32x8xbf16>, vector<8x16xbf16>, vector<32x16xf32> -> vector<32x16xf32>
    %21 = vector.shape_cast %20 : vector<32x16xf32> to vector<4x8x16xf32>
    %22 = vector.extract_strided_slice %9 {offsets = [3, 0], sizes = [1, 16], strides = [1, 1]} : vector<21x48xf32> to vector<1x16xf32>
    %23 = vector.extract_strided_slice %9 {offsets = [0, 0], sizes = [1, 16], strides = [1, 1]} : vector<21x48xf32> to vector<1x16xf32>
    %24 = vector.shape_cast %22 : vector<1x16xf32> to vector<1x1x16xf32>
    %25 = vector.broadcast %24 : vector<1x1x16xf32> to vector<4x8x16xf32>
    %26 = arith.mulf %21, %25 : vector<4x8x16xf32>
    %cst_18 = arith.constant dense<0.000000e+00> : vector<4x8xf32>
    %27 = vector.multi_reduction <add>, %26, %cst_18 [2] : vector<4x8x16xf32> to vector<4x8xf32>
    %28 = vector.shape_cast %23 : vector<1x16xf32> to vector<1x1x16xf32>
    %29 = vector.broadcast %28 : vector<1x1x16xf32> to vector<4x8x16xf32>
    %30 = arith.mulf %21, %29 : vector<4x8x16xf32>
    %cst_19 = arith.constant dense<0.000000e+00> : vector<4x8xf32>
    %31 = vector.multi_reduction <add>, %30, %cst_19 [2] : vector<4x8x16xf32> to vector<4x8xf32>
    %32 = vector.shape_cast %27 : vector<4x8xf32> to vector<4x8x1xf32>
    %33 = vector.shape_cast %31 : vector<4x8xf32> to vector<4x1x8xf32>
    %34 = vector.broadcast %32 : vector<4x8x1xf32> to vector<4x8x8xf32>
    %35 = vector.broadcast %33 : vector<4x1x8xf32> to vector<4x8x8xf32>
    %36 = arith.addf %34, %35 : vector<4x8x8xf32>
    %cst_20 = arith.constant 0.000000e+00 : f32
    %37 = vector.broadcast %cst_20 : f32 to vector<4x8x8xf32>
    %38 = arith.cmpf ogt, %36, %37 : vector<4x8x8xf32>
    %cst_21 = arith.constant 2.000000e-01 : f32
    %39 = vector.broadcast %cst_21 : f32 to vector<4x8x8xf32>
    %40 = arith.mulf %39, %36 : vector<4x8x8xf32>
    %41 = arith.select %38, %36, %40 : vector<4x8x8xi1>, vector<4x8x8xf32>
    %cst_22 = arith.constant -1.000000e+30 : f32
    %42 = vector.broadcast %cst_22 : f32 to vector<4x8x8xf32>
    %43 = arith.select %17, %41, %42 : vector<4x8x8xi1>, vector<4x8x8xf32>
    %cst_23 = arith.constant dense<0xFF800000> : vector<4x8xf32>
    %44 = vector.multi_reduction <maximumf>, %43, %cst_23 [2] : vector<4x8x8xf32> to vector<4x8xf32>
    %45 = vector.shape_cast %44 : vector<4x8xf32> to vector<4x8x1xf32>
    %46 = vector.broadcast %45 : vector<4x8x1xf32> to vector<4x8x8xf32>
    %47 = arith.subf %43, %46 : vector<4x8x8xf32>
    %48 = math.exp %47 : vector<4x8x8xf32>
    %cst_24 = arith.constant dense<0.000000e+00> : vector<4x8xf32>
    %49 = vector.multi_reduction <add>, %48, %cst_24 [2] : vector<4x8x8xf32> to vector<4x8xf32>
    %50 = vector.shape_cast %49 : vector<4x8xf32> to vector<4x8x1xf32>
    %51 = vector.shape_cast %48 : vector<4x8x8xf32> to vector<4x8x8x1xf32>
    %52 = vector.shape_cast %21 : vector<4x8x16xf32> to vector<4x1x8x16xf32>
    %53 = vector.broadcast %51 : vector<4x8x8x1xf32> to vector<4x8x8x16xf32>
    %54 = vector.broadcast %52 : vector<4x1x8x16xf32> to vector<4x8x8x16xf32>
    %55 = arith.mulf %53, %54 : vector<4x8x8x16xf32>
    %cst_25 = arith.constant dense<0.000000e+00> : vector<4x8x16xf32>
    %56 = vector.multi_reduction <add>, %55, %cst_25 [2] : vector<4x8x8x16xf32> to vector<4x8x16xf32>
    %57 = tpu.reciprocal %50 {approx = true} : vector<4x8x1xf32> -> vector<4x8x1xf32>
    %58 = vector.broadcast %57 : vector<4x8x1xf32> to vector<4x8x16xf32>
    %59 = arith.mulf %56, %58 : vector<4x8x16xf32>
    %60 = vector.shape_cast %59 : vector<4x8x16xf32> to vector<32x16xf32>
    %61 = vector.extract_strided_slice %9 {offsets = [6, 0], sizes = [1, 16], strides = [1, 1]} : vector<21x48xf32> to vector<1x16xf32>
    %62 = vector.broadcast %61 : vector<1x16xf32> to vector<32x16xf32>
    %63 = arith.addf %60, %62 : vector<32x16xf32>
    %64 = vector.extract_strided_slice %9 {offsets = [9, 0], sizes = [1, 16], strides = [1, 1]} : vector<21x48xf32> to vector<1x16xf32>
    %65 = vector.extract_strided_slice %9 {offsets = [12, 0], sizes = [1, 16], strides = [1, 1]} : vector<21x48xf32> to vector<1x16xf32>
    %cst_26 = arith.constant 0.000000e+00 : f32
    %66 = vector.broadcast %cst_26 : f32 to vector<32x16xf32>
    %67 = arith.maximumf %63, %66 : vector<32x16xf32>
    %cst_27 = arith.constant dense<0.000000e+00> : vector<16xf32>
    %68 = vector.multi_reduction <add>, %67, %cst_27 [0] : vector<32x16xf32> to vector<16xf32>
    %69 = vector.shape_cast %68 : vector<16xf32> to vector<1x16xf32>
    %cst_28 = arith.constant 3.200000e+01 : f32
    %70 = vector.broadcast %cst_28 : f32 to vector<1x16xf32>
    %71 = arith.divf %69, %70 : vector<1x16xf32>
    %72 = vector.broadcast %71 : vector<1x16xf32> to vector<32x16xf32>
    %73 = arith.subf %67, %72 : vector<32x16xf32>
    %74 = arith.mulf %73, %73 : vector<32x16xf32>
    %cst_29 = arith.constant dense<0.000000e+00> : vector<16xf32>
    %75 = vector.multi_reduction <add>, %74, %cst_29 [0] : vector<32x16xf32> to vector<16xf32>
    %76 = vector.shape_cast %75 : vector<16xf32> to vector<1x16xf32>
    %cst_30 = arith.constant 3.200000e+01 : f32
    %77 = vector.broadcast %cst_30 : f32 to vector<1x16xf32>
    %78 = arith.divf %76, %77 : vector<1x16xf32>
    %79 = vector.broadcast %64 : vector<1x16xf32> to vector<32x16xf32>
    %80 = arith.mulf %79, %73 : vector<32x16xf32>
    %cst_31 = arith.constant 9.99999974E-6 : f32
    %81 = vector.broadcast %cst_31 : f32 to vector<1x16xf32>
    %82 = arith.addf %78, %81 : vector<1x16xf32>
    %83 = math.rsqrt %82 : vector<1x16xf32>
    %84 = vector.broadcast %83 : vector<1x16xf32> to vector<32x16xf32>
    %85 = arith.mulf %80, %84 : vector<32x16xf32>
    %86 = vector.broadcast %65 : vector<1x16xf32> to vector<32x16xf32>
    %87 = arith.addf %85, %86 : vector<32x16xf32>
    %88 = vector.extract_strided_slice %7 {offsets = [0, 0, 0], sizes = [1, 16, 16], strides = [1, 1, 1]} : vector<2x16x16xbf16> to vector<1x16x16xbf16>
    %89 = vector.shape_cast %88 : vector<1x16x16xbf16> to vector<16x16xbf16>
    %90 = arith.truncf %87 : vector<32x16xf32> to vector<32x16xbf16>
    %cst_32 = arith.constant dense<0.000000e+00> : vector<32x16xf32>
    %91 = tpu.matmul %90, %89, %cst_32 {dimension_numbers = #tpu.dot_dimension_numbers<[1], [0], [0], [1], [0, 0, 1, 1], [], []>} : vector<32x16xbf16>, vector<16x16xbf16>, vector<32x16xf32> -> vector<32x16xf32>
    %92 = vector.shape_cast %91 : vector<32x16xf32> to vector<4x8x16xf32>
    %93 = vector.extract_strided_slice %9 {offsets = [4, 0], sizes = [1, 16], strides = [1, 1]} : vector<21x48xf32> to vector<1x16xf32>
    %94 = vector.extract_strided_slice %9 {offsets = [1, 0], sizes = [1, 16], strides = [1, 1]} : vector<21x48xf32> to vector<1x16xf32>
    %95 = vector.shape_cast %93 : vector<1x16xf32> to vector<1x1x16xf32>
    %96 = vector.broadcast %95 : vector<1x1x16xf32> to vector<4x8x16xf32>
    %97 = arith.mulf %92, %96 : vector<4x8x16xf32>
    %cst_33 = arith.constant dense<0.000000e+00> : vector<4x8xf32>
    %98 = vector.multi_reduction <add>, %97, %cst_33 [2] : vector<4x8x16xf32> to vector<4x8xf32>
    %99 = vector.shape_cast %94 : vector<1x16xf32> to vector<1x1x16xf32>
    %100 = vector.broadcast %99 : vector<1x1x16xf32> to vector<4x8x16xf32>
    %101 = arith.mulf %92, %100 : vector<4x8x16xf32>
    %cst_34 = arith.constant dense<0.000000e+00> : vector<4x8xf32>
    %102 = vector.multi_reduction <add>, %101, %cst_34 [2] : vector<4x8x16xf32> to vector<4x8xf32>
    %103 = vector.shape_cast %98 : vector<4x8xf32> to vector<4x8x1xf32>
    %104 = vector.shape_cast %102 : vector<4x8xf32> to vector<4x1x8xf32>
    %105 = vector.broadcast %103 : vector<4x8x1xf32> to vector<4x8x8xf32>
    %106 = vector.broadcast %104 : vector<4x1x8xf32> to vector<4x8x8xf32>
    %107 = arith.addf %105, %106 : vector<4x8x8xf32>
    %cst_35 = arith.constant 0.000000e+00 : f32
    %108 = vector.broadcast %cst_35 : f32 to vector<4x8x8xf32>
    %109 = arith.cmpf ogt, %107, %108 : vector<4x8x8xf32>
    %cst_36 = arith.constant 2.000000e-01 : f32
    %110 = vector.broadcast %cst_36 : f32 to vector<4x8x8xf32>
    %111 = arith.mulf %110, %107 : vector<4x8x8xf32>
    %112 = arith.select %109, %107, %111 : vector<4x8x8xi1>, vector<4x8x8xf32>
    %cst_37 = arith.constant -1.000000e+30 : f32
    %113 = vector.broadcast %cst_37 : f32 to vector<4x8x8xf32>
    %114 = arith.select %17, %112, %113 : vector<4x8x8xi1>, vector<4x8x8xf32>
    %cst_38 = arith.constant dense<0xFF800000> : vector<4x8xf32>
    %115 = vector.multi_reduction <maximumf>, %114, %cst_38 [2] : vector<4x8x8xf32> to vector<4x8xf32>
    %116 = vector.shape_cast %115 : vector<4x8xf32> to vector<4x8x1xf32>
    %117 = vector.broadcast %116 : vector<4x8x1xf32> to vector<4x8x8xf32>
    %118 = arith.subf %114, %117 : vector<4x8x8xf32>
    %119 = math.exp %118 : vector<4x8x8xf32>
    %cst_39 = arith.constant dense<0.000000e+00> : vector<4x8xf32>
    %120 = vector.multi_reduction <add>, %119, %cst_39 [2] : vector<4x8x8xf32> to vector<4x8xf32>
    %121 = vector.shape_cast %120 : vector<4x8xf32> to vector<4x8x1xf32>
    %122 = vector.shape_cast %119 : vector<4x8x8xf32> to vector<4x8x8x1xf32>
    %123 = vector.shape_cast %92 : vector<4x8x16xf32> to vector<4x1x8x16xf32>
    %124 = vector.broadcast %122 : vector<4x8x8x1xf32> to vector<4x8x8x16xf32>
    %125 = vector.broadcast %123 : vector<4x1x8x16xf32> to vector<4x8x8x16xf32>
    %126 = arith.mulf %124, %125 : vector<4x8x8x16xf32>
    %cst_40 = arith.constant dense<0.000000e+00> : vector<4x8x16xf32>
    %127 = vector.multi_reduction <add>, %126, %cst_40 [2] : vector<4x8x8x16xf32> to vector<4x8x16xf32>
    %128 = tpu.reciprocal %121 {approx = true} : vector<4x8x1xf32> -> vector<4x8x1xf32>
    %129 = vector.broadcast %128 : vector<4x8x1xf32> to vector<4x8x16xf32>
    %130 = arith.mulf %127, %129 : vector<4x8x16xf32>
    %131 = vector.shape_cast %130 : vector<4x8x16xf32> to vector<32x16xf32>
    %132 = vector.extract_strided_slice %9 {offsets = [7, 0], sizes = [1, 16], strides = [1, 1]} : vector<21x48xf32> to vector<1x16xf32>
    %133 = vector.broadcast %132 : vector<1x16xf32> to vector<32x16xf32>
    %134 = arith.addf %131, %133 : vector<32x16xf32>
    %135 = vector.extract_strided_slice %9 {offsets = [10, 0], sizes = [1, 16], strides = [1, 1]} : vector<21x48xf32> to vector<1x16xf32>
    %136 = vector.extract_strided_slice %9 {offsets = [13, 0], sizes = [1, 16], strides = [1, 1]} : vector<21x48xf32> to vector<1x16xf32>
    %cst_41 = arith.constant 0.000000e+00 : f32
    %137 = vector.broadcast %cst_41 : f32 to vector<32x16xf32>
    %138 = arith.maximumf %134, %137 : vector<32x16xf32>
    %cst_42 = arith.constant dense<0.000000e+00> : vector<16xf32>
    %139 = vector.multi_reduction <add>, %138, %cst_42 [0] : vector<32x16xf32> to vector<16xf32>
    %140 = vector.shape_cast %139 : vector<16xf32> to vector<1x16xf32>
    %cst_43 = arith.constant 3.200000e+01 : f32
    %141 = vector.broadcast %cst_43 : f32 to vector<1x16xf32>
    %142 = arith.divf %140, %141 : vector<1x16xf32>
    %143 = vector.broadcast %142 : vector<1x16xf32> to vector<32x16xf32>
    %144 = arith.subf %138, %143 : vector<32x16xf32>
    %145 = arith.mulf %144, %144 : vector<32x16xf32>
    %cst_44 = arith.constant dense<0.000000e+00> : vector<16xf32>
    %146 = vector.multi_reduction <add>, %145, %cst_44 [0] : vector<32x16xf32> to vector<16xf32>
    %147 = vector.shape_cast %146 : vector<16xf32> to vector<1x16xf32>
    %cst_45 = arith.constant 3.200000e+01 : f32
    %148 = vector.broadcast %cst_45 : f32 to vector<1x16xf32>
    %149 = arith.divf %147, %148 : vector<1x16xf32>
    %150 = vector.broadcast %135 : vector<1x16xf32> to vector<32x16xf32>
    %151 = arith.mulf %150, %144 : vector<32x16xf32>
    %cst_46 = arith.constant 9.99999974E-6 : f32
    %152 = vector.broadcast %cst_46 : f32 to vector<1x16xf32>
    %153 = arith.addf %149, %152 : vector<1x16xf32>
    %154 = math.rsqrt %153 : vector<1x16xf32>
    %155 = vector.broadcast %154 : vector<1x16xf32> to vector<32x16xf32>
    %156 = arith.mulf %151, %155 : vector<32x16xf32>
    %157 = vector.broadcast %136 : vector<1x16xf32> to vector<32x16xf32>
    %158 = arith.addf %156, %157 : vector<32x16xf32>
    %159 = vector.extract_strided_slice %7 {offsets = [1, 0, 0], sizes = [1, 16, 16], strides = [1, 1, 1]} : vector<2x16x16xbf16> to vector<1x16x16xbf16>
    %160 = vector.shape_cast %159 : vector<1x16x16xbf16> to vector<16x16xbf16>
    %161 = arith.truncf %158 : vector<32x16xf32> to vector<32x16xbf16>
    %cst_47 = arith.constant dense<0.000000e+00> : vector<32x16xf32>
    %162 = tpu.matmul %161, %160, %cst_47 {dimension_numbers = #tpu.dot_dimension_numbers<[1], [0], [0], [1], [0, 0, 1, 1], [], []>} : vector<32x16xbf16>, vector<16x16xbf16>, vector<32x16xf32> -> vector<32x16xf32>
    %163 = vector.shape_cast %162 : vector<32x16xf32> to vector<4x8x16xf32>
    %164 = vector.extract_strided_slice %9 {offsets = [5, 0], sizes = [1, 16], strides = [1, 1]} : vector<21x48xf32> to vector<1x16xf32>
    %165 = vector.extract_strided_slice %9 {offsets = [2, 0], sizes = [1, 16], strides = [1, 1]} : vector<21x48xf32> to vector<1x16xf32>
    %166 = vector.shape_cast %164 : vector<1x16xf32> to vector<1x1x16xf32>
    %167 = vector.broadcast %166 : vector<1x1x16xf32> to vector<4x8x16xf32>
    %168 = arith.mulf %163, %167 : vector<4x8x16xf32>
    %cst_48 = arith.constant dense<0.000000e+00> : vector<4x8xf32>
    %169 = vector.multi_reduction <add>, %168, %cst_48 [2] : vector<4x8x16xf32> to vector<4x8xf32>
    %170 = vector.shape_cast %165 : vector<1x16xf32> to vector<1x1x16xf32>
    %171 = vector.broadcast %170 : vector<1x1x16xf32> to vector<4x8x16xf32>
    %172 = arith.mulf %163, %171 : vector<4x8x16xf32>
    %cst_49 = arith.constant dense<0.000000e+00> : vector<4x8xf32>
    %173 = vector.multi_reduction <add>, %172, %cst_49 [2] : vector<4x8x16xf32> to vector<4x8xf32>
    %174 = vector.shape_cast %169 : vector<4x8xf32> to vector<4x8x1xf32>
    %175 = vector.shape_cast %173 : vector<4x8xf32> to vector<4x1x8xf32>
    %176 = vector.broadcast %174 : vector<4x8x1xf32> to vector<4x8x8xf32>
    %177 = vector.broadcast %175 : vector<4x1x8xf32> to vector<4x8x8xf32>
    %178 = arith.addf %176, %177 : vector<4x8x8xf32>
    %cst_50 = arith.constant 0.000000e+00 : f32
    %179 = vector.broadcast %cst_50 : f32 to vector<4x8x8xf32>
    %180 = arith.cmpf ogt, %178, %179 : vector<4x8x8xf32>
    %cst_51 = arith.constant 2.000000e-01 : f32
    %181 = vector.broadcast %cst_51 : f32 to vector<4x8x8xf32>
    %182 = arith.mulf %181, %178 : vector<4x8x8xf32>
    %183 = arith.select %180, %178, %182 : vector<4x8x8xi1>, vector<4x8x8xf32>
    %cst_52 = arith.constant -1.000000e+30 : f32
    %184 = vector.broadcast %cst_52 : f32 to vector<4x8x8xf32>
    %185 = arith.select %17, %183, %184 : vector<4x8x8xi1>, vector<4x8x8xf32>
    %cst_53 = arith.constant dense<0xFF800000> : vector<4x8xf32>
    %186 = vector.multi_reduction <maximumf>, %185, %cst_53 [2] : vector<4x8x8xf32> to vector<4x8xf32>
    %187 = vector.shape_cast %186 : vector<4x8xf32> to vector<4x8x1xf32>
    %188 = vector.broadcast %187 : vector<4x8x1xf32> to vector<4x8x8xf32>
    %189 = arith.subf %185, %188 : vector<4x8x8xf32>
    %190 = math.exp %189 : vector<4x8x8xf32>
    %cst_54 = arith.constant dense<0.000000e+00> : vector<4x8xf32>
    %191 = vector.multi_reduction <add>, %190, %cst_54 [2] : vector<4x8x8xf32> to vector<4x8xf32>
    %192 = vector.shape_cast %191 : vector<4x8xf32> to vector<4x8x1xf32>
    %193 = vector.shape_cast %190 : vector<4x8x8xf32> to vector<4x8x8x1xf32>
    %194 = vector.shape_cast %163 : vector<4x8x16xf32> to vector<4x1x8x16xf32>
    %195 = vector.broadcast %193 : vector<4x8x8x1xf32> to vector<4x8x8x16xf32>
    %196 = vector.broadcast %194 : vector<4x1x8x16xf32> to vector<4x8x8x16xf32>
    %197 = arith.mulf %195, %196 : vector<4x8x8x16xf32>
    %cst_55 = arith.constant dense<0.000000e+00> : vector<4x8x16xf32>
    %198 = vector.multi_reduction <add>, %197, %cst_55 [2] : vector<4x8x8x16xf32> to vector<4x8x16xf32>
    %199 = tpu.reciprocal %192 {approx = true} : vector<4x8x1xf32> -> vector<4x8x1xf32>
    %200 = vector.broadcast %199 : vector<4x8x1xf32> to vector<4x8x16xf32>
    %201 = arith.mulf %198, %200 : vector<4x8x16xf32>
    %202 = vector.shape_cast %201 : vector<4x8x16xf32> to vector<32x16xf32>
    %203 = vector.extract_strided_slice %9 {offsets = [8, 0], sizes = [1, 16], strides = [1, 1]} : vector<21x48xf32> to vector<1x16xf32>
    %204 = vector.broadcast %203 : vector<1x16xf32> to vector<32x16xf32>
    %205 = arith.addf %202, %204 : vector<32x16xf32>
    %206 = vector.extract_strided_slice %9 {offsets = [11, 0], sizes = [1, 16], strides = [1, 1]} : vector<21x48xf32> to vector<1x16xf32>
    %207 = vector.extract_strided_slice %9 {offsets = [14, 0], sizes = [1, 16], strides = [1, 1]} : vector<21x48xf32> to vector<1x16xf32>
    %cst_56 = arith.constant 0.000000e+00 : f32
    %208 = vector.broadcast %cst_56 : f32 to vector<32x16xf32>
    %209 = arith.maximumf %205, %208 : vector<32x16xf32>
    %cst_57 = arith.constant dense<0.000000e+00> : vector<16xf32>
    %210 = vector.multi_reduction <add>, %209, %cst_57 [0] : vector<32x16xf32> to vector<16xf32>
    %211 = vector.shape_cast %210 : vector<16xf32> to vector<1x16xf32>
    %cst_58 = arith.constant 3.200000e+01 : f32
    %212 = vector.broadcast %cst_58 : f32 to vector<1x16xf32>
    %213 = arith.divf %211, %212 : vector<1x16xf32>
    %214 = vector.broadcast %213 : vector<1x16xf32> to vector<32x16xf32>
    %215 = arith.subf %209, %214 : vector<32x16xf32>
    %216 = arith.mulf %215, %215 : vector<32x16xf32>
    %cst_59 = arith.constant dense<0.000000e+00> : vector<16xf32>
    %217 = vector.multi_reduction <add>, %216, %cst_59 [0] : vector<32x16xf32> to vector<16xf32>
    %218 = vector.shape_cast %217 : vector<16xf32> to vector<1x16xf32>
    %cst_60 = arith.constant 3.200000e+01 : f32
    %219 = vector.broadcast %cst_60 : f32 to vector<1x16xf32>
    %220 = arith.divf %218, %219 : vector<1x16xf32>
    %221 = vector.broadcast %206 : vector<1x16xf32> to vector<32x16xf32>
    %222 = arith.mulf %221, %215 : vector<32x16xf32>
    %cst_61 = arith.constant 9.99999974E-6 : f32
    %223 = vector.broadcast %cst_61 : f32 to vector<1x16xf32>
    %224 = arith.addf %220, %223 : vector<1x16xf32>
    %225 = math.rsqrt %224 : vector<1x16xf32>
    %226 = vector.broadcast %225 : vector<1x16xf32> to vector<32x16xf32>
    %227 = arith.mulf %222, %226 : vector<32x16xf32>
    %228 = vector.broadcast %207 : vector<1x16xf32> to vector<32x16xf32>
    %229 = arith.addf %227, %228 : vector<32x16xf32>
    %230 = tpu.concatenate %87, %158, %229 in 1 : vector<32x16xf32>, vector<32x16xf32>, vector<32x16xf32> -> vector<32x48xf32>
    %231 = vector.shape_cast %230 : vector<32x48xf32> to vector<4x8x48xf32>
    %232 = vector.shape_cast %3 : vector<4x8x8xf32> to vector<4x8x8x1xf32>
    %233 = vector.shape_cast %231 : vector<4x8x48xf32> to vector<4x1x8x48xf32>
    %234 = vector.broadcast %232 : vector<4x8x8x1xf32> to vector<4x8x8x48xf32>
    %235 = vector.broadcast %233 : vector<4x1x8x48xf32> to vector<4x8x8x48xf32>
    %236 = arith.mulf %234, %235 : vector<4x8x8x48xf32>
    %cst_62 = arith.constant dense<0.000000e+00> : vector<4x8x48xf32>
    %237 = vector.multi_reduction <add>, %236, %cst_62 [2] : vector<4x8x8x48xf32> to vector<4x8x48xf32>
    %238 = vector.extract_strided_slice %9 {offsets = [15, 0], sizes = [1, 48], strides = [1, 1]} : vector<21x48xf32> to vector<1x48xf32>
    %239 = vector.shape_cast %238 : vector<1x48xf32> to vector<1x1x48xf32>
    %240 = vector.broadcast %239 : vector<1x1x48xf32> to vector<4x8x48xf32>
    %241 = arith.mulf %237, %240 : vector<4x8x48xf32>
    %cst_63 = arith.constant dense<0.000000e+00> : vector<4x8xf32>
    %242 = vector.multi_reduction <add>, %241, %cst_63 [2] : vector<4x8x48xf32> to vector<4x8xf32>
    %243 = vector.extract_strided_slice %9 {offsets = [16, 0], sizes = [1, 48], strides = [1, 1]} : vector<21x48xf32> to vector<1x48xf32>
    %244 = vector.shape_cast %243 : vector<1x48xf32> to vector<1x1x48xf32>
    %245 = vector.broadcast %244 : vector<1x1x48xf32> to vector<4x8x48xf32>
    %246 = arith.mulf %231, %245 : vector<4x8x48xf32>
    %cst_64 = arith.constant dense<0.000000e+00> : vector<4x8xf32>
    %247 = vector.multi_reduction <add>, %246, %cst_64 [2] : vector<4x8x48xf32> to vector<4x8xf32>
    %248 = arith.addf %242, %247 : vector<4x8xf32>
    %249 = vector.extract_strided_slice %9 {offsets = [17, 0], sizes = [1, 1], strides = [1, 1]} : vector<21x48xf32> to vector<1x1xf32>
    %250 = vector.broadcast %249 : vector<1x1xf32> to vector<4x8xf32>
    %251 = arith.addf %248, %250 : vector<4x8xf32>
    %252 = math.tanh %251 : vector<4x8xf32>
    %253 = vector.shape_cast %252 : vector<4x8xf32> to vector<4x8x1xf32>
    %254 = tpu.concatenate %231, %253 in 2 : vector<4x8x48xf32>, vector<4x8x1xf32> -> vector<4x8x49xf32>
    %cst_65 = arith.constant 0.000000e+00 : f32
    %255 = vector.broadcast %cst_65 : f32 to vector<4x8x79xf32>
    %256 = tpu.concatenate %254, %255 in 2 : vector<4x8x49xf32>, vector<4x8x79xf32> -> vector<4x8x128xf32>
    %c0_66 = arith.constant 0 : index
    %c0_67 = arith.constant 0 : index
    %c0_68 = arith.constant 0 : index
    %c0_69 = arith.constant 0 : index
    %257 = vector.load %arg6[%c0_66, %c0_67, %c0_68, %c0_69] : memref<1x4x8x128xf32, #tpu.memory_space<vmem>>, vector<1x4x8x128xf32>
    %258 = vector.shape_cast %257 : vector<1x4x8x128xf32> to vector<4x8x128xf32>
    %259 = vector.shape_cast %256 : vector<4x8x128xf32> to vector<1x4x8x128xf32>
    tpu.vector_store %arg6[%c0_66, %c0_67, %c0_68, %c0_69], %259 {strides = array<i32>} : memref<1x4x8x128xf32, #tpu.memory_space<vmem>>, vector<1x4x8x128xf32>,
    return
  }
  func.func @transform_0(%arg0: i32) -> (i32, i32, i32, i32) {
    %c0_i32 = arith.constant 0 : i32
    %c0_i32_0 = arith.constant 0 : i32
    %c0_i32_1 = arith.constant 0 : i32
    %c0_i32_2 = arith.constant 0 : i32
    return %arg0, %c0_i32, %c0_i32_0, %c0_i32_1 : i32, i32, i32, i32
  }
  func.func @transform_1(%arg0: i32) -> (i32, i32, i32, i32) {
    %c0_i32 = arith.constant 0 : i32
    %c0_i32_0 = arith.constant 0 : i32
    %c0_i32_1 = arith.constant 0 : i32
    %c0_i32_2 = arith.constant 0 : i32
    return %arg0, %c0_i32, %c0_i32_0, %c0_i32_1 : i32, i32, i32, i32
  }
  func.func @transform_2(%arg0: i32) -> (i32, i32, i32) {
    %c0_i32 = arith.constant 0 : i32
    %c0_i32_0 = arith.constant 0 : i32
    %c0_i32_1 = arith.constant 0 : i32
    return %arg0, %c0_i32, %c0_i32_0 : i32, i32, i32
  }
  func.func @transform_3(%arg0: i32) -> (i32, i32, i32, i32) {
    %c0_i32 = arith.constant 0 : i32
    %c0_i32_0 = arith.constant 0 : i32
    %c0_i32_1 = arith.constant 0 : i32
    %c0_i32_2 = arith.constant 0 : i32
    return %arg0, %c0_i32, %c0_i32_0, %c0_i32_1 : i32, i32, i32, i32
  }
  func.func @transform_4(%arg0: i32) -> (i32, i32, i32) {
    %c0_i32 = arith.constant 0 : i32
    %c0_i32_0 = arith.constant 0 : i32
    %c0_i32_1 = arith.constant 0 : i32
    return %arg0, %c0_i32, %c0_i32_0 : i32, i32, i32
  }
  func.func @transform_5(%arg0: i32) -> (i32, i32, i32, i32) {
    %c0_i32 = arith.constant 0 : i32
    %c0_i32_0 = arith.constant 0 : i32
    %c0_i32_1 = arith.constant 0 : i32
    %c0_i32_2 = arith.constant 0 : i32
    return %arg0, %c0_i32, %c0_i32_0, %c0_i32_1 : i32, i32, i32, i32
  }
}

module attributes {stable_mosaic.version = 11 : i64} {
  func.func @_block_next_kernel(%arg0: i32, %arg1: memref<1x4x4x48xf32, #tpu.memory_space<vmem>>, %arg2: memref<1x4x4x1xf32, #tpu.memory_space<vmem>>, %arg3: memref<1x21x48xf32, #tpu.memory_space<vmem>>, %arg4: memref<1x4x4x4xf32, #tpu.memory_space<vmem>>, %arg5: memref<1x48x16xbf16, #tpu.memory_space<vmem>>, %arg6: memref<1x2x16x16xbf16, #tpu.memory_space<vmem>>, %arg7: memref<1x21x48xf32, #tpu.memory_space<vmem>>, %arg8: memref<1x4x4x128xf32, #tpu.memory_space<vmem>>) attributes {dimension_semantics = [#tpu.dimension_semantics<parallel>], iteration_bounds = array<i64: 3>, scalar_prefetch = 0 : i64, scratch_operands = 0 : i64, tpu.core_type = #tpu.core_type<tc>, window_params = [{transform_indices = @transform_0, window_bounds = array<i64: 1, 4, 4, 48>}, {transform_indices = @transform_1, window_bounds = array<i64: 1, 4, 4, 1>}, {transform_indices = @transform_2, window_bounds = array<i64: 1, 21, 48>}, {transform_indices = @transform_3, window_bounds = array<i64: 1, 4, 4, 4>}, {transform_indices = @transform_4, window_bounds = array<i64: 1, 48, 16>}, {transform_indices = @transform_5, window_bounds = array<i64: 1, 2, 16, 16>}, {transform_indices = @transform_6, window_bounds = array<i64: 1, 21, 48>}, {transform_indices = @transform_7, window_bounds = array<i64: 1, 4, 4, 128>}]} {
    %c0 = arith.constant 0 : index
    %c0_0 = arith.constant 0 : index
    %c0_1 = arith.constant 0 : index
    %0 = vector.load %arg3[%c0, %c0_0, %c0_1] : memref<1x21x48xf32, #tpu.memory_space<vmem>>, vector<1x21x48xf32>
    %1 = vector.shape_cast %0 : vector<1x21x48xf32> to vector<21x48xf32>
    %c0_2 = arith.constant 0 : index
    %c0_3 = arith.constant 0 : index
    %c0_4 = arith.constant 0 : index
    %c0_5 = arith.constant 0 : index
    %2 = vector.load %arg1[%c0_2, %c0_3, %c0_4, %c0_5] : memref<1x4x4x48xf32, #tpu.memory_space<vmem>>, vector<1x4x4x48xf32>
    %3 = vector.shape_cast %2 : vector<1x4x4x48xf32> to vector<4x4x48xf32>
    %c0_6 = arith.constant 0 : index
    %c0_7 = arith.constant 0 : index
    %c0_8 = arith.constant 0 : index
    %c0_9 = arith.constant 0 : index
    %4 = vector.load %arg2[%c0_6, %c0_7, %c0_8, %c0_9] : memref<1x4x4x1xf32, #tpu.memory_space<vmem>>, vector<1x4x4x1xf32>
    %5 = vector.shape_cast %4 : vector<1x4x4x1xf32> to vector<4x4x1xf32>
    %6 = vector.extract_strided_slice %1 {offsets = [18, 0], sizes = [1, 48], strides = [1, 1]} : vector<21x48xf32> to vector<1x48xf32>
    %7 = vector.extract_strided_slice %1 {offsets = [19, 0], sizes = [1, 48], strides = [1, 1]} : vector<21x48xf32> to vector<1x48xf32>
    %8 = vector.extract_strided_slice %1 {offsets = [20, 0], sizes = [1, 48], strides = [1, 1]} : vector<21x48xf32> to vector<1x48xf32>
    %9 = vector.broadcast %5 : vector<4x4x1xf32> to vector<4x4x48xf32>
    %10 = arith.mulf %3, %9 : vector<4x4x48xf32>
    %cst = arith.constant dense<0.000000e+00> : vector<4x48xf32>
    %11 = vector.multi_reduction <add>, %10, %cst [1] : vector<4x4x48xf32> to vector<4x48xf32>
    %12 = vector.shape_cast %11 : vector<4x48xf32> to vector<4x1x48xf32>
    %cst_10 = arith.constant 4.000000e+00 : f32
    %13 = vector.broadcast %cst_10 : f32 to vector<4x1x48xf32>
    %14 = arith.divf %12, %13 : vector<4x1x48xf32>
    %15 = vector.shape_cast %8 : vector<1x48xf32> to vector<1x1x48xf32>
    %16 = vector.broadcast %15 : vector<1x1x48xf32> to vector<4x1x48xf32>
    %17 = arith.mulf %14, %16 : vector<4x1x48xf32>
    %18 = vector.broadcast %17 : vector<4x1x48xf32> to vector<4x4x48xf32>
    %19 = arith.subf %10, %18 : vector<4x4x48xf32>
    %20 = arith.mulf %19, %19 : vector<4x4x48xf32>
    %cst_11 = arith.constant dense<0.000000e+00> : vector<4x48xf32>
    %21 = vector.multi_reduction <add>, %20, %cst_11 [1] : vector<4x4x48xf32> to vector<4x48xf32>
    %22 = vector.shape_cast %21 : vector<4x48xf32> to vector<4x1x48xf32>
    %cst_12 = arith.constant 4.000000e+00 : f32
    %23 = vector.broadcast %cst_12 : f32 to vector<4x1x48xf32>
    %24 = arith.divf %22, %23 : vector<4x1x48xf32>
    %25 = vector.shape_cast %6 : vector<1x48xf32> to vector<1x1x48xf32>
    %26 = vector.broadcast %25 : vector<1x1x48xf32> to vector<4x4x48xf32>
    %27 = arith.mulf %26, %19 : vector<4x4x48xf32>
    %cst_13 = arith.constant 9.99999974E-6 : f32
    %28 = vector.broadcast %cst_13 : f32 to vector<4x1x48xf32>
    %29 = arith.addf %24, %28 : vector<4x1x48xf32>
    %30 = math.rsqrt %29 : vector<4x1x48xf32>
    %31 = vector.broadcast %30 : vector<4x1x48xf32> to vector<4x4x48xf32>
    %32 = arith.mulf %27, %31 : vector<4x4x48xf32>
    %33 = vector.shape_cast %7 : vector<1x48xf32> to vector<1x1x48xf32>
    %34 = vector.broadcast %33 : vector<1x1x48xf32> to vector<4x4x48xf32>
    %35 = arith.addf %32, %34 : vector<4x4x48xf32>
    %c0_14 = arith.constant 0 : index
    %c0_15 = arith.constant 0 : index
    %c0_16 = arith.constant 0 : index
    %c0_17 = arith.constant 0 : index
    %36 = vector.load %arg4[%c0_14, %c0_15, %c0_16, %c0_17] : memref<1x4x4x4xf32, #tpu.memory_space<vmem>>, vector<1x4x4x4xf32>
    %37 = vector.shape_cast %36 : vector<1x4x4x4xf32> to vector<4x4x4xf32>
    %c0_18 = arith.constant 0 : index
    %c0_19 = arith.constant 0 : index
    %c0_20 = arith.constant 0 : index
    %38 = vector.load %arg5[%c0_18, %c0_19, %c0_20] : memref<1x48x16xbf16, #tpu.memory_space<vmem>>, vector<1x48x16xbf16>
    %39 = vector.shape_cast %38 : vector<1x48x16xbf16> to vector<48x16xbf16>
    %c0_21 = arith.constant 0 : index
    %c0_22 = arith.constant 0 : index
    %c0_23 = arith.constant 0 : index
    %c0_24 = arith.constant 0 : index
    %40 = vector.load %arg6[%c0_21, %c0_22, %c0_23, %c0_24] : memref<1x2x16x16xbf16, #tpu.memory_space<vmem>>, vector<1x2x16x16xbf16>
    %41 = vector.shape_cast %40 : vector<1x2x16x16xbf16> to vector<2x16x16xbf16>
    %c0_25 = arith.constant 0 : index
    %c0_26 = arith.constant 0 : index
    %c0_27 = arith.constant 0 : index
    %42 = vector.load %arg7[%c0_25, %c0_26, %c0_27] : memref<1x21x48xf32, #tpu.memory_space<vmem>>, vector<1x21x48xf32>
    %43 = vector.shape_cast %42 : vector<1x21x48xf32> to vector<21x48xf32>
    %44 = tpu.iota {dimensions = array<i32: 0>} : vector<4x4xi32>
    %45 = tpu.iota {dimensions = array<i32: 1>} : vector<4x4xi32>
    %cst_28 = arith.constant 0.000000e+00 : f32
    %46 = vector.broadcast %cst_28 : f32 to vector<4x4x4xf32>
    %47 = arith.cmpf ogt, %37, %46 : vector<4x4x4xf32>
    %48 = arith.cmpi eq, %44, %45 : vector<4x4xi32>
    %49 = vector.shape_cast %48 : vector<4x4xi1> to vector<1x4x4xi1>
    %50 = vector.broadcast %49 : vector<1x4x4xi1> to vector<4x4x4xi1>
    %51 = arith.ori %47, %50 : vector<4x4x4xi1>
    %52 = vector.shape_cast %35 : vector<4x4x48xf32> to vector<16x48xf32>
    %53 = arith.truncf %52 : vector<16x48xf32> to vector<16x48xbf16>
    %cst_29 = arith.constant dense<0.000000e+00> : vector<16x16xf32>
    %54 = tpu.matmul %53, %39, %cst_29 {dimension_numbers = #tpu.dot_dimension_numbers<[1], [0], [0], [1], [0, 0, 1, 1], [], []>} : vector<16x48xbf16>, vector<48x16xbf16>, vector<16x16xf32> -> vector<16x16xf32>
    %55 = vector.shape_cast %54 : vector<16x16xf32> to vector<4x4x16xf32>
    %56 = vector.extract_strided_slice %43 {offsets = [3, 0], sizes = [1, 16], strides = [1, 1]} : vector<21x48xf32> to vector<1x16xf32>
    %57 = vector.extract_strided_slice %43 {offsets = [0, 0], sizes = [1, 16], strides = [1, 1]} : vector<21x48xf32> to vector<1x16xf32>
    %58 = vector.shape_cast %56 : vector<1x16xf32> to vector<1x1x16xf32>
    %59 = vector.broadcast %58 : vector<1x1x16xf32> to vector<4x4x16xf32>
    %60 = arith.mulf %55, %59 : vector<4x4x16xf32>
    %cst_30 = arith.constant dense<0.000000e+00> : vector<4x4xf32>
    %61 = vector.multi_reduction <add>, %60, %cst_30 [2] : vector<4x4x16xf32> to vector<4x4xf32>
    %62 = vector.shape_cast %57 : vector<1x16xf32> to vector<1x1x16xf32>
    %63 = vector.broadcast %62 : vector<1x1x16xf32> to vector<4x4x16xf32>
    %64 = arith.mulf %55, %63 : vector<4x4x16xf32>
    %cst_31 = arith.constant dense<0.000000e+00> : vector<4x4xf32>
    %65 = vector.multi_reduction <add>, %64, %cst_31 [2] : vector<4x4x16xf32> to vector<4x4xf32>
    %66 = vector.shape_cast %61 : vector<4x4xf32> to vector<4x4x1xf32>
    %67 = vector.shape_cast %65 : vector<4x4xf32> to vector<4x1x4xf32>
    %68 = vector.broadcast %66 : vector<4x4x1xf32> to vector<4x4x4xf32>
    %69 = vector.broadcast %67 : vector<4x1x4xf32> to vector<4x4x4xf32>
    %70 = arith.addf %68, %69 : vector<4x4x4xf32>
    %cst_32 = arith.constant 0.000000e+00 : f32
    %71 = vector.broadcast %cst_32 : f32 to vector<4x4x4xf32>
    %72 = arith.cmpf ogt, %70, %71 : vector<4x4x4xf32>
    %cst_33 = arith.constant 2.000000e-01 : f32
    %73 = vector.broadcast %cst_33 : f32 to vector<4x4x4xf32>
    %74 = arith.mulf %73, %70 : vector<4x4x4xf32>
    %75 = arith.select %72, %70, %74 : vector<4x4x4xi1>, vector<4x4x4xf32>
    %cst_34 = arith.constant -1.000000e+30 : f32
    %76 = vector.broadcast %cst_34 : f32 to vector<4x4x4xf32>
    %77 = arith.select %51, %75, %76 : vector<4x4x4xi1>, vector<4x4x4xf32>
    %cst_35 = arith.constant dense<0xFF800000> : vector<4x4xf32>
    %78 = vector.multi_reduction <maximumf>, %77, %cst_35 [2] : vector<4x4x4xf32> to vector<4x4xf32>
    %79 = vector.shape_cast %78 : vector<4x4xf32> to vector<4x4x1xf32>
    %80 = vector.broadcast %79 : vector<4x4x1xf32> to vector<4x4x4xf32>
    %81 = arith.subf %77, %80 : vector<4x4x4xf32>
    %82 = math.exp %81 : vector<4x4x4xf32>
    %cst_36 = arith.constant dense<0.000000e+00> : vector<4x4xf32>
    %83 = vector.multi_reduction <add>, %82, %cst_36 [2] : vector<4x4x4xf32> to vector<4x4xf32>
    %84 = vector.shape_cast %83 : vector<4x4xf32> to vector<4x4x1xf32>
    %85 = vector.shape_cast %82 : vector<4x4x4xf32> to vector<4x4x4x1xf32>
    %86 = vector.shape_cast %55 : vector<4x4x16xf32> to vector<4x1x4x16xf32>
    %87 = vector.broadcast %85 : vector<4x4x4x1xf32> to vector<4x4x4x16xf32>
    %88 = vector.broadcast %86 : vector<4x1x4x16xf32> to vector<4x4x4x16xf32>
    %89 = arith.mulf %87, %88 : vector<4x4x4x16xf32>
    %cst_37 = arith.constant dense<0.000000e+00> : vector<4x4x16xf32>
    %90 = vector.multi_reduction <add>, %89, %cst_37 [2] : vector<4x4x4x16xf32> to vector<4x4x16xf32>
    %91 = tpu.reciprocal %84 {approx = true} : vector<4x4x1xf32> -> vector<4x4x1xf32>
    %92 = vector.broadcast %91 : vector<4x4x1xf32> to vector<4x4x16xf32>
    %93 = arith.mulf %90, %92 : vector<4x4x16xf32>
    %94 = vector.shape_cast %93 : vector<4x4x16xf32> to vector<16x16xf32>
    %95 = vector.extract_strided_slice %43 {offsets = [6, 0], sizes = [1, 16], strides = [1, 1]} : vector<21x48xf32> to vector<1x16xf32>
    %96 = vector.broadcast %95 : vector<1x16xf32> to vector<16x16xf32>
    %97 = arith.addf %94, %96 : vector<16x16xf32>
    %98 = vector.extract_strided_slice %43 {offsets = [9, 0], sizes = [1, 16], strides = [1, 1]} : vector<21x48xf32> to vector<1x16xf32>
    %99 = vector.extract_strided_slice %43 {offsets = [12, 0], sizes = [1, 16], strides = [1, 1]} : vector<21x48xf32> to vector<1x16xf32>
    %cst_38 = arith.constant 0.000000e+00 : f32
    %100 = vector.broadcast %cst_38 : f32 to vector<16x16xf32>
    %101 = arith.maximumf %97, %100 : vector<16x16xf32>
    %cst_39 = arith.constant dense<0.000000e+00> : vector<16xf32>
    %102 = vector.multi_reduction <add>, %101, %cst_39 [0] : vector<16x16xf32> to vector<16xf32>
    %103 = vector.shape_cast %102 : vector<16xf32> to vector<1x16xf32>
    %cst_40 = arith.constant 1.600000e+01 : f32
    %104 = vector.broadcast %cst_40 : f32 to vector<1x16xf32>
    %105 = arith.divf %103, %104 : vector<1x16xf32>
    %106 = vector.broadcast %105 : vector<1x16xf32> to vector<16x16xf32>
    %107 = arith.subf %101, %106 : vector<16x16xf32>
    %108 = arith.mulf %107, %107 : vector<16x16xf32>
    %cst_41 = arith.constant dense<0.000000e+00> : vector<16xf32>
    %109 = vector.multi_reduction <add>, %108, %cst_41 [0] : vector<16x16xf32> to vector<16xf32>
    %110 = vector.shape_cast %109 : vector<16xf32> to vector<1x16xf32>
    %cst_42 = arith.constant 1.600000e+01 : f32
    %111 = vector.broadcast %cst_42 : f32 to vector<1x16xf32>
    %112 = arith.divf %110, %111 : vector<1x16xf32>
    %113 = vector.broadcast %98 : vector<1x16xf32> to vector<16x16xf32>
    %114 = arith.mulf %113, %107 : vector<16x16xf32>
    %cst_43 = arith.constant 9.99999974E-6 : f32
    %115 = vector.broadcast %cst_43 : f32 to vector<1x16xf32>
    %116 = arith.addf %112, %115 : vector<1x16xf32>
    %117 = math.rsqrt %116 : vector<1x16xf32>
    %118 = vector.broadcast %117 : vector<1x16xf32> to vector<16x16xf32>
    %119 = arith.mulf %114, %118 : vector<16x16xf32>
    %120 = vector.broadcast %99 : vector<1x16xf32> to vector<16x16xf32>
    %121 = arith.addf %119, %120 : vector<16x16xf32>
    %122 = vector.extract_strided_slice %41 {offsets = [0, 0, 0], sizes = [1, 16, 16], strides = [1, 1, 1]} : vector<2x16x16xbf16> to vector<1x16x16xbf16>
    %123 = vector.shape_cast %122 : vector<1x16x16xbf16> to vector<16x16xbf16>
    %124 = arith.truncf %121 : vector<16x16xf32> to vector<16x16xbf16>
    %cst_44 = arith.constant dense<0.000000e+00> : vector<16x16xf32>
    %125 = tpu.matmul %124, %123, %cst_44 {dimension_numbers = #tpu.dot_dimension_numbers<[1], [0], [0], [1], [0, 0, 1, 1], [], []>} : vector<16x16xbf16>, vector<16x16xbf16>, vector<16x16xf32> -> vector<16x16xf32>
    %126 = vector.shape_cast %125 : vector<16x16xf32> to vector<4x4x16xf32>
    %127 = vector.extract_strided_slice %43 {offsets = [4, 0], sizes = [1, 16], strides = [1, 1]} : vector<21x48xf32> to vector<1x16xf32>
    %128 = vector.extract_strided_slice %43 {offsets = [1, 0], sizes = [1, 16], strides = [1, 1]} : vector<21x48xf32> to vector<1x16xf32>
    %129 = vector.shape_cast %127 : vector<1x16xf32> to vector<1x1x16xf32>
    %130 = vector.broadcast %129 : vector<1x1x16xf32> to vector<4x4x16xf32>
    %131 = arith.mulf %126, %130 : vector<4x4x16xf32>
    %cst_45 = arith.constant dense<0.000000e+00> : vector<4x4xf32>
    %132 = vector.multi_reduction <add>, %131, %cst_45 [2] : vector<4x4x16xf32> to vector<4x4xf32>
    %133 = vector.shape_cast %128 : vector<1x16xf32> to vector<1x1x16xf32>
    %134 = vector.broadcast %133 : vector<1x1x16xf32> to vector<4x4x16xf32>
    %135 = arith.mulf %126, %134 : vector<4x4x16xf32>
    %cst_46 = arith.constant dense<0.000000e+00> : vector<4x4xf32>
    %136 = vector.multi_reduction <add>, %135, %cst_46 [2] : vector<4x4x16xf32> to vector<4x4xf32>
    %137 = vector.shape_cast %132 : vector<4x4xf32> to vector<4x4x1xf32>
    %138 = vector.shape_cast %136 : vector<4x4xf32> to vector<4x1x4xf32>
    %139 = vector.broadcast %137 : vector<4x4x1xf32> to vector<4x4x4xf32>
    %140 = vector.broadcast %138 : vector<4x1x4xf32> to vector<4x4x4xf32>
    %141 = arith.addf %139, %140 : vector<4x4x4xf32>
    %cst_47 = arith.constant 0.000000e+00 : f32
    %142 = vector.broadcast %cst_47 : f32 to vector<4x4x4xf32>
    %143 = arith.cmpf ogt, %141, %142 : vector<4x4x4xf32>
    %cst_48 = arith.constant 2.000000e-01 : f32
    %144 = vector.broadcast %cst_48 : f32 to vector<4x4x4xf32>
    %145 = arith.mulf %144, %141 : vector<4x4x4xf32>
    %146 = arith.select %143, %141, %145 : vector<4x4x4xi1>, vector<4x4x4xf32>
    %cst_49 = arith.constant -1.000000e+30 : f32
    %147 = vector.broadcast %cst_49 : f32 to vector<4x4x4xf32>
    %148 = arith.select %51, %146, %147 : vector<4x4x4xi1>, vector<4x4x4xf32>
    %cst_50 = arith.constant dense<0xFF800000> : vector<4x4xf32>
    %149 = vector.multi_reduction <maximumf>, %148, %cst_50 [2] : vector<4x4x4xf32> to vector<4x4xf32>
    %150 = vector.shape_cast %149 : vector<4x4xf32> to vector<4x4x1xf32>
    %151 = vector.broadcast %150 : vector<4x4x1xf32> to vector<4x4x4xf32>
    %152 = arith.subf %148, %151 : vector<4x4x4xf32>
    %153 = math.exp %152 : vector<4x4x4xf32>
    %cst_51 = arith.constant dense<0.000000e+00> : vector<4x4xf32>
    %154 = vector.multi_reduction <add>, %153, %cst_51 [2] : vector<4x4x4xf32> to vector<4x4xf32>
    %155 = vector.shape_cast %154 : vector<4x4xf32> to vector<4x4x1xf32>
    %156 = vector.shape_cast %153 : vector<4x4x4xf32> to vector<4x4x4x1xf32>
    %157 = vector.shape_cast %126 : vector<4x4x16xf32> to vector<4x1x4x16xf32>
    %158 = vector.broadcast %156 : vector<4x4x4x1xf32> to vector<4x4x4x16xf32>
    %159 = vector.broadcast %157 : vector<4x1x4x16xf32> to vector<4x4x4x16xf32>
    %160 = arith.mulf %158, %159 : vector<4x4x4x16xf32>
    %cst_52 = arith.constant dense<0.000000e+00> : vector<4x4x16xf32>
    %161 = vector.multi_reduction <add>, %160, %cst_52 [2] : vector<4x4x4x16xf32> to vector<4x4x16xf32>
    %162 = tpu.reciprocal %155 {approx = true} : vector<4x4x1xf32> -> vector<4x4x1xf32>
    %163 = vector.broadcast %162 : vector<4x4x1xf32> to vector<4x4x16xf32>
    %164 = arith.mulf %161, %163 : vector<4x4x16xf32>
    %165 = vector.shape_cast %164 : vector<4x4x16xf32> to vector<16x16xf32>
    %166 = vector.extract_strided_slice %43 {offsets = [7, 0], sizes = [1, 16], strides = [1, 1]} : vector<21x48xf32> to vector<1x16xf32>
    %167 = vector.broadcast %166 : vector<1x16xf32> to vector<16x16xf32>
    %168 = arith.addf %165, %167 : vector<16x16xf32>
    %169 = vector.extract_strided_slice %43 {offsets = [10, 0], sizes = [1, 16], strides = [1, 1]} : vector<21x48xf32> to vector<1x16xf32>
    %170 = vector.extract_strided_slice %43 {offsets = [13, 0], sizes = [1, 16], strides = [1, 1]} : vector<21x48xf32> to vector<1x16xf32>
    %cst_53 = arith.constant 0.000000e+00 : f32
    %171 = vector.broadcast %cst_53 : f32 to vector<16x16xf32>
    %172 = arith.maximumf %168, %171 : vector<16x16xf32>
    %cst_54 = arith.constant dense<0.000000e+00> : vector<16xf32>
    %173 = vector.multi_reduction <add>, %172, %cst_54 [0] : vector<16x16xf32> to vector<16xf32>
    %174 = vector.shape_cast %173 : vector<16xf32> to vector<1x16xf32>
    %cst_55 = arith.constant 1.600000e+01 : f32
    %175 = vector.broadcast %cst_55 : f32 to vector<1x16xf32>
    %176 = arith.divf %174, %175 : vector<1x16xf32>
    %177 = vector.broadcast %176 : vector<1x16xf32> to vector<16x16xf32>
    %178 = arith.subf %172, %177 : vector<16x16xf32>
    %179 = arith.mulf %178, %178 : vector<16x16xf32>
    %cst_56 = arith.constant dense<0.000000e+00> : vector<16xf32>
    %180 = vector.multi_reduction <add>, %179, %cst_56 [0] : vector<16x16xf32> to vector<16xf32>
    %181 = vector.shape_cast %180 : vector<16xf32> to vector<1x16xf32>
    %cst_57 = arith.constant 1.600000e+01 : f32
    %182 = vector.broadcast %cst_57 : f32 to vector<1x16xf32>
    %183 = arith.divf %181, %182 : vector<1x16xf32>
    %184 = vector.broadcast %169 : vector<1x16xf32> to vector<16x16xf32>
    %185 = arith.mulf %184, %178 : vector<16x16xf32>
    %cst_58 = arith.constant 9.99999974E-6 : f32
    %186 = vector.broadcast %cst_58 : f32 to vector<1x16xf32>
    %187 = arith.addf %183, %186 : vector<1x16xf32>
    %188 = math.rsqrt %187 : vector<1x16xf32>
    %189 = vector.broadcast %188 : vector<1x16xf32> to vector<16x16xf32>
    %190 = arith.mulf %185, %189 : vector<16x16xf32>
    %191 = vector.broadcast %170 : vector<1x16xf32> to vector<16x16xf32>
    %192 = arith.addf %190, %191 : vector<16x16xf32>
    %193 = vector.extract_strided_slice %41 {offsets = [1, 0, 0], sizes = [1, 16, 16], strides = [1, 1, 1]} : vector<2x16x16xbf16> to vector<1x16x16xbf16>
    %194 = vector.shape_cast %193 : vector<1x16x16xbf16> to vector<16x16xbf16>
    %195 = arith.truncf %192 : vector<16x16xf32> to vector<16x16xbf16>
    %cst_59 = arith.constant dense<0.000000e+00> : vector<16x16xf32>
    %196 = tpu.matmul %195, %194, %cst_59 {dimension_numbers = #tpu.dot_dimension_numbers<[1], [0], [0], [1], [0, 0, 1, 1], [], []>} : vector<16x16xbf16>, vector<16x16xbf16>, vector<16x16xf32> -> vector<16x16xf32>
    %197 = vector.shape_cast %196 : vector<16x16xf32> to vector<4x4x16xf32>
    %198 = vector.extract_strided_slice %43 {offsets = [5, 0], sizes = [1, 16], strides = [1, 1]} : vector<21x48xf32> to vector<1x16xf32>
    %199 = vector.extract_strided_slice %43 {offsets = [2, 0], sizes = [1, 16], strides = [1, 1]} : vector<21x48xf32> to vector<1x16xf32>
    %200 = vector.shape_cast %198 : vector<1x16xf32> to vector<1x1x16xf32>
    %201 = vector.broadcast %200 : vector<1x1x16xf32> to vector<4x4x16xf32>
    %202 = arith.mulf %197, %201 : vector<4x4x16xf32>
    %cst_60 = arith.constant dense<0.000000e+00> : vector<4x4xf32>
    %203 = vector.multi_reduction <add>, %202, %cst_60 [2] : vector<4x4x16xf32> to vector<4x4xf32>
    %204 = vector.shape_cast %199 : vector<1x16xf32> to vector<1x1x16xf32>
    %205 = vector.broadcast %204 : vector<1x1x16xf32> to vector<4x4x16xf32>
    %206 = arith.mulf %197, %205 : vector<4x4x16xf32>
    %cst_61 = arith.constant dense<0.000000e+00> : vector<4x4xf32>
    %207 = vector.multi_reduction <add>, %206, %cst_61 [2] : vector<4x4x16xf32> to vector<4x4xf32>
    %208 = vector.shape_cast %203 : vector<4x4xf32> to vector<4x4x1xf32>
    %209 = vector.shape_cast %207 : vector<4x4xf32> to vector<4x1x4xf32>
    %210 = vector.broadcast %208 : vector<4x4x1xf32> to vector<4x4x4xf32>
    %211 = vector.broadcast %209 : vector<4x1x4xf32> to vector<4x4x4xf32>
    %212 = arith.addf %210, %211 : vector<4x4x4xf32>
    %cst_62 = arith.constant 0.000000e+00 : f32
    %213 = vector.broadcast %cst_62 : f32 to vector<4x4x4xf32>
    %214 = arith.cmpf ogt, %212, %213 : vector<4x4x4xf32>
    %cst_63 = arith.constant 2.000000e-01 : f32
    %215 = vector.broadcast %cst_63 : f32 to vector<4x4x4xf32>
    %216 = arith.mulf %215, %212 : vector<4x4x4xf32>
    %217 = arith.select %214, %212, %216 : vector<4x4x4xi1>, vector<4x4x4xf32>
    %cst_64 = arith.constant -1.000000e+30 : f32
    %218 = vector.broadcast %cst_64 : f32 to vector<4x4x4xf32>
    %219 = arith.select %51, %217, %218 : vector<4x4x4xi1>, vector<4x4x4xf32>
    %cst_65 = arith.constant dense<0xFF800000> : vector<4x4xf32>
    %220 = vector.multi_reduction <maximumf>, %219, %cst_65 [2] : vector<4x4x4xf32> to vector<4x4xf32>
    %221 = vector.shape_cast %220 : vector<4x4xf32> to vector<4x4x1xf32>
    %222 = vector.broadcast %221 : vector<4x4x1xf32> to vector<4x4x4xf32>
    %223 = arith.subf %219, %222 : vector<4x4x4xf32>
    %224 = math.exp %223 : vector<4x4x4xf32>
    %cst_66 = arith.constant dense<0.000000e+00> : vector<4x4xf32>
    %225 = vector.multi_reduction <add>, %224, %cst_66 [2] : vector<4x4x4xf32> to vector<4x4xf32>
    %226 = vector.shape_cast %225 : vector<4x4xf32> to vector<4x4x1xf32>
    %227 = vector.shape_cast %224 : vector<4x4x4xf32> to vector<4x4x4x1xf32>
    %228 = vector.shape_cast %197 : vector<4x4x16xf32> to vector<4x1x4x16xf32>
    %229 = vector.broadcast %227 : vector<4x4x4x1xf32> to vector<4x4x4x16xf32>
    %230 = vector.broadcast %228 : vector<4x1x4x16xf32> to vector<4x4x4x16xf32>
    %231 = arith.mulf %229, %230 : vector<4x4x4x16xf32>
    %cst_67 = arith.constant dense<0.000000e+00> : vector<4x4x16xf32>
    %232 = vector.multi_reduction <add>, %231, %cst_67 [2] : vector<4x4x4x16xf32> to vector<4x4x16xf32>
    %233 = tpu.reciprocal %226 {approx = true} : vector<4x4x1xf32> -> vector<4x4x1xf32>
    %234 = vector.broadcast %233 : vector<4x4x1xf32> to vector<4x4x16xf32>
    %235 = arith.mulf %232, %234 : vector<4x4x16xf32>
    %236 = vector.shape_cast %235 : vector<4x4x16xf32> to vector<16x16xf32>
    %237 = vector.extract_strided_slice %43 {offsets = [8, 0], sizes = [1, 16], strides = [1, 1]} : vector<21x48xf32> to vector<1x16xf32>
    %238 = vector.broadcast %237 : vector<1x16xf32> to vector<16x16xf32>
    %239 = arith.addf %236, %238 : vector<16x16xf32>
    %240 = vector.extract_strided_slice %43 {offsets = [11, 0], sizes = [1, 16], strides = [1, 1]} : vector<21x48xf32> to vector<1x16xf32>
    %241 = vector.extract_strided_slice %43 {offsets = [14, 0], sizes = [1, 16], strides = [1, 1]} : vector<21x48xf32> to vector<1x16xf32>
    %cst_68 = arith.constant 0.000000e+00 : f32
    %242 = vector.broadcast %cst_68 : f32 to vector<16x16xf32>
    %243 = arith.maximumf %239, %242 : vector<16x16xf32>
    %cst_69 = arith.constant dense<0.000000e+00> : vector<16xf32>
    %244 = vector.multi_reduction <add>, %243, %cst_69 [0] : vector<16x16xf32> to vector<16xf32>
    %245 = vector.shape_cast %244 : vector<16xf32> to vector<1x16xf32>
    %cst_70 = arith.constant 1.600000e+01 : f32
    %246 = vector.broadcast %cst_70 : f32 to vector<1x16xf32>
    %247 = arith.divf %245, %246 : vector<1x16xf32>
    %248 = vector.broadcast %247 : vector<1x16xf32> to vector<16x16xf32>
    %249 = arith.subf %243, %248 : vector<16x16xf32>
    %250 = arith.mulf %249, %249 : vector<16x16xf32>
    %cst_71 = arith.constant dense<0.000000e+00> : vector<16xf32>
    %251 = vector.multi_reduction <add>, %250, %cst_71 [0] : vector<16x16xf32> to vector<16xf32>
    %252 = vector.shape_cast %251 : vector<16xf32> to vector<1x16xf32>
    %cst_72 = arith.constant 1.600000e+01 : f32
    %253 = vector.broadcast %cst_72 : f32 to vector<1x16xf32>
    %254 = arith.divf %252, %253 : vector<1x16xf32>
    %255 = vector.broadcast %240 : vector<1x16xf32> to vector<16x16xf32>
    %256 = arith.mulf %255, %249 : vector<16x16xf32>
    %cst_73 = arith.constant 9.99999974E-6 : f32
    %257 = vector.broadcast %cst_73 : f32 to vector<1x16xf32>
    %258 = arith.addf %254, %257 : vector<1x16xf32>
    %259 = math.rsqrt %258 : vector<1x16xf32>
    %260 = vector.broadcast %259 : vector<1x16xf32> to vector<16x16xf32>
    %261 = arith.mulf %256, %260 : vector<16x16xf32>
    %262 = vector.broadcast %241 : vector<1x16xf32> to vector<16x16xf32>
    %263 = arith.addf %261, %262 : vector<16x16xf32>
    %264 = tpu.concatenate %121, %192, %263 in 1 : vector<16x16xf32>, vector<16x16xf32>, vector<16x16xf32> -> vector<16x48xf32>
    %265 = vector.shape_cast %264 : vector<16x48xf32> to vector<4x4x48xf32>
    %266 = vector.shape_cast %37 : vector<4x4x4xf32> to vector<4x4x4x1xf32>
    %267 = vector.shape_cast %265 : vector<4x4x48xf32> to vector<4x1x4x48xf32>
    %268 = vector.broadcast %266 : vector<4x4x4x1xf32> to vector<4x4x4x48xf32>
    %269 = vector.broadcast %267 : vector<4x1x4x48xf32> to vector<4x4x4x48xf32>
    %270 = arith.mulf %268, %269 : vector<4x4x4x48xf32>
    %cst_74 = arith.constant dense<0.000000e+00> : vector<4x4x48xf32>
    %271 = vector.multi_reduction <add>, %270, %cst_74 [2] : vector<4x4x4x48xf32> to vector<4x4x48xf32>
    %272 = vector.extract_strided_slice %43 {offsets = [15, 0], sizes = [1, 48], strides = [1, 1]} : vector<21x48xf32> to vector<1x48xf32>
    %273 = vector.shape_cast %272 : vector<1x48xf32> to vector<1x1x48xf32>
    %274 = vector.broadcast %273 : vector<1x1x48xf32> to vector<4x4x48xf32>
    %275 = arith.mulf %271, %274 : vector<4x4x48xf32>
    %cst_75 = arith.constant dense<0.000000e+00> : vector<4x4xf32>
    %276 = vector.multi_reduction <add>, %275, %cst_75 [2] : vector<4x4x48xf32> to vector<4x4xf32>
    %277 = vector.extract_strided_slice %43 {offsets = [16, 0], sizes = [1, 48], strides = [1, 1]} : vector<21x48xf32> to vector<1x48xf32>
    %278 = vector.shape_cast %277 : vector<1x48xf32> to vector<1x1x48xf32>
    %279 = vector.broadcast %278 : vector<1x1x48xf32> to vector<4x4x48xf32>
    %280 = arith.mulf %265, %279 : vector<4x4x48xf32>
    %cst_76 = arith.constant dense<0.000000e+00> : vector<4x4xf32>
    %281 = vector.multi_reduction <add>, %280, %cst_76 [2] : vector<4x4x48xf32> to vector<4x4xf32>
    %282 = arith.addf %276, %281 : vector<4x4xf32>
    %283 = vector.extract_strided_slice %43 {offsets = [17, 0], sizes = [1, 1], strides = [1, 1]} : vector<21x48xf32> to vector<1x1xf32>
    %284 = vector.broadcast %283 : vector<1x1xf32> to vector<4x4xf32>
    %285 = arith.addf %282, %284 : vector<4x4xf32>
    %286 = math.tanh %285 : vector<4x4xf32>
    %287 = vector.shape_cast %286 : vector<4x4xf32> to vector<4x4x1xf32>
    %288 = tpu.concatenate %265, %287 in 2 : vector<4x4x48xf32>, vector<4x4x1xf32> -> vector<4x4x49xf32>
    %cst_77 = arith.constant 0.000000e+00 : f32
    %289 = vector.broadcast %cst_77 : f32 to vector<4x4x79xf32>
    %290 = tpu.concatenate %288, %289 in 2 : vector<4x4x49xf32>, vector<4x4x79xf32> -> vector<4x4x128xf32>
    %c0_78 = arith.constant 0 : index
    %c0_79 = arith.constant 0 : index
    %c0_80 = arith.constant 0 : index
    %c0_81 = arith.constant 0 : index
    %291 = vector.load %arg8[%c0_78, %c0_79, %c0_80, %c0_81] : memref<1x4x4x128xf32, #tpu.memory_space<vmem>>, vector<1x4x4x128xf32>
    %292 = vector.shape_cast %291 : vector<1x4x4x128xf32> to vector<4x4x128xf32>
    %293 = vector.shape_cast %290 : vector<4x4x128xf32> to vector<1x4x4x128xf32>
    tpu.vector_store %arg8[%c0_78, %c0_79, %c0_80, %c0_81], %293 {strides = array<i32>} : memref<1x4x4x128xf32, #tpu.memory_space<vmem>>, vector<1x4x4x128xf32>,
    return
  }
  func.func @transform_0(%arg0: i32) -> (i32, i32, i32, i32) {
    %c0_i32 = arith.constant 0 : i32
    %c0_i32_0 = arith.constant 0 : i32
    %c0_i32_1 = arith.constant 0 : i32
    %c0_i32_2 = arith.constant 0 : i32
    return %arg0, %c0_i32, %c0_i32_0, %c0_i32_1 : i32, i32, i32, i32
  }
  func.func @transform_1(%arg0: i32) -> (i32, i32, i32, i32) {
    %c0_i32 = arith.constant 0 : i32
    %c0_i32_0 = arith.constant 0 : i32
    %c0_i32_1 = arith.constant 0 : i32
    %c0_i32_2 = arith.constant 0 : i32
    return %arg0, %c0_i32, %c0_i32_0, %c0_i32_1 : i32, i32, i32, i32
  }
  func.func @transform_2(%arg0: i32) -> (i32, i32, i32) {
    %c0_i32 = arith.constant 0 : i32
    %c0_i32_0 = arith.constant 0 : i32
    %c0_i32_1 = arith.constant 0 : i32
    return %arg0, %c0_i32, %c0_i32_0 : i32, i32, i32
  }
  func.func @transform_3(%arg0: i32) -> (i32, i32, i32, i32) {
    %c0_i32 = arith.constant 0 : i32
    %c0_i32_0 = arith.constant 0 : i32
    %c0_i32_1 = arith.constant 0 : i32
    %c0_i32_2 = arith.constant 0 : i32
    return %arg0, %c0_i32, %c0_i32_0, %c0_i32_1 : i32, i32, i32, i32
  }
  func.func @transform_4(%arg0: i32) -> (i32, i32, i32) {
    %c0_i32 = arith.constant 0 : i32
    %c0_i32_0 = arith.constant 0 : i32
    %c0_i32_1 = arith.constant 0 : i32
    return %arg0, %c0_i32, %c0_i32_0 : i32, i32, i32
  }
  func.func @transform_5(%arg0: i32) -> (i32, i32, i32, i32) {
    %c0_i32 = arith.constant 0 : i32
    %c0_i32_0 = arith.constant 0 : i32
    %c0_i32_1 = arith.constant 0 : i32
    %c0_i32_2 = arith.constant 0 : i32
    return %arg0, %c0_i32, %c0_i32_0, %c0_i32_1 : i32, i32, i32, i32
  }
  func.func @transform_6(%arg0: i32) -> (i32, i32, i32) {
    %c0_i32 = arith.constant 0 : i32
    %c0_i32_0 = arith.constant 0 : i32
    %c0_i32_1 = arith.constant 0 : i32
    return %arg0, %c0_i32, %c0_i32_0 : i32, i32, i32
  }
  func.func @transform_7(%arg0: i32) -> (i32, i32, i32, i32) {
    %c0_i32 = arith.constant 0 : i32
    %c0_i32_0 = arith.constant 0 : i32
    %c0_i32_1 = arith.constant 0 : i32
    %c0_i32_2 = arith.constant 0 : i32
    return %arg0, %c0_i32, %c0_i32_0, %c0_i32_1 : i32, i32, i32, i32
  }
}

module attributes {stable_mosaic.version = 11 : i64} {
  func.func @_stream_head_kernel(%arg0: i32, %arg1: memref<1x4x2x48xf32, #tpu.memory_space<vmem>>, %arg2: memref<1x4x2x1xf32, #tpu.memory_space<vmem>>, %arg3: memref<1x21x48xf32, #tpu.memory_space<vmem>>, %arg4: memref<1x48x64xbf16, #tpu.memory_space<vmem>>, %arg5: memref<1x64x32xbf16, #tpu.memory_space<vmem>>, %arg6: memref<1x6x64xf32, #tpu.memory_space<vmem>>, %arg7: memref<1x4x128xf32, #tpu.memory_space<vmem>>) attributes {dimension_semantics = [#tpu.dimension_semantics<parallel>], iteration_bounds = array<i64: 3>, scalar_prefetch = 0 : i64, scratch_operands = 0 : i64, tpu.core_type = #tpu.core_type<tc>, window_params = [{transform_indices = @transform_0, window_bounds = array<i64: 1, 4, 2, 48>}, {transform_indices = @transform_1, window_bounds = array<i64: 1, 4, 2, 1>}, {transform_indices = @transform_2, window_bounds = array<i64: 1, 21, 48>}, {transform_indices = @transform_3, window_bounds = array<i64: 1, 48, 64>}, {transform_indices = @transform_4, window_bounds = array<i64: 1, 64, 32>}, {transform_indices = @transform_5, window_bounds = array<i64: 1, 6, 64>}, {transform_indices = @transform_6, window_bounds = array<i64: 1, 4, 128>}]} {
    %c0 = arith.constant 0 : index
    %c0_0 = arith.constant 0 : index
    %c0_1 = arith.constant 0 : index
    %0 = vector.load %arg3[%c0, %c0_0, %c0_1] : memref<1x21x48xf32, #tpu.memory_space<vmem>>, vector<1x21x48xf32>
    %1 = vector.shape_cast %0 : vector<1x21x48xf32> to vector<21x48xf32>
    %c0_2 = arith.constant 0 : index
    %c0_3 = arith.constant 0 : index
    %c0_4 = arith.constant 0 : index
    %c0_5 = arith.constant 0 : index
    %2 = vector.load %arg1[%c0_2, %c0_3, %c0_4, %c0_5] : memref<1x4x2x48xf32, #tpu.memory_space<vmem>>, vector<1x4x2x48xf32>
    %3 = vector.shape_cast %2 : vector<1x4x2x48xf32> to vector<4x2x48xf32>
    %c0_6 = arith.constant 0 : index
    %c0_7 = arith.constant 0 : index
    %c0_8 = arith.constant 0 : index
    %c0_9 = arith.constant 0 : index
    %4 = vector.load %arg2[%c0_6, %c0_7, %c0_8, %c0_9] : memref<1x4x2x1xf32, #tpu.memory_space<vmem>>, vector<1x4x2x1xf32>
    %5 = vector.shape_cast %4 : vector<1x4x2x1xf32> to vector<4x2x1xf32>
    %6 = vector.extract_strided_slice %1 {offsets = [18, 0], sizes = [1, 48], strides = [1, 1]} : vector<21x48xf32> to vector<1x48xf32>
    %7 = vector.extract_strided_slice %1 {offsets = [19, 0], sizes = [1, 48], strides = [1, 1]} : vector<21x48xf32> to vector<1x48xf32>
    %8 = vector.extract_strided_slice %1 {offsets = [20, 0], sizes = [1, 48], strides = [1, 1]} : vector<21x48xf32> to vector<1x48xf32>
    %9 = vector.broadcast %5 : vector<4x2x1xf32> to vector<4x2x48xf32>
    %10 = arith.mulf %3, %9 : vector<4x2x48xf32>
    %cst = arith.constant dense<0.000000e+00> : vector<4x48xf32>
    %11 = vector.multi_reduction <add>, %10, %cst [1] : vector<4x2x48xf32> to vector<4x48xf32>
    %12 = vector.shape_cast %11 : vector<4x48xf32> to vector<4x1x48xf32>
    %cst_10 = arith.constant 2.000000e+00 : f32
    %13 = vector.broadcast %cst_10 : f32 to vector<4x1x48xf32>
    %14 = arith.divf %12, %13 : vector<4x1x48xf32>
    %15 = vector.shape_cast %8 : vector<1x48xf32> to vector<1x1x48xf32>
    %16 = vector.broadcast %15 : vector<1x1x48xf32> to vector<4x1x48xf32>
    %17 = arith.mulf %14, %16 : vector<4x1x48xf32>
    %18 = vector.broadcast %17 : vector<4x1x48xf32> to vector<4x2x48xf32>
    %19 = arith.subf %10, %18 : vector<4x2x48xf32>
    %20 = arith.mulf %19, %19 : vector<4x2x48xf32>
    %cst_11 = arith.constant dense<0.000000e+00> : vector<4x48xf32>
    %21 = vector.multi_reduction <add>, %20, %cst_11 [1] : vector<4x2x48xf32> to vector<4x48xf32>
    %22 = vector.shape_cast %21 : vector<4x48xf32> to vector<4x1x48xf32>
    %cst_12 = arith.constant 2.000000e+00 : f32
    %23 = vector.broadcast %cst_12 : f32 to vector<4x1x48xf32>
    %24 = arith.divf %22, %23 : vector<4x1x48xf32>
    %25 = vector.shape_cast %6 : vector<1x48xf32> to vector<1x1x48xf32>
    %26 = vector.broadcast %25 : vector<1x1x48xf32> to vector<4x2x48xf32>
    %27 = arith.mulf %26, %19 : vector<4x2x48xf32>
    %cst_13 = arith.constant 9.99999974E-6 : f32
    %28 = vector.broadcast %cst_13 : f32 to vector<4x1x48xf32>
    %29 = arith.addf %24, %28 : vector<4x1x48xf32>
    %30 = math.rsqrt %29 : vector<4x1x48xf32>
    %31 = vector.broadcast %30 : vector<4x1x48xf32> to vector<4x2x48xf32>
    %32 = arith.mulf %27, %31 : vector<4x2x48xf32>
    %33 = vector.shape_cast %7 : vector<1x48xf32> to vector<1x1x48xf32>
    %34 = vector.broadcast %33 : vector<1x1x48xf32> to vector<4x2x48xf32>
    %35 = arith.addf %32, %34 : vector<4x2x48xf32>
    %cst_14 = arith.constant dense<0.000000e+00> : vector<4x48xf32>
    %36 = vector.multi_reduction <add>, %35, %cst_14 [1] : vector<4x2x48xf32> to vector<4x48xf32>
    %cst_15 = arith.constant 2.000000e+00 : f32
    %37 = vector.broadcast %cst_15 : f32 to vector<4x48xf32>
    %38 = arith.divf %36, %37 : vector<4x48xf32>
    %c0_16 = arith.constant 0 : index
    %c0_17 = arith.constant 0 : index
    %c0_18 = arith.constant 0 : index
    %39 = vector.load %arg6[%c0_16, %c0_17, %c0_18] : memref<1x6x64xf32, #tpu.memory_space<vmem>>, vector<1x6x64xf32>
    %40 = vector.shape_cast %39 : vector<1x6x64xf32> to vector<6x64xf32>
    %41 = arith.truncf %38 : vector<4x48xf32> to vector<4x48xbf16>
    %c0_19 = arith.constant 0 : index
    %c0_20 = arith.constant 0 : index
    %c0_21 = arith.constant 0 : index
    %42 = vector.load %arg4[%c0_19, %c0_20, %c0_21] : memref<1x48x64xbf16, #tpu.memory_space<vmem>>, vector<1x48x64xbf16>
    %43 = vector.shape_cast %42 : vector<1x48x64xbf16> to vector<48x64xbf16>
    %cst_22 = arith.constant dense<0.000000e+00> : vector<4x64xf32>
    %44 = tpu.matmul %41, %43, %cst_22 {dimension_numbers = #tpu.dot_dimension_numbers<[1], [0], [0], [1], [0, 0, 1, 1], [], []>} : vector<4x48xbf16>, vector<48x64xbf16>, vector<4x64xf32> -> vector<4x64xf32>
    %45 = vector.extract_strided_slice %40 {offsets = [0, 0], sizes = [1, 64], strides = [1, 1]} : vector<6x64xf32> to vector<1x64xf32>
    %46 = vector.broadcast %45 : vector<1x64xf32> to vector<4x64xf32>
    %47 = arith.addf %44, %46 : vector<4x64xf32>
    %48 = vector.extract_strided_slice %40 {offsets = [1, 0], sizes = [1, 64], strides = [1, 1]} : vector<6x64xf32> to vector<1x64xf32>
    %49 = vector.extract_strided_slice %40 {offsets = [2, 0], sizes = [1, 64], strides = [1, 1]} : vector<6x64xf32> to vector<1x64xf32>
    %cst_23 = arith.constant 0.000000e+00 : f32
    %50 = vector.broadcast %cst_23 : f32 to vector<4x64xf32>
    %51 = arith.maximumf %47, %50 : vector<4x64xf32>
    %cst_24 = arith.constant dense<0.000000e+00> : vector<64xf32>
    %52 = vector.multi_reduction <add>, %51, %cst_24 [0] : vector<4x64xf32> to vector<64xf32>
    %53 = vector.shape_cast %52 : vector<64xf32> to vector<1x64xf32>
    %cst_25 = arith.constant 4.000000e+00 : f32
    %54 = vector.broadcast %cst_25 : f32 to vector<1x64xf32>
    %55 = arith.divf %53, %54 : vector<1x64xf32>
    %56 = vector.broadcast %55 : vector<1x64xf32> to vector<4x64xf32>
    %57 = arith.subf %51, %56 : vector<4x64xf32>
    %58 = arith.mulf %57, %57 : vector<4x64xf32>
    %cst_26 = arith.constant dense<0.000000e+00> : vector<64xf32>
    %59 = vector.multi_reduction <add>, %58, %cst_26 [0] : vector<4x64xf32> to vector<64xf32>
    %60 = vector.shape_cast %59 : vector<64xf32> to vector<1x64xf32>
    %cst_27 = arith.constant 4.000000e+00 : f32
    %61 = vector.broadcast %cst_27 : f32 to vector<1x64xf32>
    %62 = arith.divf %60, %61 : vector<1x64xf32>
    %63 = vector.broadcast %48 : vector<1x64xf32> to vector<4x64xf32>
    %64 = arith.mulf %63, %57 : vector<4x64xf32>
    %cst_28 = arith.constant 9.99999974E-6 : f32
    %65 = vector.broadcast %cst_28 : f32 to vector<1x64xf32>
    %66 = arith.addf %62, %65 : vector<1x64xf32>
    %67 = math.rsqrt %66 : vector<1x64xf32>
    %68 = vector.broadcast %67 : vector<1x64xf32> to vector<4x64xf32>
    %69 = arith.mulf %64, %68 : vector<4x64xf32>
    %70 = vector.broadcast %49 : vector<1x64xf32> to vector<4x64xf32>
    %71 = arith.addf %69, %70 : vector<4x64xf32>
    %72 = arith.truncf %71 : vector<4x64xf32> to vector<4x64xbf16>
    %c0_29 = arith.constant 0 : index
    %c0_30 = arith.constant 0 : index
    %c0_31 = arith.constant 0 : index
    %73 = vector.load %arg5[%c0_29, %c0_30, %c0_31] : memref<1x64x32xbf16, #tpu.memory_space<vmem>>, vector<1x64x32xbf16>
    %74 = vector.shape_cast %73 : vector<1x64x32xbf16> to vector<64x32xbf16>
    %cst_32 = arith.constant dense<0.000000e+00> : vector<4x32xf32>
    %75 = tpu.matmul %72, %74, %cst_32 {dimension_numbers = #tpu.dot_dimension_numbers<[1], [0], [0], [1], [0, 0, 1, 1], [], []>} : vector<4x64xbf16>, vector<64x32xbf16>, vector<4x32xf32> -> vector<4x32xf32>
    %76 = vector.extract_strided_slice %40 {offsets = [3, 0], sizes = [1, 32], strides = [1, 1]} : vector<6x64xf32> to vector<1x32xf32>
    %77 = vector.broadcast %76 : vector<1x32xf32> to vector<4x32xf32>
    %78 = arith.addf %75, %77 : vector<4x32xf32>
    %79 = vector.extract_strided_slice %40 {offsets = [4, 0], sizes = [1, 32], strides = [1, 1]} : vector<6x64xf32> to vector<1x32xf32>
    %80 = vector.extract_strided_slice %40 {offsets = [5, 0], sizes = [1, 32], strides = [1, 1]} : vector<6x64xf32> to vector<1x32xf32>
    %cst_33 = arith.constant 0.000000e+00 : f32
    %81 = vector.broadcast %cst_33 : f32 to vector<4x32xf32>
    %82 = arith.maximumf %78, %81 : vector<4x32xf32>
    %cst_34 = arith.constant dense<0.000000e+00> : vector<32xf32>
    %83 = vector.multi_reduction <add>, %82, %cst_34 [0] : vector<4x32xf32> to vector<32xf32>
    %84 = vector.shape_cast %83 : vector<32xf32> to vector<1x32xf32>
    %cst_35 = arith.constant 4.000000e+00 : f32
    %85 = vector.broadcast %cst_35 : f32 to vector<1x32xf32>
    %86 = arith.divf %84, %85 : vector<1x32xf32>
    %87 = vector.broadcast %86 : vector<1x32xf32> to vector<4x32xf32>
    %88 = arith.subf %82, %87 : vector<4x32xf32>
    %89 = arith.mulf %88, %88 : vector<4x32xf32>
    %cst_36 = arith.constant dense<0.000000e+00> : vector<32xf32>
    %90 = vector.multi_reduction <add>, %89, %cst_36 [0] : vector<4x32xf32> to vector<32xf32>
    %91 = vector.shape_cast %90 : vector<32xf32> to vector<1x32xf32>
    %cst_37 = arith.constant 4.000000e+00 : f32
    %92 = vector.broadcast %cst_37 : f32 to vector<1x32xf32>
    %93 = arith.divf %91, %92 : vector<1x32xf32>
    %94 = vector.broadcast %79 : vector<1x32xf32> to vector<4x32xf32>
    %95 = arith.mulf %94, %88 : vector<4x32xf32>
    %cst_38 = arith.constant 9.99999974E-6 : f32
    %96 = vector.broadcast %cst_38 : f32 to vector<1x32xf32>
    %97 = arith.addf %93, %96 : vector<1x32xf32>
    %98 = math.rsqrt %97 : vector<1x32xf32>
    %99 = vector.broadcast %98 : vector<1x32xf32> to vector<4x32xf32>
    %100 = arith.mulf %95, %99 : vector<4x32xf32>
    %101 = vector.broadcast %80 : vector<1x32xf32> to vector<4x32xf32>
    %102 = arith.addf %100, %101 : vector<4x32xf32>
    %cst_39 = arith.constant 0.000000e+00 : f32
    %103 = vector.broadcast %cst_39 : f32 to vector<4x96xf32>
    %104 = tpu.concatenate %102, %103 in 1 : vector<4x32xf32>, vector<4x96xf32> -> vector<4x128xf32>
    %c0_40 = arith.constant 0 : index
    %c0_41 = arith.constant 0 : index
    %c0_42 = arith.constant 0 : index
    %105 = vector.load %arg7[%c0_40, %c0_41, %c0_42] : memref<1x4x128xf32, #tpu.memory_space<vmem>>, vector<1x4x128xf32>
    %106 = vector.shape_cast %105 : vector<1x4x128xf32> to vector<4x128xf32>
    %107 = vector.shape_cast %104 : vector<4x128xf32> to vector<1x4x128xf32>
    tpu.vector_store %arg7[%c0_40, %c0_41, %c0_42], %107 {strides = array<i32>} : memref<1x4x128xf32, #tpu.memory_space<vmem>>, vector<1x4x128xf32>,
    return
  }
  func.func @transform_0(%arg0: i32) -> (i32, i32, i32, i32) {
    %c0_i32 = arith.constant 0 : i32
    %c0_i32_0 = arith.constant 0 : i32
    %c0_i32_1 = arith.constant 0 : i32
    %c0_i32_2 = arith.constant 0 : i32
    return %arg0, %c0_i32, %c0_i32_0, %c0_i32_1 : i32, i32, i32, i32
  }
  func.func @transform_1(%arg0: i32) -> (i32, i32, i32, i32) {
    %c0_i32 = arith.constant 0 : i32
    %c0_i32_0 = arith.constant 0 : i32
    %c0_i32_1 = arith.constant 0 : i32
    %c0_i32_2 = arith.constant 0 : i32
    return %arg0, %c0_i32, %c0_i32_0, %c0_i32_1 : i32, i32, i32, i32
  }
  func.func @transform_2(%arg0: i32) -> (i32, i32, i32) {
    %c0_i32 = arith.constant 0 : i32
    %c0_i32_0 = arith.constant 0 : i32
    %c0_i32_1 = arith.constant 0 : i32
    return %arg0, %c0_i32, %c0_i32_0 : i32, i32, i32
  }
  func.func @transform_3(%arg0: i32) -> (i32, i32, i32) {
    %c0_i32 = arith.constant 0 : i32
    %c0_i32_0 = arith.constant 0 : i32
    %c0_i32_1 = arith.constant 0 : i32
    return %arg0, %c0_i32, %c0_i32_0 : i32, i32, i32
  }
  func.func @transform_4(%arg0: i32) -> (i32, i32, i32) {
    %c0_i32 = arith.constant 0 : i32
    %c0_i32_0 = arith.constant 0 : i32
    %c0_i32_1 = arith.constant 0 : i32
    return %arg0, %c0_i32, %c0_i32_0 : i32, i32, i32
  }
  func.func @transform_5(%arg0: i32) -> (i32, i32, i32) {
    %c0_i32 = arith.constant 0 : i32
    %c0_i32_0 = arith.constant 0 : i32
    %c0_i32_1 = arith.constant 0 : i32
    return %arg0, %c0_i32, %c0_i32_0 : i32, i32, i32
  }
  func.func @transform_6(%arg0: i32) -> (i32, i32, i32) {
    %c0_i32 = arith.constant 0 : i32
    %c0_i32_0 = arith.constant 0 : i32
    %c0_i32_1 = arith.constant 0 : i32
    return %arg0, %c0_i32, %c0_i32_0 : i32, i32, i32
  }
}

module attributes {stable_mosaic.version = 11 : i64} {
  func.func @_final_head_kernel(%arg0: i32, %arg1: memref<4x96xf32, #tpu.memory_space<vmem>>, %arg2: memref<96x16xbf16, #tpu.memory_space<vmem>>, %arg3: memref<1x16xf32, #tpu.memory_space<vmem>>, %arg4: memref<1x16xf32, #tpu.memory_space<vmem>>, %arg5: memref<1x16xf32, #tpu.memory_space<vmem>>, %arg6: memref<16x3xbf16, #tpu.memory_space<vmem>>, %arg7: memref<1x3xf32, #tpu.memory_space<vmem>>, %arg8: memref<4x3xf32, #tpu.memory_space<vmem>>) attributes {dimension_semantics = [#tpu.dimension_semantics<arbitrary>], iteration_bounds = array<i64: 1>, scalar_prefetch = 0 : i64, scratch_operands = 0 : i64, tpu.core_type = #tpu.core_type<tc>, window_params = [{pipeline_mode = #tpu.pipeline_mode<synchronous>, transform_indices = @transform_0, window_bounds = array<i64: 4, 96>}, {pipeline_mode = #tpu.pipeline_mode<synchronous>, transform_indices = @transform_1, window_bounds = array<i64: 96, 16>}, {pipeline_mode = #tpu.pipeline_mode<synchronous>, transform_indices = @transform_2, window_bounds = array<i64: 1, 16>}, {pipeline_mode = #tpu.pipeline_mode<synchronous>, transform_indices = @transform_3, window_bounds = array<i64: 1, 16>}, {pipeline_mode = #tpu.pipeline_mode<synchronous>, transform_indices = @transform_4, window_bounds = array<i64: 1, 16>}, {pipeline_mode = #tpu.pipeline_mode<synchronous>, transform_indices = @transform_5, window_bounds = array<i64: 16, 3>}, {pipeline_mode = #tpu.pipeline_mode<synchronous>, transform_indices = @transform_6, window_bounds = array<i64: 1, 3>}, {pipeline_mode = #tpu.pipeline_mode<synchronous>, transform_indices = @transform_7, window_bounds = array<i64: 4, 3>}]} {
    %c0 = arith.constant 0 : index
    %c0_0 = arith.constant 0 : index
    %0 = vector.load %arg1[%c0, %c0_0] : memref<4x96xf32, #tpu.memory_space<vmem>>, vector<4x96xf32>
    %1 = arith.truncf %0 : vector<4x96xf32> to vector<4x96xbf16>
    %c0_1 = arith.constant 0 : index
    %c0_2 = arith.constant 0 : index
    %2 = vector.load %arg2[%c0_1, %c0_2] : memref<96x16xbf16, #tpu.memory_space<vmem>>, vector<96x16xbf16>
    %cst = arith.constant dense<0.000000e+00> : vector<4x16xf32>
    %3 = tpu.matmul %1, %2, %cst {dimension_numbers = #tpu.dot_dimension_numbers<[1], [0], [0], [1], [0, 0, 1, 1], [], []>} : vector<4x96xbf16>, vector<96x16xbf16>, vector<4x16xf32> -> vector<4x16xf32>
    %c0_3 = arith.constant 0 : index
    %c0_4 = arith.constant 0 : index
    %4 = vector.load %arg3[%c0_3, %c0_4] : memref<1x16xf32, #tpu.memory_space<vmem>>, vector<1x16xf32>
    %5 = vector.broadcast %4 : vector<1x16xf32> to vector<4x16xf32>
    %6 = arith.addf %3, %5 : vector<4x16xf32>
    %c0_5 = arith.constant 0 : index
    %c0_6 = arith.constant 0 : index
    %7 = vector.load %arg4[%c0_5, %c0_6] : memref<1x16xf32, #tpu.memory_space<vmem>>, vector<1x16xf32>
    %c0_7 = arith.constant 0 : index
    %c0_8 = arith.constant 0 : index
    %8 = vector.load %arg5[%c0_7, %c0_8] : memref<1x16xf32, #tpu.memory_space<vmem>>, vector<1x16xf32>
    %cst_9 = arith.constant 0.000000e+00 : f32
    %9 = vector.broadcast %cst_9 : f32 to vector<4x16xf32>
    %10 = arith.maximumf %6, %9 : vector<4x16xf32>
    %cst_10 = arith.constant dense<0.000000e+00> : vector<16xf32>
    %11 = vector.multi_reduction <add>, %10, %cst_10 [0] : vector<4x16xf32> to vector<16xf32>
    %12 = vector.shape_cast %11 : vector<16xf32> to vector<1x16xf32>
    %cst_11 = arith.constant 4.000000e+00 : f32
    %13 = vector.broadcast %cst_11 : f32 to vector<1x16xf32>
    %14 = arith.divf %12, %13 : vector<1x16xf32>
    %15 = vector.broadcast %14 : vector<1x16xf32> to vector<4x16xf32>
    %16 = arith.subf %10, %15 : vector<4x16xf32>
    %17 = arith.mulf %16, %16 : vector<4x16xf32>
    %cst_12 = arith.constant dense<0.000000e+00> : vector<16xf32>
    %18 = vector.multi_reduction <add>, %17, %cst_12 [0] : vector<4x16xf32> to vector<16xf32>
    %19 = vector.shape_cast %18 : vector<16xf32> to vector<1x16xf32>
    %cst_13 = arith.constant 4.000000e+00 : f32
    %20 = vector.broadcast %cst_13 : f32 to vector<1x16xf32>
    %21 = arith.divf %19, %20 : vector<1x16xf32>
    %22 = vector.broadcast %7 : vector<1x16xf32> to vector<4x16xf32>
    %23 = arith.mulf %22, %16 : vector<4x16xf32>
    %cst_14 = arith.constant 9.99999974E-6 : f32
    %24 = vector.broadcast %cst_14 : f32 to vector<1x16xf32>
    %25 = arith.addf %21, %24 : vector<1x16xf32>
    %26 = math.rsqrt %25 : vector<1x16xf32>
    %27 = vector.broadcast %26 : vector<1x16xf32> to vector<4x16xf32>
    %28 = arith.mulf %23, %27 : vector<4x16xf32>
    %29 = vector.broadcast %8 : vector<1x16xf32> to vector<4x16xf32>
    %30 = arith.addf %28, %29 : vector<4x16xf32>
    %31 = arith.truncf %30 : vector<4x16xf32> to vector<4x16xbf16>
    %c0_15 = arith.constant 0 : index
    %c0_16 = arith.constant 0 : index
    %32 = vector.load %arg6[%c0_15, %c0_16] : memref<16x3xbf16, #tpu.memory_space<vmem>>, vector<16x3xbf16>
    %cst_17 = arith.constant dense<0.000000e+00> : vector<4x3xf32>
    %33 = tpu.matmul %31, %32, %cst_17 {dimension_numbers = #tpu.dot_dimension_numbers<[1], [0], [0], [1], [0, 0, 1, 1], [], []>} : vector<4x16xbf16>, vector<16x3xbf16>, vector<4x3xf32> -> vector<4x3xf32>
    %c0_18 = arith.constant 0 : index
    %c0_19 = arith.constant 0 : index
    %34 = vector.load %arg7[%c0_18, %c0_19] : memref<1x3xf32, #tpu.memory_space<vmem>>, vector<1x3xf32>
    %35 = vector.broadcast %34 : vector<1x3xf32> to vector<4x3xf32>
    %36 = arith.addf %33, %35 : vector<4x3xf32>
    %c0_20 = arith.constant 0 : index
    %c0_21 = arith.constant 0 : index
    %37 = vector.load %arg8[%c0_20, %c0_21] : memref<4x3xf32, #tpu.memory_space<vmem>>, vector<4x3xf32>
    tpu.vector_store %arg8[%c0_20, %c0_21], %36 {strides = array<i32>} : memref<4x3xf32, #tpu.memory_space<vmem>>, vector<4x3xf32>,
    return
  }
  func.func @transform_0(%arg0: i32) -> (i32, i32) {
    %c0_i32 = arith.constant 0 : i32
    %c0_i32_0 = arith.constant 0 : i32
    %c0_i32_1 = arith.constant 0 : i32
    return %c0_i32, %c0_i32_0 : i32, i32
  }
  func.func @transform_1(%arg0: i32) -> (i32, i32) {
    %c0_i32 = arith.constant 0 : i32
    %c0_i32_0 = arith.constant 0 : i32
    %c0_i32_1 = arith.constant 0 : i32
    return %c0_i32, %c0_i32_0 : i32, i32
  }
  func.func @transform_2(%arg0: i32) -> (i32, i32) {
    %c0_i32 = arith.constant 0 : i32
    %c0_i32_0 = arith.constant 0 : i32
    %c0_i32_1 = arith.constant 0 : i32
    return %c0_i32, %c0_i32_0 : i32, i32
  }
  func.func @transform_3(%arg0: i32) -> (i32, i32) {
    %c0_i32 = arith.constant 0 : i32
    %c0_i32_0 = arith.constant 0 : i32
    %c0_i32_1 = arith.constant 0 : i32
    return %c0_i32, %c0_i32_0 : i32, i32
  }
  func.func @transform_4(%arg0: i32) -> (i32, i32) {
    %c0_i32 = arith.constant 0 : i32
    %c0_i32_0 = arith.constant 0 : i32
    %c0_i32_1 = arith.constant 0 : i32
    return %c0_i32, %c0_i32_0 : i32, i32
  }
  func.func @transform_5(%arg0: i32) -> (i32, i32) {
    %c0_i32 = arith.constant 0 : i32
    %c0_i32_0 = arith.constant 0 : i32
    %c0_i32_1 = arith.constant 0 : i32
    return %c0_i32, %c0_i32_0 : i32, i32
  }
  func.func @transform_6(%arg0: i32) -> (i32, i32) {
    %c0_i32 = arith.constant 0 : i32
    %c0_i32_0 = arith.constant 0 : i32
    %c0_i32_1 = arith.constant 0 : i32
    return %c0_i32, %c0_i32_0 : i32, i32
  }
  func.func @transform_7(%arg0: i32) -> (i32, i32) {
    %c0_i32 = arith.constant 0 : i32
    %c0_i32_0 = arith.constant 0 : i32
    %c0_i32_1 = arith.constant 0 : i32
    return %c0_i32, %c0_i32_0 : i32, i32
  }
}

</mosaic_0001>

<llo_original>
// kernel: neg.2
$region0: #{neg.2}
  #allocation0 [shape = 's32[1]{0}', space=sflag, size = 0x4, scoped, tag = 'scoped memory for neg.2']
  %s0 = inlined_call_operand.vmem [shape: f32[3,4,8], index: 0, kind: input, shape index: {}]
  %s1 = inlined_call_operand.vmem [shape: f32[3,4,8], index: 1, kind: output, shape index: {}]
  %v2 = vld [vmem:[%s0] sm:$0xff]
  %3 = xla_tuple %v2
  %4 = xla_tuple %3
  %v5 = vxor.u32 %v2, 2147483648
  %6 = xla_tuple %v5
  %7 = vst [vmem:[%s1] sm:$0xff] %v5
  %s8 = scalar_lea.vmem %s0, 8
  %v9 = vld [vmem:[%s8] sm:$0xff]
  %10 = xla_tuple %v9
  %11 = xla_tuple %10
  %v12 = vxor.u32 %v9, 2147483648
  %13 = xla_tuple %v12
  %s14 = scalar_lea.vmem %s1, 8
  %15 = vst [vmem:[%s14] sm:$0xff] %v12
  %s16 = scalar_lea.vmem %s0, 16
  %v17 = vld [vmem:[%s16] sm:$0xff]
  %18 = xla_tuple %v17
  %19 = xla_tuple %18
  %v20 = vxor.u32 %v17, 2147483648
  %21 = xla_tuple %v20
  %s22 = scalar_lea.vmem %s1, 16
  %23 = vst [vmem:[%s22] sm:$0xff] %v20

// kernel: neg.3
$region0: #{neg.3}
  #allocation0 [shape = 's32[1]{0}', space=sflag, size = 0x4, scoped, tag = 'scoped memory for neg.3']
  %s0 = inlined_call_operand.vmem [shape: f32[3,4,4], index: 0, kind: input, shape index: {}]
  %s1 = inlined_call_operand.vmem [shape: f32[3,4,4], index: 1, kind: output, shape index: {}]
  %v2 = vld [vmem:[%s0] sm:$0xf]
  %3 = xla_tuple %v2
  %4 = xla_tuple %3
  %v5 = vxor.u32 %v2, 2147483648
  %6 = xla_tuple %v5
  %7 = vst [vmem:[%s1] sm:$0xf] %v5
  %s8 = scalar_lea.vmem %s0, 4
  %v9 = vld [vmem:[%s8] sm:$0xf]
  %10 = xla_tuple %v9
  %11 = xla_tuple %10
  %v12 = vxor.u32 %v9, 2147483648
  %13 = xla_tuple %v12
  %s14 = scalar_lea.vmem %s1, 4
  %15 = vst [vmem:[%s14] sm:$0xf] %v12
  %s16 = scalar_lea.vmem %s0, 8
  %v17 = vld [vmem:[%s16] sm:$0xf]
  %18 = xla_tuple %v17
  %19 = xla_tuple %18
  %v20 = vxor.u32 %v17, 2147483648
  %21 = xla_tuple %v20
  %s22 = scalar_lea.vmem %s1, 8
  %23 = vst [vmem:[%s22] sm:$0xf] %v20

// kernel: multi_graph_convolution.4
$region0: #{multi_graph_convolution.4}
  #allocation0 [shape = 'u32[]', space=smem, size = 0x4, offset = 0x4, fixed_abs, tag = 'smem constant byte address 0x4 - core index']
  #allocation1 [shape = 'u32[144,128]{1,0:T(1,128)}', space=vmem, size = 0x12000, scoped, tag = 'internal scratch']
  %s0 = inlined_call_operand.hbm [shape: f32[3,4,8,8], index: 0, kind: input, shape index: {}]
  %s1 = inlined_call_operand.hbm [shape: f32[3,4,8,8], index: 1, kind: input, shape index: {}]
  %s2 = inlined_call_operand.hbm [shape: bf16[3,8,16], index: 2, kind: input, shape index: {}]
  %s3 = inlined_call_operand.vmem [shape: bf16[3,2,16,16], index: 3, kind: input, shape index: {}]
  %s4 = inlined_call_operand.hbm [shape: f32[3,21,48], index: 4, kind: input, shape index: {}]
  %s5 = inlined_call_operand.vmem [shape: f32[3,4,8,128], index: 5, kind: output, shape index: {}]
  %s6 = sld [smem:[#allocation0]]
  $region69: #{multi_graph_convolution.4} parent=0
    _
  %s8 = ssub.s32 1, %s6
  %s9 = scalar_select 0, %s8, %s6
  $region1: #{multi_graph_convolution.4} parent=0
    #allocation2 [shape = 'u8[32768]{0}', space=vmem, size = 0x8000, scoped, tag = 'input window, operand 0']
    #allocation3 [shape = 's32[2]{0}', space=sflag, size = 0x8, scoped, tag = 'scoped memory for multi_graph_convolution.4']
    #allocation4 [shape = 'u8[32768]{0}', space=vmem, size = 0x8000, scoped, tag = 'input window, operand 1']
    #allocation5 [shape = 's32[2]{0}', space=sflag, size = 0x8, scoped, tag = 'scoped memory for multi_graph_convolution.4']
    #allocation6 [shape = 'u8[4096]{0}', space=vmem, size = 0x1000, scoped, tag = 'input window, operand 2']
    #allocation7 [shape = 'u8[24576]{0}', space=vmem, size = 0x6000, scoped, tag = 'input window, operand 4']
    #allocation8 [shape = 's32[2]{0}', space=sflag, size = 0x8, scoped, tag = 'scoped memory for multi_graph_convolution.4']
    %10 = vsyncpa [#allocation3], 0
    %s11 = scalar_lea.sflag [#allocation3], 1
    %12 = vsyncpa %s11, 0
    %13 = vsyncpa [#allocation5], 0
    %s14 = scalar_lea.sflag [#allocation5], 1
    %15 = vsyncpa %s14, 0
    %16 = vsyncpa [#allocation8], 0
    %s17 = scalar_lea.sflag [#allocation8], 1
    %18 = vsyncpa %s17, 0
    loop: start=0, step=1, limit=5
    $region2: #{multi_graph_convolution.4} parent=1 // loop_pre_header
      _
    $region3: #{multi_graph_convolution.4} parent=1 // loop_header
      %s20 = sphi 0, %s24
      %p21 = scmp.ge.s32.totalorder %s20, 5
      %s30 = sphi 0, %s32
      %s33 = sphi 0, %s30
      %s34 = sphi 0, %s33
      %s50 = sphi 0, %s34
      %s56 = sphi 0, %s58
      %s59 = sphi 0, %s56
      %s60 = sphi 0, %s59
      %s76 = sphi 0, %s60
      %s82 = sphi 0, %s84
      %s85 = sphi 0, %s82
      %s86 = sphi 0, %s85
      %s102 = sphi 0, %s86
      %s108 = sphi 0, %s110
      %s111 = sphi 0, %s108
      %s112 = sphi 0, %s111
      %s128 = sphi 0, %s112
      %s134 = sphi 0, %s136
      %s137 = sphi 0, %s134
      %s138 = sphi 0, %s137
      %s154 = sphi 0, %s138
      %s160 = sphi 0, %s162
      %s163 = sphi 0, %s160
      %s164 = sphi 0, %s163
      %s180 = sphi 0, %s164
    $region4: #{multi_graph_convolution.4} parent=1 // loop_header_branch
      %23 = sbr.rel (%p21) target = $region8
    $region5: #{multi_graph_convolution.4} parent=1 // loop_body
      %s25 = ssub.s32 %s20, 1
      %s26 = ssub.s32 %s20, 2
      %s27 = sadd.s32 %s20, 1
      %s28 = ssub.s32 %s20, %s27
      %p29 = scmp.eq.s32.totalorder %s28, 0
      %s31 = sadd.s32 %s30, 1
      %s32 = scalar_select %p29, %s30, %s31
      %p35 = pneg %p29
      %p36 = scmp.eq.s32.totalorder %s20, 2
      %p37 = por %p35, %p36
      %p38 = scmp.ne.s32.totalorder %s30, %s33
      %p39 = scmp.eq.s32.totalorder %s20, 0
      %p40 = por %p38, %p39
      %p41 = scmp.ne.s32.totalorder %s30, %s33
      %p42 = scmp.eq.s32.totalorder %s25, 2
      %p43 = por %p41, %p42
      %p44 = scmp.ne.s32.totalorder %s33, %s34
      %p45 = scmp.eq.s32.totalorder %s25, 0
      %p46 = por %p44, %p45
      %p47 = scmp.ne.s32.totalorder %s33, %s34
      %p48 = scmp.eq.s32.totalorder %s26, 2
      %p49 = por %p47, %p48
      %p51 = scmp.ne.s32.totalorder %s34, %s50
      %p52 = scmp.eq.s32.totalorder %s26, 0
      %p53 = por %p51, %p52
      %s54 = ssub.s32 %s20, %s27
      %p55 = scmp.eq.s32.totalorder %s54, 0
      %s57 = sadd.s32 %s56, 1
      %s58 = scalar_select %p55, %s56, %s57
      %p61 = pneg %p55
      %p62 = scmp.eq.s32.totalorder %s20, 2
      %p63 = por %p61, %p62
      %p64 = scmp.ne.s32.totalorder %s56, %s59
      %p65 = scmp.eq.s32.totalorder %s20, 0
      %p66 = por %p64, %p65
      %p67 = scmp.ne.s32.totalorder %s56, %s59
      %p68 = scmp.eq.s32.totalorder %s25, 2
      %p69 = por %p67, %p68
      %p70 = scmp.ne.s32.totalorder %s59, %s60
      %p71 = scmp.eq.s32.totalorder %s25, 0
      %p72 = por %p70, %p71
      %p73 = scmp.ne.s32.totalorder %s59, %s60
      %p74 = scmp.eq.s32.totalorder %s26, 2
      %p75 = por %p73, %p74
      %p77 = scmp.ne.s32.totalorder %s60, %s76
      %p78 = scmp.eq.s32.totalorder %s26, 0
      %p79 = por %p77, %p78
      %s80 = ssub.s32 %s20, %s27
      %p81 = scmp.eq.s32.totalorder %s80, 0
      %s83 = sadd.s32 %s82, 1
      %s84 = scalar_select %p81, %s82, %s83
      %p87 = pneg %p81
      %p88 = scmp.eq.s32.totalorder %s20, 2
      %p89 = por %p87, %p88
      %p90 = scmp.ne.s32.totalorder %s82, %s85
      %p91 = scmp.eq.s32.totalorder %s20, 0
      %p92 = por %p90, %p91
      %p93 = scmp.ne.s32.totalorder %s82, %s85
      %p94 = scmp.eq.s32.totalorder %s25, 2
      %p95 = por %p93, %p94
      %p96 = scmp.ne.s32.totalorder %s85, %s86
      %p97 = scmp.eq.s32.totalorder %s25, 0
      %p98 = por %p96, %p97
      %p99 = scmp.ne.s32.totalorder %s85, %s86
      %p100 = scmp.eq.s32.totalorder %s26, 2
      %p101 = por %p99, %p100
      %p103 = scmp.ne.s32.totalorder %s86, %s102
      %p104 = scmp.eq.s32.totalorder %s26, 0
      %p105 = por %p103, %p104
      %s106 = ssub.s32 %s20, %s27
      %p107 = scmp.eq.s32.totalorder %s106, 0
      %s109 = sadd.s32 %s108, 1
      %s110 = scalar_select %p107, %s108, %s109
      %p113 = pneg %p107
      %p114 = scmp.eq.s32.totalorder %s20, 2
      %p115 = por %p113, %p114
      %p116 = scmp.ne.s32.totalorder %s108, %s111
      %p117 = scmp.eq.s32.totalorder %s20, 0
      %p118 = por %p116, %p117
      %p119 = scmp.ne.s32.totalorder %s108, %s111
      %p120 = scmp.eq.s32.totalorder %s25, 2
      %p121 = por %p119, %p120
      %p122 = scmp.ne.s32.totalorder %s111, %s112
      %p123 = scmp.eq.s32.totalorder %s25, 0
      %p124 = por %p122, %p123
      %p125 = scmp.ne.s32.totalorder %s111, %s112
      %p126 = scmp.eq.s32.totalorder %s26, 2
      %p127 = por %p125, %p126
      %p129 = scmp.ne.s32.totalorder %s112, %s128
      %p130 = scmp.eq.s32.totalorder %s26, 0
      %p131 = por %p129, %p130
      %s132 = ssub.s32 %s20, %s27
      %p133 = scmp.eq.s32.totalorder %s132, 0
      %s135 = sadd.s32 %s134, 1
      %s136 = scalar_select %p133, %s134, %s135
      %p139 = pneg %p133
      %p140 = scmp.eq.s32.totalorder %s20, 2
      %p141 = por %p139, %p140
      %p142 = scmp.ne.s32.totalorder %s134, %s137
      %p143 = scmp.eq.s32.totalorder %s20, 0
      %p144 = por %p142, %p143
      %p145 = scmp.ne.s32.totalorder %s134, %s137
      %p146 = scmp.eq.s32.totalorder %s25, 2
      %p147 = por %p145, %p146
      %p148 = scmp.ne.s32.totalorder %s137, %s138
      %p149 = scmp.eq.s32.totalorder %s25, 0
      %p150 = por %p148, %p149
      %p151 = scmp.ne.s32.totalorder %s137, %s138
      %p152 = scmp.eq.s32.totalorder %s26, 2
      %p153 = por %p151, %p152
      %p155 = scmp.ne.s32.totalorder %s138, %s154
      %p156 = scmp.eq.s32.totalorder %s26, 0
      %p157 = por %p155, %p156
      %s158 = ssub.s32 %s20, %s27
      %p159 = scmp.eq.s32.totalorder %s158, 0
      %s161 = sadd.s32 %s160, 1
      %s162 = scalar_select %p159, %s160, %s161
      %p165 = pneg %p159
      %p166 = scmp.eq.s32.totalorder %s20, 2
      %p167 = por %p165, %p166
      %p168 = scmp.ne.s32.totalorder %s160, %s163
      %p169 = scmp.eq.s32.totalorder %s20, 0
      %p170 = por %p168, %p169
      %p171 = scmp.ne.s32.totalorder %s160, %s163
      %p172 = scmp.eq.s32.totalorder %s25, 2
      %p173 = por %p171, %p172
      %p174 = scmp.ne.s32.totalorder %s163, %s164
      %p175 = scmp.eq.s32.totalorder %s25, 0
      %p176 = por %p174, %p175
      %p177 = scmp.ne.s32.totalorder %s163, %s164
      %p178 = scmp.eq.s32.totalorder %s26, 2
      %p179 = por %p177, %p178
      %p181 = scmp.ne.s32.totalorder %s164, %s180
      %p182 = scmp.eq.s32.totalorder %s26, 0
      %p183 = por %p181, %p182
      %p184 = scmp.le.s32.totalorder 1, %s20
      %p185 = scmp.lt.s32.totalorder %s20, 4
      %p186 = pnand %p184, %p185
      %p187 = pneg %p186
      // Predicated region
      $region9: #{multi_graph_convolution.4} parent=5 // pred_check
        _
      $region10: #{multi_graph_convolution.4} parent=5 // pred_check_branch
        %189 = sbr.rel (%p186) target = $region12
      $region11: #{multi_graph_convolution.4} parent=5 // pred_region
        %s190 = ssub.s32 %s20, 1
      $region12: #{multi_graph_convolution.4} parent=5 // pred_fallthru
        _
      %p191 = scmp.lt.s32.totalorder %s20, 3
      // Predicated region
      $region13: #{multi_graph_convolution.4} parent=5 // pred_check
        %p192 = pneg %p191
      $region14: #{multi_graph_convolution.4} parent=5 // pred_check_branch
        %194 = sbr.rel (%p192) target = $region16
      $region15: #{multi_graph_convolution.4} parent=5 // pred_region
        // Predicated region
        $region17: #{multi_graph_convolution.4} parent=15 // pred_check
          %p195 = pneg %p40
        $region18: #{multi_graph_convolution.4} parent=15 // pred_check_branch
          %197 = sbr.rel (%p195) target = $region20
        $region19: #{multi_graph_convolution.4} parent=15 // pred_region
          %s198 = sand.u32 %s30, 1
          %s199 = scalar_lea.sflag [#allocation3], %s198
          %s200 = sand.u32 %s30, 1
          %s201 = smul.addr %s200, 32
          %s202 = scalar_lea.vmem [#allocation2], %s201
          %s204 = ssub.s32 512, 512
          %205 = vsyncadd %s199, %s204
          %s206 = smul.addr %s20, 4
          %s207 = smul.addr %s206, 128
          %s208 = scalar_lea.hbm %s0, %s207
          %s209 = sshll.u32 %s202, 4
          %s210 = int_to_ptr.vmem [resolvable:$true] %s209
          %215 = dma.hbm_to_vmem [thread:$0]  %s208, 512, %s210, %s199, 128, 128, 8
        $region20: #{multi_graph_convolution.4} parent=15 // pred_fallthru
          _
        // Predicated region
        $region21: #{multi_graph_convolution.4} parent=15 // pred_check
          %p216 = pneg %p66
        $region22: #{multi_graph_convolution.4} parent=15 // pred_check_branch
          %218 = sbr.rel (%p216) target = $region24
        $region23: #{multi_graph_convolution.4} parent=15 // pred_region
          %s219 = sand.u32 %s20, 1
          %s220 = scalar_lea.sflag [#allocation5], %s219
          %s221 = sand.u32 %s56, 1
          %s222 = smul.addr %s221, 32
          %s223 = scalar_lea.vmem [#allocation4], %s222
          %s225 = ssub.s32 512, 512
          %226 = vsyncadd %s220, %s225
          %s227 = smul.addr %s20, 4
          %s228 = smul.addr %s227, 128
          %s229 = scalar_lea.hbm %s1, %s228
          %s230 = sshll.u32 %s223, 4
          %s231 = int_to_ptr.vmem [resolvable:$true] %s230
          %236 = dma.hbm_to_vmem [thread:$0]  %s229, 512, %s231, %s220, 128, 128, 8
        $region24: #{multi_graph_convolution.4} parent=15 // pred_fallthru
          _
        // Predicated region
        $region25: #{multi_graph_convolution.4} parent=15 // pred_check
          %p237 = pneg %p92
        $region26: #{multi_graph_convolution.4} parent=15 // pred_check_branch
          %239 = sbr.rel (%p237) target = $region28
        $region27: #{multi_graph_convolution.4} parent=15 // pred_region
          %s240 = sand.u32 %s20, 1
          %s241 = scalar_lea.sflag [#allocation5], %s240
          %s242 = sand.u32 %s82, 1
          %s243 = smul.addr %s242, 4
          %s244 = scalar_lea.vmem [#allocation6], %s243
          %s246 = ssub.s32 64, 64
          %247 = vsyncadd %s241, %s246
          %s248 = smul.addr %s20, 64
          %s249 = scalar_lea.hbm %s2, %s248
          %s251 = sshll.u32 %s244, 4
          %s252 = int_to_ptr.vmem [resolvable:$true] %s251
          %254 = dma.hbm_to_vmem [thread:$0]  %s249, 64, %s252, %s241
        $region28: #{multi_graph_convolution.4} parent=15 // pred_fallthru
          _
        // Predicated region
        $region29: #{multi_graph_convolution.4} parent=15 // pred_check
          %p255 = pneg %p118
        $region30: #{multi_graph_convolution.4} parent=15 // pred_check_branch
          %257 = sbr.rel (%p255) target = $region32
        $region31: #{multi_graph_convolution.4} parent=15 // pred_region
          %p258 = scmp.lt.s32.totalorder %s20, 2
          %s259 = scalar_select %p258, %s20, 2
          %s260 = smul.addr %s259, 4
          %s261 = smul.addr %s260, 4
          %s262 = scalar_lea.vmem %s3, %s261
        $region32: #{multi_graph_convolution.4} parent=15 // pred_fallthru
          _
        // Predicated region
        $region33: #{multi_graph_convolution.4} parent=15 // pred_check
          %p263 = pneg %p144
        $region34: #{multi_graph_convolution.4} parent=15 // pred_check_branch
          %265 = sbr.rel (%p263) target = $region36
        $region35: #{multi_graph_convolution.4} parent=15 // pred_region
          %s266 = sand.u32 %s134, 1
          %s267 = scalar_lea.sflag [#allocation8], %s266
          %s268 = sand.u32 %s134, 1
          %s269 = smul.addr %s268, 24
          %s270 = scalar_lea.vmem [#allocation7], %s269
          %s272 = ssub.s32 384, 384
          %273 = vsyncadd %s267, %s272
          %s274 = smul.addr %s20, 3
          %s275 = smul.addr %s274, 128
          %s276 = scalar_lea.hbm %s4, %s275
          %s277 = sshll.u32 %s270, 4
          %s278 = int_to_ptr.vmem [resolvable:$true] %s277
          %283 = dma.hbm_to_vmem [thread:$0]  %s276, 384, %s278, %s267, 128, 128, 8
        $region36: #{multi_graph_convolution.4} parent=15 // pred_fallthru
          _
      $region16: #{multi_graph_convolution.4} parent=5 // pred_fallthru
        _
      %p284 = scmp.le.s32.totalorder 1, %s20
      %p285 = scmp.lt.s32.totalorder %s20, 4
      %p286 = pnand %p284, %p285
      %p287 = pneg %p286
      // Predicated region
      $region37: #{multi_graph_convolution.4} parent=5 // pred_check
        _
      $region38: #{multi_graph_convolution.4} parent=5 // pred_check_branch
        %289 = sbr.rel (%p286) target = $region40
      $region39: #{multi_graph_convolution.4} parent=5 // pred_region
        %s290 = ssub.s32 %s20, 1
        %s291 = sand.u32 %s33, 1
        %s292 = scalar_lea.sflag [#allocation3], %s291
        %s293 = sand.u32 %s33, 1
        %s294 = smul.addr %s293, 32
        %s295 = scalar_lea.vmem [#allocation2], %s294
        // Predicated region
        $region41: #{multi_graph_convolution.4} parent=39 // pred_check
          %p296 = pneg %p46
        $region42: #{multi_graph_convolution.4} parent=39 // pred_check_branch
          %298 = sbr.rel (%p296) target = $region44
        $region43: #{multi_graph_convolution.4} parent=39 // pred_region
          %299 = dma.done %s292, 512
        $region44: #{multi_graph_convolution.4} parent=39 // pred_fallthru
          _
        %s300 = sand.u32 %s25, 1
        %s301 = scalar_lea.sflag [#allocation5], %s300
        %s302 = sand.u32 %s59, 1
        %s303 = smul.addr %s302, 32
        %s304 = scalar_lea.vmem [#allocation4], %s303
        // Predicated region
        $region45: #{multi_graph_convolution.4} parent=39 // pred_check
          %p305 = pneg %p72
        $region46: #{multi_graph_convolution.4} parent=39 // pred_check_branch
          %307 = sbr.rel (%p305) target = $region48
        $region47: #{multi_graph_convolution.4} parent=39 // pred_region
          %308 = dma.done %s301, 512
        $region48: #{multi_graph_convolution.4} parent=39 // pred_fallthru
          _
        %s309 = sand.u32 %s25, 1
        %s310 = scalar_lea.sflag [#allocation5], %s309
        %s311 = sand.u32 %s85, 1
        %s312 = smul.addr %s311, 4
        %s313 = scalar_lea.vmem [#allocation6], %s312
        // Predicated region
        $region49: #{multi_graph_convolution.4} parent=39 // pred_check
          %p314 = pneg %p98
        $region50: #{multi_graph_convolution.4} parent=39 // pred_check_branch
          %316 = sbr.rel (%p314) target = $region52
        $region51: #{multi_graph_convolution.4} parent=39 // pred_region
          %317 = dma.done %s310, 64
        $region52: #{multi_graph_convolution.4} parent=39 // pred_fallthru
          _
        %s318 = sand.u32 %s137, 1
        %s319 = scalar_lea.sflag [#allocation8], %s318
        %s320 = sand.u32 %s137, 1
        %s321 = smul.addr %s320, 24
        %s322 = scalar_lea.vmem [#allocation7], %s321
        // Predicated region
        $region53: #{multi_graph_convolution.4} parent=39 // pred_check
          %p323 = pneg %p150
        $region54: #{multi_graph_convolution.4} parent=39 // pred_check_branch
          %325 = sbr.rel (%p323) target = $region56
        $region55: #{multi_graph_convolution.4} parent=39 // pred_region
          %326 = dma.done %s319, 384
        $region56: #{multi_graph_convolution.4} parent=39 // pred_fallthru
          _
        %s327 = sand.u32 %s33, 1
        %s328 = scalar_lea.sflag [#allocation3], %s327
        %s329 = sand.u32 %s33, 1
        %s330 = smul.addr %s329, 32
        %s331 = scalar_lea.vmem [#allocation2], %s330
        %p332 = pneg %p46
        %p333 = pneg %p43
        %s334 = sand.u32 %s25, 1
        %s335 = scalar_lea.sflag [#allocation5], %s334
        %s336 = sand.u32 %s59, 1
        %s337 = smul.addr %s336, 32
        %s338 = scalar_lea.vmem [#allocation4], %s337
        %p339 = pneg %p72
        %p340 = pneg %p69
        %s341 = sand.u32 %s25, 1
        %s342 = scalar_lea.sflag [#allocation5], %s341
        %s343 = sand.u32 %s85, 1
        %s344 = smul.addr %s343, 4
        %s345 = scalar_lea.vmem [#allocation6], %s344
        %p346 = pneg %p98
        %p347 = pneg %p95
        %p348 = scmp.lt.s32.totalorder %s25, 2
        %s349 = scalar_select %p348, %s25, 2
        %s350 = smul.addr %s349, 4
        %s351 = smul.addr %s350, 4
        %s352 = scalar_lea.vmem %s3, %s351
        %p353 = pneg %p124
        %p354 = pneg %p121
        %s355 = sand.u32 %s137, 1
        %s356 = scalar_lea.sflag [#allocation8], %s355
        %s357 = sand.u32 %s137, 1
        %s358 = smul.addr %s357, 24
        %s359 = scalar_lea.vmem [#allocation7], %s358
        %p360 = pneg %p150
        %p361 = pneg %p147
        %p362 = pneg %p176
        %p363 = pneg %p173
        %p364 = scmp.lt.s32.totalorder %s25, 2
        %s365 = scalar_select %p364, %s25, 2
        %s366 = smul.addr %s365, 4
        %s367 = smul.addr %s366, 8
        %s368 = scalar_lea.vmem %s5, %s367
        %p369 = scmp.lt.s32.totalorder %s25, 2
        %s370 = scalar_select %p369, %s25, 2
        %s371 = smul.addr %s370, 4
        %s372 = smul.addr %s371, 4
        %s373 = scalar_lea.vmem %s3, %s372
        %p374 = scmp.lt.s32.totalorder %s25, 2
        %s375 = scalar_select %p374, %s25, 2
        %s376 = smul.addr %s375, 4
        %s377 = smul.addr %s376, 8
        %s378 = scalar_lea.vmem %s5, %s377
        %v380 = vld [vmem:[%s295] sm:$0xff]
        %v381 = vld [vmem:[%s295 + $0x8] sm:$0xff]
        %v382 = vld [vmem:[%s295 + $0x10] sm:$0xff]
        %v383 = vld [vmem:[%s295 + $0x18] sm:$0xff]
        %v384 = vld [vmem:[%s304] sm:$0xff]
        %v385 = vld [vmem:[%s304 + $0x8] sm:$0xff]
        %v386 = vld [vmem:[%s304 + $0x10] sm:$0xff]
        %v387 = vld [vmem:[%s304 + $0x18] sm:$0xff]
        %v388 = vld [vmem:[%s313] sm:$0xf]
        %v389 = vld [vmem:[%s373] sm:$0xf]
        %v390 = vld [vmem:[%s373 + $0x4] sm:$0xf]
        %v391 = vld [vmem:[%s373 + $0x8] sm:$0xf]
        %v392 = vld [vmem:[%s373 + $0xc] sm:$0xf]
        %v393 = vld [vmem:[%s322] sm:$0xff]
        %v394 = vld [vmem:[%s322 + $0x8] sm:$0xff]
        %v395 = vld [vmem:[%s322 + $0x10] sm:$0x1f]
        %v396 = vlaneseq
        %v397 = vshrl.u32 %v396, 7
        %v398 = vlaneseq
        %v399 = vand.u32 %v398, 127
        %vm400 = vcmp.gt.f32.partialorder %v384, 0.0
        %vm401 = vcmp.gt.f32.partialorder %v385, 0.0
        %vm402 = vcmp.gt.f32.partialorder %v386, 0.0
        %vm403 = vcmp.gt.f32.partialorder %v387, 0.0
        %vm404 = vcmp.eq.s32.totalorder %v397, %v399
        %v405 = vsel %vm404, 1, 0
        %vm406 = vcmp.eq.s32.totalorder %v405, 1
        %vm407 = vmor %vm400, %vm406
        %vm408 = vmor %vm401, %vm406
        %vm409 = vmor %vm402, %vm406
        %vm410 = vmor %vm403, %vm406
        %v411 = vpack.c.bf16 %v381, %v380
        %v412 = vpack.c.bf16 %v383, %v382
        %vm413 = vcmask 64512
        %v415 = vsel %vm413, %v411, 0
        %v418 = vsel %vm413, %v412, 0
        %vm420 = vcmask 1043456
        %v422 = vsel %vm420, %v388, 0
        %424 = vmatprep.subr.bf16.mxu0 0
        %425 = vmatpush1.bf16.msra.mxu0 %v422
        %426 = vmatprep.subr.bf16.mxu0 0
        %427 = vmatpush1.bf16.msra.mxu0 0
        %428 = vmatprep.subr.bf16.mxu0 0
        %429 = vmatpush1.bf16.msra.mxu0 0
        %430 = vmatprep.subr.bf16.mxu0 0
        %431 = vmatpush1.bf16.msra.mxu0 0
        %432 = vmatprep.subr.bf16.mxu0 0
        %433 = vmatpush1.bf16.msra.mxu0 0
        %434 = vmatprep.subr.bf16.mxu0 0
        %435 = vmatpush1.bf16.msra.mxu0 0
        %436 = vmatprep.subr.bf16.mxu0 0
        %437 = vmatpush1.bf16.msra.mxu0 0
        %438 = vmatprep.subr.bf16.mxu0 0
        %439 = vmatpush1.bf16.msra.mxu0 0
        %440 = vmatprep.subr.bf16.mxu0 0
        %441 = vmatpush1.bf16.msra.mxu0 0
        %442 = vmatprep.subr.bf16.mxu0 0
        %443 = vmatpush1.bf16.msra.mxu0 0
        %444 = vmatprep.subr.bf16.mxu0 0
        %445 = vmatpush1.bf16.msra.mxu0 0
        %446 = vmatprep.subr.bf16.mxu0 0
        %447 = vmatpush1.bf16.msra.mxu0 0
        %448 = vmatprep.subr.bf16.mxu0 0
        %449 = vmatpush1.bf16.msra.mxu0 0
        %450 = vmatprep.subr.bf16.mxu0 0
        %451 = vmatpush1.bf16.msra.mxu0 0
        %452 = vmatprep.subr.bf16.mxu0 0
        %453 = vmatpush1.bf16.msra.mxu0 0
        %454 = vmatprep.subr.bf16.mxu0 0
        %455 = vmatpush1.bf16.msra.mxu0 0
        %456 = vmatprep.mubr.bf16.mxu0 0
        %457 = vmatmul.mubr.bf16.gmra.mrb[0].mxu0 %v415
        %v458 = vpop.f32.mrb[0].mxu0
        %v459 = vadd.f32 0.0, %v458
        %v460 = vpop.f32.mrb[0].mxu0
        %v461 = vpop.f32.mrb[0].mxu0
        %v462 = vadd.f32 0.0, %v461
        %v463 = vpop.f32.mrb[0].mxu0
        %464 = vmatprep.mubr.bf16.mxu0 0
        %465 = vmatmul.mubr.bf16.gmra.mrb[0].mxu0 %v418
        %v466 = vpop.f32.mrb[0].mxu0
        %v467 = vadd.f32 0.0, %v466
        %v468 = vpop.f32.mrb[0].mxu0
        %v469 = vpop.f32.mrb[0].mxu0
        %v470 = vadd.f32 0.0, %v469
        %v471 = vpop.f32.mrb[0].mxu0
        %472 = vdwg.mxu0
        %v473 = vlaneseq
        %v474 = vshrl.u32 %v473, 7
        %v475 = vsub.s32 3, %v474
        %v476 = vrot.slane %v393, %v475
        %v477 = vmul.f32 %v459, %v476
        %v478 = vmul.f32 %v462, %v476
        %v479 = vmul.f32 %v467, %v476
        %v480 = vmul.f32 %v470, %v476
        %vm481 = vcmask 130048
        %v482 = vsel %vm481, %v477, 0.0
        %483 = vadd.xlane.f32.xlu0 %v482
        %v484 = vpop.xlane.xlu0 %483
        %v485 = vsel %vm481, %v478, 0.0
        %486 = vadd.xlane.f32.xlu0 %v485
        %v487 = vpop.xlane.xlu0 %486
        %v488 = vsel %vm481, %v479, 0.0
        %489 = vadd.xlane.f32.xlu0 %v488
        %v490 = vpop.xlane.xlu0 %489
        %v491 = vsel %vm481, %v480, 0.0
        %492 = vadd.xlane.f32.xlu0 %v491
        %v493 = vpop.xlane.xlu0 %492
        %v494 = vlaneseq
        %v495 = vshrl.u32 %v494, 7
        %v496 = vsub.s32 0, %v495
        %v497 = vrot.slane %v393, %v496
        %v498 = vmul.f32 %v459, %v497
        %v499 = vmul.f32 %v462, %v497
        %v500 = vmul.f32 %v467, %v497
        %v501 = vmul.f32 %v470, %v497
        %v502 = vsel %vm481, %v498, 0.0
        %503 = vadd.xlane.f32.xlu0 %v502
        %v504 = vpop.xlane.xlu0 %503
        %v505 = vsel %vm481, %v499, 0.0
        %506 = vadd.xlane.f32.xlu0 %v505
        %v507 = vpop.xlane.xlu0 %506
        %v508 = vsel %vm481, %v500, 0.0
        %509 = vadd.xlane.f32.xlu0 %v508
        %v510 = vpop.xlane.xlu0 %509
        %v511 = vsel %vm481, %v501, 0.0
        %512 = vadd.xlane.f32.xlu0 %v511
        %v513 = vpop.xlane.xlu0 %512
        %v518 = vlaneseq
        %v519 = vshrl.u32 %v518, 7
        %v520 = vsub.s32 %v399, %v519
        %v521 = vrot.slane %v504, %v520
        %v522 = vlaneseq
        %v523 = vshrl.u32 %v522, 7
        %v524 = vsub.s32 %v399, %v523
        %v525 = vrot.slane %v507, %v524
        %v526 = vlaneseq
        %v527 = vshrl.u32 %v526, 7
        %v528 = vsub.s32 %v399, %v527
        %v529 = vrot.slane %v510, %v528
        %v530 = vlaneseq
        %v531 = vshrl.u32 %v530, 7
        %v532 = vsub.s32 %v399, %v531
        %v533 = vrot.slane %v513, %v532
        %vm534 = vcmask 1041409
        %vm535 = vcmask 1042434
        %v536 = vsel %vm535, %v521, %v521
        %vm537 = vcmask 1043459
        %v538 = vsel %vm537, %v521, %v536
        %vm539 = vcmask 1044484
        %v540 = vsel %vm539, %v521, %v538
        %vm541 = vcmask 1045509
        %v542 = vsel %vm541, %v521, %v540
        %vm543 = vcmask 1046534
        %v544 = vsel %vm543, %v521, %v542
        %vm545 = vcmask 1047559
        %v546 = vsel %vm545, %v521, %v544
        %v547 = vsel %vm535, %v525, %v525
        %v548 = vsel %vm537, %v525, %v547
        %v549 = vsel %vm539, %v525, %v548
        %v550 = vsel %vm541, %v525, %v549
        %v551 = vsel %vm543, %v525, %v550
        %v552 = vsel %vm545, %v525, %v551
        %v553 = vsel %vm535, %v529, %v529
        %v554 = vsel %vm537, %v529, %v553
        %v555 = vsel %vm539, %v529, %v554
        %v556 = vsel %vm541, %v529, %v555
        %v557 = vsel %vm543, %v529, %v556
        %v558 = vsel %vm545, %v529, %v557
        %v559 = vsel %vm535, %v533, %v533
        %v560 = vsel %vm537, %v533, %v559
        %v561 = vsel %vm539, %v533, %v560
        %v562 = vsel %vm541, %v533, %v561
        %v563 = vsel %vm543, %v533, %v562
        %v564 = vsel %vm545, %v533, %v563
        %v569 = vadd.f32 %v484, %v546
        %v570 = vadd.f32 %v487, %v552
        %v571 = vadd.f32 %v490, %v558
        %v572 = vadd.f32 %v493, %v564
        %vm573 = vcmp.gt.f32.partialorder %v569, 0.0
        %vm574 = vcmp.gt.f32.partialorder %v570, 0.0
        %vm575 = vcmp.gt.f32.partialorder %v571, 0.0
        %vm576 = vcmp.gt.f32.partialorder %v572, 0.0
        %v577 = vmul.f32 %v569, 0.2
        %v578 = vmul.f32 %v570, 0.2
        %v579 = vmul.f32 %v571, 0.2
        %v580 = vmul.f32 %v572, 0.2
        %v581 = vsel %vm573, %v569, %v577
        %v582 = vsel %vm574, %v570, %v578
        %v583 = vsel %vm575, %v571, %v579
        %v584 = vsel %vm576, %v572, %v580
        %v585 = vsel %vm407, %v581, -1e+30
        %v586 = vsel %vm408, %v582, -1e+30
        %v587 = vsel %vm409, %v583, -1e+30
        %v588 = vsel %vm410, %v584, -1e+30
        %v589 = vsel %vm413, %v585, -inf
        %590 = vmax.xlane.f32.xlu0 %v589
        %v591 = vpop.xlane.xlu0 %590
        %v592 = vsel %vm413, %v586, -inf
        %593 = vmax.xlane.f32.xlu0 %v592
        %v594 = vpop.xlane.xlu0 %593
        %v595 = vsel %vm413, %v587, -inf
        %596 = vmax.xlane.f32.xlu0 %v595
        %v597 = vpop.xlane.xlu0 %596
        %v598 = vsel %vm413, %v588, -inf
        %599 = vmax.xlane.f32.xlu0 %v598
        %v600 = vpop.xlane.xlu0 %599
        %v601 = vsub.f32 %v585, %v591
        %v602 = vsub.f32 %v586, %v594
        %v603 = vsub.f32 %v587, %v597
        %v604 = vsub.f32 %v588, %v600
        %v605 = vmul.f32 %v601, 1.442695
        %v606 = vpow.pop %v605
        %v607 = vmul.f32 %v602, 1.442695
        %v608 = vpow.pop %v607
        %v609 = vmul.f32 %v603, 1.442695
        %v610 = vpow.pop %v609
        %v611 = vmul.f32 %v604, 1.442695
        %v612 = vpow.pop %v611
        %v613 = vsel %vm413, %v606, 0.0
        %614 = vadd.xlane.f32.xlu0 %v613
        %v615 = vpop.xlane.xlu0 %614
        %v616 = vsel %vm413, %v608, 0.0
        %617 = vadd.xlane.f32.xlu0 %v616
        %v618 = vpop.xlane.xlu0 %617
        %v619 = vsel %vm413, %v610, 0.0
        %620 = vadd.xlane.f32.xlu0 %v619
        %v621 = vpop.xlane.xlu0 %620
        %v622 = vsel %vm413, %v612, 0.0
        %623 = vadd.xlane.f32.xlu0 %v622
        %v624 = vpop.xlane.xlu0 %623
        %v625 = vlaneseq
        %v626 = vshrl.u32 %v625, 7
        %v627 = vsub.s32 0, %v626
        %v628 = vrot.slane %v606, %v627
        %630 = vbcast.lane.b32.xlu0 %v628, 256
        %v631 = vpop.permute.xlu0 %630
        %v632 = vlaneseq
        %v633 = vshrl.u32 %v632, 7
        %v634 = vsub.s32 1, %v633
        %v635 = vrot.slane %v606, %v634
        %637 = vbcast.lane.b32.xlu0 %v635, 256
        %v638 = vpop.permute.xlu0 %637
        %v639 = vlaneseq
        %v640 = vshrl.u32 %v639, 7
        %v641 = vsub.s32 2, %v640
        %v642 = vrot.slane %v606, %v641
        %644 = vbcast.lane.b32.xlu0 %v642, 256
        %v645 = vpop.permute.xlu0 %644
        %v646 = vlaneseq
        %v647 = vshrl.u32 %v646, 7
        %v648 = vsub.s32 3, %v647
        %v649 = vrot.slane %v606, %v648
        %651 = vbcast.lane.b32.xlu0 %v649, 256
        %v652 = vpop.permute.xlu0 %651
        %v653 = vlaneseq
        %v654 = vshrl.u32 %v653, 7
        %v655 = vsub.s32 4, %v654
        %v656 = vrot.slane %v606, %v655
        %658 = vbcast.lane.b32.xlu0 %v656, 256
        %v659 = vpop.permute.xlu0 %658
        %v660 = vlaneseq
        %v661 = vshrl.u32 %v660, 7
        %v662 = vsub.s32 5, %v661
        %v663 = vrot.slane %v606, %v662
        %665 = vbcast.lane.b32.xlu0 %v663, 256
        %v666 = vpop.permute.xlu0 %665
        %v667 = vlaneseq
        %v668 = vshrl.u32 %v667, 7
        %v669 = vsub.s32 6, %v668
        %v670 = vrot.slane %v606, %v669
        %672 = vbcast.lane.b32.xlu0 %v670, 256
        %v673 = vpop.permute.xlu0 %672
        %v674 = vlaneseq
        %v675 = vshrl.u32 %v674, 7
        %v676 = vsub.s32 7, %v675
        %v677 = vrot.slane %v606, %v676
        %679 = vbcast.lane.b32.xlu0 %v677, 256
        %v680 = vpop.permute.xlu0 %679
        %v681 = vlaneseq
        %v682 = vshrl.u32 %v681, 7
        %v683 = vsub.s32 0, %v682
        %v684 = vrot.slane %v608, %v683
        %686 = vbcast.lane.b32.xlu0 %v684, 256
        %v687 = vpop.permute.xlu0 %686
        %v688 = vlaneseq
        %v689 = vshrl.u32 %v688, 7
        %v690 = vsub.s32 1, %v689
        %v691 = vrot.slane %v608, %v690
        %693 = vbcast.lane.b32.xlu0 %v691, 256
        %v694 = vpop.permute.xlu0 %693
        %v695 = vlaneseq
        %v696 = vshrl.u32 %v695, 7
        %v697 = vsub.s32 2, %v696
        %v698 = vrot.slane %v608, %v697
        %700 = vbcast.lane.b32.xlu0 %v698, 256
        %v701 = vpop.permute.xlu0 %700
        %v702 = vlaneseq
        %v703 = vshrl.u32 %v702, 7
        %v704 = vsub.s32 3, %v703
        %v705 = vrot.slane %v608, %v704
        %707 = vbcast.lane.b32.xlu0 %v705, 256
        %v708 = vpop.permute.xlu0 %707
        %v709 = vlaneseq
        %v710 = vshrl.u32 %v709, 7
        %v711 = vsub.s32 4, %v710
        %v712 = vrot.slane %v608, %v711
        %714 = vbcast.lane.b32.xlu0 %v712, 256
        %v715 = vpop.permute.xlu0 %714
        %v716 = vlaneseq
        %v717 = vshrl.u32 %v716, 7
        %v718 = vsub.s32 5, %v717
        %v719 = vrot.slane %v608, %v718
        %721 = vbcast.lane.b32.xlu0 %v719, 256
        %v722 = vpop.permute.xlu0 %721
        %v723 = vlaneseq
        %v724 = vshrl.u32 %v723, 7
        %v725 = vsub.s32 6, %v724
        %v726 = vrot.slane %v608, %v725
        %728 = vbcast.lane.b32.xlu0 %v726, 256
        %v729 = vpop.permute.xlu0 %728
        %v730 = vlaneseq
        %v731 = vshrl.u32 %v730, 7
        %v732 = vsub.s32 7, %v731
        %v733 = vrot.slane %v608, %v732
        %735 = vbcast.lane.b32.xlu0 %v733, 256
        %v736 = vpop.permute.xlu0 %735
        %v737 = vlaneseq
        %v738 = vshrl.u32 %v737, 7
        %v739 = vsub.s32 0, %v738
        %v740 = vrot.slane %v610, %v739
        %742 = vbcast.lane.b32.xlu0 %v740, 256
        %v743 = vpop.permute.xlu0 %742
        %v744 = vlaneseq
        %v745 = vshrl.u32 %v744, 7
        %v746 = vsub.s32 1, %v745
        %v747 = vrot.slane %v610, %v746
        %749 = vbcast.lane.b32.xlu0 %v747, 256
        %v750 = vpop.permute.xlu0 %749
        %v751 = vlaneseq
        %v752 = vshrl.u32 %v751, 7
        %v753 = vsub.s32 2, %v752
        %v754 = vrot.slane %v610, %v753
        %756 = vbcast.lane.b32.xlu0 %v754, 256
        %v757 = vpop.permute.xlu0 %756
        %v758 = vlaneseq
        %v759 = vshrl.u32 %v758, 7
        %v760 = vsub.s32 3, %v759
        %v761 = vrot.slane %v610, %v760
        %763 = vbcast.lane.b32.xlu0 %v761, 256
        %v764 = vpop.permute.xlu0 %763
        %v765 = vlaneseq
        %v766 = vshrl.u32 %v765, 7
        %v767 = vsub.s32 4, %v766
        %v768 = vrot.slane %v610, %v767
        %770 = vbcast.lane.b32.xlu0 %v768, 256
        %v771 = vpop.permute.xlu0 %770
        %v772 = vlaneseq
        %v773 = vshrl.u32 %v772, 7
        %v774 = vsub.s32 5, %v773
        %v775 = vrot.slane %v610, %v774
        %777 = vbcast.lane.b32.xlu0 %v775, 256
        %v778 = vpop.permute.xlu0 %777
        %v779 = vlaneseq
        %v780 = vshrl.u32 %v779, 7
        %v781 = vsub.s32 6, %v780
        %v782 = vrot.slane %v610, %v781
        %784 = vbcast.lane.b32.xlu0 %v782, 256
        %v785 = vpop.permute.xlu0 %784
        %v786 = vlaneseq
        %v787 = vshrl.u32 %v786, 7
        %v788 = vsub.s32 7, %v787
        %v789 = vrot.slane %v610, %v788
        %791 = vbcast.lane.b32.xlu0 %v789, 256
        %v792 = vpop.permute.xlu0 %791
        %v793 = vlaneseq
        %v794 = vshrl.u32 %v793, 7
        %v795 = vsub.s32 0, %v794
        %v796 = vrot.slane %v612, %v795
        %798 = vbcast.lane.b32.xlu0 %v796, 256
        %v799 = vpop.permute.xlu0 %798
        %v800 = vlaneseq
        %v801 = vshrl.u32 %v800, 7
        %v802 = vsub.s32 1, %v801
        %v803 = vrot.slane %v612, %v802
        %805 = vbcast.lane.b32.xlu0 %v803, 256
        %v806 = vpop.permute.xlu0 %805
        %v807 = vlaneseq
        %v808 = vshrl.u32 %v807, 7
        %v809 = vsub.s32 2, %v808
        %v810 = vrot.slane %v612, %v809
        %812 = vbcast.lane.b32.xlu0 %v810, 256
        %v813 = vpop.permute.xlu0 %812
        %v814 = vlaneseq
        %v815 = vshrl.u32 %v814, 7
        %v816 = vsub.s32 3, %v815
        %v817 = vrot.slane %v612, %v816
        %819 = vbcast.lane.b32.xlu0 %v817, 256
        %v820 = vpop.permute.xlu0 %819
        %v821 = vlaneseq
        %v822 = vshrl.u32 %v821, 7
        %v823 = vsub.s32 4, %v822
        %v824 = vrot.slane %v612, %v823
        %826 = vbcast.lane.b32.xlu0 %v824, 256
        %v827 = vpop.permute.xlu0 %826
        %v828 = vlaneseq
        %v829 = vshrl.u32 %v828, 7
        %v830 = vsub.s32 5, %v829
        %v831 = vrot.slane %v612, %v830
        %833 = vbcast.lane.b32.xlu0 %v831, 256
        %v834 = vpop.permute.xlu0 %833
        %v835 = vlaneseq
        %v836 = vshrl.u32 %v835, 7
        %v837 = vsub.s32 6, %v836
        %v838 = vrot.slane %v612, %v837
        %840 = vbcast.lane.b32.xlu0 %v838, 256
        %v841 = vpop.permute.xlu0 %840
        %v842 = vlaneseq
        %v843 = vshrl.u32 %v842, 7
        %v844 = vsub.s32 7, %v843
        %v845 = vrot.slane %v612, %v844
        %847 = vbcast.lane.b32.xlu0 %v845, 256
        %v848 = vpop.permute.xlu0 %847
        %v849 = vmul.f32 %v631, %v459
        %v850 = vmul.f32 %v638, %v459
        %v851 = vmul.f32 %v645, %v459
        %v852 = vmul.f32 %v652, %v459
        %v853 = vmul.f32 %v659, %v459
        %v854 = vmul.f32 %v666, %v459
        %v855 = vmul.f32 %v673, %v459
        %v856 = vmul.f32 %v680, %v459
        %v857 = vmul.f32 %v687, %v462
        %v858 = vmul.f32 %v694, %v462
        %v859 = vmul.f32 %v701, %v462
        %v860 = vmul.f32 %v708, %v462
        %v861 = vmul.f32 %v715, %v462
        %v862 = vmul.f32 %v722, %v462
        %v863 = vmul.f32 %v729, %v462
        %v864 = vmul.f32 %v736, %v462
        %v865 = vmul.f32 %v743, %v467
        %v866 = vmul.f32 %v750, %v467
        %v867 = vmul.f32 %v757, %v467
        %v868 = vmul.f32 %v764, %v467
        %v869 = vmul.f32 %v771, %v467
        %v870 = vmul.f32 %v778, %v467
        %v871 = vmul.f32 %v785, %v467
        %v872 = vmul.f32 %v792, %v467
        %v873 = vmul.f32 %v799, %v470
        %v874 = vmul.f32 %v806, %v470
        %v875 = vmul.f32 %v813, %v470
        %v876 = vmul.f32 %v820, %v470
        %v877 = vmul.f32 %v827, %v470
        %v878 = vmul.f32 %v834, %v470
        %v879 = vmul.f32 %v841, %v470
        %v880 = vmul.f32 %v848, %v470
        %v881 = vsel %vm481, %v849, 0.0
        %v882 = vrot.slane %v881, 4
        %v883 = vadd.f32 %v881, %v882
        %v884 = vrot.slane %v883, 2
        %v885 = vadd.f32 %v883, %v884
        %v886 = vrot.slane %v885, 1
        %v887 = vadd.f32 %v885, %v886
        %v888 = vsel %vm481, %v850, 0.0
        %v889 = vrot.slane %v888, 4
        %v890 = vadd.f32 %v888, %v889
        %v891 = vrot.slane %v890, 2
        %v892 = vadd.f32 %v890, %v891
        %v893 = vrot.slane %v892, 1
        %v894 = vadd.f32 %v892, %v893
        %v895 = vsel %vm481, %v851, 0.0
        %v896 = vrot.slane %v895, 4
        %v897 = vadd.f32 %v895, %v896
        %v898 = vrot.slane %v897, 2
        %v899 = vadd.f32 %v897, %v898
        %v900 = vrot.slane %v899, 1
        %v901 = vadd.f32 %v899, %v900
        %v902 = vsel %vm481, %v852, 0.0
        %v903 = vrot.slane %v902, 4
        %v904 = vadd.f32 %v902, %v903
        %v905 = vrot.slane %v904, 2
        %v906 = vadd.f32 %v904, %v905
        %v907 = vrot.slane %v906, 1
        %v908 = vadd.f32 %v906, %v907
        %v909 = vsel %vm481, %v853, 0.0
        %v910 = vrot.slane %v909, 4
        %v911 = vadd.f32 %v909, %v910
        %v912 = vrot.slane %v911, 2
        %v913 = vadd.f32 %v911, %v912
        %v914 = vrot.slane %v913, 1
        %v915 = vadd.f32 %v913, %v914
        %v916 = vsel %vm481, %v854, 0.0
        %v917 = vrot.slane %v916, 4
        %v918 = vadd.f32 %v916, %v917
        %v919 = vrot.slane %v918, 2
        %v920 = vadd.f32 %v918, %v919
        %v921 = vrot.slane %v920, 1
        %v922 = vadd.f32 %v920, %v921
        %v923 = vsel %vm481, %v855, 0.0
        %v924 = vrot.slane %v923, 4
        %v925 = vadd.f32 %v923, %v924
        %v926 = vrot.slane %v925, 2
        %v927 = vadd.f32 %v925, %v926
        %v928 = vrot.slane %v927, 1
        %v929 = vadd.f32 %v927, %v928
        %v930 = vsel %vm481, %v856, 0.0
        %v931 = vrot.slane %v930, 4
        %v932 = vadd.f32 %v930, %v931
        %v933 = vrot.slane %v932, 2
        %v934 = vadd.f32 %v932, %v933
        %v935 = vrot.slane %v934, 1
        %v936 = vadd.f32 %v934, %v935
        %v937 = vsel %vm481, %v857, 0.0
        %v938 = vrot.slane %v937, 4
        %v939 = vadd.f32 %v937, %v938
        %v940 = vrot.slane %v939, 2
        %v941 = vadd.f32 %v939, %v940
        %v942 = vrot.slane %v941, 1
        %v943 = vadd.f32 %v941, %v942
        %v944 = vsel %vm481, %v858, 0.0
        %v945 = vrot.slane %v944, 4
        %v946 = vadd.f32 %v944, %v945
        %v947 = vrot.slane %v946, 2
        %v948 = vadd.f32 %v946, %v947
        %v949 = vrot.slane %v948, 1
        %v950 = vadd.f32 %v948, %v949
        %v951 = vsel %vm481, %v859, 0.0
        %v952 = vrot.slane %v951, 4
        %v953 = vadd.f32 %v951, %v952
        %v954 = vrot.slane %v953, 2
        %v955 = vadd.f32 %v953, %v954
        %v956 = vrot.slane %v955, 1
        %v957 = vadd.f32 %v955, %v956
        %v958 = vsel %vm481, %v860, 0.0
        %v959 = vrot.slane %v958, 4
        %v960 = vadd.f32 %v958, %v959
        %v961 = vrot.slane %v960, 2
        %v962 = vadd.f32 %v960, %v961
        %v963 = vrot.slane %v962, 1
        %v964 = vadd.f32 %v962, %v963
        %v965 = vsel %vm481, %v861, 0.0
        %v966 = vrot.slane %v965, 4
        %v967 = vadd.f32 %v965, %v966
        %v968 = vrot.slane %v967, 2
        %v969 = vadd.f32 %v967, %v968
        %v970 = vrot.slane %v969, 1
        %v971 = vadd.f32 %v969, %v970
        %v972 = vsel %vm481, %v862, 0.0
        %v973 = vrot.slane %v972, 4
        %v974 = vadd.f32 %v972, %v973
        %v975 = vrot.slane %v974, 2
        %v976 = vadd.f32 %v974, %v975
        %v977 = vrot.slane %v976, 1
        %v978 = vadd.f32 %v976, %v977
        %v979 = vsel %vm481, %v863, 0.0
        %v980 = vrot.slane %v979, 4
        %v981 = vadd.f32 %v979, %v980
        %v982 = vrot.slane %v981, 2
        %v983 = vadd.f32 %v981, %v982
        %v984 = vrot.slane %v983, 1
        %v985 = vadd.f32 %v983, %v984
        %v986 = vsel %vm481, %v864, 0.0
        %v987 = vrot.slane %v986, 4
        %v988 = vadd.f32 %v986, %v987
        %v989 = vrot.slane %v988, 2
        %v990 = vadd.f32 %v988, %v989
        %v991 = vrot.slane %v990, 1
        %v992 = vadd.f32 %v990, %v991
        %v993 = vsel %vm481, %v865, 0.0
        %v994 = vrot.slane %v993, 4
        %v995 = vadd.f32 %v993, %v994
        %v996 = vrot.slane %v995, 2
        %v997 = vadd.f32 %v995, %v996
        %v998 = vrot.slane %v997, 1
        %v999 = vadd.f32 %v997, %v998
        %v1000 = vsel %vm481, %v866, 0.0
        %v1001 = vrot.slane %v1000, 4
        %v1002 = vadd.f32 %v1000, %v1001
        %v1003 = vrot.slane %v1002, 2
        %v1004 = vadd.f32 %v1002, %v1003
        %v1005 = vrot.slane %v1004, 1
        %v1006 = vadd.f32 %v1004, %v1005
        %v1007 = vsel %vm481, %v867, 0.0
        %v1008 = vrot.slane %v1007, 4
        %v1009 = vadd.f32 %v1007, %v1008
        %v1010 = vrot.slane %v1009, 2
        %v1011 = vadd.f32 %v1009, %v1010
        %v1012 = vrot.slane %v1011, 1
        %v1013 = vadd.f32 %v1011, %v1012
        %v1014 = vsel %vm481, %v868, 0.0
        %v1015 = vrot.slane %v1014, 4
        %v1016 = vadd.f32 %v1014, %v1015
        %v1017 = vrot.slane %v1016, 2
        %v1018 = vadd.f32 %v1016, %v1017
        %v1019 = vrot.slane %v1018, 1
        %v1020 = vadd.f32 %v1018, %v1019
        %v1021 = vsel %vm481, %v869, 0.0
        %v1022 = vrot.slane %v1021, 4
        %v1023 = vadd.f32 %v1021, %v1022
        %v1024 = vrot.slane %v1023, 2
        %v1025 = vadd.f32 %v1023, %v1024
        %v1026 = vrot.slane %v1025, 1
        %v1027 = vadd.f32 %v1025, %v1026
        %v1028 = vsel %vm481, %v870, 0.0
        %v1029 = vrot.slane %v1028, 4
        %v1030 = vadd.f32 %v1028, %v1029
        %v1031 = vrot.slane %v1030, 2
        %v1032 = vadd.f32 %v1030, %v1031
        %v1033 = vrot.slane %v1032, 1
        %v1034 = vadd.f32 %v1032, %v1033
        %v1035 = vsel %vm481, %v871, 0.0
        %v1036 = vrot.slane %v1035, 4
        %v1037 = vadd.f32 %v1035, %v1036
        %v1038 = vrot.slane %v1037, 2
        %v1039 = vadd.f32 %v1037, %v1038
        %v1040 = vrot.slane %v1039, 1
        %v1041 = vadd.f32 %v1039, %v1040
        %v1042 = vsel %vm481, %v872, 0.0
        %v1043 = vrot.slane %v1042, 4
        %v1044 = vadd.f32 %v1042, %v1043
        %v1045 = vrot.slane %v1044, 2
        %v1046 = vadd.f32 %v1044, %v1045
        %v1047 = vrot.slane %v1046, 1
        %v1048 = vadd.f32 %v1046, %v1047
        %v1049 = vsel %vm481, %v873, 0.0
        %v1050 = vrot.slane %v1049, 4
        %v1051 = vadd.f32 %v1049, %v1050
        %v1052 = vrot.slane %v1051, 2
        %v1053 = vadd.f32 %v1051, %v1052
        %v1054 = vrot.slane %v1053, 1
        %v1055 = vadd.f32 %v1053, %v1054
        %v1056 = vsel %vm481, %v874, 0.0
        %v1057 = vrot.slane %v1056, 4
        %v1058 = vadd.f32 %v1056, %v1057
        %v1059 = vrot.slane %v1058, 2
        %v1060 = vadd.f32 %v1058, %v1059
        %v1061 = vrot.slane %v1060, 1
        %v1062 = vadd.f32 %v1060, %v1061
        %v1063 = vsel %vm481, %v875, 0.0
        %v1064 = vrot.slane %v1063, 4
        %v1065 = vadd.f32 %v1063, %v1064
        %v1066 = vrot.slane %v1065, 2
        %v1067 = vadd.f32 %v1065, %v1066
        %v1068 = vrot.slane %v1067, 1
        %v1069 = vadd.f32 %v1067, %v1068
        %v1070 = vsel %vm481, %v876, 0.0
        %v1071 = vrot.slane %v1070, 4
        %v1072 = vadd.f32 %v1070, %v1071
        %v1073 = vrot.slane %v1072, 2
        %v1074 = vadd.f32 %v1072, %v1073
        %v1075 = vrot.slane %v1074, 1
        %v1076 = vadd.f32 %v1074, %v1075
        %v1077 = vsel %vm481, %v877, 0.0
        %v1078 = vrot.slane %v1077, 4
        %v1079 = vadd.f32 %v1077, %v1078
        %v1080 = vrot.slane %v1079, 2
        %v1081 = vadd.f32 %v1079, %v1080
        %v1082 = vrot.slane %v1081, 1
        %v1083 = vadd.f32 %v1081, %v1082
        %v1084 = vsel %vm481, %v878, 0.0
        %v1085 = vrot.slane %v1084, 4
        %v1086 = vadd.f32 %v1084, %v1085
        %v1087 = vrot.slane %v1086, 2
        %v1088 = vadd.f32 %v1086, %v1087
        %v1089 = vrot.slane %v1088, 1
        %v1090 = vadd.f32 %v1088, %v1089
        %v1091 = vsel %vm481, %v879, 0.0
        %v1092 = vrot.slane %v1091, 4
        %v1093 = vadd.f32 %v1091, %v1092
        %v1094 = vrot.slane %v1093, 2
        %v1095 = vadd.f32 %v1093, %v1094
        %v1096 = vrot.slane %v1095, 1
        %v1097 = vadd.f32 %v1095, %v1096
        %v1098 = vsel %vm481, %v880, 0.0
        %v1099 = vrot.slane %v1098, 4
        %v1100 = vadd.f32 %v1098, %v1099
        %v1101 = vrot.slane %v1100, 2
        %v1102 = vadd.f32 %v1100, %v1101
        %v1103 = vrot.slane %v1102, 1
        %v1104 = vadd.f32 %v1102, %v1103
        %v1105 = vrcp.pop %v615
        %v1106 = vrcp.pop %v618
        %v1107 = vrcp.pop %v621
        %v1108 = vrcp.pop %v624
        %v1113 = vrot.slane %v1105, 1
        %v1114 = vrot.slane %v1105, 2
        %v1115 = vrot.slane %v1105, 3
        %v1116 = vrot.slane %v1105, 4
        %v1117 = vrot.slane %v1105, 5
        %v1118 = vrot.slane %v1105, 6
        %v1119 = vrot.slane %v1105, 7
        %v1120 = vrot.slane %v1106, 1
        %v1121 = vrot.slane %v1106, 2
        %v1122 = vrot.slane %v1106, 3
        %v1123 = vrot.slane %v1106, 4
        %v1124 = vrot.slane %v1106, 5
        %v1125 = vrot.slane %v1106, 6
        %v1126 = vrot.slane %v1106, 7
        %v1127 = vrot.slane %v1107, 1
        %v1128 = vrot.slane %v1107, 2
        %v1129 = vrot.slane %v1107, 3
        %v1130 = vrot.slane %v1107, 4
        %v1131 = vrot.slane %v1107, 5
        %v1132 = vrot.slane %v1107, 6
        %v1133 = vrot.slane %v1107, 7
        %v1134 = vrot.slane %v1108, 1
        %v1135 = vrot.slane %v1108, 2
        %v1136 = vrot.slane %v1108, 3
        %v1137 = vrot.slane %v1108, 4
        %v1138 = vrot.slane %v1108, 5
        %v1139 = vrot.slane %v1108, 6
        %v1140 = vrot.slane %v1108, 7
        %v1173 = vmul.f32 %v887, %v1105
        %v1174 = vmul.f32 %v894, %v1113
        %v1175 = vmul.f32 %v901, %v1114
        %v1176 = vmul.f32 %v908, %v1115
        %v1177 = vmul.f32 %v915, %v1116
        %v1178 = vmul.f32 %v922, %v1117
        %v1179 = vmul.f32 %v929, %v1118
        %v1180 = vmul.f32 %v936, %v1119
        %v1181 = vmul.f32 %v943, %v1106
        %v1182 = vmul.f32 %v950, %v1120
        %v1183 = vmul.f32 %v957, %v1121
        %v1184 = vmul.f32 %v964, %v1122
        %v1185 = vmul.f32 %v971, %v1123
        %v1186 = vmul.f32 %v978, %v1124
        %v1187 = vmul.f32 %v985, %v1125
        %v1188 = vmul.f32 %v992, %v1126
        %v1189 = vmul.f32 %v999, %v1107
        %v1190 = vmul.f32 %v1006, %v1127
        %v1191 = vmul.f32 %v1013, %v1128
        %v1192 = vmul.f32 %v1020, %v1129
        %v1193 = vmul.f32 %v1027, %v1130
        %v1194 = vmul.f32 %v1034, %v1131
        %v1195 = vmul.f32 %v1041, %v1132
        %v1196 = vmul.f32 %v1048, %v1133
        %v1197 = vmul.f32 %v1055, %v1108
        %v1198 = vmul.f32 %v1062, %v1134
        %v1199 = vmul.f32 %v1069, %v1135
        %v1200 = vmul.f32 %v1076, %v1136
        %v1201 = vmul.f32 %v1083, %v1137
        %v1202 = vmul.f32 %v1090, %v1138
        %v1203 = vmul.f32 %v1097, %v1139
        %v1204 = vmul.f32 %v1104, %v1140
        %v1205 = vlaneseq
        %v1206 = vshrl.u32 %v1205, 7
        %v1207 = vsub.s32 6, %v1206
        %v1208 = vrot.slane %v393, %v1207
        %v1209 = vadd.f32 %v1173, %v1208
        %v1210 = vadd.f32 %v1174, %v1208
        %v1211 = vadd.f32 %v1175, %v1208
        %v1212 = vadd.f32 %v1176, %v1208
        %v1213 = vadd.f32 %v1177, %v1208
        %v1214 = vadd.f32 %v1178, %v1208
        %v1215 = vadd.f32 %v1179, %v1208
        %v1216 = vadd.f32 %v1180, %v1208
        %v1217 = vadd.f32 %v1181, %v1208
        %v1218 = vadd.f32 %v1182, %v1208
        %v1219 = vadd.f32 %v1183, %v1208
        %v1220 = vadd.f32 %v1184, %v1208
        %v1221 = vadd.f32 %v1185, %v1208
        %v1222 = vadd.f32 %v1186, %v1208
        %v1223 = vadd.f32 %v1187, %v1208
        %v1224 = vadd.f32 %v1188, %v1208
        %v1225 = vadd.f32 %v1189, %v1208
        %v1226 = vadd.f32 %v1190, %v1208
        %v1227 = vadd.f32 %v1191, %v1208
        %v1228 = vadd.f32 %v1192, %v1208
        %v1229 = vadd.f32 %v1193, %v1208
        %v1230 = vadd.f32 %v1194, %v1208
        %v1231 = vadd.f32 %v1195, %v1208
        %v1232 = vadd.f32 %v1196, %v1208
        %v1233 = vadd.f32 %v1197, %v1208
        %v1234 = vadd.f32 %v1198, %v1208
        %v1235 = vadd.f32 %v1199, %v1208
        %v1236 = vadd.f32 %v1200, %v1208
        %v1237 = vadd.f32 %v1201, %v1208
        %v1238 = vadd.f32 %v1202, %v1208
        %v1239 = vadd.f32 %v1203, %v1208
        %v1240 = vadd.f32 %v1204, %v1208
        %v1241 = vmax.f32 %v1209, 0.0
        %v1242 = vmax.f32 %v1210, 0.0
        %v1243 = vmax.f32 %v1211, 0.0
        %v1244 = vmax.f32 %v1212, 0.0
        %v1245 = vmax.f32 %v1213, 0.0
        %v1246 = vmax.f32 %v1214, 0.0
        %v1247 = vmax.f32 %v1215, 0.0
        %v1248 = vmax.f32 %v1216, 0.0
        %v1249 = vmax.f32 %v1217, 0.0
        %v1250 = vmax.f32 %v1218, 0.0
        %v1251 = vmax.f32 %v1219, 0.0
        %v1252 = vmax.f32 %v1220, 0.0
        %v1253 = vmax.f32 %v1221, 0.0
        %v1254 = vmax.f32 %v1222, 0.0
        %v1255 = vmax.f32 %v1223, 0.0
        %v1256 = vmax.f32 %v1224, 0.0
        %v1257 = vmax.f32 %v1225, 0.0
        %v1258 = vmax.f32 %v1226, 0.0
        %v1259 = vmax.f32 %v1227, 0.0
        %v1260 = vmax.f32 %v1228, 0.0
        %v1261 = vmax.f32 %v1229, 0.0
        %v1262 = vmax.f32 %v1230, 0.0
        %v1263 = vmax.f32 %v1231, 0.0
        %v1264 = vmax.f32 %v1232, 0.0
        %v1265 = vmax.f32 %v1233, 0.0
        %v1266 = vmax.f32 %v1234, 0.0
        %v1267 = vmax.f32 %v1235, 0.0
        %v1268 = vmax.f32 %v1236, 0.0
        %v1269 = vmax.f32 %v1237, 0.0
        %v1270 = vmax.f32 %v1238, 0.0
        %v1271 = vmax.f32 %v1239, 0.0
        %v1272 = vmax.f32 %v1240, 0.0
        %v1305 = vrot.slane %v1242, 7
        %v1306 = vsel %vm534, %v1305, %v1241
        %v1307 = vrot.slane %v1243, 6
        %v1308 = vsel %vm535, %v1307, %v1306
        %v1309 = vrot.slane %v1244, 5
        %v1310 = vsel %vm537, %v1309, %v1308
        %v1311 = vrot.slane %v1245, 4
        %v1312 = vsel %vm539, %v1311, %v1310
        %v1313 = vrot.slane %v1246, 3
        %v1314 = vsel %vm541, %v1313, %v1312
        %v1315 = vrot.slane %v1247, 2
        %v1316 = vsel %vm543, %v1315, %v1314
        %v1317 = vrot.slane %v1248, 1
        %v1318 = vsel %vm545, %v1317, %v1316
        %v1319 = vrot.slane %v1250, 7
        %v1320 = vsel %vm534, %v1319, %v1249
        %v1321 = vrot.slane %v1251, 6
        %v1322 = vsel %vm535, %v1321, %v1320
        %v1323 = vrot.slane %v1252, 5
        %v1324 = vsel %vm537, %v1323, %v1322
        %v1325 = vrot.slane %v1253, 4
        %v1326 = vsel %vm539, %v1325, %v1324
        %v1327 = vrot.slane %v1254, 3
        %v1328 = vsel %vm541, %v1327, %v1326
        %v1329 = vrot.slane %v1255, 2
        %v1330 = vsel %vm543, %v1329, %v1328
        %v1331 = vrot.slane %v1256, 1
        %v1332 = vsel %vm545, %v1331, %v1330
        %v1333 = vrot.slane %v1258, 7
        %v1334 = vsel %vm534, %v1333, %v1257
        %v1335 = vrot.slane %v1259, 6
        %v1336 = vsel %vm535, %v1335, %v1334
        %v1337 = vrot.slane %v1260, 5
        %v1338 = vsel %vm537, %v1337, %v1336
        %v1339 = vrot.slane %v1261, 4
        %v1340 = vsel %vm539, %v1339, %v1338
        %v1341 = vrot.slane %v1262, 3
        %v1342 = vsel %vm541, %v1341, %v1340
        %v1343 = vrot.slane %v1263, 2
        %v1344 = vsel %vm543, %v1343, %v1342
        %v1345 = vrot.slane %v1264, 1
        %v1346 = vsel %vm545, %v1345, %v1344
        %v1347 = vrot.slane %v1266, 7
        %v1348 = vsel %vm534, %v1347, %v1265
        %v1349 = vrot.slane %v1267, 6
        %v1350 = vsel %vm535, %v1349, %v1348
        %v1351 = vrot.slane %v1268, 5
        %v1352 = vsel %vm537, %v1351, %v1350
        %v1353 = vrot.slane %v1269, 4
        %v1354 = vsel %vm539, %v1353, %v1352
        %v1355 = vrot.slane %v1270, 3
        %v1356 = vsel %vm541, %v1355, %v1354
        %v1357 = vrot.slane %v1271, 2
        %v1358 = vsel %vm543, %v1357, %v1356
        %v1359 = vrot.slane %v1272, 1
        %v1360 = vsel %vm545, %v1359, %v1358
        %v1365 = vsel %vm481, %v1318, 0.0
        %v1366 = vsel %vm481, %v1332, 0.0
        %v1367 = vadd.f32 %v1365, %v1366
        %v1368 = vsel %vm481, %v1346, 0.0
        %v1369 = vadd.f32 %v1367, %v1368
        %v1370 = vsel %vm481, %v1360, 0.0
        %v1371 = vadd.f32 %v1369, %v1370
        %v1372 = vrot.slane %v1371, 4
        %v1373 = vadd.f32 %v1371, %v1372
        %v1374 = vrot.slane %v1373, 2
        %v1375 = vadd.f32 %v1373, %v1374
        %v1376 = vrot.slane %v1375, 1
        %v1377 = vadd.f32 %v1375, %v1376
        %v1378 = vrcp.pop 32.0
        %v1379 = vmul.f32 %v1377, %v1378
        %v1380 = vlaneseq
        %v1381 = vshrl.u32 %v1380, 7
        %v1382 = vsub.s32 0, %v1381
        %v1383 = vrot.slane %v1379, %v1382
        %v1384 = vsub.f32 %v1241, %v1383
        %v1385 = vsub.f32 %v1242, %v1383
        %v1386 = vsub.f32 %v1243, %v1383
        %v1387 = vsub.f32 %v1244, %v1383
        %v1388 = vsub.f32 %v1245, %v1383
        %v1389 = vsub.f32 %v1246, %v1383
        %v1390 = vsub.f32 %v1247, %v1383
        %v1391 = vsub.f32 %v1248, %v1383
        %v1392 = vsub.f32 %v1249, %v1383
        %v1393 = vsub.f32 %v1250, %v1383
        %v1394 = vsub.f32 %v1251, %v1383
        %v1395 = vsub.f32 %v1252, %v1383
        %v1396 = vsub.f32 %v1253, %v1383
        %v1397 = vsub.f32 %v1254, %v1383
        %v1398 = vsub.f32 %v1255, %v1383
        %v1399 = vsub.f32 %v1256, %v1383
        %v1400 = vsub.f32 %v1257, %v1383
        %v1401 = vsub.f32 %v1258, %v1383
        %v1402 = vsub.f32 %v1259, %v1383
        %v1403 = vsub.f32 %v1260, %v1383
        %v1404 = vsub.f32 %v1261, %v1383
        %v1405 = vsub.f32 %v1262, %v1383
        %v1406 = vsub.f32 %v1263, %v1383
        %v1407 = vsub.f32 %v1264, %v1383
        %v1408 = vsub.f32 %v1265, %v1383
        %v1409 = vsub.f32 %v1266, %v1383
        %v1410 = vsub.f32 %v1267, %v1383
        %v1411 = vsub.f32 %v1268, %v1383
        %v1412 = vsub.f32 %v1269, %v1383
        %v1413 = vsub.f32 %v1270, %v1383
        %v1414 = vsub.f32 %v1271, %v1383
        %v1415 = vsub.f32 %v1272, %v1383
        %v1416 = vmul.f32 %v1384, %v1384
        %v1417 = vmul.f32 %v1385, %v1385
        %v1418 = vmul.f32 %v1386, %v1386
        %v1419 = vmul.f32 %v1387, %v1387
        %v1420 = vmul.f32 %v1388, %v1388
        %v1421 = vmul.f32 %v1389, %v1389
        %v1422 = vmul.f32 %v1390, %v1390
        %v1423 = vmul.f32 %v1391, %v1391
        %v1424 = vmul.f32 %v1392, %v1392
        %v1425 = vmul.f32 %v1393, %v1393
        %v1426 = vmul.f32 %v1394, %v1394
        %v1427 = vmul.f32 %v1395, %v1395
        %v1428 = vmul.f32 %v1396, %v1396
        %v1429 = vmul.f32 %v1397, %v1397
        %v1430 = vmul.f32 %v1398, %v1398
        %v1431 = vmul.f32 %v1399, %v1399
        %v1432 = vmul.f32 %v1400, %v1400
        %v1433 = vmul.f32 %v1401, %v1401
        %v1434 = vmul.f32 %v1402, %v1402
        %v1435 = vmul.f32 %v1403, %v1403
        %v1436 = vmul.f32 %v1404, %v1404
        %v1437 = vmul.f32 %v1405, %v1405
        %v1438 = vmul.f32 %v1406, %v1406
        %v1439 = vmul.f32 %v1407, %v1407
        %v1440 = vmul.f32 %v1408, %v1408
        %v1441 = vmul.f32 %v1409, %v1409
        %v1442 = vmul.f32 %v1410, %v1410
        %v1443 = vmul.f32 %v1411, %v1411
        %v1444 = vmul.f32 %v1412, %v1412
        %v1445 = vmul.f32 %v1413, %v1413
        %v1446 = vmul.f32 %v1414, %v1414
        %v1447 = vmul.f32 %v1415, %v1415
        %v1480 = vrot.slane %v1417, 7
        %v1481 = vsel %vm534, %v1480, %v1416
        %v1482 = vrot.slane %v1418, 6
        %v1483 = vsel %vm535, %v1482, %v1481
        %v1484 = vrot.slane %v1419, 5
        %v1485 = vsel %vm537, %v1484, %v1483
        %v1486 = vrot.slane %v1420, 4
        %v1487 = vsel %vm539, %v1486, %v1485
        %v1488 = vrot.slane %v1421, 3
        %v1489 = vsel %vm541, %v1488, %v1487
        %v1490 = vrot.slane %v1422, 2
        %v1491 = vsel %vm543, %v1490, %v1489
        %v1492 = vrot.slane %v1423, 1
        %v1493 = vsel %vm545, %v1492, %v1491
        %v1494 = vrot.slane %v1425, 7
        %v1495 = vsel %vm534, %v1494, %v1424
        %v1496 = vrot.slane %v1426, 6
        %v1497 = vsel %vm535, %v1496, %v1495
        %v1498 = vrot.slane %v1427, 5
        %v1499 = vsel %vm537, %v1498, %v1497
        %v1500 = vrot.slane %v1428, 4
        %v1501 = vsel %vm539, %v1500, %v1499
        %v1502 = vrot.slane %v1429, 3
        %v1503 = vsel %vm541, %v1502, %v1501
        %v1504 = vrot.slane %v1430, 2
        %v1505 = vsel %vm543, %v1504, %v1503
        %v1506 = vrot.slane %v1431, 1
        %v1507 = vsel %vm545, %v1506, %v1505
        %v1508 = vrot.slane %v1433, 7
        %v1509 = vsel %vm534, %v1508, %v1432
        %v1510 = vrot.slane %v1434, 6
        %v1511 = vsel %vm535, %v1510, %v1509
        %v1512 = vrot.slane %v1435, 5
        %v1513 = vsel %vm537, %v1512, %v1511
        %v1514 = vrot.slane %v1436, 4
        %v1515 = vsel %vm539, %v1514, %v1513
        %v1516 = vrot.slane %v1437, 3
        %v1517 = vsel %vm541, %v1516, %v1515
        %v1518 = vrot.slane %v1438, 2
        %v1519 = vsel %vm543, %v1518, %v1517
        %v1520 = vrot.slane %v1439, 1
        %v1521 = vsel %vm545, %v1520, %v1519
        %v1522 = vrot.slane %v1441, 7
        %v1523 = vsel %vm534, %v1522, %v1440
        %v1524 = vrot.slane %v1442, 6
        %v1525 = vsel %vm535, %v1524, %v1523
        %v1526 = vrot.slane %v1443, 5
        %v1527 = vsel %vm537, %v1526, %v1525
        %v1528 = vrot.slane %v1444, 4
        %v1529 = vsel %vm539, %v1528, %v1527
        %v1530 = vrot.slane %v1445, 3
        %v1531 = vsel %vm541, %v1530, %v1529
        %v1532 = vrot.slane %v1446, 2
        %v1533 = vsel %vm543, %v1532, %v1531
        %v1534 = vrot.slane %v1447, 1
        %v1535 = vsel %vm545, %v1534, %v1533
        %v1540 = vsel %vm481, %v1493, 0.0
        %v1541 = vsel %vm481, %v1507, 0.0
        %v1542 = vadd.f32 %v1540, %v1541
        %v1543 = vsel %vm481, %v1521, 0.0
        %v1544 = vadd.f32 %v1542, %v1543
        %v1545 = vsel %vm481, %v1535, 0.0
        %v1546 = vadd.f32 %v1544, %v1545
        %v1547 = vrot.slane %v1546, 4
        %v1548 = vadd.f32 %v1546, %v1547
        %v1549 = vrot.slane %v1548, 2
        %v1550 = vadd.f32 %v1548, %v1549
        %v1551 = vrot.slane %v1550, 1
        %v1552 = vadd.f32 %v1550, %v1551
        %v1553 = vmul.f32 %v1552, %v1378
        %v1554 = vlaneseq
        %v1555 = vshrl.u32 %v1554, 7
        %v1556 = vsub.s32 1, %v1555
        %v1557 = vrot.slane %v394, %v1556
        %v1590 = vrot.slane %v1385, 7
        %v1591 = vsel %vm534, %v1590, %v1384
        %v1592 = vrot.slane %v1386, 6
        %v1593 = vsel %vm535, %v1592, %v1591
        %v1594 = vrot.slane %v1387, 5
        %v1595 = vsel %vm537, %v1594, %v1593
        %v1596 = vrot.slane %v1388, 4
        %v1597 = vsel %vm539, %v1596, %v1595
        %v1598 = vrot.slane %v1389, 3
        %v1599 = vsel %vm541, %v1598, %v1597
        %v1600 = vrot.slane %v1390, 2
        %v1601 = vsel %vm543, %v1600, %v1599
        %v1602 = vrot.slane %v1391, 1
        %v1603 = vsel %vm545, %v1602, %v1601
        %v1604 = vrot.slane %v1393, 7
        %v1605 = vsel %vm534, %v1604, %v1392
        %v1606 = vrot.slane %v1394, 6
        %v1607 = vsel %vm535, %v1606, %v1605
        %v1608 = vrot.slane %v1395, 5
        %v1609 = vsel %vm537, %v1608, %v1607
        %v1610 = vrot.slane %v1396, 4
        %v1611 = vsel %vm539, %v1610, %v1609
        %v1612 = vrot.slane %v1397, 3
        %v1613 = vsel %vm541, %v1612, %v1611
        %v1614 = vrot.slane %v1398, 2
        %v1615 = vsel %vm543, %v1614, %v1613
        %v1616 = vrot.slane %v1399, 1
        %v1617 = vsel %vm545, %v1616, %v1615
        %v1618 = vrot.slane %v1401, 7
        %v1619 = vsel %vm534, %v1618, %v1400
        %v1620 = vrot.slane %v1402, 6
        %v1621 = vsel %vm535, %v1620, %v1619
        %v1622 = vrot.slane %v1403, 5
        %v1623 = vsel %vm537, %v1622, %v1621
        %v1624 = vrot.slane %v1404, 4
        %v1625 = vsel %vm539, %v1624, %v1623
        %v1626 = vrot.slane %v1405, 3
        %v1627 = vsel %vm541, %v1626, %v1625
        %v1628 = vrot.slane %v1406, 2
        %v1629 = vsel %vm543, %v1628, %v1627
        %v1630 = vrot.slane %v1407, 1
        %v1631 = vsel %vm545, %v1630, %v1629
        %v1632 = vrot.slane %v1409, 7
        %v1633 = vsel %vm534, %v1632, %v1408
        %v1634 = vrot.slane %v1410, 6
        %v1635 = vsel %vm535, %v1634, %v1633
        %v1636 = vrot.slane %v1411, 5
        %v1637 = vsel %vm537, %v1636, %v1635
        %v1638 = vrot.slane %v1412, 4
        %v1639 = vsel %vm539, %v1638, %v1637
        %v1640 = vrot.slane %v1413, 3
        %v1641 = vsel %vm541, %v1640, %v1639
        %v1642 = vrot.slane %v1414, 2
        %v1643 = vsel %vm543, %v1642, %v1641
        %v1644 = vrot.slane %v1415, 1
        %v1645 = vsel %vm545, %v1644, %v1643
        %v1650 = vmul.f32 %v1557, %v1603
        %v1651 = vmul.f32 %v1557, %v1617
        %v1652 = vmul.f32 %v1557, %v1631
        %v1653 = vmul.f32 %v1557, %v1645
        %v1654 = vadd.f32 %v1553, 1e-05
        %v1655 = vrsqrt.pop %v1654
        %v1656 = vlaneseq
        %v1657 = vshrl.u32 %v1656, 7
        %v1658 = vsub.s32 0, %v1657
        %v1659 = vrot.slane %v1655, %v1658
        %v1660 = vmul.f32 %v1650, %v1659
        %v1661 = vmul.f32 %v1651, %v1659
        %v1662 = vmul.f32 %v1652, %v1659
        %v1663 = vmul.f32 %v1653, %v1659
        %v1664 = vlaneseq
        %v1665 = vshrl.u32 %v1664, 7
        %v1666 = vsub.s32 4, %v1665
        %v1667 = vrot.slane %v394, %v1666
        %v1668 = vadd.f32 %v1660, %v1667
        %v1669 = vadd.f32 %v1661, %v1667
        %v1670 = vadd.f32 %v1662, %v1667
        %v1671 = vadd.f32 %v1663, %v1667
        %v1672 = vpack.c.bf16 %v1669, %v1668
        %v1673 = vpack.c.bf16 %v1671, %v1670
        %v1676 = vunpack.c.l.b16 %v389
        %v1677 = vunpack.c.l.b16 %v390
        %v1678 = vpack.c.b16 %v1677, %v1676
        %v1681 = vsel %vm481, %v1672, 0
        %v1684 = vsel %vm481, %v1673, 0
        %1686 = vmatprep.subr.bf16.mxu0 0
        %1687 = vmatpush1.bf16.msra.mxu0 %v1678
        %1688 = vmatprep.subr.bf16.mxu0 0
        %1689 = vmatpush1.bf16.msra.mxu0 0
        %1690 = vmatprep.subr.bf16.mxu0 0
        %1691 = vmatpush1.bf16.msra.mxu0 0
        %1692 = vmatprep.subr.bf16.mxu0 0
        %1693 = vmatpush1.bf16.msra.mxu0 0
        %1694 = vmatprep.subr.bf16.mxu0 0
        %1695 = vmatpush1.bf16.msra.mxu0 0
        %1696 = vmatprep.subr.bf16.mxu0 0
        %1697 = vmatpush1.bf16.msra.mxu0 0
        %1698 = vmatprep.subr.bf16.mxu0 0
        %1699 = vmatpush1.bf16.msra.mxu0 0
        %1700 = vmatprep.subr.bf16.mxu0 0
        %1701 = vmatpush1.bf16.msra.mxu0 0
        %1702 = vmatprep.subr.bf16.mxu0 0
        %1703 = vmatpush1.bf16.msra.mxu0 0
        %1704 = vmatprep.subr.bf16.mxu0 0
        %1705 = vmatpush1.bf16.msra.mxu0 0
        %1706 = vmatprep.subr.bf16.mxu0 0
        %1707 = vmatpush1.bf16.msra.mxu0 0
        %1708 = vmatprep.subr.bf16.mxu0 0
        %1709 = vmatpush1.bf16.msra.mxu0 0
        %1710 = vmatprep.subr.bf16.mxu0 0
        %1711 = vmatpush1.bf16.msra.mxu0 0
        %1712 = vmatprep.subr.bf16.mxu0 0
        %1713 = vmatpush1.bf16.msra.mxu0 0
        %1714 = vmatprep.subr.bf16.mxu0 0
        %1715 = vmatpush1.bf16.msra.mxu0 0
        %1716 = vmatprep.subr.bf16.mxu0 0
        %1717 = vmatpush1.bf16.msra.mxu0 0
        %1718 = vmatprep.mubr.bf16.mxu0 0
        %1719 = vmatmul.mubr.bf16.gmra.mrb[0].mxu0 %v1681
        %v1720 = vpop.f32.mrb[0].mxu0
        %v1721 = vadd.f32 0.0, %v1720
        %v1722 = vpop.f32.mrb[0].mxu0
        %v1723 = vpop.f32.mrb[0].mxu0
        %v1724 = vadd.f32 0.0, %v1723
        %v1725 = vpop.f32.mrb[0].mxu0
        %1726 = vmatprep.mubr.bf16.mxu0 0
        %1727 = vmatmul.mubr.bf16.gmra.mrb[0].mxu0 %v1684
        %v1728 = vpop.f32.mrb[0].mxu0
        %v1729 = vadd.f32 0.0, %v1728
        %v1730 = vpop.f32.mrb[0].mxu0
        %v1731 = vpop.f32.mrb[0].mxu0
        %v1732 = vadd.f32 0.0, %v1731
        %v1733 = vpop.f32.mrb[0].mxu0
        %1734 = vdwg.mxu0
        %v1735 = vlaneseq
        %v1736 = vshrl.u32 %v1735, 7
        %v1737 = vsub.s32 4, %v1736
        %v1738 = vrot.slane %v393, %v1737
        %v1739 = vmul.f32 %v1721, %v1738
        %v1740 = vmul.f32 %v1724, %v1738
        %v1741 = vmul.f32 %v1729, %v1738
        %v1742 = vmul.f32 %v1732, %v1738
        %v1743 = vsel %vm481, %v1739, 0.0
        %1744 = vadd.xlane.f32.xlu0 %v1743
        %v1745 = vpop.xlane.xlu0 %1744
        %v1746 = vsel %vm481, %v1740, 0.0
        %1747 = vadd.xlane.f32.xlu0 %v1746
        %v1748 = vpop.xlane.xlu0 %1747
        %v1749 = vsel %vm481, %v1741, 0.0
        %1750 = vadd.xlane.f32.xlu0 %v1749
        %v1751 = vpop.xlane.xlu0 %1750
        %v1752 = vsel %vm481, %v1742, 0.0
        %1753 = vadd.xlane.f32.xlu0 %v1752
        %v1754 = vpop.xlane.xlu0 %1753
        %v1755 = vlaneseq
        %v1756 = vshrl.u32 %v1755, 7
        %v1757 = vsub.s32 1, %v1756
        %v1758 = vrot.slane %v393, %v1757
        %v1759 = vmul.f32 %v1721, %v1758
        %v1760 = vmul.f32 %v1724, %v1758
        %v1761 = vmul.f32 %v1729, %v1758
        %v1762 = vmul.f32 %v1732, %v1758
        %v1763 = vsel %vm481, %v1759, 0.0
        %1764 = vadd.xlane.f32.xlu0 %v1763
        %v1765 = vpop.xlane.xlu0 %1764
        %v1766 = vsel %vm481, %v1760, 0.0
        %1767 = vadd.xlane.f32.xlu0 %v1766
        %v1768 = vpop.xlane.xlu0 %1767
        %v1769 = vsel %vm481, %v1761, 0.0
        %1770 = vadd.xlane.f32.xlu0 %v1769
        %v1771 = vpop.xlane.xlu0 %1770
        %v1772 = vsel %vm481, %v1762, 0.0
        %1773 = vadd.xlane.f32.xlu0 %v1772
        %v1774 = vpop.xlane.xlu0 %1773
        %v1779 = vlaneseq
        %v1780 = vshrl.u32 %v1779, 7
        %v1781 = vsub.s32 %v399, %v1780
        %v1782 = vrot.slane %v1765, %v1781
        %v1783 = vlaneseq
        %v1784 = vshrl.u32 %v1783, 7
        %v1785 = vsub.s32 %v399, %v1784
        %v1786 = vrot.slane %v1768, %v1785
        %v1787 = vlaneseq
        %v1788 = vshrl.u32 %v1787, 7
        %v1789 = vsub.s32 %v399, %v1788
        %v1790 = vrot.slane %v1771, %v1789
        %v1791 = vlaneseq
        %v1792 = vshrl.u32 %v1791, 7
        %v1793 = vsub.s32 %v399, %v1792
        %v1794 = vrot.slane %v1774, %v1793
        %v1795 = vsel %vm535, %v1782, %v1782
        %v1796 = vsel %vm537, %v1782, %v1795
        %v1797 = vsel %vm539, %v1782, %v1796
        %v1798 = vsel %vm541, %v1782, %v1797
        %v1799 = vsel %vm543, %v1782, %v1798
        %v1800 = vsel %vm545, %v1782, %v1799
        %v1801 = vsel %vm535, %v1786, %v1786
        %v1802 = vsel %vm537, %v1786, %v1801
        %v1803 = vsel %vm539, %v1786, %v1802
        %v1804 = vsel %vm541, %v1786, %v1803
        %v1805 = vsel %vm543, %v1786, %v1804
        %v1806 = vsel %vm545, %v1786, %v1805
        %v1807 = vsel %vm535, %v1790, %v1790
        %v1808 = vsel %vm537, %v1790, %v1807
        %v1809 = vsel %vm539, %v1790, %v1808
        %v1810 = vsel %vm541, %v1790, %v1809
        %v1811 = vsel %vm543, %v1790, %v1810
        %v1812 = vsel %vm545, %v1790, %v1811
        %v1813 = vsel %vm535, %v1794, %v1794
        %v1814 = vsel %vm537, %v1794, %v1813
        %v1815 = vsel %vm539, %v1794, %v1814
        %v1816 = vsel %vm541, %v1794, %v1815
        %v1817 = vsel %vm543, %v1794, %v1816
        %v1818 = vsel %vm545, %v1794, %v1817
        %v1823 = vadd.f32 %v1745, %v1800
        %v1824 = vadd.f32 %v1748, %v1806
        %v1825 = vadd.f32 %v1751, %v1812
        %v1826 = vadd.f32 %v1754, %v1818
        %vm1827 = vcmp.gt.f32.partialorder %v1823, 0.0
        %vm1828 = vcmp.gt.f32.partialorder %v1824, 0.0
        %vm1829 = vcmp.gt.f32.partialorder %v1825, 0.0
        %vm1830 = vcmp.gt.f32.partialorder %v1826, 0.0
        %v1831 = vmul.f32 %v1823, 0.2
        %v1832 = vmul.f32 %v1824, 0.2
        %v1833 = vmul.f32 %v1825, 0.2
        %v1834 = vmul.f32 %v1826, 0.2
        %v1835 = vsel %vm1827, %v1823, %v1831
        %v1836 = vsel %vm1828, %v1824, %v1832
        %v1837 = vsel %vm1829, %v1825, %v1833
        %v1838 = vsel %vm1830, %v1826, %v1834
        %v1839 = vsel %vm407, %v1835, -1e+30
        %v1840 = vsel %vm408, %v1836, -1e+30
        %v1841 = vsel %vm409, %v1837, -1e+30
        %v1842 = vsel %vm410, %v1838, -1e+30
        %v1843 = vsel %vm413, %v1839, -inf
        %1844 = vmax.xlane.f32.xlu0 %v1843
        %v1845 = vpop.xlane.xlu0 %1844
        %v1846 = vsel %vm413, %v1840, -inf
        %1847 = vmax.xlane.f32.xlu0 %v1846
        %v1848 = vpop.xlane.xlu0 %1847
        %v1849 = vsel %vm413, %v1841, -inf
        %1850 = vmax.xlane.f32.xlu0 %v1849
        %v1851 = vpop.xlane.xlu0 %1850
        %v1852 = vsel %vm413, %v1842, -inf
        %1853 = vmax.xlane.f32.xlu0 %v1852
        %v1854 = vpop.xlane.xlu0 %1853
        %v1855 = vsub.f32 %v1839, %v1845
        %v1856 = vsub.f32 %v1840, %v1848
        %v1857 = vsub.f32 %v1841, %v1851
        %v1858 = vsub.f32 %v1842, %v1854
        %v1859 = vmul.f32 %v1855, 1.442695
        %v1860 = vpow.pop %v1859
        %v1861 = vmul.f32 %v1856, 1.442695
        %v1862 = vpow.pop %v1861
        %v1863 = vmul.f32 %v1857, 1.442695
        %v1864 = vpow.pop %v1863
        %v1865 = vmul.f32 %v1858, 1.442695
        %v1866 = vpow.pop %v1865
        %v1867 = vsel %vm413, %v1860, 0.0
        %1868 = vadd.xlane.f32.xlu0 %v1867
        %v1869 = vpop.xlane.xlu0 %1868
        %v1870 = vsel %vm413, %v1862, 0.0
        %1871 = vadd.xlane.f32.xlu0 %v1870
        %v1872 = vpop.xlane.xlu0 %1871
        %v1873 = vsel %vm413, %v1864, 0.0
        %1874 = vadd.xlane.f32.xlu0 %v1873
        %v1875 = vpop.xlane.xlu0 %1874
        %v1876 = vsel %vm413, %v1866, 0.0
        %1877 = vadd.xlane.f32.xlu0 %v1876
        %v1878 = vpop.xlane.xlu0 %1877
        %v1879 = vlaneseq
        %v1880 = vshrl.u32 %v1879, 7
        %v1881 = vsub.s32 0, %v1880
        %v1882 = vrot.slane %v1860, %v1881
        %1884 = vbcast.lane.b32.xlu0 %v1882, 256
        %v1885 = vpop.permute.xlu0 %1884
        %v1886 = vlaneseq
        %v1887 = vshrl.u32 %v1886, 7
        %v1888 = vsub.s32 1, %v1887
        %v1889 = vrot.slane %v1860, %v1888
        %1891 = vbcast.lane.b32.xlu0 %v1889, 256
        %v1892 = vpop.permute.xlu0 %1891
        %v1893 = vlaneseq
        %v1894 = vshrl.u32 %v1893, 7
        %v1895 = vsub.s32 2, %v1894
        %v1896 = vrot.slane %v1860, %v1895
        %1898 = vbcast.lane.b32.xlu0 %v1896, 256
        %v1899 = vpop.permute.xlu0 %1898
        %v1900 = vlaneseq
        %v1901 = vshrl.u32 %v1900, 7
        %v1902 = vsub.s32 3, %v1901
        %v1903 = vrot.slane %v1860, %v1902
        %1905 = vbcast.lane.b32.xlu0 %v1903, 256
        %v1906 = vpop.permute.xlu0 %1905
        %v1907 = vlaneseq
        %v1908 = vshrl.u32 %v1907, 7
        %v1909 = vsub.s32 4, %v1908
        %v1910 = vrot.slane %v1860, %v1909
        %1912 = vbcast.lane.b32.xlu0 %v1910, 256
        %v1913 = vpop.permute.xlu0 %1912
        %v1914 = vlaneseq
        %v1915 = vshrl.u32 %v1914, 7
        %v1916 = vsub.s32 5, %v1915
        %v1917 = vrot.slane %v1860, %v1916
        %1919 = vbcast.lane.b32.xlu0 %v1917, 256
        %v1920 = vpop.permute.xlu0 %1919
        %v1921 = vlaneseq
        %v1922 = vshrl.u32 %v1921, 7
        %v1923 = vsub.s32 6, %v1922
        %v1924 = vrot.slane %v1860, %v1923
        %1926 = vbcast.lane.b32.xlu0 %v1924, 256
        %v1927 = vpop.permute.xlu0 %1926
        %v1928 = vlaneseq
        %v1929 = vshrl.u32 %v1928, 7
        %v1930 = vsub.s32 7, %v1929
        %v1931 = vrot.slane %v1860, %v1930
        %1933 = vbcast.lane.b32.xlu0 %v1931, 256
        %v1934 = vpop.permute.xlu0 %1933
        %v1935 = vlaneseq
        %v1936 = vshrl.u32 %v1935, 7
        %v1937 = vsub.s32 0, %v1936
        %v1938 = vrot.slane %v1862, %v1937
        %1940 = vbcast.lane.b32.xlu0 %v1938, 256
        %v1941 = vpop.permute.xlu0 %1940
        %v1942 = vlaneseq
        %v1943 = vshrl.u32 %v1942, 7
        %v1944 = vsub.s32 1, %v1943
        %v1945 = vrot.slane %v1862, %v1944
        %1947 = vbcast.lane.b32.xlu0 %v1945, 256
        %v1948 = vpop.permute.xlu0 %1947
        %v1949 = vlaneseq
        %v1950 = vshrl.u32 %v1949, 7
        %v1951 = vsub.s32 2, %v1950
        %v1952 = vrot.slane %v1862, %v1951
        %1954 = vbcast.lane.b32.xlu0 %v1952, 256
        %v1955 = vpop.permute.xlu0 %1954
        %v1956 = vlaneseq
        %v1957 = vshrl.u32 %v1956, 7
        %v1958 = vsub.s32 3, %v1957
        %v1959 = vrot.slane %v1862, %v1958
        %1961 = vbcast.lane.b32.xlu0 %v1959, 256
        %v1962 = vpop.permute.xlu0 %1961
        %v1963 = vlaneseq
        %v1964 = vshrl.u32 %v1963, 7
        %v1965 = vsub.s32 4, %v1964
        %v1966 = vrot.slane %v1862, %v1965
        %1968 = vbcast.lane.b32.xlu0 %v1966, 256
        %v1969 = vpop.permute.xlu0 %1968
        %v1970 = vlaneseq
        %v1971 = vshrl.u32 %v1970, 7
        %v1972 = vsub.s32 5, %v1971
        %v1973 = vrot.slane %v1862, %v1972
        %1975 = vbcast.lane.b32.xlu0 %v1973, 256
        %v1976 = vpop.permute.xlu0 %1975
        %v1977 = vlaneseq
        %v1978 = vshrl.u32 %v1977, 7
        %v1979 = vsub.s32 6, %v1978
        %v1980 = vrot.slane %v1862, %v1979
        %1982 = vbcast.lane.b32.xlu0 %v1980, 256
        %v1983 = vpop.permute.xlu0 %1982
        %v1984 = vlaneseq
        %v1985 = vshrl.u32 %v1984, 7
        %v1986 = vsub.s32 7, %v1985
        %v1987 = vrot.slane %v1862, %v1986
        %1989 = vbcast.lane.b32.xlu0 %v1987, 256
        %v1990 = vpop.permute.xlu0 %1989
        %v1991 = vlaneseq
        %v1992 = vshrl.u32 %v1991, 7
        %v1993 = vsub.s32 0, %v1992
        %v1994 = vrot.slane %v1864, %v1993
        %1996 = vbcast.lane.b32.xlu0 %v1994, 256
        %v1997 = vpop.permute.xlu0 %1996
        %v1998 = vlaneseq
        %v1999 = vshrl.u32 %v1998, 7
        %v2000 = vsub.s32 1, %v1999
        %v2001 = vrot.slane %v1864, %v2000
        %2003 = vbcast.lane.b32.xlu0 %v2001, 256
        %v2004 = vpop.permute.xlu0 %2003
        %v2005 = vlaneseq
        %v2006 = vshrl.u32 %v2005, 7
        %v2007 = vsub.s32 2, %v2006
        %v2008 = vrot.slane %v1864, %v2007
        %2010 = vbcast.lane.b32.xlu0 %v2008, 256
        %v2011 = vpop.permute.xlu0 %2010
        %v2012 = vlaneseq
        %v2013 = vshrl.u32 %v2012, 7
        %v2014 = vsub.s32 3, %v2013
        %v2015 = vrot.slane %v1864, %v2014
        %2017 = vbcast.lane.b32.xlu0 %v2015, 256
        %v2018 = vpop.permute.xlu0 %2017
        %v2019 = vlaneseq
        %v2020 = vshrl.u32 %v2019, 7
        %v2021 = vsub.s32 4, %v2020
        %v2022 = vrot.slane %v1864, %v2021
        %2024 = vbcast.lane.b32.xlu0 %v2022, 256
        %v2025 = vpop.permute.xlu0 %2024
        %v2026 = vlaneseq
        %v2027 = vshrl.u32 %v2026, 7
        %v2028 = vsub.s32 5, %v2027
        %v2029 = vrot.slane %v1864, %v2028
        %2031 = vbcast.lane.b32.xlu0 %v2029, 256
        %v2032 = vpop.permute.xlu0 %2031
        %v2033 = vlaneseq
        %v2034 = vshrl.u32 %v2033, 7
        %v2035 = vsub.s32 6, %v2034
        %v2036 = vrot.slane %v1864, %v2035
        %2038 = vbcast.lane.b32.xlu0 %v2036, 256
        %v2039 = vpop.permute.xlu0 %2038
        %v2040 = vlaneseq
        %v2041 = vshrl.u32 %v2040, 7
        %v2042 = vsub.s32 7, %v2041
        %v2043 = vrot.slane %v1864, %v2042
        %2045 = vbcast.lane.b32.xlu0 %v2043, 256
        %v2046 = vpop.permute.xlu0 %2045
        %v2047 = vlaneseq
        %v2048 = vshrl.u32 %v2047, 7
        %v2049 = vsub.s32 0, %v2048
        %v2050 = vrot.slane %v1866, %v2049
        %2052 = vbcast.lane.b32.xlu0 %v2050, 256
        %v2053 = vpop.permute.xlu0 %2052
        %v2054 = vlaneseq
        %v2055 = vshrl.u32 %v2054, 7
        %v2056 = vsub.s32 1, %v2055
        %v2057 = vrot.slane %v1866, %v2056
        %2059 = vbcast.lane.b32.xlu0 %v2057, 256
        %v2060 = vpop.permute.xlu0 %2059
        %v2061 = vlaneseq
        %v2062 = vshrl.u32 %v2061, 7
        %v2063 = vsub.s32 2, %v2062
        %v2064 = vrot.slane %v1866, %v2063
        %2066 = vbcast.lane.b32.xlu0 %v2064, 256
        %v2067 = vpop.permute.xlu0 %2066
        %v2068 = vlaneseq
        %v2069 = vshrl.u32 %v2068, 7
        %v2070 = vsub.s32 3, %v2069
        %v2071 = vrot.slane %v1866, %v2070
        %2073 = vbcast.lane.b32.xlu0 %v2071, 256
        %v2074 = vpop.permute.xlu0 %2073
        %v2075 = vlaneseq
        %v2076 = vshrl.u32 %v2075, 7
        %v2077 = vsub.s32 4, %v2076
        %v2078 = vrot.slane %v1866, %v2077
        %2080 = vbcast.lane.b32.xlu0 %v2078, 256
        %v2081 = vpop.permute.xlu0 %2080
        %v2082 = vlaneseq
        %v2083 = vshrl.u32 %v2082, 7
        %v2084 = vsub.s32 5, %v2083
        %v2085 = vrot.slane %v1866, %v2084
        %2087 = vbcast.lane.b32.xlu0 %v2085, 256
        %v2088 = vpop.permute.xlu0 %2087
        %v2089 = vlaneseq
        %v2090 = vshrl.u32 %v2089, 7
        %v2091 = vsub.s32 6, %v2090
        %v2092 = vrot.slane %v1866, %v2091
        %2094 = vbcast.lane.b32.xlu0 %v2092, 256
        %v2095 = vpop.permute.xlu0 %2094
        %v2096 = vlaneseq
        %v2097 = vshrl.u32 %v2096, 7
        %v2098 = vsub.s32 7, %v2097
        %v2099 = vrot.slane %v1866, %v2098
        %2101 = vbcast.lane.b32.xlu0 %v2099, 256
        %v2102 = vpop.permute.xlu0 %2101
        %v2103 = vmul.f32 %v1885, %v1721
        %v2104 = vmul.f32 %v1892, %v1721
        %v2105 = vmul.f32 %v1899, %v1721
        %v2106 = vmul.f32 %v1906, %v1721
        %v2107 = vmul.f32 %v1913, %v1721
        %v2108 = vmul.f32 %v1920, %v1721
        %v2109 = vmul.f32 %v1927, %v1721
        %v2110 = vmul.f32 %v1934, %v1721
        %v2111 = vmul.f32 %v1941, %v1724
        %v2112 = vmul.f32 %v1948, %v1724
        %v2113 = vmul.f32 %v1955, %v1724
        %v2114 = vmul.f32 %v1962, %v1724
        %v2115 = vmul.f32 %v1969, %v1724
        %v2116 = vmul.f32 %v1976, %v1724
        %v2117 = vmul.f32 %v1983, %v1724
        %v2118 = vmul.f32 %v1990, %v1724
        %v2119 = vmul.f32 %v1997, %v1729
        %v2120 = vmul.f32 %v2004, %v1729
        %v2121 = vmul.f32 %v2011, %v1729
        %v2122 = vmul.f32 %v2018, %v1729
        %v2123 = vmul.f32 %v2025, %v1729
        %v2124 = vmul.f32 %v2032, %v1729
        %v2125 = vmul.f32 %v2039, %v1729
        %v2126 = vmul.f32 %v2046, %v1729
        %v2127 = vmul.f32 %v2053, %v1732
        %v2128 = vmul.f32 %v2060, %v1732
        %v2129 = vmul.f32 %v2067, %v1732
        %v2130 = vmul.f32 %v2074, %v1732
        %v2131 = vmul.f32 %v2081, %v1732
        %v2132 = vmul.f32 %v2088, %v1732
        %v2133 = vmul.f32 %v2095, %v1732
        %v2134 = vmul.f32 %v2102, %v1732
        %v2135 = vsel %vm481, %v2103, 0.0
        %v2136 = vrot.slane %v2135, 4
        %v2137 = vadd.f32 %v2135, %v2136
        %v2138 = vrot.slane %v2137, 2
        %v2139 = vadd.f32 %v2137, %v2138
        %v2140 = vrot.slane %v2139, 1
        %v2141 = vadd.f32 %v2139, %v2140
        %v2142 = vsel %vm481, %v2104, 0.0
        %v2143 = vrot.slane %v2142, 4
        %v2144 = vadd.f32 %v2142, %v2143
        %v2145 = vrot.slane %v2144, 2
        %v2146 = vadd.f32 %v2144, %v2145
        %v2147 = vrot.slane %v2146, 1
        %v2148 = vadd.f32 %v2146, %v2147
        %v2149 = vsel %vm481, %v2105, 0.0
        %v2150 = vrot.slane %v2149, 4
        %v2151 = vadd.f32 %v2149, %v2150
        %v2152 = vrot.slane %v2151, 2
        %v2153 = vadd.f32 %v2151, %v2152
        %v2154 = vrot.slane %v2153, 1
        %v2155 = vadd.f32 %v2153, %v2154
        %v2156 = vsel %vm481, %v2106, 0.0
        %v2157 = vrot.slane %v2156, 4
        %v2158 = vadd.f32 %v2156, %v2157
        %v2159 = vrot.slane %v2158, 2
        %v2160 = vadd.f32 %v2158, %v2159
        %v2161 = vrot.slane %v2160, 1
        %v2162 = vadd.f32 %v2160, %v2161
        %v2163 = vsel %vm481, %v2107, 0.0
        %v2164 = vrot.slane %v2163, 4
        %v2165 = vadd.f32 %v2163, %v2164
        %v2166 = vrot.slane %v2165, 2
        %v2167 = vadd.f32 %v2165, %v2166
        %v2168 = vrot.slane %v2167, 1
        %v2169 = vadd.f32 %v2167, %v2168
        %v2170 = vsel %vm481, %v2108, 0.0
        %v2171 = vrot.slane %v2170, 4
        %v2172 = vadd.f32 %v2170, %v2171
        %v2173 = vrot.slane %v2172, 2
        %v2174 = vadd.f32 %v2172, %v2173
        %v2175 = vrot.slane %v2174, 1
        %v2176 = vadd.f32 %v2174, %v2175
        %v2177 = vsel %vm481, %v2109, 0.0
        %v2178 = vrot.slane %v2177, 4
        %v2179 = vadd.f32 %v2177, %v2178
        %v2180 = vrot.slane %v2179, 2
        %v2181 = vadd.f32 %v2179, %v2180
        %v2182 = vrot.slane %v2181, 1
        %v2183 = vadd.f32 %v2181, %v2182
        %v2184 = vsel %vm481, %v2110, 0.0
        %v2185 = vrot.slane %v2184, 4
        %v2186 = vadd.f32 %v2184, %v2185
        %v2187 = vrot.slane %v2186, 2
        %v2188 = vadd.f32 %v2186, %v2187
        %v2189 = vrot.slane %v2188, 1
        %v2190 = vadd.f32 %v2188, %v2189
        %v2191 = vsel %vm481, %v2111, 0.0
        %v2192 = vrot.slane %v2191, 4
        %v2193 = vadd.f32 %v2191, %v2192
        %v2194 = vrot.slane %v2193, 2
        %v2195 = vadd.f32 %v2193, %v2194
        %v2196 = vrot.slane %v2195, 1
        %v2197 = vadd.f32 %v2195, %v2196
        %v2198 = vsel %vm481, %v2112, 0.0
        %v2199 = vrot.slane %v2198, 4
        %v2200 = vadd.f32 %v2198, %v2199
        %v2201 = vrot.slane %v2200, 2
        %v2202 = vadd.f32 %v2200, %v2201
        %v2203 = vrot.slane %v2202, 1
        %v2204 = vadd.f32 %v2202, %v2203
        %v2205 = vsel %vm481, %v2113, 0.0
        %v2206 = vrot.slane %v2205, 4
        %v2207 = vadd.f32 %v2205, %v2206
        %v2208 = vrot.slane %v2207, 2
        %v2209 = vadd.f32 %v2207, %v2208
        %v2210 = vrot.slane %v2209, 1
        %v2211 = vadd.f32 %v2209, %v2210
        %v2212 = vsel %vm481, %v2114, 0.0
        %v2213 = vrot.slane %v2212, 4
        %v2214 = vadd.f32 %v2212, %v2213
        %v2215 = vrot.slane %v2214, 2
        %v2216 = vadd.f32 %v2214, %v2215
        %v2217 = vrot.slane %v2216, 1
        %v2218 = vadd.f32 %v2216, %v2217
        %v2219 = vsel %vm481, %v2115, 0.0
        %v2220 = vrot.slane %v2219, 4
        %v2221 = vadd.f32 %v2219, %v2220
        %v2222 = vrot.slane %v2221, 2
        %v2223 = vadd.f32 %v2221, %v2222
        %v2224 = vrot.slane %v2223, 1
        %v2225 = vadd.f32 %v2223, %v2224
        %v2226 = vsel %vm481, %v2116, 0.0
        %v2227 = vrot.slane %v2226, 4
        %v2228 = vadd.f32 %v2226, %v2227
        %v2229 = vrot.slane %v2228, 2
        %v2230 = vadd.f32 %v2228, %v2229
        %v2231 = vrot.slane %v2230, 1
        %v2232 = vadd.f32 %v2230, %v2231
        %v2233 = vsel %vm481, %v2117, 0.0
        %v2234 = vrot.slane %v2233, 4
        %v2235 = vadd.f32 %v2233, %v2234
        %v2236 = vrot.slane %v2235, 2
        %v2237 = vadd.f32 %v2235, %v2236
        %v2238 = vrot.slane %v2237, 1
        %v2239 = vadd.f32 %v2237, %v2238
        %v2240 = vsel %vm481, %v2118, 0.0
        %v2241 = vrot.slane %v2240, 4
        %v2242 = vadd.f32 %v2240, %v2241
        %v2243 = vrot.slane %v2242, 2
        %v2244 = vadd.f32 %v2242, %v2243
        %v2245 = vrot.slane %v2244, 1
        %v2246 = vadd.f32 %v2244, %v2245
        %v2247 = vsel %vm481, %v2119, 0.0
        %v2248 = vrot.slane %v2247, 4
        %v2249 = vadd.f32 %v2247, %v2248
        %v2250 = vrot.slane %v2249, 2
        %v2251 = vadd.f32 %v2249, %v2250
        %v2252 = vrot.slane %v2251, 1
        %v2253 = vadd.f32 %v2251, %v2252
        %v2254 = vsel %vm481, %v2120, 0.0
        %v2255 = vrot.slane %v2254, 4
        %v2256 = vadd.f32 %v2254, %v2255
        %v2257 = vrot.slane %v2256, 2
        %v2258 = vadd.f32 %v2256, %v2257
        %v2259 = vrot.slane %v2258, 1
        %v2260 = vadd.f32 %v2258, %v2259
        %v2261 = vsel %vm481, %v2121, 0.0
        %v2262 = vrot.slane %v2261, 4
        %v2263 = vadd.f32 %v2261, %v2262
        %v2264 = vrot.slane %v2263, 2
        %v2265 = vadd.f32 %v2263, %v2264
        %v2266 = vrot.slane %v2265, 1
        %v2267 = vadd.f32 %v2265, %v2266
        %v2268 = vsel %vm481, %v2122, 0.0
        %v2269 = vrot.slane %v2268, 4
        %v2270 = vadd.f32 %v2268, %v2269
        %v2271 = vrot.slane %v2270, 2
        %v2272 = vadd.f32 %v2270, %v2271
        %v2273 = vrot.slane %v2272, 1
        %v2274 = vadd.f32 %v2272, %v2273
        %v2275 = vsel %vm481, %v2123, 0.0
        %v2276 = vrot.slane %v2275, 4
        %v2277 = vadd.f32 %v2275, %v2276
        %v2278 = vrot.slane %v2277, 2
        %v2279 = vadd.f32 %v2277, %v2278
        %v2280 = vrot.slane %v2279, 1
        %v2281 = vadd.f32 %v2279, %v2280
        %v2282 = vsel %vm481, %v2124, 0.0
        %v2283 = vrot.slane %v2282, 4
        %v2284 = vadd.f32 %v2282, %v2283
        %v2285 = vrot.slane %v2284, 2
        %v2286 = vadd.f32 %v2284, %v2285
        %v2287 = vrot.slane %v2286, 1
        %v2288 = vadd.f32 %v2286, %v2287
        %v2289 = vsel %vm481, %v2125, 0.0
        %v2290 = vrot.slane %v2289, 4
        %v2291 = vadd.f32 %v2289, %v2290
        %v2292 = vrot.slane %v2291, 2
        %v2293 = vadd.f32 %v2291, %v2292
        %v2294 = vrot.slane %v2293, 1
        %v2295 = vadd.f32 %v2293, %v2294
        %v2296 = vsel %vm481, %v2126, 0.0
        %v2297 = vrot.slane %v2296, 4
        %v2298 = vadd.f32 %v2296, %v2297
        %v2299 = vrot.slane %v2298, 2
        %v2300 = vadd.f32 %v2298, %v2299
        %v2301 = vrot.slane %v2300, 1
        %v2302 = vadd.f32 %v2300, %v2301
        %v2303 = vsel %vm481, %v2127, 0.0
        %v2304 = vrot.slane %v2303, 4
        %v2305 = vadd.f32 %v2303, %v2304
        %v2306 = vrot.slane %v2305, 2
        %v2307 = vadd.f32 %v2305, %v2306
        %v2308 = vrot.slane %v2307, 1
        %v2309 = vadd.f32 %v2307, %v2308
        %v2310 = vsel %vm481, %v2128, 0.0
        %v2311 = vrot.slane %v2310, 4
        %v2312 = vadd.f32 %v2310, %v2311
        %v2313 = vrot.slane %v2312, 2
        %v2314 = vadd.f32 %v2312, %v2313
        %v2315 = vrot.slane %v2314, 1
        %v2316 = vadd.f32 %v2314, %v2315
        %v2317 = vsel %vm481, %v2129, 0.0
        %v2318 = vrot.slane %v2317, 4
        %v2319 = vadd.f32 %v2317, %v2318
        %v2320 = vrot.slane %v2319, 2
        %v2321 = vadd.f32 %v2319, %v2320
        %v2322 = vrot.slane %v2321, 1
        %v2323 = vadd.f32 %v2321, %v2322
        %v2324 = vsel %vm481, %v2130, 0.0
        %v2325 = vrot.slane %v2324, 4
        %v2326 = vadd.f32 %v2324, %v2325
        %v2327 = vrot.slane %v2326, 2
        %v2328 = vadd.f32 %v2326, %v2327
        %v2329 = vrot.slane %v2328, 1
        %v2330 = vadd.f32 %v2328, %v2329
        %v2331 = vsel %vm481, %v2131, 0.0
        %v2332 = vrot.slane %v2331, 4
        %v2333 = vadd.f32 %v2331, %v2332
        %v2334 = vrot.slane %v2333, 2
        %v2335 = vadd.f32 %v2333, %v2334
        %v2336 = vrot.slane %v2335, 1
        %v2337 = vadd.f32 %v2335, %v2336
        %v2338 = vsel %vm481, %v2132, 0.0
        %v2339 = vrot.slane %v2338, 4
        %v2340 = vadd.f32 %v2338, %v2339
        %v2341 = vrot.slane %v2340, 2
        %v2342 = vadd.f32 %v2340, %v2341
        %v2343 = vrot.slane %v2342, 1
        %v2344 = vadd.f32 %v2342, %v2343
        %v2345 = vsel %vm481, %v2133, 0.0
        %v2346 = vrot.slane %v2345, 4
        %v2347 = vadd.f32 %v2345, %v2346
        %v2348 = vrot.slane %v2347, 2
        %v2349 = vadd.f32 %v2347, %v2348
        %v2350 = vrot.slane %v2349, 1
        %v2351 = vadd.f32 %v2349, %v2350
        %v2352 = vsel %vm481, %v2134, 0.0
        %v2353 = vrot.slane %v2352, 4
        %v2354 = vadd.f32 %v2352, %v2353
        %v2355 = vrot.slane %v2354, 2
        %v2356 = vadd.f32 %v2354, %v2355
        %v2357 = vrot.slane %v2356, 1
        %v2358 = vadd.f32 %v2356, %v2357
        %v2359 = vrcp.pop %v1869
        %v2360 = vrcp.pop %v1872
        %v2361 = vrcp.pop %v1875
        %v2362 = vrcp.pop %v1878
        %v2367 = vrot.slane %v2359, 1
        %v2368 = vrot.slane %v2359, 2
        %v2369 = vrot.slane %v2359, 3
        %v2370 = vrot.slane %v2359, 4
        %v2371 = vrot.slane %v2359, 5
        %v2372 = vrot.slane %v2359, 6
        %v2373 = vrot.slane %v2359, 7
        %v2374 = vrot.slane %v2360, 1
        %v2375 = vrot.slane %v2360, 2
        %v2376 = vrot.slane %v2360, 3
        %v2377 = vrot.slane %v2360, 4
        %v2378 = vrot.slane %v2360, 5
        %v2379 = vrot.slane %v2360, 6
        %v2380 = vrot.slane %v2360, 7
        %v2381 = vrot.slane %v2361, 1
        %v2382 = vrot.slane %v2361, 2
        %v2383 = vrot.slane %v2361, 3
        %v2384 = vrot.slane %v2361, 4
        %v2385 = vrot.slane %v2361, 5
        %v2386 = vrot.slane %v2361, 6
        %v2387 = vrot.slane %v2361, 7
        %v2388 = vrot.slane %v2362, 1
        %v2389 = vrot.slane %v2362, 2
        %v2390 = vrot.slane %v2362, 3
        %v2391 = vrot.slane %v2362, 4
        %v2392 = vrot.slane %v2362, 5
        %v2393 = vrot.slane %v2362, 6
        %v2394 = vrot.slane %v2362, 7
        %v2427 = vmul.f32 %v2141, %v2359
        %v2428 = vmul.f32 %v2148, %v2367
        %v2429 = vmul.f32 %v2155, %v2368
        %v2430 = vmul.f32 %v2162, %v2369
        %v2431 = vmul.f32 %v2169, %v2370
        %v2432 = vmul.f32 %v2176, %v2371
        %v2433 = vmul.f32 %v2183, %v2372
        %v2434 = vmul.f32 %v2190, %v2373
        %v2435 = vmul.f32 %v2197, %v2360
        %v2436 = vmul.f32 %v2204, %v2374
        %v2437 = vmul.f32 %v2211, %v2375
        %v2438 = vmul.f32 %v2218, %v2376
        %v2439 = vmul.f32 %v2225, %v2377
        %v2440 = vmul.f32 %v2232, %v2378
        %v2441 = vmul.f32 %v2239, %v2379
        %v2442 = vmul.f32 %v2246, %v2380
        %v2443 = vmul.f32 %v2253, %v2361
        %v2444 = vmul.f32 %v2260, %v2381
        %v2445 = vmul.f32 %v2267, %v2382
        %v2446 = vmul.f32 %v2274, %v2383
        %v2447 = vmul.f32 %v2281, %v2384
        %v2448 = vmul.f32 %v2288, %v2385
        %v2449 = vmul.f32 %v2295, %v2386
        %v2450 = vmul.f32 %v2302, %v2387
        %v2451 = vmul.f32 %v2309, %v2362
        %v2452 = vmul.f32 %v2316, %v2388
        %v2453 = vmul.f32 %v2323, %v2389
        %v2454 = vmul.f32 %v2330, %v2390
        %v2455 = vmul.f32 %v2337, %v2391
        %v2456 = vmul.f32 %v2344, %v2392
        %v2457 = vmul.f32 %v2351, %v2393
        %v2458 = vmul.f32 %v2358, %v2394
        %v2459 = vlaneseq
        %v2460 = vshrl.u32 %v2459, 7
        %v2461 = vsub.s32 7, %v2460
        %v2462 = vrot.slane %v393, %v2461
        %v2463 = vadd.f32 %v2427, %v2462
        %v2464 = vadd.f32 %v2428, %v2462
        %v2465 = vadd.f32 %v2429, %v2462
        %v2466 = vadd.f32 %v2430, %v2462
        %v2467 = vadd.f32 %v2431, %v2462
        %v2468 = vadd.f32 %v2432, %v2462
        %v2469 = vadd.f32 %v2433, %v2462
        %v2470 = vadd.f32 %v2434, %v2462
        %v2471 = vadd.f32 %v2435, %v2462
        %v2472 = vadd.f32 %v2436, %v2462
        %v2473 = vadd.f32 %v2437, %v2462
        %v2474 = vadd.f32 %v2438, %v2462
        %v2475 = vadd.f32 %v2439, %v2462
        %v2476 = vadd.f32 %v2440, %v2462
        %v2477 = vadd.f32 %v2441, %v2462
        %v2478 = vadd.f32 %v2442, %v2462
        %v2479 = vadd.f32 %v2443, %v2462
        %v2480 = vadd.f32 %v2444, %v2462
        %v2481 = vadd.f32 %v2445, %v2462
        %v2482 = vadd.f32 %v2446, %v2462
        %v2483 = vadd.f32 %v2447, %v2462
        %v2484 = vadd.f32 %v2448, %v2462
        %v2485 = vadd.f32 %v2449, %v2462
        %v2486 = vadd.f32 %v2450, %v2462
        %v2487 = vadd.f32 %v2451, %v2462
        %v2488 = vadd.f32 %v2452, %v2462
        %v2489 = vadd.f32 %v2453, %v2462
        %v2490 = vadd.f32 %v2454, %v2462
        %v2491 = vadd.f32 %v2455, %v2462
        %v2492 = vadd.f32 %v2456, %v2462
        %v2493 = vadd.f32 %v2457, %v2462
        %v2494 = vadd.f32 %v2458, %v2462
        %v2495 = vmax.f32 %v2463, 0.0
        %v2496 = vmax.f32 %v2464, 0.0
        %v2497 = vmax.f32 %v2465, 0.0
        %v2498 = vmax.f32 %v2466, 0.0
        %v2499 = vmax.f32 %v2467, 0.0
        %v2500 = vmax.f32 %v2468, 0.0
        %v2501 = vmax.f32 %v2469, 0.0
        %v2502 = vmax.f32 %v2470, 0.0
        %v2503 = vmax.f32 %v2471, 0.0
        %v2504 = vmax.f32 %v2472, 0.0
        %v2505 = vmax.f32 %v2473, 0.0
        %v2506 = vmax.f32 %v2474, 0.0
        %v2507 = vmax.f32 %v2475, 0.0
        %v2508 = vmax.f32 %v2476, 0.0
        %v2509 = vmax.f32 %v2477, 0.0
        %v2510 = vmax.f32 %v2478, 0.0
        %v2511 = vmax.f32 %v2479, 0.0
        %v2512 = vmax.f32 %v2480, 0.0
        %v2513 = vmax.f32 %v2481, 0.0
        %v2514 = vmax.f32 %v2482, 0.0
        %v2515 = vmax.f32 %v2483, 0.0
        %v2516 = vmax.f32 %v2484, 0.0
        %v2517 = vmax.f32 %v2485, 0.0
        %v2518 = vmax.f32 %v2486, 0.0
        %v2519 = vmax.f32 %v2487, 0.0
        %v2520 = vmax.f32 %v2488, 0.0
        %v2521 = vmax.f32 %v2489, 0.0
        %v2522 = vmax.f32 %v2490, 0.0
        %v2523 = vmax.f32 %v2491, 0.0
        %v2524 = vmax.f32 %v2492, 0.0
        %v2525 = vmax.f32 %v2493, 0.0
        %v2526 = vmax.f32 %v2494, 0.0
        %v2559 = vrot.slane %v2496, 7
        %v2560 = vsel %vm534, %v2559, %v2495
        %v2561 = vrot.slane %v2497, 6
        %v2562 = vsel %vm535, %v2561, %v2560
        %v2563 = vrot.slane %v2498, 5
        %v2564 = vsel %vm537, %v2563, %v2562
        %v2565 = vrot.slane %v2499, 4
        %v2566 = vsel %vm539, %v2565, %v2564
        %v2567 = vrot.slane %v2500, 3
        %v2568 = vsel %vm541, %v2567, %v2566
        %v2569 = vrot.slane %v2501, 2
        %v2570 = vsel %vm543, %v2569, %v2568
        %v2571 = vrot.slane %v2502, 1
        %v2572 = vsel %vm545, %v2571, %v2570
        %v2573 = vrot.slane %v2504, 7
        %v2574 = vsel %vm534, %v2573, %v2503
        %v2575 = vrot.slane %v2505, 6
        %v2576 = vsel %vm535, %v2575, %v2574
        %v2577 = vrot.slane %v2506, 5
        %v2578 = vsel %vm537, %v2577, %v2576
        %v2579 = vrot.slane %v2507, 4
        %v2580 = vsel %vm539, %v2579, %v2578
        %v2581 = vrot.slane %v2508, 3
        %v2582 = vsel %vm541, %v2581, %v2580
        %v2583 = vrot.slane %v2509, 2
        %v2584 = vsel %vm543, %v2583, %v2582
        %v2585 = vrot.slane %v2510, 1
        %v2586 = vsel %vm545, %v2585, %v2584
        %v2587 = vrot.slane %v2512, 7
        %v2588 = vsel %vm534, %v2587, %v2511
        %v2589 = vrot.slane %v2513, 6
        %v2590 = vsel %vm535, %v2589, %v2588
        %v2591 = vrot.slane %v2514, 5
        %v2592 = vsel %vm537, %v2591, %v2590
        %v2593 = vrot.slane %v2515, 4
        %v2594 = vsel %vm539, %v2593, %v2592
        %v2595 = vrot.slane %v2516, 3
        %v2596 = vsel %vm541, %v2595, %v2594
        %v2597 = vrot.slane %v2517, 2
        %v2598 = vsel %vm543, %v2597, %v2596
        %v2599 = vrot.slane %v2518, 1
        %v2600 = vsel %vm545, %v2599, %v2598
        %v2601 = vrot.slane %v2520, 7
        %v2602 = vsel %vm534, %v2601, %v2519
        %v2603 = vrot.slane %v2521, 6
        %v2604 = vsel %vm535, %v2603, %v2602
        %v2605 = vrot.slane %v2522, 5
        %v2606 = vsel %vm537, %v2605, %v2604
        %v2607 = vrot.slane %v2523, 4
        %v2608 = vsel %vm539, %v2607, %v2606
        %v2609 = vrot.slane %v2524, 3
        %v2610 = vsel %vm541, %v2609, %v2608
        %v2611 = vrot.slane %v2525, 2
        %v2612 = vsel %vm543, %v2611, %v2610
        %v2613 = vrot.slane %v2526, 1
        %v2614 = vsel %vm545, %v2613, %v2612
        %v2619 = vsel %vm481, %v2572, 0.0
        %v2620 = vsel %vm481, %v2586, 0.0
        %v2621 = vadd.f32 %v2619, %v2620
        %v2622 = vsel %vm481, %v2600, 0.0
        %v2623 = vadd.f32 %v2621, %v2622
        %v2624 = vsel %vm481, %v2614, 0.0
        %v2625 = vadd.f32 %v2623, %v2624
        %v2626 = vrot.slane %v2625, 4
        %v2627 = vadd.f32 %v2625, %v2626
        %v2628 = vrot.slane %v2627, 2
        %v2629 = vadd.f32 %v2627, %v2628
        %v2630 = vrot.slane %v2629, 1
        %v2631 = vadd.f32 %v2629, %v2630
        %v2632 = vmul.f32 %v2631, %v1378
        %v2633 = vlaneseq
        %v2634 = vshrl.u32 %v2633, 7
        %v2635 = vsub.s32 0, %v2634
        %v2636 = vrot.slane %v2632, %v2635
        %v2637 = vsub.f32 %v2495, %v2636
        %v2638 = vsub.f32 %v2496, %v2636
        %v2639 = vsub.f32 %v2497, %v2636
        %v2640 = vsub.f32 %v2498, %v2636
        %v2641 = vsub.f32 %v2499, %v2636
        %v2642 = vsub.f32 %v2500, %v2636
        %v2643 = vsub.f32 %v2501, %v2636
        %v2644 = vsub.f32 %v2502, %v2636
        %v2645 = vsub.f32 %v2503, %v2636
        %v2646 = vsub.f32 %v2504, %v2636
        %v2647 = vsub.f32 %v2505, %v2636
        %v2648 = vsub.f32 %v2506, %v2636
        %v2649 = vsub.f32 %v2507, %v2636
        %v2650 = vsub.f32 %v2508, %v2636
        %v2651 = vsub.f32 %v2509, %v2636
        %v2652 = vsub.f32 %v2510, %v2636
        %v2653 = vsub.f32 %v2511, %v2636
        %v2654 = vsub.f32 %v2512, %v2636
        %v2655 = vsub.f32 %v2513, %v2636
        %v2656 = vsub.f32 %v2514, %v2636
        %v2657 = vsub.f32 %v2515, %v2636
        %v2658 = vsub.f32 %v2516, %v2636
        %v2659 = vsub.f32 %v2517, %v2636
        %v2660 = vsub.f32 %v2518, %v2636
        %v2661 = vsub.f32 %v2519, %v2636
        %v2662 = vsub.f32 %v2520, %v2636
        %v2663 = vsub.f32 %v2521, %v2636
        %v2664 = vsub.f32 %v2522, %v2636
        %v2665 = vsub.f32 %v2523, %v2636
        %v2666 = vsub.f32 %v2524, %v2636
        %v2667 = vsub.f32 %v2525, %v2636
        %v2668 = vsub.f32 %v2526, %v2636
        %v2669 = vmul.f32 %v2637, %v2637
        %v2670 = vmul.f32 %v2638, %v2638
        %v2671 = vmul.f32 %v2639, %v2639
        %v2672 = vmul.f32 %v2640, %v2640
        %v2673 = vmul.f32 %v2641, %v2641
        %v2674 = vmul.f32 %v2642, %v2642
        %v2675 = vmul.f32 %v2643, %v2643
        %v2676 = vmul.f32 %v2644, %v2644
        %v2677 = vmul.f32 %v2645, %v2645
        %v2678 = vmul.f32 %v2646, %v2646
        %v2679 = vmul.f32 %v2647, %v2647
        %v2680 = vmul.f32 %v2648, %v2648
        %v2681 = vmul.f32 %v2649, %v2649
        %v2682 = vmul.f32 %v2650, %v2650
        %v2683 = vmul.f32 %v2651, %v2651
        %v2684 = vmul.f32 %v2652, %v2652
        %v2685 = vmul.f32 %v2653, %v2653
        %v2686 = vmul.f32 %v2654, %v2654
        %v2687 = vmul.f32 %v2655, %v2655
        %v2688 = vmul.f32 %v2656, %v2656
        %v2689 = vmul.f32 %v2657, %v2657
        %v2690 = vmul.f32 %v2658, %v2658
        %v2691 = vmul.f32 %v2659, %v2659
        %v2692 = vmul.f32 %v2660, %v2660
        %v2693 = vmul.f32 %v2661, %v2661
        %v2694 = vmul.f32 %v2662, %v2662
        %v2695 = vmul.f32 %v2663, %v2663
        %v2696 = vmul.f32 %v2664, %v2664
        %v2697 = vmul.f32 %v2665, %v2665
        %v2698 = vmul.f32 %v2666, %v2666
        %v2699 = vmul.f32 %v2667, %v2667
        %v2700 = vmul.f32 %v2668, %v2668
        %v2733 = vrot.slane %v2670, 7
        %v2734 = vsel %vm534, %v2733, %v2669
        %v2735 = vrot.slane %v2671, 6
        %v2736 = vsel %vm535, %v2735, %v2734
        %v2737 = vrot.slane %v2672, 5
        %v2738 = vsel %vm537, %v2737, %v2736
        %v2739 = vrot.slane %v2673, 4
        %v2740 = vsel %vm539, %v2739, %v2738
        %v2741 = vrot.slane %v2674, 3
        %v2742 = vsel %vm541, %v2741, %v2740
        %v2743 = vrot.slane %v2675, 2
        %v2744 = vsel %vm543, %v2743, %v2742
        %v2745 = vrot.slane %v2676, 1
        %v2746 = vsel %vm545, %v2745, %v2744
        %v2747 = vrot.slane %v2678, 7
        %v2748 = vsel %vm534, %v2747, %v2677
        %v2749 = vrot.slane %v2679, 6
        %v2750 = vsel %vm535, %v2749, %v2748
        %v2751 = vrot.slane %v2680, 5
        %v2752 = vsel %vm537, %v2751, %v2750
        %v2753 = vrot.slane %v2681, 4
        %v2754 = vsel %vm539, %v2753, %v2752
        %v2755 = vrot.slane %v2682, 3
        %v2756 = vsel %vm541, %v2755, %v2754
        %v2757 = vrot.slane %v2683, 2
        %v2758 = vsel %vm543, %v2757, %v2756
        %v2759 = vrot.slane %v2684, 1
        %v2760 = vsel %vm545, %v2759, %v2758
        %v2761 = vrot.slane %v2686, 7
        %v2762 = vsel %vm534, %v2761, %v2685
        %v2763 = vrot.slane %v2687, 6
        %v2764 = vsel %vm535, %v2763, %v2762
        %v2765 = vrot.slane %v2688, 5
        %v2766 = vsel %vm537, %v2765, %v2764
        %v2767 = vrot.slane %v2689, 4
        %v2768 = vsel %vm539, %v2767, %v2766
        %v2769 = vrot.slane %v2690, 3
        %v2770 = vsel %vm541, %v2769, %v2768
        %v2771 = vrot.slane %v2691, 2
        %v2772 = vsel %vm543, %v2771, %v2770
        %v2773 = vrot.slane %v2692, 1
        %v2774 = vsel %vm545, %v2773, %v2772
        %v2775 = vrot.slane %v2694, 7
        %v2776 = vsel %vm534, %v2775, %v2693
        %v2777 = vrot.slane %v2695, 6
        %v2778 = vsel %vm535, %v2777, %v2776
        %v2779 = vrot.slane %v2696, 5
        %v2780 = vsel %vm537, %v2779, %v2778
        %v2781 = vrot.slane %v2697, 4
        %v2782 = vsel %vm539, %v2781, %v2780
        %v2783 = vrot.slane %v2698, 3
        %v2784 = vsel %vm541, %v2783, %v2782
        %v2785 = vrot.slane %v2699, 2
        %v2786 = vsel %vm543, %v2785, %v2784
        %v2787 = vrot.slane %v2700, 1
        %v2788 = vsel %vm545, %v2787, %v2786
        %v2793 = vsel %vm481, %v2746, 0.0
        %v2794 = vsel %vm481, %v2760, 0.0
        %v2795 = vadd.f32 %v2793, %v2794
        %v2796 = vsel %vm481, %v2774, 0.0
        %v2797 = vadd.f32 %v2795, %v2796
        %v2798 = vsel %vm481, %v2788, 0.0
        %v2799 = vadd.f32 %v2797, %v2798
        %v2800 = vrot.slane %v2799, 4
        %v2801 = vadd.f32 %v2799, %v2800
        %v2802 = vrot.slane %v2801, 2
        %v2803 = vadd.f32 %v2801, %v2802
        %v2804 = vrot.slane %v2803, 1
        %v2805 = vadd.f32 %v2803, %v2804
        %v2806 = vmul.f32 %v2805, %v1378
        %v2807 = vlaneseq
        %v2808 = vshrl.u32 %v2807, 7
        %v2809 = vsub.s32 2, %v2808
        %v2810 = vrot.slane %v394, %v2809
        %v2843 = vrot.slane %v2638, 7
        %v2844 = vsel %vm534, %v2843, %v2637
        %v2845 = vrot.slane %v2639, 6
        %v2846 = vsel %vm535, %v2845, %v2844
        %v2847 = vrot.slane %v2640, 5
        %v2848 = vsel %vm537, %v2847, %v2846
        %v2849 = vrot.slane %v2641, 4
        %v2850 = vsel %vm539, %v2849, %v2848
        %v2851 = vrot.slane %v2642, 3
        %v2852 = vsel %vm541, %v2851, %v2850
        %v2853 = vrot.slane %v2643, 2
        %v2854 = vsel %vm543, %v2853, %v2852
        %v2855 = vrot.slane %v2644, 1
        %v2856 = vsel %vm545, %v2855, %v2854
        %v2857 = vrot.slane %v2646, 7
        %v2858 = vsel %vm534, %v2857, %v2645
        %v2859 = vrot.slane %v2647, 6
        %v2860 = vsel %vm535, %v2859, %v2858
        %v2861 = vrot.slane %v2648, 5
        %v2862 = vsel %vm537, %v2861, %v2860
        %v2863 = vrot.slane %v2649, 4
        %v2864 = vsel %vm539, %v2863, %v2862
        %v2865 = vrot.slane %v2650, 3
        %v2866 = vsel %vm541, %v2865, %v2864
        %v2867 = vrot.slane %v2651, 2
        %v2868 = vsel %vm543, %v2867, %v2866
        %v2869 = vrot.slane %v2652, 1
        %v2870 = vsel %vm545, %v2869, %v2868
        %v2871 = vrot.slane %v2654, 7
        %v2872 = vsel %vm534, %v2871, %v2653
        %v2873 = vrot.slane %v2655, 6
        %v2874 = vsel %vm535, %v2873, %v2872
        %v2875 = vrot.slane %v2656, 5
        %v2876 = vsel %vm537, %v2875, %v2874
        %v2877 = vrot.slane %v2657, 4
        %v2878 = vsel %vm539, %v2877, %v2876
        %v2879 = vrot.slane %v2658, 3
        %v2880 = vsel %vm541, %v2879, %v2878
        %v2881 = vrot.slane %v2659, 2
        %v2882 = vsel %vm543, %v2881, %v2880
        %v2883 = vrot.slane %v2660, 1
        %v2884 = vsel %vm545, %v2883, %v2882
        %v2885 = vrot.slane %v2662, 7
        %v2886 = vsel %vm534, %v2885, %v2661
        %v2887 = vrot.slane %v2663, 6
        %v2888 = vsel %vm535, %v2887, %v2886
        %v2889 = vrot.slane %v2664, 5
        %v2890 = vsel %vm537, %v2889, %v2888
        %v2891 = vrot.slane %v2665, 4
        %v2892 = vsel %vm539, %v2891, %v2890
        %v2893 = vrot.slane %v2666, 3
        %v2894 = vsel %vm541, %v2893, %v2892
        %v2895 = vrot.slane %v2667, 2
        %v2896 = vsel %vm543, %v2895, %v2894
        %v2897 = vrot.slane %v2668, 1
        %v2898 = vsel %vm545, %v2897, %v2896
        %v2903 = vmul.f32 %v2810, %v2856
        %v2904 = vmul.f32 %v2810, %v2870
        %v2905 = vmul.f32 %v2810, %v2884
        %v2906 = vmul.f32 %v2810, %v2898
        %v2907 = vadd.f32 %v2806, 1e-05
        %v2908 = vrsqrt.pop %v2907
        %v2909 = vlaneseq
        %v2910 = vshrl.u32 %v2909, 7
        %v2911 = vsub.s32 0, %v2910
        %v2912 = vrot.slane %v2908, %v2911
        %v2913 = vmul.f32 %v2903, %v2912
        %v2914 = vmul.f32 %v2904, %v2912
        %v2915 = vmul.f32 %v2905, %v2912
        %v2916 = vmul.f32 %v2906, %v2912
        %v2917 = vlaneseq
        %v2918 = vshrl.u32 %v2917, 7
        %v2919 = vsub.s32 5, %v2918
        %v2920 = vrot.slane %v394, %v2919
        %v2921 = vadd.f32 %v2913, %v2920
        %v2922 = vadd.f32 %v2914, %v2920
        %v2923 = vadd.f32 %v2915, %v2920
        %v2924 = vadd.f32 %v2916, %v2920
        %v2925 = vpack.c.bf16 %v2922, %v2921
        %v2926 = vpack.c.bf16 %v2924, %v2923
        %v2929 = vunpack.c.l.b16 %v391
        %v2930 = vunpack.c.l.b16 %v392
        %v2931 = vpack.c.b16 %v2930, %v2929
        %v2934 = vsel %vm481, %v2925, 0
        %v2937 = vsel %vm481, %v2926, 0
        %2939 = vmatprep.subr.bf16.mxu0 0
        %2940 = vmatpush1.bf16.msra.mxu0 %v2931
        %2941 = vmatprep.subr.bf16.mxu0 0
        %2942 = vmatpush1.bf16.msra.mxu0 0
        %2943 = vmatprep.subr.bf16.mxu0 0
        %2944 = vmatpush1.bf16.msra.mxu0 0
        %2945 = vmatprep.subr.bf16.mxu0 0
        %2946 = vmatpush1.bf16.msra.mxu0 0
        %2947 = vmatprep.subr.bf16.mxu0 0
        %2948 = vmatpush1.bf16.msra.mxu0 0
        %2949 = vmatprep.subr.bf16.mxu0 0
        %2950 = vmatpush1.bf16.msra.mxu0 0
        %2951 = vmatprep.subr.bf16.mxu0 0
        %2952 = vmatpush1.bf16.msra.mxu0 0
        %2953 = vmatprep.subr.bf16.mxu0 0
        %2954 = vmatpush1.bf16.msra.mxu0 0
        %2955 = vmatprep.subr.bf16.mxu0 0
        %2956 = vmatpush1.bf16.msra.mxu0 0
        %2957 = vmatprep.subr.bf16.mxu0 0
        %2958 = vmatpush1.bf16.msra.mxu0 0
        %2959 = vmatprep.subr.bf16.mxu0 0
        %2960 = vmatpush1.bf16.msra.mxu0 0
        %2961 = vmatprep.subr.bf16.mxu0 0
        %2962 = vmatpush1.bf16.msra.mxu0 0
        %2963 = vmatprep.subr.bf16.mxu0 0
        %2964 = vmatpush1.bf16.msra.mxu0 0
        %2965 = vmatprep.subr.bf16.mxu0 0
        %2966 = vmatpush1.bf16.msra.mxu0 0
        %2967 = vmatprep.subr.bf16.mxu0 0
        %2968 = vmatpush1.bf16.msra.mxu0 0
        %2969 = vmatprep.subr.bf16.mxu0 0
        %2970 = vmatpush1.bf16.msra.mxu0 0
        %2971 = vmatprep.mubr.bf16.mxu0 0
        %2972 = vmatmul.mubr.bf16.gmra.mrb[0].mxu0 %v2934
        %v2973 = vpop.f32.mrb[0].mxu0
        %v2974 = vadd.f32 0.0, %v2973
        %v2975 = vpop.f32.mrb[0].mxu0
        %v2976 = vpop.f32.mrb[0].mxu0
        %v2977 = vadd.f32 0.0, %v2976
        %v2978 = vpop.f32.mrb[0].mxu0
        %2979 = vmatprep.mubr.bf16.mxu0 0
        %2980 = vmatmul.mubr.bf16.gmra.mrb[0].mxu0 %v2937
        %v2981 = vpop.f32.mrb[0].mxu0
        %v2982 = vadd.f32 0.0, %v2981
        %v2983 = vpop.f32.mrb[0].mxu0
        %v2984 = vpop.f32.mrb[0].mxu0
        %v2985 = vadd.f32 0.0, %v2984
        %v2986 = vpop.f32.mrb[0].mxu0
        %2987 = vdwg.mxu0
        %v2988 = vlaneseq
        %v2989 = vshrl.u32 %v2988, 7
        %v2990 = vsub.s32 5, %v2989
        %v2991 = vrot.slane %v393, %v2990
        %v2992 = vmul.f32 %v2974, %v2991
        %v2993 = vmul.f32 %v2977, %v2991
        %v2994 = vmul.f32 %v2982, %v2991
        %v2995 = vmul.f32 %v2985, %v2991
        %v2996 = vsel %vm481, %v2992, 0.0
        %2997 = vadd.xlane.f32.xlu0 %v2996
        %v2998 = vpop.xlane.xlu0 %2997
        %v2999 = vsel %vm481, %v2993, 0.0
        %3000 = vadd.xlane.f32.xlu0 %v2999
        %v3001 = vpop.xlane.xlu0 %3000
        %v3002 = vsel %vm481, %v2994, 0.0
        %3003 = vadd.xlane.f32.xlu0 %v3002
        %v3004 = vpop.xlane.xlu0 %3003
        %v3005 = vsel %vm481, %v2995, 0.0
        %3006 = vadd.xlane.f32.xlu0 %v3005
        %v3007 = vpop.xlane.xlu0 %3006
        %v3008 = vlaneseq
        %v3009 = vshrl.u32 %v3008, 7
        %v3010 = vsub.s32 2, %v3009
        %v3011 = vrot.slane %v393, %v3010
        %v3012 = vmul.f32 %v2974, %v3011
        %v3013 = vmul.f32 %v2977, %v3011
        %v3014 = vmul.f32 %v2982, %v3011
        %v3015 = vmul.f32 %v2985, %v3011
        %v3016 = vsel %vm481, %v3012, 0.0
        %3017 = vadd.xlane.f32.xlu0 %v3016
        %v3018 = vpop.xlane.xlu0 %3017
        %v3019 = vsel %vm481, %v3013, 0.0
        %3020 = vadd.xlane.f32.xlu0 %v3019
        %v3021 = vpop.xlane.xlu0 %3020
        %v3022 = vsel %vm481, %v3014, 0.0
        %3023 = vadd.xlane.f32.xlu0 %v3022
        %v3024 = vpop.xlane.xlu0 %3023
        %v3025 = vsel %vm481, %v3015, 0.0
        %3026 = vadd.xlane.f32.xlu0 %v3025
        %v3027 = vpop.xlane.xlu0 %3026
        %v3032 = vlaneseq
        %v3033 = vshrl.u32 %v3032, 7
        %v3034 = vsub.s32 %v399, %v3033
        %v3035 = vrot.slane %v3018, %v3034
        %v3036 = vlaneseq
        %v3037 = vshrl.u32 %v3036, 7
        %v3038 = vsub.s32 %v399, %v3037
        %v3039 = vrot.slane %v3021, %v3038
        %v3040 = vlaneseq
        %v3041 = vshrl.u32 %v3040, 7
        %v3042 = vsub.s32 %v399, %v3041
        %v3043 = vrot.slane %v3024, %v3042
        %v3044 = vlaneseq
        %v3045 = vshrl.u32 %v3044, 7
        %v3046 = vsub.s32 %v399, %v3045
        %v3047 = vrot.slane %v3027, %v3046
        %v3048 = vsel %vm535, %v3035, %v3035
        %v3049 = vsel %vm537, %v3035, %v3048
        %v3050 = vsel %vm539, %v3035, %v3049
        %v3051 = vsel %vm541, %v3035, %v3050
        %v3052 = vsel %vm543, %v3035, %v3051
        %v3053 = vsel %vm545, %v3035, %v3052
        %v3054 = vsel %vm535, %v3039, %v3039
        %v3055 = vsel %vm537, %v3039, %v3054
        %v3056 = vsel %vm539, %v3039, %v3055
        %v3057 = vsel %vm541, %v3039, %v3056
        %v3058 = vsel %vm543, %v3039, %v3057
        %v3059 = vsel %vm545, %v3039, %v3058
        %v3060 = vsel %vm535, %v3043, %v3043
        %v3061 = vsel %vm537, %v3043, %v3060
        %v3062 = vsel %vm539, %v3043, %v3061
        %v3063 = vsel %vm541, %v3043, %v3062
        %v3064 = vsel %vm543, %v3043, %v3063
        %v3065 = vsel %vm545, %v3043, %v3064
        %v3066 = vsel %vm535, %v3047, %v3047
        %v3067 = vsel %vm537, %v3047, %v3066
        %v3068 = vsel %vm539, %v3047, %v3067
        %v3069 = vsel %vm541, %v3047, %v3068
        %v3070 = vsel %vm543, %v3047, %v3069
        %v3071 = vsel %vm545, %v3047, %v3070
        %v3076 = vadd.f32 %v2998, %v3053
        %v3077 = vadd.f32 %v3001, %v3059
        %v3078 = vadd.f32 %v3004, %v3065
        %v3079 = vadd.f32 %v3007, %v3071
        %vm3080 = vcmp.gt.f32.partialorder %v3076, 0.0
        %vm3081 = vcmp.gt.f32.partialorder %v3077, 0.0
        %vm3082 = vcmp.gt.f32.partialorder %v3078, 0.0
        %vm3083 = vcmp.gt.f32.partialorder %v3079, 0.0
        %v3084 = vmul.f32 %v3076, 0.2
        %v3085 = vmul.f32 %v3077, 0.2
        %v3086 = vmul.f32 %v3078, 0.2
        %v3087 = vmul.f32 %v3079, 0.2
        %v3088 = vsel %vm3080, %v3076, %v3084
        %v3089 = vsel %vm3081, %v3077, %v3085
        %v3090 = vsel %vm3082, %v3078, %v3086
        %v3091 = vsel %vm3083, %v3079, %v3087
        %v3092 = vsel %vm407, %v3088, -1e+30
        %v3093 = vsel %vm408, %v3089, -1e+30
        %v3094 = vsel %vm409, %v3090, -1e+30
        %v3095 = vsel %vm410, %v3091, -1e+30
        %v3096 = vsel %vm413, %v3092, -inf
        %3097 = vmax.xlane.f32.xlu0 %v3096
        %v3098 = vpop.xlane.xlu0 %3097
        %v3099 = vsel %vm413, %v3093, -inf
        %3100 = vmax.xlane.f32.xlu0 %v3099
        %v3101 = vpop.xlane.xlu0 %3100
        %v3102 = vsel %vm413, %v3094, -inf
        %3103 = vmax.xlane.f32.xlu0 %v3102
        %v3104 = vpop.xlane.xlu0 %3103
        %v3105 = vsel %vm413, %v3095, -inf
        %3106 = vmax.xlane.f32.xlu0 %v3105
        %v3107 = vpop.xlane.xlu0 %3106
        %v3108 = vsub.f32 %v3092, %v3098
        %v3109 = vsub.f32 %v3093, %v3101
        %v3110 = vsub.f32 %v3094, %v3104
        %v3111 = vsub.f32 %v3095, %v3107
        %v3112 = vmul.f32 %v3108, 1.442695
        %v3113 = vpow.pop %v3112
        %v3114 = vmul.f32 %v3109, 1.442695
        %v3115 = vpow.pop %v3114
        %v3116 = vmul.f32 %v3110, 1.442695
        %v3117 = vpow.pop %v3116
        %v3118 = vmul.f32 %v3111, 1.442695
        %v3119 = vpow.pop %v3118
        %v3120 = vsel %vm413, %v3113, 0.0
        %3121 = vadd.xlane.f32.xlu0 %v3120
        %v3122 = vpop.xlane.xlu0 %3121
        %v3123 = vsel %vm413, %v3115, 0.0
        %3124 = vadd.xlane.f32.xlu0 %v3123
        %v3125 = vpop.xlane.xlu0 %3124
        %v3126 = vsel %vm413, %v3117, 0.0
        %3127 = vadd.xlane.f32.xlu0 %v3126
        %v3128 = vpop.xlane.xlu0 %3127
        %v3129 = vsel %vm413, %v3119, 0.0
        %3130 = vadd.xlane.f32.xlu0 %v3129
        %v3131 = vpop.xlane.xlu0 %3130
        %v3132 = vlaneseq
        %v3133 = vshrl.u32 %v3132, 7
        %v3134 = vsub.s32 0, %v3133
        %v3135 = vrot.slane %v3113, %v3134
        %3137 = vbcast.lane.b32.xlu0 %v3135, 256
        %v3138 = vpop.permute.xlu0 %3137
        %v3139 = vlaneseq
        %v3140 = vshrl.u32 %v3139, 7
        %v3141 = vsub.s32 1, %v3140
        %v3142 = vrot.slane %v3113, %v3141
        %3144 = vbcast.lane.b32.xlu0 %v3142, 256
        %v3145 = vpop.permute.xlu0 %3144
        %v3146 = vlaneseq
        %v3147 = vshrl.u32 %v3146, 7
        %v3148 = vsub.s32 2, %v3147
        %v3149 = vrot.slane %v3113, %v3148
        %3151 = vbcast.lane.b32.xlu0 %v3149, 256
        %v3152 = vpop.permute.xlu0 %3151
        %v3153 = vlaneseq
        %v3154 = vshrl.u32 %v3153, 7
        %v3155 = vsub.s32 3, %v3154
        %v3156 = vrot.slane %v3113, %v3155
        %3158 = vbcast.lane.b32.xlu0 %v3156, 256
        %v3159 = vpop.permute.xlu0 %3158
        %v3160 = vlaneseq
        %v3161 = vshrl.u32 %v3160, 7
        %v3162 = vsub.s32 4, %v3161
        %v3163 = vrot.slane %v3113, %v3162
        %3165 = vbcast.lane.b32.xlu0 %v3163, 256
        %v3166 = vpop.permute.xlu0 %3165
        %v3167 = vlaneseq
        %v3168 = vshrl.u32 %v3167, 7
        %v3169 = vsub.s32 5, %v3168
        %v3170 = vrot.slane %v3113, %v3169
        %3172 = vbcast.lane.b32.xlu0 %v3170, 256
        %v3173 = vpop.permute.xlu0 %3172
        %v3174 = vlaneseq
        %v3175 = vshrl.u32 %v3174, 7
        %v3176 = vsub.s32 6, %v3175
        %v3177 = vrot.slane %v3113, %v3176
        %3179 = vbcast.lane.b32.xlu0 %v3177, 256
        %v3180 = vpop.permute.xlu0 %3179
        %v3181 = vlaneseq
        %v3182 = vshrl.u32 %v3181, 7
        %v3183 = vsub.s32 7, %v3182
        %v3184 = vrot.slane %v3113, %v3183
        %3186 = vbcast.lane.b32.xlu0 %v3184, 256
        %v3187 = vpop.permute.xlu0 %3186
        %v3188 = vlaneseq
        %v3189 = vshrl.u32 %v3188, 7
        %v3190 = vsub.s32 0, %v3189
        %v3191 = vrot.slane %v3115, %v3190
        %3193 = vbcast.lane.b32.xlu0 %v3191, 256
        %v3194 = vpop.permute.xlu0 %3193
        %v3195 = vlaneseq
        %v3196 = vshrl.u32 %v3195, 7
        %v3197 = vsub.s32 1, %v3196
        %v3198 = vrot.slane %v3115, %v3197
        %3200 = vbcast.lane.b32.xlu0 %v3198, 256
        %v3201 = vpop.permute.xlu0 %3200
        %v3202 = vlaneseq
        %v3203 = vshrl.u32 %v3202, 7
        %v3204 = vsub.s32 2, %v3203
        %v3205 = vrot.slane %v3115, %v3204
        %3207 = vbcast.lane.b32.xlu0 %v3205, 256
        %v3208 = vpop.permute.xlu0 %3207
        %v3209 = vlaneseq
        %v3210 = vshrl.u32 %v3209, 7
        %v3211 = vsub.s32 3, %v3210
        %v3212 = vrot.slane %v3115, %v3211
        %3214 = vbcast.lane.b32.xlu0 %v3212, 256
        %v3215 = vpop.permute.xlu0 %3214
        %v3216 = vlaneseq
        %v3217 = vshrl.u32 %v3216, 7
        %v3218 = vsub.s32 4, %v3217
        %v3219 = vrot.slane %v3115, %v3218
        %3221 = vbcast.lane.b32.xlu0 %v3219, 256
        %v3222 = vpop.permute.xlu0 %3221
        %v3223 = vlaneseq
        %v3224 = vshrl.u32 %v3223, 7
        %v3225 = vsub.s32 5, %v3224
        %v3226 = vrot.slane %v3115, %v3225
        %3228 = vbcast.lane.b32.xlu0 %v3226, 256
        %v3229 = vpop.permute.xlu0 %3228
        %v3230 = vlaneseq
        %v3231 = vshrl.u32 %v3230, 7
        %v3232 = vsub.s32 6, %v3231
        %v3233 = vrot.slane %v3115, %v3232
        %3235 = vbcast.lane.b32.xlu0 %v3233, 256
        %v3236 = vpop.permute.xlu0 %3235
        %v3237 = vlaneseq
        %v3238 = vshrl.u32 %v3237, 7
        %v3239 = vsub.s32 7, %v3238
        %v3240 = vrot.slane %v3115, %v3239
        %3242 = vbcast.lane.b32.xlu0 %v3240, 256
        %v3243 = vpop.permute.xlu0 %3242
        %v3244 = vlaneseq
        %v3245 = vshrl.u32 %v3244, 7
        %v3246 = vsub.s32 0, %v3245
        %v3247 = vrot.slane %v3117, %v3246
        %3249 = vbcast.lane.b32.xlu0 %v3247, 256
        %v3250 = vpop.permute.xlu0 %3249
        %v3251 = vlaneseq
        %v3252 = vshrl.u32 %v3251, 7
        %v3253 = vsub.s32 1, %v3252
        %v3254 = vrot.slane %v3117, %v3253
        %3256 = vbcast.lane.b32.xlu0 %v3254, 256
        %v3257 = vpop.permute.xlu0 %3256
        %v3258 = vlaneseq
        %v3259 = vshrl.u32 %v3258, 7
        %v3260 = vsub.s32 2, %v3259
        %v3261 = vrot.slane %v3117, %v3260
        %3263 = vbcast.lane.b32.xlu0 %v3261, 256
        %v3264 = vpop.permute.xlu0 %3263
        %v3265 = vlaneseq
        %v3266 = vshrl.u32 %v3265, 7
        %v3267 = vsub.s32 3, %v3266
        %v3268 = vrot.slane %v3117, %v3267
        %3270 = vbcast.lane.b32.xlu0 %v3268, 256
        %v3271 = vpop.permute.xlu0 %3270
        %v3272 = vlaneseq
        %v3273 = vshrl.u32 %v3272, 7
        %v3274 = vsub.s32 4, %v3273
        %v3275 = vrot.slane %v3117, %v3274
        %3277 = vbcast.lane.b32.xlu0 %v3275, 256
        %v3278 = vpop.permute.xlu0 %3277
        %v3279 = vlaneseq
        %v3280 = vshrl.u32 %v3279, 7
        %v3281 = vsub.s32 5, %v3280
        %v3282 = vrot.slane %v3117, %v3281
        %3284 = vbcast.lane.b32.xlu0 %v3282, 256
        %v3285 = vpop.permute.xlu0 %3284
        %v3286 = vlaneseq
        %v3287 = vshrl.u32 %v3286, 7
        %v3288 = vsub.s32 6, %v3287
        %v3289 = vrot.slane %v3117, %v3288
        %3291 = vbcast.lane.b32.xlu0 %v3289, 256
        %v3292 = vpop.permute.xlu0 %3291
        %v3293 = vlaneseq
        %v3294 = vshrl.u32 %v3293, 7
        %v3295 = vsub.s32 7, %v3294
        %v3296 = vrot.slane %v3117, %v3295
        %3298 = vbcast.lane.b32.xlu0 %v3296, 256
        %v3299 = vpop.permute.xlu0 %3298
        %v3300 = vlaneseq
        %v3301 = vshrl.u32 %v3300, 7
        %v3302 = vsub.s32 0, %v3301
        %v3303 = vrot.slane %v3119, %v3302
        %3305 = vbcast.lane.b32.xlu0 %v3303, 256
        %v3306 = vpop.permute.xlu0 %3305
        %v3307 = vlaneseq
        %v3308 = vshrl.u32 %v3307, 7
        %v3309 = vsub.s32 1, %v3308
        %v3310 = vrot.slane %v3119, %v3309
        %3312 = vbcast.lane.b32.xlu0 %v3310, 256
        %v3313 = vpop.permute.xlu0 %3312
        %v3314 = vlaneseq
        %v3315 = vshrl.u32 %v3314, 7
        %v3316 = vsub.s32 2, %v3315
        %v3317 = vrot.slane %v3119, %v3316
        %3319 = vbcast.lane.b32.xlu0 %v3317, 256
        %v3320 = vpop.permute.xlu0 %3319
        %v3321 = vlaneseq
        %v3322 = vshrl.u32 %v3321, 7
        %v3323 = vsub.s32 3, %v3322
        %v3324 = vrot.slane %v3119, %v3323
        %3326 = vbcast.lane.b32.xlu0 %v3324, 256
        %v3327 = vpop.permute.xlu0 %3326
        %v3328 = vlaneseq
        %v3329 = vshrl.u32 %v3328, 7
        %v3330 = vsub.s32 4, %v3329
        %v3331 = vrot.slane %v3119, %v3330
        %3333 = vbcast.lane.b32.xlu0 %v3331, 256
        %v3334 = vpop.permute.xlu0 %3333
        %v3335 = vlaneseq
        %v3336 = vshrl.u32 %v3335, 7
        %v3337 = vsub.s32 5, %v3336
        %v3338 = vrot.slane %v3119, %v3337
        %3340 = vbcast.lane.b32.xlu0 %v3338, 256
        %v3341 = vpop.permute.xlu0 %3340
        %v3342 = vlaneseq
        %v3343 = vshrl.u32 %v3342, 7
        %v3344 = vsub.s32 6, %v3343
        %v3345 = vrot.slane %v3119, %v3344
        %3347 = vbcast.lane.b32.xlu0 %v3345, 256
        %v3348 = vpop.permute.xlu0 %3347
        %v3349 = vlaneseq
        %v3350 = vshrl.u32 %v3349, 7
        %v3351 = vsub.s32 7, %v3350
        %v3352 = vrot.slane %v3119, %v3351
        %3354 = vbcast.lane.b32.xlu0 %v3352, 256
        %v3355 = vpop.permute.xlu0 %3354
        %v3356 = vmul.f32 %v3138, %v2974
        %v3357 = vmul.f32 %v3145, %v2974
        %v3358 = vmul.f32 %v3152, %v2974
        %v3359 = vmul.f32 %v3159, %v2974
        %v3360 = vmul.f32 %v3166, %v2974
        %v3361 = vmul.f32 %v3173, %v2974
        %v3362 = vmul.f32 %v3180, %v2974
        %v3363 = vmul.f32 %v3187, %v2974
        %v3364 = vmul.f32 %v3194, %v2977
        %v3365 = vmul.f32 %v3201, %v2977
        %v3366 = vmul.f32 %v3208, %v2977
        %v3367 = vmul.f32 %v3215, %v2977
        %v3368 = vmul.f32 %v3222, %v2977
        %v3369 = vmul.f32 %v3229, %v2977
        %v3370 = vmul.f32 %v3236, %v2977
        %v3371 = vmul.f32 %v3243, %v2977
        %v3372 = vmul.f32 %v3250, %v2982
        %v3373 = vmul.f32 %v3257, %v2982
        %v3374 = vmul.f32 %v3264, %v2982
        %v3375 = vmul.f32 %v3271, %v2982
        %v3376 = vmul.f32 %v3278, %v2982
        %v3377 = vmul.f32 %v3285, %v2982
        %v3378 = vmul.f32 %v3292, %v2982
        %v3379 = vmul.f32 %v3299, %v2982
        %v3380 = vmul.f32 %v3306, %v2985
        %v3381 = vmul.f32 %v3313, %v2985
        %v3382 = vmul.f32 %v3320, %v2985
        %v3383 = vmul.f32 %v3327, %v2985
        %v3384 = vmul.f32 %v3334, %v2985
        %v3385 = vmul.f32 %v3341, %v2985
        %v3386 = vmul.f32 %v3348, %v2985
        %v3387 = vmul.f32 %v3355, %v2985
        %v3388 = vsel %vm481, %v3356, 0.0
        %v3389 = vrot.slane %v3388, 4
        %v3390 = vadd.f32 %v3388, %v3389
        %v3391 = vrot.slane %v3390, 2
        %v3392 = vadd.f32 %v3390, %v3391
        %v3393 = vrot.slane %v3392, 1
        %v3394 = vadd.f32 %v3392, %v3393
        %v3395 = vsel %vm481, %v3357, 0.0
        %v3396 = vrot.slane %v3395, 4
        %v3397 = vadd.f32 %v3395, %v3396
        %v3398 = vrot.slane %v3397, 2
        %v3399 = vadd.f32 %v3397, %v3398
        %v3400 = vrot.slane %v3399, 1
        %v3401 = vadd.f32 %v3399, %v3400
        %v3402 = vsel %vm481, %v3358, 0.0
        %v3403 = vrot.slane %v3402, 4
        %v3404 = vadd.f32 %v3402, %v3403
        %v3405 = vrot.slane %v3404, 2
        %v3406 = vadd.f32 %v3404, %v3405
        %v3407 = vrot.slane %v3406, 1
        %v3408 = vadd.f32 %v3406, %v3407
        %v3409 = vsel %vm481, %v3359, 0.0
        %v3410 = vrot.slane %v3409, 4
        %v3411 = vadd.f32 %v3409, %v3410
        %v3412 = vrot.slane %v3411, 2
        %v3413 = vadd.f32 %v3411, %v3412
        %v3414 = vrot.slane %v3413, 1
        %v3415 = vadd.f32 %v3413, %v3414
        %v3416 = vsel %vm481, %v3360, 0.0
        %v3417 = vrot.slane %v3416, 4
        %v3418 = vadd.f32 %v3416, %v3417
        %v3419 = vrot.slane %v3418, 2
        %v3420 = vadd.f32 %v3418, %v3419
        %v3421 = vrot.slane %v3420, 1
        %v3422 = vadd.f32 %v3420, %v3421
        %v3423 = vsel %vm481, %v3361, 0.0
        %v3424 = vrot.slane %v3423, 4
        %v3425 = vadd.f32 %v3423, %v3424
        %v3426 = vrot.slane %v3425, 2
        %v3427 = vadd.f32 %v3425, %v3426
        %v3428 = vrot.slane %v3427, 1
        %v3429 = vadd.f32 %v3427, %v3428
        %v3430 = vsel %vm481, %v3362, 0.0
        %v3431 = vrot.slane %v3430, 4
        %v3432 = vadd.f32 %v3430, %v3431
        %v3433 = vrot.slane %v3432, 2
        %v3434 = vadd.f32 %v3432, %v3433
        %v3435 = vrot.slane %v3434, 1
        %v3436 = vadd.f32 %v3434, %v3435
        %v3437 = vsel %vm481, %v3363, 0.0
        %v3438 = vrot.slane %v3437, 4
        %v3439 = vadd.f32 %v3437, %v3438
        %v3440 = vrot.slane %v3439, 2
        %v3441 = vadd.f32 %v3439, %v3440
        %v3442 = vrot.slane %v3441, 1
        %v3443 = vadd.f32 %v3441, %v3442
        %v3444 = vsel %vm481, %v3364, 0.0
        %v3445 = vrot.slane %v3444, 4
        %v3446 = vadd.f32 %v3444, %v3445
        %v3447 = vrot.slane %v3446, 2
        %v3448 = vadd.f32 %v3446, %v3447
        %v3449 = vrot.slane %v3448, 1
        %v3450 = vadd.f32 %v3448, %v3449
        %v3451 = vsel %vm481, %v3365, 0.0
        %v3452 = vrot.slane %v3451, 4
        %v3453 = vadd.f32 %v3451, %v3452
        %v3454 = vrot.slane %v3453, 2
        %v3455 = vadd.f32 %v3453, %v3454
        %v3456 = vrot.slane %v3455, 1
        %v3457 = vadd.f32 %v3455, %v3456
        %v3458 = vsel %vm481, %v3366, 0.0
        %v3459 = vrot.slane %v3458, 4
        %v3460 = vadd.f32 %v3458, %v3459
        %v3461 = vrot.slane %v3460, 2
        %v3462 = vadd.f32 %v3460, %v3461
        %v3463 = vrot.slane %v3462, 1
        %v3464 = vadd.f32 %v3462, %v3463
        %v3465 = vsel %vm481, %v3367, 0.0
        %v3466 = vrot.slane %v3465, 4
        %v3467 = vadd.f32 %v3465, %v3466
        %v3468 = vrot.slane %v3467, 2
        %v3469 = vadd.f32 %v3467, %v3468
        %v3470 = vrot.slane %v3469, 1
        %v3471 = vadd.f32 %v3469, %v3470
        %v3472 = vsel %vm481, %v3368, 0.0
        %v3473 = vrot.slane %v3472, 4
        %v3474 = vadd.f32 %v3472, %v3473
        %v3475 = vrot.slane %v3474, 2
        %v3476 = vadd.f32 %v3474, %v3475
        %v3477 = vrot.slane %v3476, 1
        %v3478 = vadd.f32 %v3476, %v3477
        %v3479 = vsel %vm481, %v3369, 0.0
        %v3480 = vrot.slane %v3479, 4
        %v3481 = vadd.f32 %v3479, %v3480
        %v3482 = vrot.slane %v3481, 2
        %v3483 = vadd.f32 %v3481, %v3482
        %v3484 = vrot.slane %v3483, 1
        %v3485 = vadd.f32 %v3483, %v3484
        %v3486 = vsel %vm481, %v3370, 0.0
        %v3487 = vrot.slane %v3486, 4
        %v3488 = vadd.f32 %v3486, %v3487
        %v3489 = vrot.slane %v3488, 2
        %v3490 = vadd.f32 %v3488, %v3489
        %v3491 = vrot.slane %v3490, 1
        %v3492 = vadd.f32 %v3490, %v3491
        %v3493 = vsel %vm481, %v3371, 0.0
        %v3494 = vrot.slane %v3493, 4
        %v3495 = vadd.f32 %v3493, %v3494
        %v3496 = vrot.slane %v3495, 2
        %v3497 = vadd.f32 %v3495, %v3496
        %v3498 = vrot.slane %v3497, 1
        %v3499 = vadd.f32 %v3497, %v3498
        %v3500 = vsel %vm481, %v3372, 0.0
        %v3501 = vrot.slane %v3500, 4
        %v3502 = vadd.f32 %v3500, %v3501
        %v3503 = vrot.slane %v3502, 2
        %v3504 = vadd.f32 %v3502, %v3503
        %v3505 = vrot.slane %v3504, 1
        %v3506 = vadd.f32 %v3504, %v3505
        %v3507 = vsel %vm481, %v3373, 0.0
        %v3508 = vrot.slane %v3507, 4
        %v3509 = vadd.f32 %v3507, %v3508
        %v3510 = vrot.slane %v3509, 2
        %v3511 = vadd.f32 %v3509, %v3510
        %v3512 = vrot.slane %v3511, 1
        %v3513 = vadd.f32 %v3511, %v3512
        %v3514 = vsel %vm481, %v3374, 0.0
        %v3515 = vrot.slane %v3514, 4
        %v3516 = vadd.f32 %v3514, %v3515
        %v3517 = vrot.slane %v3516, 2
        %v3518 = vadd.f32 %v3516, %v3517
        %v3519 = vrot.slane %v3518, 1
        %v3520 = vadd.f32 %v3518, %v3519
        %v3521 = vsel %vm481, %v3375, 0.0
        %v3522 = vrot.slane %v3521, 4
        %v3523 = vadd.f32 %v3521, %v3522
        %v3524 = vrot.slane %v3523, 2
        %v3525 = vadd.f32 %v3523, %v3524
        %v3526 = vrot.slane %v3525, 1
        %v3527 = vadd.f32 %v3525, %v3526
        %v3528 = vsel %vm481, %v3376, 0.0
        %v3529 = vrot.slane %v3528, 4
        %v3530 = vadd.f32 %v3528, %v3529
        %v3531 = vrot.slane %v3530, 2
        %v3532 = vadd.f32 %v3530, %v3531
        %v3533 = vrot.slane %v3532, 1
        %v3534 = vadd.f32 %v3532, %v3533
        %v3535 = vsel %vm481, %v3377, 0.0
        %v3536 = vrot.slane %v3535, 4
        %v3537 = vadd.f32 %v3535, %v3536
        %v3538 = vrot.slane %v3537, 2
        %v3539 = vadd.f32 %v3537, %v3538
        %v3540 = vrot.slane %v3539, 1
        %v3541 = vadd.f32 %v3539, %v3540
        %v3542 = vsel %vm481, %v3378, 0.0
        %v3543 = vrot.slane %v3542, 4
        %v3544 = vadd.f32 %v3542, %v3543
        %v3545 = vrot.slane %v3544, 2
        %v3546 = vadd.f32 %v3544, %v3545
        %v3547 = vrot.slane %v3546, 1
        %v3548 = vadd.f32 %v3546, %v3547
        %v3549 = vsel %vm481, %v3379, 0.0
        %v3550 = vrot.slane %v3549, 4
        %v3551 = vadd.f32 %v3549, %v3550
        %v3552 = vrot.slane %v3551, 2
        %v3553 = vadd.f32 %v3551, %v3552
        %v3554 = vrot.slane %v3553, 1
        %v3555 = vadd.f32 %v3553, %v3554
        %v3556 = vsel %vm481, %v3380, 0.0
        %v3557 = vrot.slane %v3556, 4
        %v3558 = vadd.f32 %v3556, %v3557
        %v3559 = vrot.slane %v3558, 2
        %v3560 = vadd.f32 %v3558, %v3559
        %v3561 = vrot.slane %v3560, 1
        %v3562 = vadd.f32 %v3560, %v3561
        %v3563 = vsel %vm481, %v3381, 0.0
        %v3564 = vrot.slane %v3563, 4
        %v3565 = vadd.f32 %v3563, %v3564
        %v3566 = vrot.slane %v3565, 2
        %v3567 = vadd.f32 %v3565, %v3566
        %v3568 = vrot.slane %v3567, 1
        %v3569 = vadd.f32 %v3567, %v3568
        %v3570 = vsel %vm481, %v3382, 0.0
        %v3571 = vrot.slane %v3570, 4
        %v3572 = vadd.f32 %v3570, %v3571
        %v3573 = vrot.slane %v3572, 2
        %v3574 = vadd.f32 %v3572, %v3573
        %v3575 = vrot.slane %v3574, 1
        %v3576 = vadd.f32 %v3574, %v3575
        %v3577 = vsel %vm481, %v3383, 0.0
        %v3578 = vrot.slane %v3577, 4
        %v3579 = vadd.f32 %v3577, %v3578
        %v3580 = vrot.slane %v3579, 2
        %v3581 = vadd.f32 %v3579, %v3580
        %v3582 = vrot.slane %v3581, 1
        %v3583 = vadd.f32 %v3581, %v3582
        %v3584 = vsel %vm481, %v3384, 0.0
        %v3585 = vrot.slane %v3584, 4
        %v3586 = vadd.f32 %v3584, %v3585
        %v3587 = vrot.slane %v3586, 2
        %v3588 = vadd.f32 %v3586, %v3587
        %v3589 = vrot.slane %v3588, 1
        %v3590 = vadd.f32 %v3588, %v3589
        %v3591 = vsel %vm481, %v3385, 0.0
        %v3592 = vrot.slane %v3591, 4
        %v3593 = vadd.f32 %v3591, %v3592
        %v3594 = vrot.slane %v3593, 2
        %v3595 = vadd.f32 %v3593, %v3594
        %v3596 = vrot.slane %v3595, 1
        %v3597 = vadd.f32 %v3595, %v3596
        %v3598 = vsel %vm481, %v3386, 0.0
        %v3599 = vrot.slane %v3598, 4
        %v3600 = vadd.f32 %v3598, %v3599
        %v3601 = vrot.slane %v3600, 2
        %v3602 = vadd.f32 %v3600, %v3601
        %v3603 = vrot.slane %v3602, 1
        %v3604 = vadd.f32 %v3602, %v3603
        %v3605 = vsel %vm481, %v3387, 0.0
        %v3606 = vrot.slane %v3605, 4
        %v3607 = vadd.f32 %v3605, %v3606
        %v3608 = vrot.slane %v3607, 2
        %v3609 = vadd.f32 %v3607, %v3608
        %v3610 = vrot.slane %v3609, 1
        %v3611 = vadd.f32 %v3609, %v3610
        %v3612 = vrcp.pop %v3122
        %v3613 = vrcp.pop %v3125
        %v3614 = vrcp.pop %v3128
        %v3615 = vrcp.pop %v3131
        %v3620 = vrot.slane %v3612, 1
        %v3621 = vrot.slane %v3612, 2
        %v3622 = vrot.slane %v3612, 3
        %v3623 = vrot.slane %v3612, 4
        %v3624 = vrot.slane %v3612, 5
        %v3625 = vrot.slane %v3612, 6
        %v3626 = vrot.slane %v3612, 7
        %v3627 = vrot.slane %v3613, 1
        %v3628 = vrot.slane %v3613, 2
        %v3629 = vrot.slane %v3613, 3
        %v3630 = vrot.slane %v3613, 4
        %v3631 = vrot.slane %v3613, 5
        %v3632 = vrot.slane %v3613, 6
        %v3633 = vrot.slane %v3613, 7
        %v3634 = vrot.slane %v3614, 1
        %v3635 = vrot.slane %v3614, 2
        %v3636 = vrot.slane %v3614, 3
        %v3637 = vrot.slane %v3614, 4
        %v3638 = vrot.slane %v3614, 5
        %v3639 = vrot.slane %v3614, 6
        %v3640 = vrot.slane %v3614, 7
        %v3641 = vrot.slane %v3615, 1
        %v3642 = vrot.slane %v3615, 2
        %v3643 = vrot.slane %v3615, 3
        %v3644 = vrot.slane %v3615, 4
        %v3645 = vrot.slane %v3615, 5
        %v3646 = vrot.slane %v3615, 6
        %v3647 = vrot.slane %v3615, 7
        %v3680 = vmul.f32 %v3394, %v3612
        %v3681 = vmul.f32 %v3401, %v3620
        %v3682 = vmul.f32 %v3408, %v3621
        %v3683 = vmul.f32 %v3415, %v3622
        %v3684 = vmul.f32 %v3422, %v3623
        %v3685 = vmul.f32 %v3429, %v3624
        %v3686 = vmul.f32 %v3436, %v3625
        %v3687 = vmul.f32 %v3443, %v3626
        %v3688 = vmul.f32 %v3450, %v3613
        %v3689 = vmul.f32 %v3457, %v3627
        %v3690 = vmul.f32 %v3464, %v3628
        %v3691 = vmul.f32 %v3471, %v3629
        %v3692 = vmul.f32 %v3478, %v3630
        %v3693 = vmul.f32 %v3485, %v3631
        %v3694 = vmul.f32 %v3492, %v3632
        %v3695 = vmul.f32 %v3499, %v3633
        %v3696 = vmul.f32 %v3506, %v3614
        %v3697 = vmul.f32 %v3513, %v3634
        %v3698 = vmul.f32 %v3520, %v3635
        %v3699 = vmul.f32 %v3527, %v3636
        %v3700 = vmul.f32 %v3534, %v3637
        %v3701 = vmul.f32 %v3541, %v3638
        %v3702 = vmul.f32 %v3548, %v3639
        %v3703 = vmul.f32 %v3555, %v3640
        %v3704 = vmul.f32 %v3562, %v3615
        %v3705 = vmul.f32 %v3569, %v3641
        %v3706 = vmul.f32 %v3576, %v3642
        %v3707 = vmul.f32 %v3583, %v3643
        %v3708 = vmul.f32 %v3590, %v3644
        %v3709 = vmul.f32 %v3597, %v3645
        %v3710 = vmul.f32 %v3604, %v3646
        %v3711 = vmul.f32 %v3611, %v3647
        %v3712 = vlaneseq
        %v3713 = vshrl.u32 %v3712, 7
        %v3714 = vsub.s32 0, %v3713
        %v3715 = vrot.slane %v394, %v3714
        %v3716 = vadd.f32 %v3680, %v3715
        %v3717 = vadd.f32 %v3681, %v3715
        %v3718 = vadd.f32 %v3682, %v3715
        %v3719 = vadd.f32 %v3683, %v3715
        %v3720 = vadd.f32 %v3684, %v3715
        %v3721 = vadd.f32 %v3685, %v3715
        %v3722 = vadd.f32 %v3686, %v3715
        %v3723 = vadd.f32 %v3687, %v3715
        %v3724 = vadd.f32 %v3688, %v3715
        %v3725 = vadd.f32 %v3689, %v3715
        %v3726 = vadd.f32 %v3690, %v3715
        %v3727 = vadd.f32 %v3691, %v3715
        %v3728 = vadd.f32 %v3692, %v3715
        %v3729 = vadd.f32 %v3693, %v3715
        %v3730 = vadd.f32 %v3694, %v3715
        %v3731 = vadd.f32 %v3695, %v3715
        %v3732 = vadd.f32 %v3696, %v3715
        %v3733 = vadd.f32 %v3697, %v3715
        %v3734 = vadd.f32 %v3698, %v3715
        %v3735 = vadd.f32 %v3699, %v3715
        %v3736 = vadd.f32 %v3700, %v3715
        %v3737 = vadd.f32 %v3701, %v3715
        %v3738 = vadd.f32 %v3702, %v3715
        %v3739 = vadd.f32 %v3703, %v3715
        %v3740 = vadd.f32 %v3704, %v3715
        %v3741 = vadd.f32 %v3705, %v3715
        %v3742 = vadd.f32 %v3706, %v3715
        %v3743 = vadd.f32 %v3707, %v3715
        %v3744 = vadd.f32 %v3708, %v3715
        %v3745 = vadd.f32 %v3709, %v3715
        %v3746 = vadd.f32 %v3710, %v3715
        %v3747 = vadd.f32 %v3711, %v3715
        %v3748 = vmax.f32 %v3716, 0.0
        %v3749 = vmax.f32 %v3717, 0.0
        %v3750 = vmax.f32 %v3718, 0.0
        %v3751 = vmax.f32 %v3719, 0.0
        %v3752 = vmax.f32 %v3720, 0.0
        %v3753 = vmax.f32 %v3721, 0.0
        %v3754 = vmax.f32 %v3722, 0.0
        %v3755 = vmax.f32 %v3723, 0.0
        %v3756 = vmax.f32 %v3724, 0.0
        %v3757 = vmax.f32 %v3725, 0.0
        %v3758 = vmax.f32 %v3726, 0.0
        %v3759 = vmax.f32 %v3727, 0.0
        %v3760 = vmax.f32 %v3728, 0.0
        %v3761 = vmax.f32 %v3729, 0.0
        %v3762 = vmax.f32 %v3730, 0.0
        %v3763 = vmax.f32 %v3731, 0.0
        %v3764 = vmax.f32 %v3732, 0.0
        %v3765 = vmax.f32 %v3733, 0.0
        %v3766 = vmax.f32 %v3734, 0.0
        %v3767 = vmax.f32 %v3735, 0.0
        %v3768 = vmax.f32 %v3736, 0.0
        %v3769 = vmax.f32 %v3737, 0.0
        %v3770 = vmax.f32 %v3738, 0.0
        %v3771 = vmax.f32 %v3739, 0.0
        %v3772 = vmax.f32 %v3740, 0.0
        %v3773 = vmax.f32 %v3741, 0.0
        %v3774 = vmax.f32 %v3742, 0.0
        %v3775 = vmax.f32 %v3743, 0.0
        %v3776 = vmax.f32 %v3744, 0.0
        %v3777 = vmax.f32 %v3745, 0.0
        %v3778 = vmax.f32 %v3746, 0.0
        %v3779 = vmax.f32 %v3747, 0.0
        %v3812 = vrot.slane %v3749, 7
        %v3813 = vsel %vm534, %v3812, %v3748
        %v3814 = vrot.slane %v3750, 6
        %v3815 = vsel %vm535, %v3814, %v3813
        %v3816 = vrot.slane %v3751, 5
        %v3817 = vsel %vm537, %v3816, %v3815
        %v3818 = vrot.slane %v3752, 4
        %v3819 = vsel %vm539, %v3818, %v3817
        %v3820 = vrot.slane %v3753, 3
        %v3821 = vsel %vm541, %v3820, %v3819
        %v3822 = vrot.slane %v3754, 2
        %v3823 = vsel %vm543, %v3822, %v3821
        %v3824 = vrot.slane %v3755, 1
        %v3825 = vsel %vm545, %v3824, %v3823
        %v3826 = vrot.slane %v3757, 7
        %v3827 = vsel %vm534, %v3826, %v3756
        %v3828 = vrot.slane %v3758, 6
        %v3829 = vsel %vm535, %v3828, %v3827
        %v3830 = vrot.slane %v3759, 5
        %v3831 = vsel %vm537, %v3830, %v3829
        %v3832 = vrot.slane %v3760, 4
        %v3833 = vsel %vm539, %v3832, %v3831
        %v3834 = vrot.slane %v3761, 3
        %v3835 = vsel %vm541, %v3834, %v3833
        %v3836 = vrot.slane %v3762, 2
        %v3837 = vsel %vm543, %v3836, %v3835
        %v3838 = vrot.slane %v3763, 1
        %v3839 = vsel %vm545, %v3838, %v3837
        %v3840 = vrot.slane %v3765, 7
        %v3841 = vsel %vm534, %v3840, %v3764
        %v3842 = vrot.slane %v3766, 6
        %v3843 = vsel %vm535, %v3842, %v3841
        %v3844 = vrot.slane %v3767, 5
        %v3845 = vsel %vm537, %v3844, %v3843
        %v3846 = vrot.slane %v3768, 4
        %v3847 = vsel %vm539, %v3846, %v3845
        %v3848 = vrot.slane %v3769, 3
        %v3849 = vsel %vm541, %v3848, %v3847
        %v3850 = vrot.slane %v3770, 2
        %v3851 = vsel %vm543, %v3850, %v3849
        %v3852 = vrot.slane %v3771, 1
        %v3853 = vsel %vm545, %v3852, %v3851
        %v3854 = vrot.slane %v3773, 7
        %v3855 = vsel %vm534, %v3854, %v3772
        %v3856 = vrot.slane %v3774, 6
        %v3857 = vsel %vm535, %v3856, %v3855
        %v3858 = vrot.slane %v3775, 5
        %v3859 = vsel %vm537, %v3858, %v3857
        %v3860 = vrot.slane %v3776, 4
        %v3861 = vsel %vm539, %v3860, %v3859
        %v3862 = vrot.slane %v3777, 3
        %v3863 = vsel %vm541, %v3862, %v3861
        %v3864 = vrot.slane %v3778, 2
        %v3865 = vsel %vm543, %v3864, %v3863
        %v3866 = vrot.slane %v3779, 1
        %v3867 = vsel %vm545, %v3866, %v3865
        %v3872 = vsel %vm481, %v3825, 0.0
        %v3873 = vsel %vm481, %v3839, 0.0
        %v3874 = vadd.f32 %v3872, %v3873
        %v3875 = vsel %vm481, %v3853, 0.0
        %v3876 = vadd.f32 %v3874, %v3875
        %v3877 = vsel %vm481, %v3867, 0.0
        %v3878 = vadd.f32 %v3876, %v3877
        %v3879 = vrot.slane %v3878, 4
        %v3880 = vadd.f32 %v3878, %v3879
        %v3881 = vrot.slane %v3880, 2
        %v3882 = vadd.f32 %v3880, %v3881
        %v3883 = vrot.slane %v3882, 1
        %v3884 = vadd.f32 %v3882, %v3883
        %v3885 = vmul.f32 %v3884, %v1378
        %v3886 = vlaneseq
        %v3887 = vshrl.u32 %v3886, 7
        %v3888 = vsub.s32 0, %v3887
        %v3889 = vrot.slane %v3885, %v3888
        %v3890 = vsub.f32 %v3748, %v3889
        %v3891 = vsub.f32 %v3749, %v3889
        %v3892 = vsub.f32 %v3750, %v3889
        %v3893 = vsub.f32 %v3751, %v3889
        %v3894 = vsub.f32 %v3752, %v3889
        %v3895 = vsub.f32 %v3753, %v3889
        %v3896 = vsub.f32 %v3754, %v3889
        %v3897 = vsub.f32 %v3755, %v3889
        %v3898 = vsub.f32 %v3756, %v3889
        %v3899 = vsub.f32 %v3757, %v3889
        %v3900 = vsub.f32 %v3758, %v3889
        %v3901 = vsub.f32 %v3759, %v3889
        %v3902 = vsub.f32 %v3760, %v3889
        %v3903 = vsub.f32 %v3761, %v3889
        %v3904 = vsub.f32 %v3762, %v3889
        %v3905 = vsub.f32 %v3763, %v3889
        %v3906 = vsub.f32 %v3764, %v3889
        %v3907 = vsub.f32 %v3765, %v3889
        %v3908 = vsub.f32 %v3766, %v3889
        %v3909 = vsub.f32 %v3767, %v3889
        %v3910 = vsub.f32 %v3768, %v3889
        %v3911 = vsub.f32 %v3769, %v3889
        %v3912 = vsub.f32 %v3770, %v3889
        %v3913 = vsub.f32 %v3771, %v3889
        %v3914 = vsub.f32 %v3772, %v3889
        %v3915 = vsub.f32 %v3773, %v3889
        %v3916 = vsub.f32 %v3774, %v3889
        %v3917 = vsub.f32 %v3775, %v3889
        %v3918 = vsub.f32 %v3776, %v3889
        %v3919 = vsub.f32 %v3777, %v3889
        %v3920 = vsub.f32 %v3778, %v3889
        %v3921 = vsub.f32 %v3779, %v3889
        %v3922 = vmul.f32 %v3890, %v3890
        %v3923 = vmul.f32 %v3891, %v3891
        %v3924 = vmul.f32 %v3892, %v3892
        %v3925 = vmul.f32 %v3893, %v3893
        %v3926 = vmul.f32 %v3894, %v3894
        %v3927 = vmul.f32 %v3895, %v3895
        %v3928 = vmul.f32 %v3896, %v3896
        %v3929 = vmul.f32 %v3897, %v3897
        %v3930 = vmul.f32 %v3898, %v3898
        %v3931 = vmul.f32 %v3899, %v3899
        %v3932 = vmul.f32 %v3900, %v3900
        %v3933 = vmul.f32 %v3901, %v3901
        %v3934 = vmul.f32 %v3902, %v3902
        %v3935 = vmul.f32 %v3903, %v3903
        %v3936 = vmul.f32 %v3904, %v3904
        %v3937 = vmul.f32 %v3905, %v3905
        %v3938 = vmul.f32 %v3906, %v3906
        %v3939 = vmul.f32 %v3907, %v3907
        %v3940 = vmul.f32 %v3908, %v3908
        %v3941 = vmul.f32 %v3909, %v3909
        %v3942 = vmul.f32 %v3910, %v3910
        %v3943 = vmul.f32 %v3911, %v3911
        %v3944 = vmul.f32 %v3912, %v3912
        %v3945 = vmul.f32 %v3913, %v3913
        %v3946 = vmul.f32 %v3914, %v3914
        %v3947 = vmul.f32 %v3915, %v3915
        %v3948 = vmul.f32 %v3916, %v3916
        %v3949 = vmul.f32 %v3917, %v3917
        %v3950 = vmul.f32 %v3918, %v3918
        %v3951 = vmul.f32 %v3919, %v3919
        %v3952 = vmul.f32 %v3920, %v3920
        %v3953 = vmul.f32 %v3921, %v3921
        %v3986 = vrot.slane %v3923, 7
        %v3987 = vsel %vm534, %v3986, %v3922
        %v3988 = vrot.slane %v3924, 6
        %v3989 = vsel %vm535, %v3988, %v3987
        %v3990 = vrot.slane %v3925, 5
        %v3991 = vsel %vm537, %v3990, %v3989
        %v3992 = vrot.slane %v3926, 4
        %v3993 = vsel %vm539, %v3992, %v3991
        %v3994 = vrot.slane %v3927, 3
        %v3995 = vsel %vm541, %v3994, %v3993
        %v3996 = vrot.slane %v3928, 2
        %v3997 = vsel %vm543, %v3996, %v3995
        %v3998 = vrot.slane %v3929, 1
        %v3999 = vsel %vm545, %v3998, %v3997
        %v4000 = vrot.slane %v3931, 7
        %v4001 = vsel %vm534, %v4000, %v3930
        %v4002 = vrot.slane %v3932, 6
        %v4003 = vsel %vm535, %v4002, %v4001
        %v4004 = vrot.slane %v3933, 5
        %v4005 = vsel %vm537, %v4004, %v4003
        %v4006 = vrot.slane %v3934, 4
        %v4007 = vsel %vm539, %v4006, %v4005
        %v4008 = vrot.slane %v3935, 3
        %v4009 = vsel %vm541, %v4008, %v4007
        %v4010 = vrot.slane %v3936, 2
        %v4011 = vsel %vm543, %v4010, %v4009
        %v4012 = vrot.slane %v3937, 1
        %v4013 = vsel %vm545, %v4012, %v4011
        %v4014 = vrot.slane %v3939, 7
        %v4015 = vsel %vm534, %v4014, %v3938
        %v4016 = vrot.slane %v3940, 6
        %v4017 = vsel %vm535, %v4016, %v4015
        %v4018 = vrot.slane %v3941, 5
        %v4019 = vsel %vm537, %v4018, %v4017
        %v4020 = vrot.slane %v3942, 4
        %v4021 = vsel %vm539, %v4020, %v4019
        %v4022 = vrot.slane %v3943, 3
        %v4023 = vsel %vm541, %v4022, %v4021
        %v4024 = vrot.slane %v3944, 2
        %v4025 = vsel %vm543, %v4024, %v4023
        %v4026 = vrot.slane %v3945, 1
        %v4027 = vsel %vm545, %v4026, %v4025
        %v4028 = vrot.slane %v3947, 7
        %v4029 = vsel %vm534, %v4028, %v3946
        %v4030 = vrot.slane %v3948, 6
        %v4031 = vsel %vm535, %v4030, %v4029
        %v4032 = vrot.slane %v3949, 5
        %v4033 = vsel %vm537, %v4032, %v4031
        %v4034 = vrot.slane %v3950, 4
        %v4035 = vsel %vm539, %v4034, %v4033
        %v4036 = vrot.slane %v3951, 3
        %v4037 = vsel %vm541, %v4036, %v4035
        %v4038 = vrot.slane %v3952, 2
        %v4039 = vsel %vm543, %v4038, %v4037
        %v4040 = vrot.slane %v3953, 1
        %v4041 = vsel %vm545, %v4040, %v4039
        %v4046 = vsel %vm481, %v3999, 0.0
        %v4047 = vsel %vm481, %v4013, 0.0
        %v4048 = vadd.f32 %v4046, %v4047
        %v4049 = vsel %vm481, %v4027, 0.0
        %v4050 = vadd.f32 %v4048, %v4049
        %v4051 = vsel %vm481, %v4041, 0.0
        %v4052 = vadd.f32 %v4050, %v4051
        %v4053 = vrot.slane %v4052, 4
        %v4054 = vadd.f32 %v4052, %v4053
        %v4055 = vrot.slane %v4054, 2
        %v4056 = vadd.f32 %v4054, %v4055
        %v4057 = vrot.slane %v4056, 1
        %v4058 = vadd.f32 %v4056, %v4057
        %v4059 = vmul.f32 %v4058, %v1378
        %v4060 = vlaneseq
        %v4061 = vshrl.u32 %v4060, 7
        %v4062 = vsub.s32 3, %v4061
        %v4063 = vrot.slane %v394, %v4062
        %v4096 = vrot.slane %v3891, 7
        %v4097 = vsel %vm534, %v4096, %v3890
        %v4098 = vrot.slane %v3892, 6
        %v4099 = vsel %vm535, %v4098, %v4097
        %v4100 = vrot.slane %v3893, 5
        %v4101 = vsel %vm537, %v4100, %v4099
        %v4102 = vrot.slane %v3894, 4
        %v4103 = vsel %vm539, %v4102, %v4101
        %v4104 = vrot.slane %v3895, 3
        %v4105 = vsel %vm541, %v4104, %v4103
        %v4106 = vrot.slane %v3896, 2
        %v4107 = vsel %vm543, %v4106, %v4105
        %v4108 = vrot.slane %v3897, 1
        %v4109 = vsel %vm545, %v4108, %v4107
        %v4110 = vrot.slane %v3899, 7
        %v4111 = vsel %vm534, %v4110, %v3898
        %v4112 = vrot.slane %v3900, 6
        %v4113 = vsel %vm535, %v4112, %v4111
        %v4114 = vrot.slane %v3901, 5
        %v4115 = vsel %vm537, %v4114, %v4113
        %v4116 = vrot.slane %v3902, 4
        %v4117 = vsel %vm539, %v4116, %v4115
        %v4118 = vrot.slane %v3903, 3
        %v4119 = vsel %vm541, %v4118, %v4117
        %v4120 = vrot.slane %v3904, 2
        %v4121 = vsel %vm543, %v4120, %v4119
        %v4122 = vrot.slane %v3905, 1
        %v4123 = vsel %vm545, %v4122, %v4121
        %v4124 = vrot.slane %v3907, 7
        %v4125 = vsel %vm534, %v4124, %v3906
        %v4126 = vrot.slane %v3908, 6
        %v4127 = vsel %vm535, %v4126, %v4125
        %v4128 = vrot.slane %v3909, 5
        %v4129 = vsel %vm537, %v4128, %v4127
        %v4130 = vrot.slane %v3910, 4
        %v4131 = vsel %vm539, %v4130, %v4129
        %v4132 = vrot.slane %v3911, 3
        %v4133 = vsel %vm541, %v4132, %v4131
        %v4134 = vrot.slane %v3912, 2
        %v4135 = vsel %vm543, %v4134, %v4133
        %v4136 = vrot.slane %v3913, 1
        %v4137 = vsel %vm545, %v4136, %v4135
        %v4138 = vrot.slane %v3915, 7
        %v4139 = vsel %vm534, %v4138, %v3914
        %v4140 = vrot.slane %v3916, 6
        %v4141 = vsel %vm535, %v4140, %v4139
        %v4142 = vrot.slane %v3917, 5
        %v4143 = vsel %vm537, %v4142, %v4141
        %v4144 = vrot.slane %v3918, 4
        %v4145 = vsel %vm539, %v4144, %v4143
        %v4146 = vrot.slane %v3919, 3
        %v4147 = vsel %vm541, %v4146, %v4145
        %v4148 = vrot.slane %v3920, 2
        %v4149 = vsel %vm543, %v4148, %v4147
        %v4150 = vrot.slane %v3921, 1
        %v4151 = vsel %vm545, %v4150, %v4149
        %v4156 = vmul.f32 %v4063, %v4109
        %v4157 = vmul.f32 %v4063, %v4123
        %v4158 = vmul.f32 %v4063, %v4137
        %v4159 = vmul.f32 %v4063, %v4151
        %v4160 = vadd.f32 %v4059, 1e-05
        %v4161 = vrsqrt.pop %v4160
        %v4162 = vlaneseq
        %v4163 = vshrl.u32 %v4162, 7
        %v4164 = vsub.s32 0, %v4163
        %v4165 = vrot.slane %v4161, %v4164
        %v4166 = vmul.f32 %v4156, %v4165
        %v4167 = vmul.f32 %v4157, %v4165
        %v4168 = vmul.f32 %v4158, %v4165
        %v4169 = vmul.f32 %v4159, %v4165
        %v4170 = vlaneseq
        %v4171 = vshrl.u32 %v4170, 7
        %v4172 = vsub.s32 6, %v4171
        %v4173 = vrot.slane %v394, %v4172
        %v4174 = vadd.f32 %v4166, %v4173
        %v4175 = vadd.f32 %v4167, %v4173
        %v4176 = vadd.f32 %v4168, %v4173
        %v4177 = vadd.f32 %v4169, %v4173
        %4182 = vrot.lane.b32.xlu0 %v2921, 16
        %v4183 = vpop.permute.xlu0 %4182
        %4184 = vrot.lane.b32.xlu0 %v2922, 16
        %v4185 = vpop.permute.xlu0 %4184
        %4186 = vrot.lane.b32.xlu0 %v2923, 16
        %v4187 = vpop.permute.xlu0 %4186
        %4188 = vrot.lane.b32.xlu0 %v2924, 16
        %v4189 = vpop.permute.xlu0 %4188
        %4198 = vrot.lane.b32.xlu0 %v4174, 32
        %v4199 = vpop.permute.xlu0 %4198
        %4200 = vrot.lane.b32.xlu0 %v4175, 32
        %v4201 = vpop.permute.xlu0 %4200
        %4202 = vrot.lane.b32.xlu0 %v4176, 32
        %v4203 = vpop.permute.xlu0 %4202
        %4204 = vrot.lane.b32.xlu0 %v4177, 32
        %v4205 = vpop.permute.xlu0 %4204
        %v4210 = vsel %vm481, %v1668, %v4183
        %v4211 = vsel %vm481, %v1669, %v4185
        %v4212 = vsel %vm481, %v1670, %v4187
        %v4213 = vsel %vm481, %v1671, %v4189
        %vm4214 = vcmask 261120
        %v4215 = vsel %vm4214, %v4210, %v4199
        %v4216 = vsel %vm4214, %v4211, %v4201
        %v4217 = vsel %vm4214, %v4212, %v4203
        %v4218 = vsel %vm4214, %v4213, %v4205
        %v4219 = vlaneseq
        %v4220 = vshrl.u32 %v4219, 7
        %v4221 = vsub.s32 0, %v4220
        %v4222 = vrot.slane %v384, %v4221
        %4224 = vbcast.lane.b32.xlu0 %v4222, 256
        %v4225 = vpop.permute.xlu0 %4224
        %v4226 = vlaneseq
        %v4227 = vshrl.u32 %v4226, 7
        %v4228 = vsub.s32 1, %v4227
        %v4229 = vrot.slane %v384, %v4228
        %4231 = vbcast.lane.b32.xlu0 %v4229, 256
        %v4232 = vpop.permute.xlu0 %4231
        %v4233 = vlaneseq
        %v4234 = vshrl.u32 %v4233, 7
        %v4235 = vsub.s32 2, %v4234
        %v4236 = vrot.slane %v384, %v4235
        %4238 = vbcast.lane.b32.xlu0 %v4236, 256
        %v4239 = vpop.permute.xlu0 %4238
        %v4240 = vlaneseq
        %v4241 = vshrl.u32 %v4240, 7
        %v4242 = vsub.s32 3, %v4241
        %v4243 = vrot.slane %v384, %v4242
        %4245 = vbcast.lane.b32.xlu0 %v4243, 256
        %v4246 = vpop.permute.xlu0 %4245
        %v4247 = vlaneseq
        %v4248 = vshrl.u32 %v4247, 7
        %v4249 = vsub.s32 4, %v4248
        %v4250 = vrot.slane %v384, %v4249
        %4252 = vbcast.lane.b32.xlu0 %v4250, 256
        %v4253 = vpop.permute.xlu0 %4252
        %v4254 = vlaneseq
        %v4255 = vshrl.u32 %v4254, 7
        %v4256 = vsub.s32 5, %v4255
        %v4257 = vrot.slane %v384, %v4256
        %4259 = vbcast.lane.b32.xlu0 %v4257, 256
        %v4260 = vpop.permute.xlu0 %4259
        %v4261 = vlaneseq
        %v4262 = vshrl.u32 %v4261, 7
        %v4263 = vsub.s32 6, %v4262
        %v4264 = vrot.slane %v384, %v4263
        %4266 = vbcast.lane.b32.xlu0 %v4264, 256
        %v4267 = vpop.permute.xlu0 %4266
        %v4268 = vlaneseq
        %v4269 = vshrl.u32 %v4268, 7
        %v4270 = vsub.s32 7, %v4269
        %v4271 = vrot.slane %v384, %v4270
        %4273 = vbcast.lane.b32.xlu0 %v4271, 256
        %v4274 = vpop.permute.xlu0 %4273
        %v4275 = vlaneseq
        %v4276 = vshrl.u32 %v4275, 7
        %v4277 = vsub.s32 0, %v4276
        %v4278 = vrot.slane %v385, %v4277
        %4280 = vbcast.lane.b32.xlu0 %v4278, 256
        %v4281 = vpop.permute.xlu0 %4280
        %v4282 = vlaneseq
        %v4283 = vshrl.u32 %v4282, 7
        %v4284 = vsub.s32 1, %v4283
        %v4285 = vrot.slane %v385, %v4284
        %4287 = vbcast.lane.b32.xlu0 %v4285, 256
        %v4288 = vpop.permute.xlu0 %4287
        %v4289 = vlaneseq
        %v4290 = vshrl.u32 %v4289, 7
        %v4291 = vsub.s32 2, %v4290
        %v4292 = vrot.slane %v385, %v4291
        %4294 = vbcast.lane.b32.xlu0 %v4292, 256
        %v4295 = vpop.permute.xlu0 %4294
        %v4296 = vlaneseq
        %v4297 = vshrl.u32 %v4296, 7
        %v4298 = vsub.s32 3, %v4297
        %v4299 = vrot.slane %v385, %v4298
        %4301 = vbcast.lane.b32.xlu0 %v4299, 256
        %v4302 = vpop.permute.xlu0 %4301
        %v4303 = vlaneseq
        %v4304 = vshrl.u32 %v4303, 7
        %v4305 = vsub.s32 4, %v4304
        %v4306 = vrot.slane %v385, %v4305
        %4308 = vbcast.lane.b32.xlu0 %v4306, 256
        %v4309 = vpop.permute.xlu0 %4308
        %v4310 = vlaneseq
        %v4311 = vshrl.u32 %v4310, 7
        %v4312 = vsub.s32 5, %v4311
        %v4313 = vrot.slane %v385, %v4312
        %4315 = vbcast.lane.b32.xlu0 %v4313, 256
        %v4316 = vpop.permute.xlu0 %4315
        %v4317 = vlaneseq
        %v4318 = vshrl.u32 %v4317, 7
        %v4319 = vsub.s32 6, %v4318
        %v4320 = vrot.slane %v385, %v4319
        %4322 = vbcast.lane.b32.xlu0 %v4320, 256
        %v4323 = vpop.permute.xlu0 %4322
        %v4324 = vlaneseq
        %v4325 = vshrl.u32 %v4324, 7
        %v4326 = vsub.s32 7, %v4325
        %v4327 = vrot.slane %v385, %v4326
        %4329 = vbcast.lane.b32.xlu0 %v4327, 256
        %v4330 = vpop.permute.xlu0 %4329
        %v4331 = vlaneseq
        %v4332 = vshrl.u32 %v4331, 7
        %v4333 = vsub.s32 0, %v4332
        %v4334 = vrot.slane %v386, %v4333
        %4336 = vbcast.lane.b32.xlu0 %v4334, 256
        %v4337 = vpop.permute.xlu0 %4336
        %v4338 = vlaneseq
        %v4339 = vshrl.u32 %v4338, 7
        %v4340 = vsub.s32 1, %v4339
        %v4341 = vrot.slane %v386, %v4340
        %4343 = vbcast.lane.b32.xlu0 %v4341, 256
        %v4344 = vpop.permute.xlu0 %4343
        %v4345 = vlaneseq
        %v4346 = vshrl.u32 %v4345, 7
        %v4347 = vsub.s32 2, %v4346
        %v4348 = vrot.slane %v386, %v4347
        %4350 = vbcast.lane.b32.xlu0 %v4348, 256
        %v4351 = vpop.permute.xlu0 %4350
        %v4352 = vlaneseq
        %v4353 = vshrl.u32 %v4352, 7
        %v4354 = vsub.s32 3, %v4353
        %v4355 = vrot.slane %v386, %v4354
        %4357 = vbcast.lane.b32.xlu0 %v4355, 256
        %v4358 = vpop.permute.xlu0 %4357
        %v4359 = vlaneseq
        %v4360 = vshrl.u32 %v4359, 7
        %v4361 = vsub.s32 4, %v4360
        %v4362 = vrot.slane %v386, %v4361
        %4364 = vbcast.lane.b32.xlu0 %v4362, 256
        %v4365 = vpop.permute.xlu0 %4364
        %v4366 = vlaneseq
        %v4367 = vshrl.u32 %v4366, 7
        %v4368 = vsub.s32 5, %v4367
        %v4369 = vrot.slane %v386, %v4368
        %4371 = vbcast.lane.b32.xlu0 %v4369, 256
        %v4372 = vpop.permute.xlu0 %4371
        %v4373 = vlaneseq
        %v4374 = vshrl.u32 %v4373, 7
        %v4375 = vsub.s32 6, %v4374
        %v4376 = vrot.slane %v386, %v4375
        %4378 = vbcast.lane.b32.xlu0 %v4376, 256
        %v4379 = vpop.permute.xlu0 %4378
        %v4380 = vlaneseq
        %v4381 = vshrl.u32 %v4380, 7
        %v4382 = vsub.s32 7, %v4381
        %v4383 = vrot.slane %v386, %v4382
        %4385 = vbcast.lane.b32.xlu0 %v4383, 256
        %v4386 = vpop.permute.xlu0 %4385
        %v4387 = vlaneseq
        %v4388 = vshrl.u32 %v4387, 7
        %v4389 = vsub.s32 0, %v4388
        %v4390 = vrot.slane %v387, %v4389
        %4392 = vbcast.lane.b32.xlu0 %v4390, 256
        %v4393 = vpop.permute.xlu0 %4392
        %v4394 = vlaneseq
        %v4395 = vshrl.u32 %v4394, 7
        %v4396 = vsub.s32 1, %v4395
        %v4397 = vrot.slane %v387, %v4396
        %4399 = vbcast.lane.b32.xlu0 %v4397, 256
        %v4400 = vpop.permute.xlu0 %4399
        %v4401 = vlaneseq
        %v4402 = vshrl.u32 %v4401, 7
        %v4403 = vsub.s32 2, %v4402
        %v4404 = vrot.slane %v387, %v4403
        %4406 = vbcast.lane.b32.xlu0 %v4404, 256
        %v4407 = vpop.permute.xlu0 %4406
        %v4408 = vlaneseq
        %v4409 = vshrl.u32 %v4408, 7
        %v4410 = vsub.s32 3, %v4409
        %v4411 = vrot.slane %v387, %v4410
        %4413 = vbcast.lane.b32.xlu0 %v4411, 256
        %v4414 = vpop.permute.xlu0 %4413
        %v4415 = vlaneseq
        %v4416 = vshrl.u32 %v4415, 7
        %v4417 = vsub.s32 4, %v4416
        %v4418 = vrot.slane %v387, %v4417
        %4420 = vbcast.lane.b32.xlu0 %v4418, 256
        %v4421 = vpop.permute.xlu0 %4420
        %v4422 = vlaneseq
        %v4423 = vshrl.u32 %v4422, 7
        %v4424 = vsub.s32 5, %v4423
        %v4425 = vrot.slane %v387, %v4424
        %4427 = vbcast.lane.b32.xlu0 %v4425, 256
        %v4428 = vpop.permute.xlu0 %4427
        %v4429 = vlaneseq
        %v4430 = vshrl.u32 %v4429, 7
        %v4431 = vsub.s32 6, %v4430
        %v4432 = vrot.slane %v387, %v4431
        %4434 = vbcast.lane.b32.xlu0 %v4432, 256
        %v4435 = vpop.permute.xlu0 %4434
        %v4436 = vlaneseq
        %v4437 = vshrl.u32 %v4436, 7
        %v4438 = vsub.s32 7, %v4437
        %v4439 = vrot.slane %v387, %v4438
        %4441 = vbcast.lane.b32.xlu0 %v4439, 256
        %v4442 = vpop.permute.xlu0 %4441
        %v4443 = vmul.f32 %v4225, %v4215
        %v4444 = vmul.f32 %v4232, %v4215
        %v4445 = vmul.f32 %v4239, %v4215
        %v4446 = vmul.f32 %v4246, %v4215
        %v4447 = vmul.f32 %v4253, %v4215
        %v4448 = vmul.f32 %v4260, %v4215
        %v4449 = vmul.f32 %v4267, %v4215
        %v4450 = vmul.f32 %v4274, %v4215
        %v4451 = vmul.f32 %v4281, %v4216
        %v4452 = vmul.f32 %v4288, %v4216
        %v4453 = vmul.f32 %v4295, %v4216
        %v4454 = vmul.f32 %v4302, %v4216
        %v4455 = vmul.f32 %v4309, %v4216
        %v4456 = vmul.f32 %v4316, %v4216
        %v4457 = vmul.f32 %v4323, %v4216
        %v4458 = vmul.f32 %v4330, %v4216
        %v4459 = vmul.f32 %v4337, %v4217
        %v4460 = vmul.f32 %v4344, %v4217
        %v4461 = vmul.f32 %v4351, %v4217
        %v4462 = vmul.f32 %v4358, %v4217
        %v4463 = vmul.f32 %v4365, %v4217
        %v4464 = vmul.f32 %v4372, %v4217
        %v4465 = vmul.f32 %v4379, %v4217
        %v4466 = vmul.f32 %v4386, %v4217
        %v4467 = vmul.f32 %v4393, %v4218
        %v4468 = vmul.f32 %v4400, %v4218
        %v4469 = vmul.f32 %v4407, %v4218
        %v4470 = vmul.f32 %v4414, %v4218
        %v4471 = vmul.f32 %v4421, %v4218
        %v4472 = vmul.f32 %v4428, %v4218
        %v4473 = vmul.f32 %v4435, %v4218
        %v4474 = vmul.f32 %v4442, %v4218
        %vm4475 = vcmask 392192
        %v4476 = vsel %vm4475, %v4443, 0.0
        %v4477 = vrot.slane %v4476, 4
        %v4478 = vadd.f32 %v4476, %v4477
        %v4479 = vrot.slane %v4478, 2
        %v4480 = vadd.f32 %v4478, %v4479
        %v4481 = vrot.slane %v4480, 1
        %v4482 = vadd.f32 %v4480, %v4481
        %v4483 = vsel %vm4475, %v4444, 0.0
        %v4484 = vrot.slane %v4483, 4
        %v4485 = vadd.f32 %v4483, %v4484
        %v4486 = vrot.slane %v4485, 2
        %v4487 = vadd.f32 %v4485, %v4486
        %v4488 = vrot.slane %v4487, 1
        %v4489 = vadd.f32 %v4487, %v4488
        %v4490 = vsel %vm4475, %v4445, 0.0
        %v4491 = vrot.slane %v4490, 4
        %v4492 = vadd.f32 %v4490, %v4491
        %v4493 = vrot.slane %v4492, 2
        %v4494 = vadd.f32 %v4492, %v4493
        %v4495 = vrot.slane %v4494, 1
        %v4496 = vadd.f32 %v4494, %v4495
        %v4497 = vsel %vm4475, %v4446, 0.0
        %v4498 = vrot.slane %v4497, 4
        %v4499 = vadd.f32 %v4497, %v4498
        %v4500 = vrot.slane %v4499, 2
        %v4501 = vadd.f32 %v4499, %v4500
        %v4502 = vrot.slane %v4501, 1
        %v4503 = vadd.f32 %v4501, %v4502
        %v4504 = vsel %vm4475, %v4447, 0.0
        %v4505 = vrot.slane %v4504, 4
        %v4506 = vadd.f32 %v4504, %v4505
        %v4507 = vrot.slane %v4506, 2
        %v4508 = vadd.f32 %v4506, %v4507
        %v4509 = vrot.slane %v4508, 1
        %v4510 = vadd.f32 %v4508, %v4509
        %v4511 = vsel %vm4475, %v4448, 0.0
        %v4512 = vrot.slane %v4511, 4
        %v4513 = vadd.f32 %v4511, %v4512
        %v4514 = vrot.slane %v4513, 2
        %v4515 = vadd.f32 %v4513, %v4514
        %v4516 = vrot.slane %v4515, 1
        %v4517 = vadd.f32 %v4515, %v4516
        %v4518 = vsel %vm4475, %v4449, 0.0
        %v4519 = vrot.slane %v4518, 4
        %v4520 = vadd.f32 %v4518, %v4519
        %v4521 = vrot.slane %v4520, 2
        %v4522 = vadd.f32 %v4520, %v4521
        %v4523 = vrot.slane %v4522, 1
        %v4524 = vadd.f32 %v4522, %v4523
        %v4525 = vsel %vm4475, %v4450, 0.0
        %v4526 = vrot.slane %v4525, 4
        %v4527 = vadd.f32 %v4525, %v4526
        %v4528 = vrot.slane %v4527, 2
        %v4529 = vadd.f32 %v4527, %v4528
        %v4530 = vrot.slane %v4529, 1
        %v4531 = vadd.f32 %v4529, %v4530
        %v4532 = vsel %vm4475, %v4451, 0.0
        %v4533 = vrot.slane %v4532, 4
        %v4534 = vadd.f32 %v4532, %v4533
        %v4535 = vrot.slane %v4534, 2
        %v4536 = vadd.f32 %v4534, %v4535
        %v4537 = vrot.slane %v4536, 1
        %v4538 = vadd.f32 %v4536, %v4537
        %v4539 = vsel %vm4475, %v4452, 0.0
        %v4540 = vrot.slane %v4539, 4
        %v4541 = vadd.f32 %v4539, %v4540
        %v4542 = vrot.slane %v4541, 2
        %v4543 = vadd.f32 %v4541, %v4542
        %v4544 = vrot.slane %v4543, 1
        %v4545 = vadd.f32 %v4543, %v4544
        %v4546 = vsel %vm4475, %v4453, 0.0
        %v4547 = vrot.slane %v4546, 4
        %v4548 = vadd.f32 %v4546, %v4547
        %v4549 = vrot.slane %v4548, 2
        %v4550 = vadd.f32 %v4548, %v4549
        %v4551 = vrot.slane %v4550, 1
        %v4552 = vadd.f32 %v4550, %v4551
        %v4553 = vsel %vm4475, %v4454, 0.0
        %v4554 = vrot.slane %v4553, 4
        %v4555 = vadd.f32 %v4553, %v4554
        %v4556 = vrot.slane %v4555, 2
        %v4557 = vadd.f32 %v4555, %v4556
        %v4558 = vrot.slane %v4557, 1
        %v4559 = vadd.f32 %v4557, %v4558
        %v4560 = vsel %vm4475, %v4455, 0.0
        %v4561 = vrot.slane %v4560, 4
        %v4562 = vadd.f32 %v4560, %v4561
        %v4563 = vrot.slane %v4562, 2
        %v4564 = vadd.f32 %v4562, %v4563
        %v4565 = vrot.slane %v4564, 1
        %v4566 = vadd.f32 %v4564, %v4565
        %v4567 = vsel %vm4475, %v4456, 0.0
        %v4568 = vrot.slane %v4567, 4
        %v4569 = vadd.f32 %v4567, %v4568
        %v4570 = vrot.slane %v4569, 2
        %v4571 = vadd.f32 %v4569, %v4570
        %v4572 = vrot.slane %v4571, 1
        %v4573 = vadd.f32 %v4571, %v4572
        %v4574 = vsel %vm4475, %v4457, 0.0
        %v4575 = vrot.slane %v4574, 4
        %v4576 = vadd.f32 %v4574, %v4575
        %v4577 = vrot.slane %v4576, 2
        %v4578 = vadd.f32 %v4576, %v4577
        %v4579 = vrot.slane %v4578, 1
        %v4580 = vadd.f32 %v4578, %v4579
        %v4581 = vsel %vm4475, %v4458, 0.0
        %v4582 = vrot.slane %v4581, 4
        %v4583 = vadd.f32 %v4581, %v4582
        %v4584 = vrot.slane %v4583, 2
        %v4585 = vadd.f32 %v4583, %v4584
        %v4586 = vrot.slane %v4585, 1
        %v4587 = vadd.f32 %v4585, %v4586
        %v4588 = vsel %vm4475, %v4459, 0.0
        %v4589 = vrot.slane %v4588, 4
        %v4590 = vadd.f32 %v4588, %v4589
        %v4591 = vrot.slane %v4590, 2
        %v4592 = vadd.f32 %v4590, %v4591
        %v4593 = vrot.slane %v4592, 1
        %v4594 = vadd.f32 %v4592, %v4593
        %v4595 = vsel %vm4475, %v4460, 0.0
        %v4596 = vrot.slane %v4595, 4
        %v4597 = vadd.f32 %v4595, %v4596
        %v4598 = vrot.slane %v4597, 2
        %v4599 = vadd.f32 %v4597, %v4598
        %v4600 = vrot.slane %v4599, 1
        %v4601 = vadd.f32 %v4599, %v4600
        %v4602 = vsel %vm4475, %v4461, 0.0
        %v4603 = vrot.slane %v4602, 4
        %v4604 = vadd.f32 %v4602, %v4603
        %v4605 = vrot.slane %v4604, 2
        %v4606 = vadd.f32 %v4604, %v4605
        %v4607 = vrot.slane %v4606, 1
        %v4608 = vadd.f32 %v4606, %v4607
        %v4609 = vsel %vm4475, %v4462, 0.0
        %v4610 = vrot.slane %v4609, 4
        %v4611 = vadd.f32 %v4609, %v4610
        %v4612 = vrot.slane %v4611, 2
        %v4613 = vadd.f32 %v4611, %v4612
        %v4614 = vrot.slane %v4613, 1
        %v4615 = vadd.f32 %v4613, %v4614
        %v4616 = vsel %vm4475, %v4463, 0.0
        %v4617 = vrot.slane %v4616, 4
        %v4618 = vadd.f32 %v4616, %v4617
        %v4619 = vrot.slane %v4618, 2
        %v4620 = vadd.f32 %v4618, %v4619
        %v4621 = vrot.slane %v4620, 1
        %v4622 = vadd.f32 %v4620, %v4621
        %v4623 = vsel %vm4475, %v4464, 0.0
        %v4624 = vrot.slane %v4623, 4
        %v4625 = vadd.f32 %v4623, %v4624
        %v4626 = vrot.slane %v4625, 2
        %v4627 = vadd.f32 %v4625, %v4626
        %v4628 = vrot.slane %v4627, 1
        %v4629 = vadd.f32 %v4627, %v4628
        %v4630 = vsel %vm4475, %v4465, 0.0
        %v4631 = vrot.slane %v4630, 4
        %v4632 = vadd.f32 %v4630, %v4631
        %v4633 = vrot.slane %v4632, 2
        %v4634 = vadd.f32 %v4632, %v4633
        %v4635 = vrot.slane %v4634, 1
        %v4636 = vadd.f32 %v4634, %v4635
        %v4637 = vsel %vm4475, %v4466, 0.0
        %v4638 = vrot.slane %v4637, 4
        %v4639 = vadd.f32 %v4637, %v4638
        %v4640 = vrot.slane %v4639, 2
        %v4641 = vadd.f32 %v4639, %v4640
        %v4642 = vrot.slane %v4641, 1
        %v4643 = vadd.f32 %v4641, %v4642
        %v4644 = vsel %vm4475, %v4467, 0.0
        %v4645 = vrot.slane %v4644, 4
        %v4646 = vadd.f32 %v4644, %v4645
        %v4647 = vrot.slane %v4646, 2
        %v4648 = vadd.f32 %v4646, %v4647
        %v4649 = vrot.slane %v4648, 1
        %v4650 = vadd.f32 %v4648, %v4649
        %v4651 = vsel %vm4475, %v4468, 0.0
        %v4652 = vrot.slane %v4651, 4
        %v4653 = vadd.f32 %v4651, %v4652
        %v4654 = vrot.slane %v4653, 2
        %v4655 = vadd.f32 %v4653, %v4654
        %v4656 = vrot.slane %v4655, 1
        %v4657 = vadd.f32 %v4655, %v4656
        %v4658 = vsel %vm4475, %v4469, 0.0
        %v4659 = vrot.slane %v4658, 4
        %v4660 = vadd.f32 %v4658, %v4659
        %v4661 = vrot.slane %v4660, 2
        %v4662 = vadd.f32 %v4660, %v4661
        %v4663 = vrot.slane %v4662, 1
        %v4664 = vadd.f32 %v4662, %v4663
        %v4665 = vsel %vm4475, %v4470, 0.0
        %v4666 = vrot.slane %v4665, 4
        %v4667 = vadd.f32 %v4665, %v4666
        %v4668 = vrot.slane %v4667, 2
        %v4669 = vadd.f32 %v4667, %v4668
        %v4670 = vrot.slane %v4669, 1
        %v4671 = vadd.f32 %v4669, %v4670
        %v4672 = vsel %vm4475, %v4471, 0.0
        %v4673 = vrot.slane %v4672, 4
        %v4674 = vadd.f32 %v4672, %v4673
        %v4675 = vrot.slane %v4674, 2
        %v4676 = vadd.f32 %v4674, %v4675
        %v4677 = vrot.slane %v4676, 1
        %v4678 = vadd.f32 %v4676, %v4677
        %v4679 = vsel %vm4475, %v4472, 0.0
        %v4680 = vrot.slane %v4679, 4
        %v4681 = vadd.f32 %v4679, %v4680
        %v4682 = vrot.slane %v4681, 2
        %v4683 = vadd.f32 %v4681, %v4682
        %v4684 = vrot.slane %v4683, 1
        %v4685 = vadd.f32 %v4683, %v4684
        %v4686 = vsel %vm4475, %v4473, 0.0
        %v4687 = vrot.slane %v4686, 4
        %v4688 = vadd.f32 %v4686, %v4687
        %v4689 = vrot.slane %v4688, 2
        %v4690 = vadd.f32 %v4688, %v4689
        %v4691 = vrot.slane %v4690, 1
        %v4692 = vadd.f32 %v4690, %v4691
        %v4693 = vsel %vm4475, %v4474, 0.0
        %v4694 = vrot.slane %v4693, 4
        %v4695 = vadd.f32 %v4693, %v4694
        %v4696 = vrot.slane %v4695, 2
        %v4697 = vadd.f32 %v4695, %v4696
        %v4698 = vrot.slane %v4697, 1
        %v4699 = vadd.f32 %v4697, %v4698
        %v4700 = vlaneseq
        %v4701 = vshrl.u32 %v4700, 7
        %v4702 = vsub.s32 7, %v4701
        %v4703 = vrot.slane %v394, %v4702
        %v4704 = vmul.f32 %v4482, %v4703
        %v4705 = vmul.f32 %v4489, %v4703
        %v4706 = vmul.f32 %v4496, %v4703
        %v4707 = vmul.f32 %v4503, %v4703
        %v4708 = vmul.f32 %v4510, %v4703
        %v4709 = vmul.f32 %v4517, %v4703
        %v4710 = vmul.f32 %v4524, %v4703
        %v4711 = vmul.f32 %v4531, %v4703
        %v4712 = vmul.f32 %v4538, %v4703
        %v4713 = vmul.f32 %v4545, %v4703
        %v4714 = vmul.f32 %v4552, %v4703
        %v4715 = vmul.f32 %v4559, %v4703
        %v4716 = vmul.f32 %v4566, %v4703
        %v4717 = vmul.f32 %v4573, %v4703
        %v4718 = vmul.f32 %v4580, %v4703
        %v4719 = vmul.f32 %v4587, %v4703
        %v4720 = vmul.f32 %v4594, %v4703
        %v4721 = vmul.f32 %v4601, %v4703
        %v4722 = vmul.f32 %v4608, %v4703
        %v4723 = vmul.f32 %v4615, %v4703
        %v4724 = vmul.f32 %v4622, %v4703
        %v4725 = vmul.f32 %v4629, %v4703
        %v4726 = vmul.f32 %v4636, %v4703
        %v4727 = vmul.f32 %v4643, %v4703
        %v4728 = vmul.f32 %v4650, %v4703
        %v4729 = vmul.f32 %v4657, %v4703
        %v4730 = vmul.f32 %v4664, %v4703
        %v4731 = vmul.f32 %v4671, %v4703
        %v4732 = vmul.f32 %v4678, %v4703
        %v4733 = vmul.f32 %v4685, %v4703
        %v4734 = vmul.f32 %v4692, %v4703
        %v4735 = vmul.f32 %v4699, %v4703
        %v4768 = vrot.slane %v4705, 7
        %v4769 = vsel %vm534, %v4768, %v4704
        %v4770 = vrot.slane %v4706, 6
        %v4771 = vsel %vm535, %v4770, %v4769
        %v4772 = vrot.slane %v4707, 5
        %v4773 = vsel %vm537, %v4772, %v4771
        %v4774 = vrot.slane %v4708, 4
        %v4775 = vsel %vm539, %v4774, %v4773
        %v4776 = vrot.slane %v4709, 3
        %v4777 = vsel %vm541, %v4776, %v4775
        %v4778 = vrot.slane %v4710, 2
        %v4779 = vsel %vm543, %v4778, %v4777
        %v4780 = vrot.slane %v4711, 1
        %v4781 = vsel %vm545, %v4780, %v4779
        %v4782 = vrot.slane %v4713, 7
        %v4783 = vsel %vm534, %v4782, %v4712
        %v4784 = vrot.slane %v4714, 6
        %v4785 = vsel %vm535, %v4784, %v4783
        %v4786 = vrot.slane %v4715, 5
        %v4787 = vsel %vm537, %v4786, %v4785
        %v4788 = vrot.slane %v4716, 4
        %v4789 = vsel %vm539, %v4788, %v4787
        %v4790 = vrot.slane %v4717, 3
        %v4791 = vsel %vm541, %v4790, %v4789
        %v4792 = vrot.slane %v4718, 2
        %v4793 = vsel %vm543, %v4792, %v4791
        %v4794 = vrot.slane %v4719, 1
        %v4795 = vsel %vm545, %v4794, %v4793
        %v4796 = vrot.slane %v4721, 7
        %v4797 = vsel %vm534, %v4796, %v4720
        %v4798 = vrot.slane %v4722, 6
        %v4799 = vsel %vm535, %v4798, %v4797
        %v4800 = vrot.slane %v4723, 5
        %v4801 = vsel %vm537, %v4800, %v4799
        %v4802 = vrot.slane %v4724, 4
        %v4803 = vsel %vm539, %v4802, %v4801
        %v4804 = vrot.slane %v4725, 3
        %v4805 = vsel %vm541, %v4804, %v4803
        %v4806 = vrot.slane %v4726, 2
        %v4807 = vsel %vm543, %v4806, %v4805
        %v4808 = vrot.slane %v4727, 1
        %v4809 = vsel %vm545, %v4808, %v4807
        %v4810 = vrot.slane %v4729, 7
        %v4811 = vsel %vm534, %v4810, %v4728
        %v4812 = vrot.slane %v4730, 6
        %v4813 = vsel %vm535, %v4812, %v4811
        %v4814 = vrot.slane %v4731, 5
        %v4815 = vsel %vm537, %v4814, %v4813
        %v4816 = vrot.slane %v4732, 4
        %v4817 = vsel %vm539, %v4816, %v4815
        %v4818 = vrot.slane %v4733, 3
        %v4819 = vsel %vm541, %v4818, %v4817
        %v4820 = vrot.slane %v4734, 2
        %v4821 = vsel %vm543, %v4820, %v4819
        %v4822 = vrot.slane %v4735, 1
        %v4823 = vsel %vm545, %v4822, %v4821
        %v4828 = vsel %vm4475, %v4781, 0.0
        %4829 = vadd.xlane.f32.xlu0 %v4828
        %v4830 = vpop.xlane.xlu0 %4829
        %v4831 = vsel %vm4475, %v4795, 0.0
        %4832 = vadd.xlane.f32.xlu0 %v4831
        %v4833 = vpop.xlane.xlu0 %4832
        %v4834 = vsel %vm4475, %v4809, 0.0
        %4835 = vadd.xlane.f32.xlu0 %v4834
        %v4836 = vpop.xlane.xlu0 %4835
        %v4837 = vsel %vm4475, %v4823, 0.0
        %4838 = vadd.xlane.f32.xlu0 %v4837
        %v4839 = vpop.xlane.xlu0 %4838
        %v4840 = vlaneseq
        %v4841 = vshrl.u32 %v4840, 7
        %v4842 = vsub.s32 0, %v4841
        %v4843 = vrot.slane %v395, %v4842
        %v4844 = vmul.f32 %v4215, %v4843
        %v4845 = vmul.f32 %v4216, %v4843
        %v4846 = vmul.f32 %v4217, %v4843
        %v4847 = vmul.f32 %v4218, %v4843
        %v4848 = vsel %vm4475, %v4844, 0.0
        %4849 = vadd.xlane.f32.xlu0 %v4848
        %v4850 = vpop.xlane.xlu0 %4849
        %v4851 = vsel %vm4475, %v4845, 0.0
        %4852 = vadd.xlane.f32.xlu0 %v4851
        %v4853 = vpop.xlane.xlu0 %4852
        %v4854 = vsel %vm4475, %v4846, 0.0
        %4855 = vadd.xlane.f32.xlu0 %v4854
        %v4856 = vpop.xlane.xlu0 %4855
        %v4857 = vsel %vm4475, %v4847, 0.0
        %4858 = vadd.xlane.f32.xlu0 %v4857
        %v4859 = vpop.xlane.xlu0 %4858
        %v4860 = vadd.f32 %v4830, %v4850
        %v4861 = vadd.f32 %v4833, %v4853
        %v4862 = vadd.f32 %v4836, %v4856
        %v4863 = vadd.f32 %v4839, %v4859
        %v4865 = vrot.slane %v395, 1
        %s4866 = vtos %v4865
        %v4867 = vstv %s4866
        %v4869 = vadd.f32 %v4860, %v4867
        %v4870 = vadd.f32 %v4861, %v4867
        %v4871 = vadd.f32 %v4862, %v4867
        %v4872 = vadd.f32 %v4863, %v4867
        %v4873 = vtanh.pop %v4869
        %v4874 = vtanh.pop %v4870
        %v4875 = vtanh.pop %v4871
        %v4876 = vtanh.pop %v4872
        %v4877 = vsel %vm4475, %v4215, %v4873
        %v4878 = vsel %vm4475, %v4216, %v4874
        %v4879 = vsel %vm4475, %v4217, %v4875
        %v4880 = vsel %vm4475, %v4218, %v4876
        %vm4881 = vcmask 400384
        %v4882 = vsel %vm4881, %v4877, 0.0
        %v4883 = vsel %vm4881, %v4878, 0.0
        %v4884 = vsel %vm4881, %v4879, 0.0
        %v4885 = vsel %vm4881, %v4880, 0.0
        %4886 = vst [vmem:[%s378] sm:$0xff] %v4882
        %4887 = vst [vmem:[%s378 + $0x8] sm:$0xff] %v4883
        %4888 = vst [vmem:[%s378 + $0x10] sm:$0xff] %v4884
        %4889 = vst [vmem:[%s378 + $0x18] sm:$0xff] %v4885
        %p4890 = scmp.lt.s32.totalorder %s25, 2
        %s4891 = scalar_select %p4890, %s25, 2
        %s4892 = smul.addr %s4891, 4
        %s4893 = smul.addr %s4892, 8
        %s4894 = scalar_lea.vmem %s5, %s4893
        // Predicated region
        $region57: #{multi_graph_convolution.4} parent=39 // pred_check
          %p4895 = pneg %p173
        $region58: #{multi_graph_convolution.4} parent=39 // pred_check_branch
          %4897 = sbr.rel (%p4895) target = $region60
        $region59: #{multi_graph_convolution.4} parent=39 // pred_region
          _
        $region60: #{multi_graph_convolution.4} parent=39 // pred_fallthru
          _
      $region40: #{multi_graph_convolution.4} parent=5 // pred_fallthru
        _
      %p4898 = scmp.le.s32.totalorder 2, %s20
      // Predicated region
      $region61: #{multi_graph_convolution.4} parent=5 // pred_check
        %p4899 = pneg %p4898
      $region62: #{multi_graph_convolution.4} parent=5 // pred_check_branch
        %4901 = sbr.rel (%p4899) target = $region64
      $region63: #{multi_graph_convolution.4} parent=5 // pred_region
        %s4902 = ssub.s32 %s20, 2
        // Predicated region
        $region65: #{multi_graph_convolution.4} parent=63 // pred_check
          %p4903 = pneg %p179
        $region66: #{multi_graph_convolution.4} parent=63 // pred_check_branch
          %4905 = sbr.rel (%p4903) target = $region68
        $region67: #{multi_graph_convolution.4} parent=63 // pred_region
          %p4906 = scmp.lt.s32.totalorder %s26, 2
          %s4907 = scalar_select %p4906, %s26, 2
          %s4908 = smul.addr %s4907, 4
          %s4909 = smul.addr %s4908, 8
          %s4910 = scalar_lea.vmem %s5, %s4909
        $region68: #{multi_graph_convolution.4} parent=63 // pred_fallthru
          _
      $region64: #{multi_graph_convolution.4} parent=5 // pred_fallthru
        _
    $region6: #{multi_graph_convolution.4} parent=1 // loop_footer
      %s24 = sadd.s32 1, %s20
    $region7: #{multi_graph_convolution.4} parent=1 // loop_footer_branch
      %19 = sbr.rel target = $region3
    $region8: #{multi_graph_convolution.4} parent=1 // loop_exit
      _
    %4911 = vsyncpa [#allocation3], 1
    %s4912 = scalar_lea.sflag [#allocation3], 1
    %4913 = vsyncpa %s4912, 1
    %4914 = vsyncpa [#allocation5], 1
    %s4915 = scalar_lea.sflag [#allocation5], 1
    %4916 = vsyncpa %s4915, 1
    %4917 = vsyncpa [#allocation8], 1
    %s4918 = scalar_lea.sflag [#allocation8], 1
    %4919 = vsyncpa %s4918, 1

// kernel: multi_graph_convolution.5
$region0: #{multi_graph_convolution.5}
  #allocation0 [shape = 'u32[]', space=smem, size = 0x4, offset = 0x4, fixed_abs, tag = 'smem constant byte address 0x4 - core index']
  #allocation1 [shape = 'u32[144,128]{1,0:T(1,128)}', space=vmem, size = 0x12000, scoped, tag = 'internal scratch']
  %s0 = inlined_call_operand.vmem [shape: f32[3,4,4,48], index: 0, kind: input, shape index: {}]
  %s1 = inlined_call_operand.vmem [shape: f32[3,4,4,1], index: 1, kind: input, shape index: {}]
  %s2 = inlined_call_operand.vmem [shape: f32[3,21,48], index: 2, kind: input, shape index: {}]
  %s3 = inlined_call_operand.vmem [shape: f32[3,4,4,4], index: 3, kind: input, shape index: {}]
  %s4 = inlined_call_operand.vmem [shape: bf16[3,48,16], index: 4, kind: input, shape index: {}]
  %s5 = inlined_call_operand.vmem [shape: bf16[3,2,16,16], index: 5, kind: input, shape index: {}]
  %s6 = inlined_call_operand.vmem [shape: f32[3,21,48], index: 6, kind: input, shape index: {}]
  %s7 = inlined_call_operand.vmem [shape: f32[3,4,4,128], index: 7, kind: output, shape index: {}]
  %s8 = sld [smem:[#allocation0]]
  $region61: #{multi_graph_convolution.5} parent=0
    _
  %s10 = ssub.s32 1, %s8
  %s11 = scalar_select 0, %s10, %s8
  loop: start=0, step=1, limit=5
  $region2: #{multi_graph_convolution.5} parent=0 // loop_pre_header
    _
  $region3: #{multi_graph_convolution.5} parent=0 // loop_header
    %s13 = sphi 0, %s17
    %p14 = scmp.ge.s32.totalorder %s13, 5
    %s23 = sphi 0, %s25
    %s26 = sphi 0, %s23
    %s27 = sphi 0, %s26
    %s43 = sphi 0, %s27
    %s49 = sphi 0, %s51
    %s52 = sphi 0, %s49
    %s53 = sphi 0, %s52
    %s69 = sphi 0, %s53
    %s75 = sphi 0, %s77
    %s78 = sphi 0, %s75
    %s79 = sphi 0, %s78
    %s95 = sphi 0, %s79
    %s101 = sphi 0, %s103
    %s104 = sphi 0, %s101
    %s105 = sphi 0, %s104
    %s121 = sphi 0, %s105
    %s127 = sphi 0, %s129
    %s130 = sphi 0, %s127
    %s131 = sphi 0, %s130
    %s147 = sphi 0, %s131
    %s153 = sphi 0, %s155
    %s156 = sphi 0, %s153
    %s157 = sphi 0, %s156
    %s173 = sphi 0, %s157
    %s179 = sphi 0, %s181
    %s182 = sphi 0, %s179
    %s183 = sphi 0, %s182
    %s199 = sphi 0, %s183
    %s205 = sphi 0, %s207
    %s208 = sphi 0, %s205
    %s209 = sphi 0, %s208
    %s225 = sphi 0, %s209
  $region4: #{multi_graph_convolution.5} parent=0 // loop_header_branch
    %16 = sbr.rel (%p14) target = $region8
  $region5: #{multi_graph_convolution.5} parent=0 // loop_body
    %s18 = ssub.s32 %s13, 1
    %s19 = ssub.s32 %s13, 2
    %s20 = sadd.s32 %s13, 1
    %s21 = ssub.s32 %s13, %s20
    %p22 = scmp.eq.s32.totalorder %s21, 0
    %s24 = sadd.s32 %s23, 1
    %s25 = scalar_select %p22, %s23, %s24
    %p28 = pneg %p22
    %p29 = scmp.eq.s32.totalorder %s13, 2
    %p30 = por %p28, %p29
    %p31 = scmp.ne.s32.totalorder %s23, %s26
    %p32 = scmp.eq.s32.totalorder %s13, 0
    %p33 = por %p31, %p32
    %p34 = scmp.ne.s32.totalorder %s23, %s26
    %p35 = scmp.eq.s32.totalorder %s18, 2
    %p36 = por %p34, %p35
    %p37 = scmp.ne.s32.totalorder %s26, %s27
    %p38 = scmp.eq.s32.totalorder %s18, 0
    %p39 = por %p37, %p38
    %p40 = scmp.ne.s32.totalorder %s26, %s27
    %p41 = scmp.eq.s32.totalorder %s19, 2
    %p42 = por %p40, %p41
    %p44 = scmp.ne.s32.totalorder %s27, %s43
    %p45 = scmp.eq.s32.totalorder %s19, 0
    %p46 = por %p44, %p45
    %s47 = ssub.s32 %s13, %s20
    %p48 = scmp.eq.s32.totalorder %s47, 0
    %s50 = sadd.s32 %s49, 1
    %s51 = scalar_select %p48, %s49, %s50
    %p54 = pneg %p48
    %p55 = scmp.eq.s32.totalorder %s13, 2
    %p56 = por %p54, %p55
    %p57 = scmp.ne.s32.totalorder %s49, %s52
    %p58 = scmp.eq.s32.totalorder %s13, 0
    %p59 = por %p57, %p58
    %p60 = scmp.ne.s32.totalorder %s49, %s52
    %p61 = scmp.eq.s32.totalorder %s18, 2
    %p62 = por %p60, %p61
    %p63 = scmp.ne.s32.totalorder %s52, %s53
    %p64 = scmp.eq.s32.totalorder %s18, 0
    %p65 = por %p63, %p64
    %p66 = scmp.ne.s32.totalorder %s52, %s53
    %p67 = scmp.eq.s32.totalorder %s19, 2
    %p68 = por %p66, %p67
    %p70 = scmp.ne.s32.totalorder %s53, %s69
    %p71 = scmp.eq.s32.totalorder %s19, 0
    %p72 = por %p70, %p71
    %s73 = ssub.s32 %s13, %s20
    %p74 = scmp.eq.s32.totalorder %s73, 0
    %s76 = sadd.s32 %s75, 1
    %s77 = scalar_select %p74, %s75, %s76
    %p80 = pneg %p74
    %p81 = scmp.eq.s32.totalorder %s13, 2
    %p82 = por %p80, %p81
    %p83 = scmp.ne.s32.totalorder %s75, %s78
    %p84 = scmp.eq.s32.totalorder %s13, 0
    %p85 = por %p83, %p84
    %p86 = scmp.ne.s32.totalorder %s75, %s78
    %p87 = scmp.eq.s32.totalorder %s18, 2
    %p88 = por %p86, %p87
    %p89 = scmp.ne.s32.totalorder %s78, %s79
    %p90 = scmp.eq.s32.totalorder %s18, 0
    %p91 = por %p89, %p90
    %p92 = scmp.ne.s32.totalorder %s78, %s79
    %p93 = scmp.eq.s32.totalorder %s19, 2
    %p94 = por %p92, %p93
    %p96 = scmp.ne.s32.totalorder %s79, %s95
    %p97 = scmp.eq.s32.totalorder %s19, 0
    %p98 = por %p96, %p97
    %s99 = ssub.s32 %s13, %s20
    %p100 = scmp.eq.s32.totalorder %s99, 0
    %s102 = sadd.s32 %s101, 1
    %s103 = scalar_select %p100, %s101, %s102
    %p106 = pneg %p100
    %p107 = scmp.eq.s32.totalorder %s13, 2
    %p108 = por %p106, %p107
    %p109 = scmp.ne.s32.totalorder %s101, %s104
    %p110 = scmp.eq.s32.totalorder %s13, 0
    %p111 = por %p109, %p110
    %p112 = scmp.ne.s32.totalorder %s101, %s104
    %p113 = scmp.eq.s32.totalorder %s18, 2
    %p114 = por %p112, %p113
    %p115 = scmp.ne.s32.totalorder %s104, %s105
    %p116 = scmp.eq.s32.totalorder %s18, 0
    %p117 = por %p115, %p116
    %p118 = scmp.ne.s32.totalorder %s104, %s105
    %p119 = scmp.eq.s32.totalorder %s19, 2
    %p120 = por %p118, %p119
    %p122 = scmp.ne.s32.totalorder %s105, %s121
    %p123 = scmp.eq.s32.totalorder %s19, 0
    %p124 = por %p122, %p123
    %s125 = ssub.s32 %s13, %s20
    %p126 = scmp.eq.s32.totalorder %s125, 0
    %s128 = sadd.s32 %s127, 1
    %s129 = scalar_select %p126, %s127, %s128
    %p132 = pneg %p126
    %p133 = scmp.eq.s32.totalorder %s13, 2
    %p134 = por %p132, %p133
    %p135 = scmp.ne.s32.totalorder %s127, %s130
    %p136 = scmp.eq.s32.totalorder %s13, 0
    %p137 = por %p135, %p136
    %p138 = scmp.ne.s32.totalorder %s127, %s130
    %p139 = scmp.eq.s32.totalorder %s18, 2
    %p140 = por %p138, %p139
    %p141 = scmp.ne.s32.totalorder %s130, %s131
    %p142 = scmp.eq.s32.totalorder %s18, 0
    %p143 = por %p141, %p142
    %p144 = scmp.ne.s32.totalorder %s130, %s131
    %p145 = scmp.eq.s32.totalorder %s19, 2
    %p146 = por %p144, %p145
    %p148 = scmp.ne.s32.totalorder %s131, %s147
    %p149 = scmp.eq.s32.totalorder %s19, 0
    %p150 = por %p148, %p149
    %s151 = ssub.s32 %s13, %s20
    %p152 = scmp.eq.s32.totalorder %s151, 0
    %s154 = sadd.s32 %s153, 1
    %s155 = scalar_select %p152, %s153, %s154
    %p158 = pneg %p152
    %p159 = scmp.eq.s32.totalorder %s13, 2
    %p160 = por %p158, %p159
    %p161 = scmp.ne.s32.totalorder %s153, %s156
    %p162 = scmp.eq.s32.totalorder %s13, 0
    %p163 = por %p161, %p162
    %p164 = scmp.ne.s32.totalorder %s153, %s156
    %p165 = scmp.eq.s32.totalorder %s18, 2
    %p166 = por %p164, %p165
    %p167 = scmp.ne.s32.totalorder %s156, %s157
    %p168 = scmp.eq.s32.totalorder %s18, 0
    %p169 = por %p167, %p168
    %p170 = scmp.ne.s32.totalorder %s156, %s157
    %p171 = scmp.eq.s32.totalorder %s19, 2
    %p172 = por %p170, %p171
    %p174 = scmp.ne.s32.totalorder %s157, %s173
    %p175 = scmp.eq.s32.totalorder %s19, 0
    %p176 = por %p174, %p175
    %s177 = ssub.s32 %s13, %s20
    %p178 = scmp.eq.s32.totalorder %s177, 0
    %s180 = sadd.s32 %s179, 1
    %s181 = scalar_select %p178, %s179, %s180
    %p184 = pneg %p178
    %p185 = scmp.eq.s32.totalorder %s13, 2
    %p186 = por %p184, %p185
    %p187 = scmp.ne.s32.totalorder %s179, %s182
    %p188 = scmp.eq.s32.totalorder %s13, 0
    %p189 = por %p187, %p188
    %p190 = scmp.ne.s32.totalorder %s179, %s182
    %p191 = scmp.eq.s32.totalorder %s18, 2
    %p192 = por %p190, %p191
    %p193 = scmp.ne.s32.totalorder %s182, %s183
    %p194 = scmp.eq.s32.totalorder %s18, 0
    %p195 = por %p193, %p194
    %p196 = scmp.ne.s32.totalorder %s182, %s183
    %p197 = scmp.eq.s32.totalorder %s19, 2
    %p198 = por %p196, %p197
    %p200 = scmp.ne.s32.totalorder %s183, %s199
    %p201 = scmp.eq.s32.totalorder %s19, 0
    %p202 = por %p200, %p201
    %s203 = ssub.s32 %s13, %s20
    %p204 = scmp.eq.s32.totalorder %s203, 0
    %s206 = sadd.s32 %s205, 1
    %s207 = scalar_select %p204, %s205, %s206
    %p210 = pneg %p204
    %p211 = scmp.eq.s32.totalorder %s13, 2
    %p212 = por %p210, %p211
    %p213 = scmp.ne.s32.totalorder %s205, %s208
    %p214 = scmp.eq.s32.totalorder %s13, 0
    %p215 = por %p213, %p214
    %p216 = scmp.ne.s32.totalorder %s205, %s208
    %p217 = scmp.eq.s32.totalorder %s18, 2
    %p218 = por %p216, %p217
    %p219 = scmp.ne.s32.totalorder %s208, %s209
    %p220 = scmp.eq.s32.totalorder %s18, 0
    %p221 = por %p219, %p220
    %p222 = scmp.ne.s32.totalorder %s208, %s209
    %p223 = scmp.eq.s32.totalorder %s19, 2
    %p224 = por %p222, %p223
    %p226 = scmp.ne.s32.totalorder %s209, %s225
    %p227 = scmp.eq.s32.totalorder %s19, 0
    %p228 = por %p226, %p227
    %p229 = scmp.le.s32.totalorder 1, %s13
    %p230 = scmp.lt.s32.totalorder %s13, 4
    %p231 = pnand %p229, %p230
    %p232 = pneg %p231
    // Predicated region
    $region9: #{multi_graph_convolution.5} parent=5 // pred_check
      _
    $region10: #{multi_graph_convolution.5} parent=5 // pred_check_branch
      %234 = sbr.rel (%p231) target = $region12
    $region11: #{multi_graph_convolution.5} parent=5 // pred_region
      %s235 = ssub.s32 %s13, 1
    $region12: #{multi_graph_convolution.5} parent=5 // pred_fallthru
      _
    %p236 = scmp.lt.s32.totalorder %s13, 3
    // Predicated region
    $region13: #{multi_graph_convolution.5} parent=5 // pred_check
      %p237 = pneg %p236
    $region14: #{multi_graph_convolution.5} parent=5 // pred_check_branch
      %239 = sbr.rel (%p237) target = $region16
    $region15: #{multi_graph_convolution.5} parent=5 // pred_region
      // Predicated region
      $region17: #{multi_graph_convolution.5} parent=15 // pred_check
        %p240 = pneg %p33
      $region18: #{multi_graph_convolution.5} parent=15 // pred_check_branch
        %242 = sbr.rel (%p240) target = $region20
      $region19: #{multi_graph_convolution.5} parent=15 // pred_region
        %p243 = scmp.lt.s32.totalorder %s13, 2
        %s244 = scalar_select %p243, %s13, 2
        %s245 = smul.addr %s244, 4
        %s246 = smul.addr %s245, 4
        %s247 = scalar_lea.vmem %s0, %s246
      $region20: #{multi_graph_convolution.5} parent=15 // pred_fallthru
        _
      // Predicated region
      $region21: #{multi_graph_convolution.5} parent=15 // pred_check
        %p248 = pneg %p59
      $region22: #{multi_graph_convolution.5} parent=15 // pred_check_branch
        %250 = sbr.rel (%p248) target = $region24
      $region23: #{multi_graph_convolution.5} parent=15 // pred_region
        %p251 = scmp.lt.s32.totalorder %s13, 2
        %s252 = scalar_select %p251, %s13, 2
        %s253 = smul.addr %s252, 4
        %s254 = smul.addr %s253, 4
        %s255 = scalar_lea.vmem %s1, %s254
      $region24: #{multi_graph_convolution.5} parent=15 // pred_fallthru
        _
      // Predicated region
      $region25: #{multi_graph_convolution.5} parent=15 // pred_check
        %p256 = pneg %p85
      $region26: #{multi_graph_convolution.5} parent=15 // pred_check_branch
        %258 = sbr.rel (%p256) target = $region28
      $region27: #{multi_graph_convolution.5} parent=15 // pred_region
        %p259 = scmp.lt.s32.totalorder %s13, 2
        %s260 = scalar_select %p259, %s13, 2
        %s261 = smul.addr %s260, 3
        %s262 = smul.addr %s261, 8
        %s263 = scalar_lea.vmem %s2, %s262
      $region28: #{multi_graph_convolution.5} parent=15 // pred_fallthru
        _
      // Predicated region
      $region29: #{multi_graph_convolution.5} parent=15 // pred_check
        %p264 = pneg %p111
      $region30: #{multi_graph_convolution.5} parent=15 // pred_check_branch
        %266 = sbr.rel (%p264) target = $region32
      $region31: #{multi_graph_convolution.5} parent=15 // pred_region
        %p267 = scmp.lt.s32.totalorder %s13, 2
        %s268 = scalar_select %p267, %s13, 2
        %s269 = smul.addr %s268, 4
        %s270 = smul.addr %s269, 4
        %s271 = scalar_lea.vmem %s3, %s270
      $region32: #{multi_graph_convolution.5} parent=15 // pred_fallthru
        _
      // Predicated region
      $region33: #{multi_graph_convolution.5} parent=15 // pred_check
        %p272 = pneg %p137
      $region34: #{multi_graph_convolution.5} parent=15 // pred_check_branch
        %274 = sbr.rel (%p272) target = $region36
      $region35: #{multi_graph_convolution.5} parent=15 // pred_region
        %p275 = scmp.lt.s32.totalorder %s13, 2
        %s276 = scalar_select %p275, %s13, 2
        %s277 = smul.addr %s276, 6
        %s278 = smul.addr %s277, 4
        %s279 = scalar_lea.vmem %s4, %s278
      $region36: #{multi_graph_convolution.5} parent=15 // pred_fallthru
        _
      // Predicated region
      $region37: #{multi_graph_convolution.5} parent=15 // pred_check
        %p280 = pneg %p163
      $region38: #{multi_graph_convolution.5} parent=15 // pred_check_branch
        %282 = sbr.rel (%p280) target = $region40
      $region39: #{multi_graph_convolution.5} parent=15 // pred_region
        %p283 = scmp.lt.s32.totalorder %s13, 2
        %s284 = scalar_select %p283, %s13, 2
        %s285 = smul.addr %s284, 4
        %s286 = smul.addr %s285, 4
        %s287 = scalar_lea.vmem %s5, %s286
      $region40: #{multi_graph_convolution.5} parent=15 // pred_fallthru
        _
      // Predicated region
      $region41: #{multi_graph_convolution.5} parent=15 // pred_check
        %p288 = pneg %p189
      $region42: #{multi_graph_convolution.5} parent=15 // pred_check_branch
        %290 = sbr.rel (%p288) target = $region44
      $region43: #{multi_graph_convolution.5} parent=15 // pred_region
        %p291 = scmp.lt.s32.totalorder %s13, 2
        %s292 = scalar_select %p291, %s13, 2
        %s293 = smul.addr %s292, 3
        %s294 = smul.addr %s293, 8
        %s295 = scalar_lea.vmem %s6, %s294
      $region44: #{multi_graph_convolution.5} parent=15 // pred_fallthru
        _
    $region16: #{multi_graph_convolution.5} parent=5 // pred_fallthru
      _
    %p296 = scmp.le.s32.totalorder 1, %s13
    %p297 = scmp.lt.s32.totalorder %s13, 4
    %p298 = pnand %p296, %p297
    %p299 = pneg %p298
    // Predicated region
    $region45: #{multi_graph_convolution.5} parent=5 // pred_check
      _
    $region46: #{multi_graph_convolution.5} parent=5 // pred_check_branch
      %301 = sbr.rel (%p298) target = $region48
    $region47: #{multi_graph_convolution.5} parent=5 // pred_region
      %s302 = ssub.s32 %s13, 1
      %p303 = scmp.lt.s32.totalorder %s18, 2
      %s304 = scalar_select %p303, %s18, 2
      %s305 = smul.addr %s304, 4
      %s306 = smul.addr %s305, 4
      %s307 = scalar_lea.vmem %s0, %s306
      %p308 = pneg %p39
      %p309 = pneg %p36
      %p310 = scmp.lt.s32.totalorder %s18, 2
      %s311 = scalar_select %p310, %s18, 2
      %s312 = smul.addr %s311, 4
      %s313 = smul.addr %s312, 4
      %s314 = scalar_lea.vmem %s1, %s313
      %p315 = pneg %p65
      %p316 = pneg %p62
      %p317 = scmp.lt.s32.totalorder %s18, 2
      %s318 = scalar_select %p317, %s18, 2
      %s319 = smul.addr %s318, 3
      %s320 = smul.addr %s319, 8
      %s321 = scalar_lea.vmem %s2, %s320
      %p322 = pneg %p91
      %p323 = pneg %p88
      %p324 = scmp.lt.s32.totalorder %s18, 2
      %s325 = scalar_select %p324, %s18, 2
      %s326 = smul.addr %s325, 4
      %s327 = smul.addr %s326, 4
      %s328 = scalar_lea.vmem %s3, %s327
      %p329 = pneg %p117
      %p330 = pneg %p114
      %p331 = scmp.lt.s32.totalorder %s18, 2
      %s332 = scalar_select %p331, %s18, 2
      %s333 = smul.addr %s332, 6
      %s334 = smul.addr %s333, 4
      %s335 = scalar_lea.vmem %s4, %s334
      %p336 = pneg %p143
      %p337 = pneg %p140
      %p338 = scmp.lt.s32.totalorder %s18, 2
      %s339 = scalar_select %p338, %s18, 2
      %s340 = smul.addr %s339, 4
      %s341 = smul.addr %s340, 4
      %s342 = scalar_lea.vmem %s5, %s341
      %p343 = pneg %p169
      %p344 = pneg %p166
      %p345 = scmp.lt.s32.totalorder %s18, 2
      %s346 = scalar_select %p345, %s18, 2
      %s347 = smul.addr %s346, 3
      %s348 = smul.addr %s347, 8
      %s349 = scalar_lea.vmem %s6, %s348
      %p350 = pneg %p195
      %p351 = pneg %p192
      %p352 = pneg %p221
      %p353 = pneg %p218
      %p354 = scmp.lt.s32.totalorder %s18, 2
      %s355 = scalar_select %p354, %s18, 2
      %s356 = smul.addr %s355, 4
      %s357 = smul.addr %s356, 4
      %s358 = scalar_lea.vmem %s7, %s357
      %p359 = scmp.lt.s32.totalorder %s18, 2
      %s360 = scalar_select %p359, %s18, 2
      %s361 = smul.addr %s360, 4
      %s362 = smul.addr %s361, 4
      %s363 = scalar_lea.vmem %s0, %s362
      %p364 = scmp.lt.s32.totalorder %s18, 2
      %s365 = scalar_select %p364, %s18, 2
      %s366 = smul.addr %s365, 4
      %s367 = smul.addr %s366, 4
      %s368 = scalar_lea.vmem %s1, %s367
      %p369 = scmp.lt.s32.totalorder %s18, 2
      %s370 = scalar_select %p369, %s18, 2
      %s371 = smul.addr %s370, 3
      %s372 = smul.addr %s371, 8
      %s373 = scalar_lea.vmem %s2, %s372
      %p374 = scmp.lt.s32.totalorder %s18, 2
      %s375 = scalar_select %p374, %s18, 2
      %s376 = smul.addr %s375, 4
      %s377 = smul.addr %s376, 4
      %s378 = scalar_lea.vmem %s3, %s377
      %p379 = scmp.lt.s32.totalorder %s18, 2
      %s380 = scalar_select %p379, %s18, 2
      %s381 = smul.addr %s380, 6
      %s382 = smul.addr %s381, 4
      %s383 = scalar_lea.vmem %s4, %s382
      %p384 = scmp.lt.s32.totalorder %s18, 2
      %s385 = scalar_select %p384, %s18, 2
      %s386 = smul.addr %s385, 4
      %s387 = smul.addr %s386, 4
      %s388 = scalar_lea.vmem %s5, %s387
      %p389 = scmp.lt.s32.totalorder %s18, 2
      %s390 = scalar_select %p389, %s18, 2
      %s391 = smul.addr %s390, 3
      %s392 = smul.addr %s391, 8
      %s393 = scalar_lea.vmem %s6, %s392
      %p394 = scmp.lt.s32.totalorder %s18, 2
      %s395 = scalar_select %p394, %s18, 2
      %s396 = smul.addr %s395, 4
      %s397 = smul.addr %s396, 4
      %s398 = scalar_lea.vmem %s7, %s397
      %v400 = vld [vmem:[%s373 + $0x10] sm:$0x1f]
      %v401 = vld [vmem:[%s363] sm:$0xf]
      %v402 = vld [vmem:[%s363 + $0x4] sm:$0xf]
      %v403 = vld [vmem:[%s363 + $0x8] sm:$0xf]
      %v404 = vld [vmem:[%s363 + $0xc] sm:$0xf]
      %v405 = vld [vmem:[%s368] sm:$0xf]
      %v406 = vld [vmem:[%s368 + $0x4] sm:$0xf]
      %v407 = vld [vmem:[%s368 + $0x8] sm:$0xf]
      %v408 = vld [vmem:[%s368 + $0xc] sm:$0xf]
      %410 = vset.pattern.permute.xlu0 0
      %411 = vperm.xlu0 %410, %v405
      %v412 = vpop.permute.xlu0 %411
      %415 = vset.pattern.permute.xlu0 0
      %416 = vperm.xlu0 %415, %v406
      %v417 = vpop.permute.xlu0 %416
      %420 = vset.pattern.permute.xlu0 0
      %421 = vperm.xlu0 %420, %v407
      %v422 = vpop.permute.xlu0 %421
      %425 = vset.pattern.permute.xlu0 0
      %426 = vperm.xlu0 %425, %v408
      %v427 = vpop.permute.xlu0 %426
      %v429 = vmul.f32 %v401, %v412
      %v430 = vmul.f32 %v402, %v417
      %v431 = vmul.f32 %v403, %v422
      %v432 = vmul.f32 %v404, %v427
      %vm433 = vcmask 388096
      %v434 = vsel %vm433, %v429, 0.0
      %v435 = vrot.slane %v434, 4
      %v436 = vadd.f32 %v434, %v435
      %v437 = vrot.slane %v436, 2
      %v438 = vadd.f32 %v436, %v437
      %v439 = vrot.slane %v438, 1
      %v440 = vadd.f32 %v438, %v439
      %v441 = vsel %vm433, %v430, 0.0
      %v442 = vrot.slane %v441, 4
      %v443 = vadd.f32 %v441, %v442
      %v444 = vrot.slane %v443, 2
      %v445 = vadd.f32 %v443, %v444
      %v446 = vrot.slane %v445, 1
      %v447 = vadd.f32 %v445, %v446
      %v448 = vsel %vm433, %v431, 0.0
      %v449 = vrot.slane %v448, 4
      %v450 = vadd.f32 %v448, %v449
      %v451 = vrot.slane %v450, 2
      %v452 = vadd.f32 %v450, %v451
      %v453 = vrot.slane %v452, 1
      %v454 = vadd.f32 %v452, %v453
      %v455 = vsel %vm433, %v432, 0.0
      %v456 = vrot.slane %v455, 4
      %v457 = vadd.f32 %v455, %v456
      %v458 = vrot.slane %v457, 2
      %v459 = vadd.f32 %v457, %v458
      %v460 = vrot.slane %v459, 1
      %v461 = vadd.f32 %v459, %v460
      %v462 = vrcp.pop 4.0
      %v463 = vmul.f32 %v440, %v462
      %v464 = vmul.f32 %v447, %v462
      %v465 = vmul.f32 %v454, %v462
      %v466 = vmul.f32 %v461, %v462
      %v467 = vmul.f32 %v463, %v400
      %v468 = vmul.f32 %v464, %v400
      %v469 = vmul.f32 %v465, %v400
      %v470 = vmul.f32 %v466, %v400
      %v471 = vlaneseq
      %v472 = vshrl.u32 %v471, 7
      %v473 = vsub.s32 4, %v472
      %v474 = vrot.slane %v467, %v473
      %v475 = vlaneseq
      %v476 = vshrl.u32 %v475, 7
      %v477 = vsub.s32 4, %v476
      %v478 = vrot.slane %v468, %v477
      %v479 = vlaneseq
      %v480 = vshrl.u32 %v479, 7
      %v481 = vsub.s32 4, %v480
      %v482 = vrot.slane %v469, %v481
      %v483 = vlaneseq
      %v484 = vshrl.u32 %v483, 7
      %v485 = vsub.s32 4, %v484
      %v486 = vrot.slane %v470, %v485
      %v487 = vsub.f32 %v429, %v474
      %v488 = vsub.f32 %v430, %v478
      %v489 = vsub.f32 %v431, %v482
      %v490 = vsub.f32 %v432, %v486
      %v491 = vmul.f32 %v487, %v487
      %v492 = vmul.f32 %v488, %v488
      %v493 = vmul.f32 %v489, %v489
      %v494 = vmul.f32 %v490, %v490
      %v495 = vsel %vm433, %v491, 0.0
      %v496 = vrot.slane %v495, 4
      %v497 = vadd.f32 %v495, %v496
      %v498 = vrot.slane %v497, 2
      %v499 = vadd.f32 %v497, %v498
      %v500 = vrot.slane %v499, 1
      %v501 = vadd.f32 %v499, %v500
      %v502 = vsel %vm433, %v492, 0.0
      %v503 = vrot.slane %v502, 4
      %v504 = vadd.f32 %v502, %v503
      %v505 = vrot.slane %v504, 2
      %v506 = vadd.f32 %v504, %v505
      %v507 = vrot.slane %v506, 1
      %v508 = vadd.f32 %v506, %v507
      %v509 = vsel %vm433, %v493, 0.0
      %v510 = vrot.slane %v509, 4
      %v511 = vadd.f32 %v509, %v510
      %v512 = vrot.slane %v511, 2
      %v513 = vadd.f32 %v511, %v512
      %v514 = vrot.slane %v513, 1
      %v515 = vadd.f32 %v513, %v514
      %v516 = vsel %vm433, %v494, 0.0
      %v517 = vrot.slane %v516, 4
      %v518 = vadd.f32 %v516, %v517
      %v519 = vrot.slane %v518, 2
      %v520 = vadd.f32 %v518, %v519
      %v521 = vrot.slane %v520, 1
      %v522 = vadd.f32 %v520, %v521
      %v523 = vmul.f32 %v501, %v462
      %v524 = vmul.f32 %v508, %v462
      %v525 = vmul.f32 %v515, %v462
      %v526 = vmul.f32 %v522, %v462
      %v527 = vlaneseq
      %v528 = vshrl.u32 %v527, 7
      %v529 = vsub.s32 2, %v528
      %v530 = vrot.slane %v400, %v529
      %v531 = vmul.f32 %v530, %v487
      %v532 = vmul.f32 %v530, %v488
      %v533 = vmul.f32 %v530, %v489
      %v534 = vmul.f32 %v530, %v490
      %v535 = vadd.f32 %v523, 1e-05
      %v536 = vadd.f32 %v524, 1e-05
      %v537 = vadd.f32 %v525, 1e-05
      %v538 = vadd.f32 %v526, 1e-05
      %v539 = vrsqrt.pop %v535
      %v540 = vrsqrt.pop %v536
      %v541 = vrsqrt.pop %v537
      %v542 = vrsqrt.pop %v538
      %v543 = vmul.f32 %v531, %v539
      %v544 = vmul.f32 %v532, %v540
      %v545 = vmul.f32 %v533, %v541
      %v546 = vmul.f32 %v534, %v542
      %v547 = vlaneseq
      %v548 = vshrl.u32 %v547, 7
      %v549 = vsub.s32 3, %v548
      %v550 = vrot.slane %v400, %v549
      %v551 = vadd.f32 %v543, %v550
      %v552 = vadd.f32 %v544, %v550
      %v553 = vadd.f32 %v545, %v550
      %v554 = vadd.f32 %v546, %v550
      %v555 = vld [vmem:[%s378] sm:$0xf]
      %v556 = vld [vmem:[%s378 + $0x4] sm:$0xf]
      %v557 = vld [vmem:[%s378 + $0x8] sm:$0xf]
      %v558 = vld [vmem:[%s378 + $0xc] sm:$0xf]
      %v559 = vld [vmem:[%s383] sm:$0xf]
      %v560 = vld [vmem:[%s383 + $0x4] sm:$0xf]
      %v561 = vld [vmem:[%s383 + $0x8] sm:$0xf]
      %v562 = vld [vmem:[%s383 + $0xc] sm:$0xf]
      %v563 = vld [vmem:[%s383 + $0x10] sm:$0xf]
      %v564 = vld [vmem:[%s383 + $0x14] sm:$0xf]
      %v565 = vld [vmem:[%s388] sm:$0xf]
      %v566 = vld [vmem:[%s388 + $0x4] sm:$0xf]
      %v567 = vld [vmem:[%s388 + $0x8] sm:$0xf]
      %v568 = vld [vmem:[%s388 + $0xc] sm:$0xf]
      %v569 = vld [vmem:[%s393] sm:$0xff]
      %v570 = vld [vmem:[%s393 + $0x8] sm:$0xff]
      %v571 = vld [vmem:[%s393 + $0x10] sm:$0x1f]
      %v572 = vlaneseq
      %v573 = vshrl.u32 %v572, 7
      %v574 = vlaneseq
      %v575 = vand.u32 %v574, 127
      %vm576 = vcmp.gt.f32.partialorder %v555, 0.0
      %vm577 = vcmp.gt.f32.partialorder %v556, 0.0
      %vm578 = vcmp.gt.f32.partialorder %v557, 0.0
      %vm579 = vcmp.gt.f32.partialorder %v558, 0.0
      %vm580 = vcmp.eq.s32.totalorder %v573, %v575
      %v581 = vsel %vm580, 1, 0
      %vm582 = vcmp.eq.s32.totalorder %v581, 1
      %vm583 = vmor %vm576, %vm582
      %vm584 = vmor %vm577, %vm582
      %vm585 = vmor %vm578, %vm582
      %vm586 = vmor %vm579, %vm582
      %v591 = vcombine.low %v551, %v552
      %v592 = vcombine.low %v553, %v554
      %v595 = vpack.c.bf16 %v592, %v591
      %v602 = vunpack.c.l.b16 %v559
      %v603 = vunpack.c.l.b16 %v560
      %v604 = vunpack.c.l.b16 %v561
      %v605 = vunpack.c.l.b16 %v562
      %v606 = vunpack.c.l.b16 %v563
      %v607 = vunpack.c.l.b16 %v564
      %v608 = vpack.c.b16 %v603, %v602
      %v609 = vpack.c.b16 %v605, %v604
      %v610 = vpack.c.b16 %v607, %v606
      %vm614 = vcmask 392192
      %v616 = vsel %vm614, %v595, 0
      %618 = vmatprep.subr.bf16.mxu0 0
      %619 = vmatpush1.bf16.msra.mxu0 %v608
      %620 = vmatprep.subr.bf16.mxu0 0
      %621 = vmatpush1.bf16.msra.mxu0 %v609
      %622 = vmatprep.subr.bf16.mxu0 0
      %623 = vmatpush1.bf16.msra.mxu0 %v610
      %624 = vmatprep.subr.bf16.mxu0 0
      %625 = vmatpush1.bf16.msra.mxu0 0
      %626 = vmatprep.subr.bf16.mxu0 0
      %627 = vmatpush1.bf16.msra.mxu0 0
      %628 = vmatprep.subr.bf16.mxu0 0
      %629 = vmatpush1.bf16.msra.mxu0 0
      %630 = vmatprep.subr.bf16.mxu0 0
      %631 = vmatpush1.bf16.msra.mxu0 0
      %632 = vmatprep.subr.bf16.mxu0 0
      %633 = vmatpush1.bf16.msra.mxu0 0
      %634 = vmatprep.subr.bf16.mxu0 0
      %635 = vmatpush1.bf16.msra.mxu0 0
      %636 = vmatprep.subr.bf16.mxu0 0
      %637 = vmatpush1.bf16.msra.mxu0 0
      %638 = vmatprep.subr.bf16.mxu0 0
      %639 = vmatpush1.bf16.msra.mxu0 0
      %640 = vmatprep.subr.bf16.mxu0 0
      %641 = vmatpush1.bf16.msra.mxu0 0
      %642 = vmatprep.subr.bf16.mxu0 0
      %643 = vmatpush1.bf16.msra.mxu0 0
      %644 = vmatprep.subr.bf16.mxu0 0
      %645 = vmatpush1.bf16.msra.mxu0 0
      %646 = vmatprep.subr.bf16.mxu0 0
      %647 = vmatpush1.bf16.msra.mxu0 0
      %648 = vmatprep.subr.bf16.mxu0 0
      %649 = vmatpush1.bf16.msra.mxu0 0
      %650 = vmatprep.mubr.bf16.mxu0 0
      %651 = vmatmul.mubr.bf16.gmra.mrb[0].mxu0 %v616
      %v652 = vpop.f32.mrb[0].mxu0
      %v653 = vadd.f32 0.0, %v652
      %v654 = vpop.f32.mrb[0].mxu0
      %v655 = vpop.f32.mrb[0].mxu0
      %v656 = vadd.f32 0.0, %v655
      %v657 = vpop.f32.mrb[0].mxu0
      %658 = vdwg.mxu0
      %v661 = vcombine.high %v653, %v653
      %v662 = vcombine.high %v656, %v656
      %v665 = vlaneseq
      %v666 = vshrl.u32 %v665, 7
      %v667 = vsub.s32 3, %v666
      %v668 = vrot.slane %v569, %v667
      %v669 = vmul.f32 %v653, %v668
      %v670 = vmul.f32 %v661, %v668
      %v671 = vmul.f32 %v656, %v668
      %v672 = vmul.f32 %v662, %v668
      %vm673 = vcmask 125952
      %v674 = vsel %vm673, %v669, 0.0
      %675 = vadd.xlane.f32.xlu0 %v674
      %v676 = vpop.xlane.xlu0 %675
      %v677 = vsel %vm673, %v670, 0.0
      %678 = vadd.xlane.f32.xlu0 %v677
      %v679 = vpop.xlane.xlu0 %678
      %v680 = vsel %vm673, %v671, 0.0
      %681 = vadd.xlane.f32.xlu0 %v680
      %v682 = vpop.xlane.xlu0 %681
      %v683 = vsel %vm673, %v672, 0.0
      %684 = vadd.xlane.f32.xlu0 %v683
      %v685 = vpop.xlane.xlu0 %684
      %v686 = vlaneseq
      %v687 = vshrl.u32 %v686, 7
      %v688 = vsub.s32 0, %v687
      %v689 = vrot.slane %v569, %v688
      %v690 = vmul.f32 %v653, %v689
      %v691 = vmul.f32 %v661, %v689
      %v692 = vmul.f32 %v656, %v689
      %v693 = vmul.f32 %v662, %v689
      %v694 = vsel %vm673, %v690, 0.0
      %695 = vadd.xlane.f32.xlu0 %v694
      %v696 = vpop.xlane.xlu0 %695
      %v697 = vsel %vm673, %v691, 0.0
      %698 = vadd.xlane.f32.xlu0 %v697
      %v699 = vpop.xlane.xlu0 %698
      %v700 = vsel %vm673, %v692, 0.0
      %701 = vadd.xlane.f32.xlu0 %v700
      %v702 = vpop.xlane.xlu0 %701
      %v703 = vsel %vm673, %v693, 0.0
      %704 = vadd.xlane.f32.xlu0 %v703
      %v705 = vpop.xlane.xlu0 %704
      %v710 = vlaneseq
      %v711 = vshrl.u32 %v710, 7
      %v712 = vsub.s32 %v575, %v711
      %v713 = vrot.slane %v696, %v712
      %v714 = vlaneseq
      %v715 = vshrl.u32 %v714, 7
      %v716 = vsub.s32 %v575, %v715
      %v717 = vrot.slane %v699, %v716
      %v718 = vlaneseq
      %v719 = vshrl.u32 %v718, 7
      %v720 = vsub.s32 %v575, %v719
      %v721 = vrot.slane %v702, %v720
      %v722 = vlaneseq
      %v723 = vshrl.u32 %v722, 7
      %v724 = vsub.s32 %v575, %v723
      %v725 = vrot.slane %v705, %v724
      %vm726 = vcmask 1041409
      %vm727 = vcmask 1042434
      %v728 = vsel %vm727, %v713, %v713
      %vm729 = vcmask 1043459
      %v730 = vsel %vm729, %v713, %v728
      %v731 = vsel %vm727, %v717, %v717
      %v732 = vsel %vm729, %v717, %v731
      %v733 = vsel %vm727, %v721, %v721
      %v734 = vsel %vm729, %v721, %v733
      %v735 = vsel %vm727, %v725, %v725
      %v736 = vsel %vm729, %v725, %v735
      %v741 = vadd.f32 %v676, %v730
      %v742 = vadd.f32 %v679, %v732
      %v743 = vadd.f32 %v682, %v734
      %v744 = vadd.f32 %v685, %v736
      %vm745 = vcmp.gt.f32.partialorder %v741, 0.0
      %vm746 = vcmp.gt.f32.partialorder %v742, 0.0
      %vm747 = vcmp.gt.f32.partialorder %v743, 0.0
      %vm748 = vcmp.gt.f32.partialorder %v744, 0.0
      %v749 = vmul.f32 %v741, 0.2
      %v750 = vmul.f32 %v742, 0.2
      %v751 = vmul.f32 %v743, 0.2
      %v752 = vmul.f32 %v744, 0.2
      %v753 = vsel %vm745, %v741, %v749
      %v754 = vsel %vm746, %v742, %v750
      %v755 = vsel %vm747, %v743, %v751
      %v756 = vsel %vm748, %v744, %v752
      %v757 = vsel %vm583, %v753, -1e+30
      %v758 = vsel %vm584, %v754, -1e+30
      %v759 = vsel %vm585, %v755, -1e+30
      %v760 = vsel %vm586, %v756, -1e+30
      %vm761 = vcmask 27648
      %v762 = vsel %vm761, %v757, -inf
      %763 = vmax.xlane.f32.xlu0 %v762
      %v764 = vpop.xlane.xlu0 %763
      %v765 = vsel %vm761, %v758, -inf
      %766 = vmax.xlane.f32.xlu0 %v765
      %v767 = vpop.xlane.xlu0 %766
      %v768 = vsel %vm761, %v759, -inf
      %769 = vmax.xlane.f32.xlu0 %v768
      %v770 = vpop.xlane.xlu0 %769
      %v771 = vsel %vm761, %v760, -inf
      %772 = vmax.xlane.f32.xlu0 %v771
      %v773 = vpop.xlane.xlu0 %772
      %v774 = vsub.f32 %v757, %v764
      %v775 = vsub.f32 %v758, %v767
      %v776 = vsub.f32 %v759, %v770
      %v777 = vsub.f32 %v760, %v773
      %v778 = vmul.f32 %v774, 1.442695
      %v779 = vpow.pop %v778
      %v780 = vmul.f32 %v775, 1.442695
      %v781 = vpow.pop %v780
      %v782 = vmul.f32 %v776, 1.442695
      %v783 = vpow.pop %v782
      %v784 = vmul.f32 %v777, 1.442695
      %v785 = vpow.pop %v784
      %v786 = vsel %vm761, %v779, 0.0
      %787 = vadd.xlane.f32.xlu0 %v786
      %v788 = vpop.xlane.xlu0 %787
      %v789 = vsel %vm761, %v781, 0.0
      %790 = vadd.xlane.f32.xlu0 %v789
      %v791 = vpop.xlane.xlu0 %790
      %v792 = vsel %vm761, %v783, 0.0
      %793 = vadd.xlane.f32.xlu0 %v792
      %v794 = vpop.xlane.xlu0 %793
      %v795 = vsel %vm761, %v785, 0.0
      %796 = vadd.xlane.f32.xlu0 %v795
      %v797 = vpop.xlane.xlu0 %796
      %v798 = vlaneseq
      %v799 = vshrl.u32 %v798, 7
      %v800 = vsub.s32 0, %v799
      %v801 = vrot.slane %v779, %v800
      %803 = vbcast.lane.b32.xlu0 %v801, 256
      %v804 = vpop.permute.xlu0 %803
      %v805 = vlaneseq
      %v806 = vshrl.u32 %v805, 7
      %v807 = vsub.s32 1, %v806
      %v808 = vrot.slane %v779, %v807
      %810 = vbcast.lane.b32.xlu0 %v808, 256
      %v811 = vpop.permute.xlu0 %810
      %v812 = vlaneseq
      %v813 = vshrl.u32 %v812, 7
      %v814 = vsub.s32 2, %v813
      %v815 = vrot.slane %v779, %v814
      %817 = vbcast.lane.b32.xlu0 %v815, 256
      %v818 = vpop.permute.xlu0 %817
      %v819 = vlaneseq
      %v820 = vshrl.u32 %v819, 7
      %v821 = vsub.s32 3, %v820
      %v822 = vrot.slane %v779, %v821
      %824 = vbcast.lane.b32.xlu0 %v822, 256
      %v825 = vpop.permute.xlu0 %824
      %v826 = vlaneseq
      %v827 = vshrl.u32 %v826, 7
      %v828 = vsub.s32 0, %v827
      %v829 = vrot.slane %v781, %v828
      %831 = vbcast.lane.b32.xlu0 %v829, 256
      %v832 = vpop.permute.xlu0 %831
      %v833 = vlaneseq
      %v834 = vshrl.u32 %v833, 7
      %v835 = vsub.s32 1, %v834
      %v836 = vrot.slane %v781, %v835
      %838 = vbcast.lane.b32.xlu0 %v836, 256
      %v839 = vpop.permute.xlu0 %838
      %v840 = vlaneseq
      %v841 = vshrl.u32 %v840, 7
      %v842 = vsub.s32 2, %v841
      %v843 = vrot.slane %v781, %v842
      %845 = vbcast.lane.b32.xlu0 %v843, 256
      %v846 = vpop.permute.xlu0 %845
      %v847 = vlaneseq
      %v848 = vshrl.u32 %v847, 7
      %v849 = vsub.s32 3, %v848
      %v850 = vrot.slane %v781, %v849
      %852 = vbcast.lane.b32.xlu0 %v850, 256
      %v853 = vpop.permute.xlu0 %852
      %v854 = vlaneseq
      %v855 = vshrl.u32 %v854, 7
      %v856 = vsub.s32 0, %v855
      %v857 = vrot.slane %v783, %v856
      %859 = vbcast.lane.b32.xlu0 %v857, 256
      %v860 = vpop.permute.xlu0 %859
      %v861 = vlaneseq
      %v862 = vshrl.u32 %v861, 7
      %v863 = vsub.s32 1, %v862
      %v864 = vrot.slane %v783, %v863
      %866 = vbcast.lane.b32.xlu0 %v864, 256
      %v867 = vpop.permute.xlu0 %866
      %v868 = vlaneseq
      %v869 = vshrl.u32 %v868, 7
      %v870 = vsub.s32 2, %v869
      %v871 = vrot.slane %v783, %v870
      %873 = vbcast.lane.b32.xlu0 %v871, 256
      %v874 = vpop.permute.xlu0 %873
      %v875 = vlaneseq
      %v876 = vshrl.u32 %v875, 7
      %v877 = vsub.s32 3, %v876
      %v878 = vrot.slane %v783, %v877
      %880 = vbcast.lane.b32.xlu0 %v878, 256
      %v881 = vpop.permute.xlu0 %880
      %v882 = vlaneseq
      %v883 = vshrl.u32 %v882, 7
      %v884 = vsub.s32 0, %v883
      %v885 = vrot.slane %v785, %v884
      %887 = vbcast.lane.b32.xlu0 %v885, 256
      %v888 = vpop.permute.xlu0 %887
      %v889 = vlaneseq
      %v890 = vshrl.u32 %v889, 7
      %v891 = vsub.s32 1, %v890
      %v892 = vrot.slane %v785, %v891
      %894 = vbcast.lane.b32.xlu0 %v892, 256
      %v895 = vpop.permute.xlu0 %894
      %v896 = vlaneseq
      %v897 = vshrl.u32 %v896, 7
      %v898 = vsub.s32 2, %v897
      %v899 = vrot.slane %v785, %v898
      %901 = vbcast.lane.b32.xlu0 %v899, 256
      %v902 = vpop.permute.xlu0 %901
      %v903 = vlaneseq
      %v904 = vshrl.u32 %v903, 7
      %v905 = vsub.s32 3, %v904
      %v906 = vrot.slane %v785, %v905
      %908 = vbcast.lane.b32.xlu0 %v906, 256
      %v909 = vpop.permute.xlu0 %908
      %v910 = vmul.f32 %v804, %v653
      %v911 = vmul.f32 %v811, %v653
      %v912 = vmul.f32 %v818, %v653
      %v913 = vmul.f32 %v825, %v653
      %v914 = vmul.f32 %v832, %v661
      %v915 = vmul.f32 %v839, %v661
      %v916 = vmul.f32 %v846, %v661
      %v917 = vmul.f32 %v853, %v661
      %v918 = vmul.f32 %v860, %v656
      %v919 = vmul.f32 %v867, %v656
      %v920 = vmul.f32 %v874, %v656
      %v921 = vmul.f32 %v881, %v656
      %v922 = vmul.f32 %v888, %v662
      %v923 = vmul.f32 %v895, %v662
      %v924 = vmul.f32 %v902, %v662
      %v925 = vmul.f32 %v909, %v662
      %v926 = vsel %vm673, %v910, 0.0
      %v927 = vrot.slane %v926, 4
      %v928 = vadd.f32 %v926, %v927
      %v929 = vrot.slane %v928, 2
      %v930 = vadd.f32 %v928, %v929
      %v931 = vrot.slane %v930, 1
      %v932 = vadd.f32 %v930, %v931
      %v933 = vsel %vm673, %v911, 0.0
      %v934 = vrot.slane %v933, 4
      %v935 = vadd.f32 %v933, %v934
      %v936 = vrot.slane %v935, 2
      %v937 = vadd.f32 %v935, %v936
      %v938 = vrot.slane %v937, 1
      %v939 = vadd.f32 %v937, %v938
      %v940 = vsel %vm673, %v912, 0.0
      %v941 = vrot.slane %v940, 4
      %v942 = vadd.f32 %v940, %v941
      %v943 = vrot.slane %v942, 2
      %v944 = vadd.f32 %v942, %v943
      %v945 = vrot.slane %v944, 1
      %v946 = vadd.f32 %v944, %v945
      %v947 = vsel %vm673, %v913, 0.0
      %v948 = vrot.slane %v947, 4
      %v949 = vadd.f32 %v947, %v948
      %v950 = vrot.slane %v949, 2
      %v951 = vadd.f32 %v949, %v950
      %v952 = vrot.slane %v951, 1
      %v953 = vadd.f32 %v951, %v952
      %v954 = vsel %vm673, %v914, 0.0
      %v955 = vrot.slane %v954, 4
      %v956 = vadd.f32 %v954, %v955
      %v957 = vrot.slane %v956, 2
      %v958 = vadd.f32 %v956, %v957
      %v959 = vrot.slane %v958, 1
      %v960 = vadd.f32 %v958, %v959
      %v961 = vsel %vm673, %v915, 0.0
      %v962 = vrot.slane %v961, 4
      %v963 = vadd.f32 %v961, %v962
      %v964 = vrot.slane %v963, 2
      %v965 = vadd.f32 %v963, %v964
      %v966 = vrot.slane %v965, 1
      %v967 = vadd.f32 %v965, %v966
      %v968 = vsel %vm673, %v916, 0.0
      %v969 = vrot.slane %v968, 4
      %v970 = vadd.f32 %v968, %v969
      %v971 = vrot.slane %v970, 2
      %v972 = vadd.f32 %v970, %v971
      %v973 = vrot.slane %v972, 1
      %v974 = vadd.f32 %v972, %v973
      %v975 = vsel %vm673, %v917, 0.0
      %v976 = vrot.slane %v975, 4
      %v977 = vadd.f32 %v975, %v976
      %v978 = vrot.slane %v977, 2
      %v979 = vadd.f32 %v977, %v978
      %v980 = vrot.slane %v979, 1
      %v981 = vadd.f32 %v979, %v980
      %v982 = vsel %vm673, %v918, 0.0
      %v983 = vrot.slane %v982, 4
      %v984 = vadd.f32 %v982, %v983
      %v985 = vrot.slane %v984, 2
      %v986 = vadd.f32 %v984, %v985
      %v987 = vrot.slane %v986, 1
      %v988 = vadd.f32 %v986, %v987
      %v989 = vsel %vm673, %v919, 0.0
      %v990 = vrot.slane %v989, 4
      %v991 = vadd.f32 %v989, %v990
      %v992 = vrot.slane %v991, 2
      %v993 = vadd.f32 %v991, %v992
      %v994 = vrot.slane %v993, 1
      %v995 = vadd.f32 %v993, %v994
      %v996 = vsel %vm673, %v920, 0.0
      %v997 = vrot.slane %v996, 4
      %v998 = vadd.f32 %v996, %v997
      %v999 = vrot.slane %v998, 2
      %v1000 = vadd.f32 %v998, %v999
      %v1001 = vrot.slane %v1000, 1
      %v1002 = vadd.f32 %v1000, %v1001
      %v1003 = vsel %vm673, %v921, 0.0
      %v1004 = vrot.slane %v1003, 4
      %v1005 = vadd.f32 %v1003, %v1004
      %v1006 = vrot.slane %v1005, 2
      %v1007 = vadd.f32 %v1005, %v1006
      %v1008 = vrot.slane %v1007, 1
      %v1009 = vadd.f32 %v1007, %v1008
      %v1010 = vsel %vm673, %v922, 0.0
      %v1011 = vrot.slane %v1010, 4
      %v1012 = vadd.f32 %v1010, %v1011
      %v1013 = vrot.slane %v1012, 2
      %v1014 = vadd.f32 %v1012, %v1013
      %v1015 = vrot.slane %v1014, 1
      %v1016 = vadd.f32 %v1014, %v1015
      %v1017 = vsel %vm673, %v923, 0.0
      %v1018 = vrot.slane %v1017, 4
      %v1019 = vadd.f32 %v1017, %v1018
      %v1020 = vrot.slane %v1019, 2
      %v1021 = vadd.f32 %v1019, %v1020
      %v1022 = vrot.slane %v1021, 1
      %v1023 = vadd.f32 %v1021, %v1022
      %v1024 = vsel %vm673, %v924, 0.0
      %v1025 = vrot.slane %v1024, 4
      %v1026 = vadd.f32 %v1024, %v1025
      %v1027 = vrot.slane %v1026, 2
      %v1028 = vadd.f32 %v1026, %v1027
      %v1029 = vrot.slane %v1028, 1
      %v1030 = vadd.f32 %v1028, %v1029
      %v1031 = vsel %vm673, %v925, 0.0
      %v1032 = vrot.slane %v1031, 4
      %v1033 = vadd.f32 %v1031, %v1032
      %v1034 = vrot.slane %v1033, 2
      %v1035 = vadd.f32 %v1033, %v1034
      %v1036 = vrot.slane %v1035, 1
      %v1037 = vadd.f32 %v1035, %v1036
      %v1038 = vrcp.pop %v788
      %v1039 = vrcp.pop %v791
      %v1040 = vrcp.pop %v794
      %v1041 = vrcp.pop %v797
      %v1046 = vrot.slane %v1038, 1
      %v1047 = vrot.slane %v1038, 2
      %v1048 = vrot.slane %v1038, 3
      %v1049 = vrot.slane %v1039, 1
      %v1050 = vrot.slane %v1039, 2
      %v1051 = vrot.slane %v1039, 3
      %v1052 = vrot.slane %v1040, 1
      %v1053 = vrot.slane %v1040, 2
      %v1054 = vrot.slane %v1040, 3
      %v1055 = vrot.slane %v1041, 1
      %v1056 = vrot.slane %v1041, 2
      %v1057 = vrot.slane %v1041, 3
      %v1074 = vmul.f32 %v932, %v1038
      %v1075 = vmul.f32 %v939, %v1046
      %v1076 = vmul.f32 %v946, %v1047
      %v1077 = vmul.f32 %v953, %v1048
      %v1078 = vmul.f32 %v960, %v1039
      %v1079 = vmul.f32 %v967, %v1049
      %v1080 = vmul.f32 %v974, %v1050
      %v1081 = vmul.f32 %v981, %v1051
      %v1082 = vmul.f32 %v988, %v1040
      %v1083 = vmul.f32 %v995, %v1052
      %v1084 = vmul.f32 %v1002, %v1053
      %v1085 = vmul.f32 %v1009, %v1054
      %v1086 = vmul.f32 %v1016, %v1041
      %v1087 = vmul.f32 %v1023, %v1055
      %v1088 = vmul.f32 %v1030, %v1056
      %v1089 = vmul.f32 %v1037, %v1057
      %v1090 = vlaneseq
      %v1091 = vshrl.u32 %v1090, 7
      %v1092 = vsub.s32 6, %v1091
      %v1093 = vrot.slane %v569, %v1092
      %v1094 = vadd.f32 %v1074, %v1093
      %v1095 = vadd.f32 %v1075, %v1093
      %v1096 = vadd.f32 %v1076, %v1093
      %v1097 = vadd.f32 %v1077, %v1093
      %v1098 = vadd.f32 %v1078, %v1093
      %v1099 = vadd.f32 %v1079, %v1093
      %v1100 = vadd.f32 %v1080, %v1093
      %v1101 = vadd.f32 %v1081, %v1093
      %v1102 = vadd.f32 %v1082, %v1093
      %v1103 = vadd.f32 %v1083, %v1093
      %v1104 = vadd.f32 %v1084, %v1093
      %v1105 = vadd.f32 %v1085, %v1093
      %v1106 = vadd.f32 %v1086, %v1093
      %v1107 = vadd.f32 %v1087, %v1093
      %v1108 = vadd.f32 %v1088, %v1093
      %v1109 = vadd.f32 %v1089, %v1093
      %v1110 = vmax.f32 %v1094, 0.0
      %v1111 = vmax.f32 %v1095, 0.0
      %v1112 = vmax.f32 %v1096, 0.0
      %v1113 = vmax.f32 %v1097, 0.0
      %v1114 = vmax.f32 %v1098, 0.0
      %v1115 = vmax.f32 %v1099, 0.0
      %v1116 = vmax.f32 %v1100, 0.0
      %v1117 = vmax.f32 %v1101, 0.0
      %v1118 = vmax.f32 %v1102, 0.0
      %v1119 = vmax.f32 %v1103, 0.0
      %v1120 = vmax.f32 %v1104, 0.0
      %v1121 = vmax.f32 %v1105, 0.0
      %v1122 = vmax.f32 %v1106, 0.0
      %v1123 = vmax.f32 %v1107, 0.0
      %v1124 = vmax.f32 %v1108, 0.0
      %v1125 = vmax.f32 %v1109, 0.0
      %v1142 = vrot.slane %v1111, 7
      %v1143 = vsel %vm726, %v1142, %v1110
      %v1144 = vrot.slane %v1112, 6
      %v1145 = vsel %vm727, %v1144, %v1143
      %v1146 = vrot.slane %v1113, 5
      %v1147 = vsel %vm729, %v1146, %v1145
      %v1148 = vrot.slane %v1114, 4
      %vm1149 = vcmask 1044484
      %v1150 = vsel %vm1149, %v1148, %v1147
      %v1151 = vrot.slane %v1115, 3
      %vm1152 = vcmask 1045509
      %v1153 = vsel %vm1152, %v1151, %v1150
      %v1154 = vrot.slane %v1116, 2
      %vm1155 = vcmask 1046534
      %v1156 = vsel %vm1155, %v1154, %v1153
      %v1157 = vrot.slane %v1117, 1
      %vm1158 = vcmask 1047559
      %v1159 = vsel %vm1158, %v1157, %v1156
      %v1160 = vrot.slane %v1119, 7
      %v1161 = vsel %vm726, %v1160, %v1118
      %v1162 = vrot.slane %v1120, 6
      %v1163 = vsel %vm727, %v1162, %v1161
      %v1164 = vrot.slane %v1121, 5
      %v1165 = vsel %vm729, %v1164, %v1163
      %v1166 = vrot.slane %v1122, 4
      %v1167 = vsel %vm1149, %v1166, %v1165
      %v1168 = vrot.slane %v1123, 3
      %v1169 = vsel %vm1152, %v1168, %v1167
      %v1170 = vrot.slane %v1124, 2
      %v1171 = vsel %vm1155, %v1170, %v1169
      %v1172 = vrot.slane %v1125, 1
      %v1173 = vsel %vm1158, %v1172, %v1171
      %vm1176 = vcmask 130048
      %v1177 = vsel %vm1176, %v1159, 0.0
      %v1178 = vsel %vm1176, %v1173, 0.0
      %v1179 = vadd.f32 %v1177, %v1178
      %v1180 = vrot.slane %v1179, 4
      %v1181 = vadd.f32 %v1179, %v1180
      %v1182 = vrot.slane %v1181, 2
      %v1183 = vadd.f32 %v1181, %v1182
      %v1184 = vrot.slane %v1183, 1
      %v1185 = vadd.f32 %v1183, %v1184
      %v1186 = vrcp.pop 16.0
      %v1187 = vmul.f32 %v1185, %v1186
      %v1188 = vlaneseq
      %v1189 = vshrl.u32 %v1188, 7
      %v1190 = vsub.s32 0, %v1189
      %v1191 = vrot.slane %v1187, %v1190
      %v1192 = vsub.f32 %v1110, %v1191
      %v1193 = vsub.f32 %v1111, %v1191
      %v1194 = vsub.f32 %v1112, %v1191
      %v1195 = vsub.f32 %v1113, %v1191
      %v1196 = vsub.f32 %v1114, %v1191
      %v1197 = vsub.f32 %v1115, %v1191
      %v1198 = vsub.f32 %v1116, %v1191
      %v1199 = vsub.f32 %v1117, %v1191
      %v1200 = vsub.f32 %v1118, %v1191
      %v1201 = vsub.f32 %v1119, %v1191
      %v1202 = vsub.f32 %v1120, %v1191
      %v1203 = vsub.f32 %v1121, %v1191
      %v1204 = vsub.f32 %v1122, %v1191
      %v1205 = vsub.f32 %v1123, %v1191
      %v1206 = vsub.f32 %v1124, %v1191
      %v1207 = vsub.f32 %v1125, %v1191
      %v1208 = vmul.f32 %v1192, %v1192
      %v1209 = vmul.f32 %v1193, %v1193
      %v1210 = vmul.f32 %v1194, %v1194
      %v1211 = vmul.f32 %v1195, %v1195
      %v1212 = vmul.f32 %v1196, %v1196
      %v1213 = vmul.f32 %v1197, %v1197
      %v1214 = vmul.f32 %v1198, %v1198
      %v1215 = vmul.f32 %v1199, %v1199
      %v1216 = vmul.f32 %v1200, %v1200
      %v1217 = vmul.f32 %v1201, %v1201
      %v1218 = vmul.f32 %v1202, %v1202
      %v1219 = vmul.f32 %v1203, %v1203
      %v1220 = vmul.f32 %v1204, %v1204
      %v1221 = vmul.f32 %v1205, %v1205
      %v1222 = vmul.f32 %v1206, %v1206
      %v1223 = vmul.f32 %v1207, %v1207
      %v1240 = vrot.slane %v1209, 7
      %v1241 = vsel %vm726, %v1240, %v1208
      %v1242 = vrot.slane %v1210, 6
      %v1243 = vsel %vm727, %v1242, %v1241
      %v1244 = vrot.slane %v1211, 5
      %v1245 = vsel %vm729, %v1244, %v1243
      %v1246 = vrot.slane %v1212, 4
      %v1247 = vsel %vm1149, %v1246, %v1245
      %v1248 = vrot.slane %v1213, 3
      %v1249 = vsel %vm1152, %v1248, %v1247
      %v1250 = vrot.slane %v1214, 2
      %v1251 = vsel %vm1155, %v1250, %v1249
      %v1252 = vrot.slane %v1215, 1
      %v1253 = vsel %vm1158, %v1252, %v1251
      %v1254 = vrot.slane %v1217, 7
      %v1255 = vsel %vm726, %v1254, %v1216
      %v1256 = vrot.slane %v1218, 6
      %v1257 = vsel %vm727, %v1256, %v1255
      %v1258 = vrot.slane %v1219, 5
      %v1259 = vsel %vm729, %v1258, %v1257
      %v1260 = vrot.slane %v1220, 4
      %v1261 = vsel %vm1149, %v1260, %v1259
      %v1262 = vrot.slane %v1221, 3
      %v1263 = vsel %vm1152, %v1262, %v1261
      %v1264 = vrot.slane %v1222, 2
      %v1265 = vsel %vm1155, %v1264, %v1263
      %v1266 = vrot.slane %v1223, 1
      %v1267 = vsel %vm1158, %v1266, %v1265
      %v1270 = vsel %vm1176, %v1253, 0.0
      %v1271 = vsel %vm1176, %v1267, 0.0
      %v1272 = vadd.f32 %v1270, %v1271
      %v1273 = vrot.slane %v1272, 4
      %v1274 = vadd.f32 %v1272, %v1273
      %v1275 = vrot.slane %v1274, 2
      %v1276 = vadd.f32 %v1274, %v1275
      %v1277 = vrot.slane %v1276, 1
      %v1278 = vadd.f32 %v1276, %v1277
      %v1279 = vmul.f32 %v1278, %v1186
      %v1280 = vlaneseq
      %v1281 = vshrl.u32 %v1280, 7
      %v1282 = vsub.s32 1, %v1281
      %v1283 = vrot.slane %v570, %v1282
      %v1300 = vrot.slane %v1193, 7
      %v1301 = vsel %vm726, %v1300, %v1192
      %v1302 = vrot.slane %v1194, 6
      %v1303 = vsel %vm727, %v1302, %v1301
      %v1304 = vrot.slane %v1195, 5
      %v1305 = vsel %vm729, %v1304, %v1303
      %v1306 = vrot.slane %v1196, 4
      %v1307 = vsel %vm1149, %v1306, %v1305
      %v1308 = vrot.slane %v1197, 3
      %v1309 = vsel %vm1152, %v1308, %v1307
      %v1310 = vrot.slane %v1198, 2
      %v1311 = vsel %vm1155, %v1310, %v1309
      %v1312 = vrot.slane %v1199, 1
      %v1313 = vsel %vm1158, %v1312, %v1311
      %v1314 = vrot.slane %v1201, 7
      %v1315 = vsel %vm726, %v1314, %v1200
      %v1316 = vrot.slane %v1202, 6
      %v1317 = vsel %vm727, %v1316, %v1315
      %v1318 = vrot.slane %v1203, 5
      %v1319 = vsel %vm729, %v1318, %v1317
      %v1320 = vrot.slane %v1204, 4
      %v1321 = vsel %vm1149, %v1320, %v1319
      %v1322 = vrot.slane %v1205, 3
      %v1323 = vsel %vm1152, %v1322, %v1321
      %v1324 = vrot.slane %v1206, 2
      %v1325 = vsel %vm1155, %v1324, %v1323
      %v1326 = vrot.slane %v1207, 1
      %v1327 = vsel %vm1158, %v1326, %v1325
      %v1330 = vmul.f32 %v1283, %v1313
      %v1331 = vmul.f32 %v1283, %v1327
      %v1332 = vadd.f32 %v1279, 1e-05
      %v1333 = vrsqrt.pop %v1332
      %v1334 = vlaneseq
      %v1335 = vshrl.u32 %v1334, 7
      %v1336 = vsub.s32 0, %v1335
      %v1337 = vrot.slane %v1333, %v1336
      %v1338 = vmul.f32 %v1330, %v1337
      %v1339 = vmul.f32 %v1331, %v1337
      %v1340 = vlaneseq
      %v1341 = vshrl.u32 %v1340, 7
      %v1342 = vsub.s32 4, %v1341
      %v1343 = vrot.slane %v570, %v1342
      %v1344 = vadd.f32 %v1338, %v1343
      %v1345 = vadd.f32 %v1339, %v1343
      %v1346 = vpack.c.bf16 %v1345, %v1344
      %v1349 = vunpack.c.l.b16 %v565
      %v1350 = vunpack.c.l.b16 %v566
      %v1351 = vpack.c.b16 %v1350, %v1349
      %v1354 = vsel %vm1176, %v1346, 0
      %1356 = vmatprep.subr.bf16.mxu0 0
      %1357 = vmatpush1.bf16.msra.mxu0 %v1351
      %1358 = vmatprep.subr.bf16.mxu0 0
      %1359 = vmatpush1.bf16.msra.mxu0 0
      %1360 = vmatprep.subr.bf16.mxu0 0
      %1361 = vmatpush1.bf16.msra.mxu0 0
      %1362 = vmatprep.subr.bf16.mxu0 0
      %1363 = vmatpush1.bf16.msra.mxu0 0
      %1364 = vmatprep.subr.bf16.mxu0 0
      %1365 = vmatpush1.bf16.msra.mxu0 0
      %1366 = vmatprep.subr.bf16.mxu0 0
      %1367 = vmatpush1.bf16.msra.mxu0 0
      %1368 = vmatprep.subr.bf16.mxu0 0
      %1369 = vmatpush1.bf16.msra.mxu0 0
      %1370 = vmatprep.subr.bf16.mxu0 0
      %1371 = vmatpush1.bf16.msra.mxu0 0
      %1372 = vmatprep.subr.bf16.mxu0 0
      %1373 = vmatpush1.bf16.msra.mxu0 0
      %1374 = vmatprep.subr.bf16.mxu0 0
      %1375 = vmatpush1.bf16.msra.mxu0 0
      %1376 = vmatprep.subr.bf16.mxu0 0
      %1377 = vmatpush1.bf16.msra.mxu0 0
      %1378 = vmatprep.subr.bf16.mxu0 0
      %1379 = vmatpush1.bf16.msra.mxu0 0
      %1380 = vmatprep.subr.bf16.mxu0 0
      %1381 = vmatpush1.bf16.msra.mxu0 0
      %1382 = vmatprep.subr.bf16.mxu0 0
      %1383 = vmatpush1.bf16.msra.mxu0 0
      %1384 = vmatprep.subr.bf16.mxu0 0
      %1385 = vmatpush1.bf16.msra.mxu0 0
      %1386 = vmatprep.subr.bf16.mxu0 0
      %1387 = vmatpush1.bf16.msra.mxu0 0
      %1388 = vmatprep.mubr.bf16.mxu0 0
      %1389 = vmatmul.mubr.bf16.gmra.mrb[0].mxu0 %v1354
      %v1390 = vpop.f32.mrb[0].mxu0
      %v1391 = vadd.f32 0.0, %v1390
      %v1392 = vpop.f32.mrb[0].mxu0
      %v1393 = vpop.f32.mrb[0].mxu0
      %v1394 = vadd.f32 0.0, %v1393
      %v1395 = vpop.f32.mrb[0].mxu0
      %1396 = vdwg.mxu0
      %v1399 = vcombine.high %v1391, %v1391
      %v1400 = vcombine.high %v1394, %v1394
      %v1403 = vlaneseq
      %v1404 = vshrl.u32 %v1403, 7
      %v1405 = vsub.s32 4, %v1404
      %v1406 = vrot.slane %v569, %v1405
      %v1407 = vmul.f32 %v1391, %v1406
      %v1408 = vmul.f32 %v1399, %v1406
      %v1409 = vmul.f32 %v1394, %v1406
      %v1410 = vmul.f32 %v1400, %v1406
      %v1411 = vsel %vm673, %v1407, 0.0
      %1412 = vadd.xlane.f32.xlu0 %v1411
      %v1413 = vpop.xlane.xlu0 %1412
      %v1414 = vsel %vm673, %v1408, 0.0
      %1415 = vadd.xlane.f32.xlu0 %v1414
      %v1416 = vpop.xlane.xlu0 %1415
      %v1417 = vsel %vm673, %v1409, 0.0
      %1418 = vadd.xlane.f32.xlu0 %v1417
      %v1419 = vpop.xlane.xlu0 %1418
      %v1420 = vsel %vm673, %v1410, 0.0
      %1421 = vadd.xlane.f32.xlu0 %v1420
      %v1422 = vpop.xlane.xlu0 %1421
      %v1423 = vlaneseq
      %v1424 = vshrl.u32 %v1423, 7
      %v1425 = vsub.s32 1, %v1424
      %v1426 = vrot.slane %v569, %v1425
      %v1427 = vmul.f32 %v1391, %v1426
      %v1428 = vmul.f32 %v1399, %v1426
      %v1429 = vmul.f32 %v1394, %v1426
      %v1430 = vmul.f32 %v1400, %v1426
      %v1431 = vsel %vm673, %v1427, 0.0
      %1432 = vadd.xlane.f32.xlu0 %v1431
      %v1433 = vpop.xlane.xlu0 %1432
      %v1434 = vsel %vm673, %v1428, 0.0
      %1435 = vadd.xlane.f32.xlu0 %v1434
      %v1436 = vpop.xlane.xlu0 %1435
      %v1437 = vsel %vm673, %v1429, 0.0
      %1438 = vadd.xlane.f32.xlu0 %v1437
      %v1439 = vpop.xlane.xlu0 %1438
      %v1440 = vsel %vm673, %v1430, 0.0
      %1441 = vadd.xlane.f32.xlu0 %v1440
      %v1442 = vpop.xlane.xlu0 %1441
      %v1447 = vlaneseq
      %v1448 = vshrl.u32 %v1447, 7
      %v1449 = vsub.s32 %v575, %v1448
      %v1450 = vrot.slane %v1433, %v1449
      %v1451 = vlaneseq
      %v1452 = vshrl.u32 %v1451, 7
      %v1453 = vsub.s32 %v575, %v1452
      %v1454 = vrot.slane %v1436, %v1453
      %v1455 = vlaneseq
      %v1456 = vshrl.u32 %v1455, 7
      %v1457 = vsub.s32 %v575, %v1456
      %v1458 = vrot.slane %v1439, %v1457
      %v1459 = vlaneseq
      %v1460 = vshrl.u32 %v1459, 7
      %v1461 = vsub.s32 %v575, %v1460
      %v1462 = vrot.slane %v1442, %v1461
      %v1463 = vsel %vm727, %v1450, %v1450
      %v1464 = vsel %vm729, %v1450, %v1463
      %v1465 = vsel %vm727, %v1454, %v1454
      %v1466 = vsel %vm729, %v1454, %v1465
      %v1467 = vsel %vm727, %v1458, %v1458
      %v1468 = vsel %vm729, %v1458, %v1467
      %v1469 = vsel %vm727, %v1462, %v1462
      %v1470 = vsel %vm729, %v1462, %v1469
      %v1475 = vadd.f32 %v1413, %v1464
      %v1476 = vadd.f32 %v1416, %v1466
      %v1477 = vadd.f32 %v1419, %v1468
      %v1478 = vadd.f32 %v1422, %v1470
      %vm1479 = vcmp.gt.f32.partialorder %v1475, 0.0
      %vm1480 = vcmp.gt.f32.partialorder %v1476, 0.0
      %vm1481 = vcmp.gt.f32.partialorder %v1477, 0.0
      %vm1482 = vcmp.gt.f32.partialorder %v1478, 0.0
      %v1483 = vmul.f32 %v1475, 0.2
      %v1484 = vmul.f32 %v1476, 0.2
      %v1485 = vmul.f32 %v1477, 0.2
      %v1486 = vmul.f32 %v1478, 0.2
      %v1487 = vsel %vm1479, %v1475, %v1483
      %v1488 = vsel %vm1480, %v1476, %v1484
      %v1489 = vsel %vm1481, %v1477, %v1485
      %v1490 = vsel %vm1482, %v1478, %v1486
      %v1491 = vsel %vm583, %v1487, -1e+30
      %v1492 = vsel %vm584, %v1488, -1e+30
      %v1493 = vsel %vm585, %v1489, -1e+30
      %v1494 = vsel %vm586, %v1490, -1e+30
      %v1495 = vsel %vm761, %v1491, -inf
      %1496 = vmax.xlane.f32.xlu0 %v1495
      %v1497 = vpop.xlane.xlu0 %1496
      %v1498 = vsel %vm761, %v1492, -inf
      %1499 = vmax.xlane.f32.xlu0 %v1498
      %v1500 = vpop.xlane.xlu0 %1499
      %v1501 = vsel %vm761, %v1493, -inf
      %1502 = vmax.xlane.f32.xlu0 %v1501
      %v1503 = vpop.xlane.xlu0 %1502
      %v1504 = vsel %vm761, %v1494, -inf
      %1505 = vmax.xlane.f32.xlu0 %v1504
      %v1506 = vpop.xlane.xlu0 %1505
      %v1507 = vsub.f32 %v1491, %v1497
      %v1508 = vsub.f32 %v1492, %v1500
      %v1509 = vsub.f32 %v1493, %v1503
      %v1510 = vsub.f32 %v1494, %v1506
      %v1511 = vmul.f32 %v1507, 1.442695
      %v1512 = vpow.pop %v1511
      %v1513 = vmul.f32 %v1508, 1.442695
      %v1514 = vpow.pop %v1513
      %v1515 = vmul.f32 %v1509, 1.442695
      %v1516 = vpow.pop %v1515
      %v1517 = vmul.f32 %v1510, 1.442695
      %v1518 = vpow.pop %v1517
      %v1519 = vsel %vm761, %v1512, 0.0
      %1520 = vadd.xlane.f32.xlu0 %v1519
      %v1521 = vpop.xlane.xlu0 %1520
      %v1522 = vsel %vm761, %v1514, 0.0
      %1523 = vadd.xlane.f32.xlu0 %v1522
      %v1524 = vpop.xlane.xlu0 %1523
      %v1525 = vsel %vm761, %v1516, 0.0
      %1526 = vadd.xlane.f32.xlu0 %v1525
      %v1527 = vpop.xlane.xlu0 %1526
      %v1528 = vsel %vm761, %v1518, 0.0
      %1529 = vadd.xlane.f32.xlu0 %v1528
      %v1530 = vpop.xlane.xlu0 %1529
      %v1531 = vlaneseq
      %v1532 = vshrl.u32 %v1531, 7
      %v1533 = vsub.s32 0, %v1532
      %v1534 = vrot.slane %v1512, %v1533
      %1536 = vbcast.lane.b32.xlu0 %v1534, 256
      %v1537 = vpop.permute.xlu0 %1536
      %v1538 = vlaneseq
      %v1539 = vshrl.u32 %v1538, 7
      %v1540 = vsub.s32 1, %v1539
      %v1541 = vrot.slane %v1512, %v1540
      %1543 = vbcast.lane.b32.xlu0 %v1541, 256
      %v1544 = vpop.permute.xlu0 %1543
      %v1545 = vlaneseq
      %v1546 = vshrl.u32 %v1545, 7
      %v1547 = vsub.s32 2, %v1546
      %v1548 = vrot.slane %v1512, %v1547
      %1550 = vbcast.lane.b32.xlu0 %v1548, 256
      %v1551 = vpop.permute.xlu0 %1550
      %v1552 = vlaneseq
      %v1553 = vshrl.u32 %v1552, 7
      %v1554 = vsub.s32 3, %v1553
      %v1555 = vrot.slane %v1512, %v1554
      %1557 = vbcast.lane.b32.xlu0 %v1555, 256
      %v1558 = vpop.permute.xlu0 %1557
      %v1559 = vlaneseq
      %v1560 = vshrl.u32 %v1559, 7
      %v1561 = vsub.s32 0, %v1560
      %v1562 = vrot.slane %v1514, %v1561
      %1564 = vbcast.lane.b32.xlu0 %v1562, 256
      %v1565 = vpop.permute.xlu0 %1564
      %v1566 = vlaneseq
      %v1567 = vshrl.u32 %v1566, 7
      %v1568 = vsub.s32 1, %v1567
      %v1569 = vrot.slane %v1514, %v1568
      %1571 = vbcast.lane.b32.xlu0 %v1569, 256
      %v1572 = vpop.permute.xlu0 %1571
      %v1573 = vlaneseq
      %v1574 = vshrl.u32 %v1573, 7
      %v1575 = vsub.s32 2, %v1574
      %v1576 = vrot.slane %v1514, %v1575
      %1578 = vbcast.lane.b32.xlu0 %v1576, 256
      %v1579 = vpop.permute.xlu0 %1578
      %v1580 = vlaneseq
      %v1581 = vshrl.u32 %v1580, 7
      %v1582 = vsub.s32 3, %v1581
      %v1583 = vrot.slane %v1514, %v1582
      %1585 = vbcast.lane.b32.xlu0 %v1583, 256
      %v1586 = vpop.permute.xlu0 %1585
      %v1587 = vlaneseq
      %v1588 = vshrl.u32 %v1587, 7
      %v1589 = vsub.s32 0, %v1588
      %v1590 = vrot.slane %v1516, %v1589
      %1592 = vbcast.lane.b32.xlu0 %v1590, 256
      %v1593 = vpop.permute.xlu0 %1592
      %v1594 = vlaneseq
      %v1595 = vshrl.u32 %v1594, 7
      %v1596 = vsub.s32 1, %v1595
      %v1597 = vrot.slane %v1516, %v1596
      %1599 = vbcast.lane.b32.xlu0 %v1597, 256
      %v1600 = vpop.permute.xlu0 %1599
      %v1601 = vlaneseq
      %v1602 = vshrl.u32 %v1601, 7
      %v1603 = vsub.s32 2, %v1602
      %v1604 = vrot.slane %v1516, %v1603
      %1606 = vbcast.lane.b32.xlu0 %v1604, 256
      %v1607 = vpop.permute.xlu0 %1606
      %v1608 = vlaneseq
      %v1609 = vshrl.u32 %v1608, 7
      %v1610 = vsub.s32 3, %v1609
      %v1611 = vrot.slane %v1516, %v1610
      %1613 = vbcast.lane.b32.xlu0 %v1611, 256
      %v1614 = vpop.permute.xlu0 %1613
      %v1615 = vlaneseq
      %v1616 = vshrl.u32 %v1615, 7
      %v1617 = vsub.s32 0, %v1616
      %v1618 = vrot.slane %v1518, %v1617
      %1620 = vbcast.lane.b32.xlu0 %v1618, 256
      %v1621 = vpop.permute.xlu0 %1620
      %v1622 = vlaneseq
      %v1623 = vshrl.u32 %v1622, 7
      %v1624 = vsub.s32 1, %v1623
      %v1625 = vrot.slane %v1518, %v1624
      %1627 = vbcast.lane.b32.xlu0 %v1625, 256
      %v1628 = vpop.permute.xlu0 %1627
      %v1629 = vlaneseq
      %v1630 = vshrl.u32 %v1629, 7
      %v1631 = vsub.s32 2, %v1630
      %v1632 = vrot.slane %v1518, %v1631
      %1634 = vbcast.lane.b32.xlu0 %v1632, 256
      %v1635 = vpop.permute.xlu0 %1634
      %v1636 = vlaneseq
      %v1637 = vshrl.u32 %v1636, 7
      %v1638 = vsub.s32 3, %v1637
      %v1639 = vrot.slane %v1518, %v1638
      %1641 = vbcast.lane.b32.xlu0 %v1639, 256
      %v1642 = vpop.permute.xlu0 %1641
      %v1643 = vmul.f32 %v1537, %v1391
      %v1644 = vmul.f32 %v1544, %v1391
      %v1645 = vmul.f32 %v1551, %v1391
      %v1646 = vmul.f32 %v1558, %v1391
      %v1647 = vmul.f32 %v1565, %v1399
      %v1648 = vmul.f32 %v1572, %v1399
      %v1649 = vmul.f32 %v1579, %v1399
      %v1650 = vmul.f32 %v1586, %v1399
      %v1651 = vmul.f32 %v1593, %v1394
      %v1652 = vmul.f32 %v1600, %v1394
      %v1653 = vmul.f32 %v1607, %v1394
      %v1654 = vmul.f32 %v1614, %v1394
      %v1655 = vmul.f32 %v1621, %v1400
      %v1656 = vmul.f32 %v1628, %v1400
      %v1657 = vmul.f32 %v1635, %v1400
      %v1658 = vmul.f32 %v1642, %v1400
      %v1659 = vsel %vm673, %v1643, 0.0
      %v1660 = vrot.slane %v1659, 4
      %v1661 = vadd.f32 %v1659, %v1660
      %v1662 = vrot.slane %v1661, 2
      %v1663 = vadd.f32 %v1661, %v1662
      %v1664 = vrot.slane %v1663, 1
      %v1665 = vadd.f32 %v1663, %v1664
      %v1666 = vsel %vm673, %v1644, 0.0
      %v1667 = vrot.slane %v1666, 4
      %v1668 = vadd.f32 %v1666, %v1667
      %v1669 = vrot.slane %v1668, 2
      %v1670 = vadd.f32 %v1668, %v1669
      %v1671 = vrot.slane %v1670, 1
      %v1672 = vadd.f32 %v1670, %v1671
      %v1673 = vsel %vm673, %v1645, 0.0
      %v1674 = vrot.slane %v1673, 4
      %v1675 = vadd.f32 %v1673, %v1674
      %v1676 = vrot.slane %v1675, 2
      %v1677 = vadd.f32 %v1675, %v1676
      %v1678 = vrot.slane %v1677, 1
      %v1679 = vadd.f32 %v1677, %v1678
      %v1680 = vsel %vm673, %v1646, 0.0
      %v1681 = vrot.slane %v1680, 4
      %v1682 = vadd.f32 %v1680, %v1681
      %v1683 = vrot.slane %v1682, 2
      %v1684 = vadd.f32 %v1682, %v1683
      %v1685 = vrot.slane %v1684, 1
      %v1686 = vadd.f32 %v1684, %v1685
      %v1687 = vsel %vm673, %v1647, 0.0
      %v1688 = vrot.slane %v1687, 4
      %v1689 = vadd.f32 %v1687, %v1688
      %v1690 = vrot.slane %v1689, 2
      %v1691 = vadd.f32 %v1689, %v1690
      %v1692 = vrot.slane %v1691, 1
      %v1693 = vadd.f32 %v1691, %v1692
      %v1694 = vsel %vm673, %v1648, 0.0
      %v1695 = vrot.slane %v1694, 4
      %v1696 = vadd.f32 %v1694, %v1695
      %v1697 = vrot.slane %v1696, 2
      %v1698 = vadd.f32 %v1696, %v1697
      %v1699 = vrot.slane %v1698, 1
      %v1700 = vadd.f32 %v1698, %v1699
      %v1701 = vsel %vm673, %v1649, 0.0
      %v1702 = vrot.slane %v1701, 4
      %v1703 = vadd.f32 %v1701, %v1702
      %v1704 = vrot.slane %v1703, 2
      %v1705 = vadd.f32 %v1703, %v1704
      %v1706 = vrot.slane %v1705, 1
      %v1707 = vadd.f32 %v1705, %v1706
      %v1708 = vsel %vm673, %v1650, 0.0
      %v1709 = vrot.slane %v1708, 4
      %v1710 = vadd.f32 %v1708, %v1709
      %v1711 = vrot.slane %v1710, 2
      %v1712 = vadd.f32 %v1710, %v1711
      %v1713 = vrot.slane %v1712, 1
      %v1714 = vadd.f32 %v1712, %v1713
      %v1715 = vsel %vm673, %v1651, 0.0
      %v1716 = vrot.slane %v1715, 4
      %v1717 = vadd.f32 %v1715, %v1716
      %v1718 = vrot.slane %v1717, 2
      %v1719 = vadd.f32 %v1717, %v1718
      %v1720 = vrot.slane %v1719, 1
      %v1721 = vadd.f32 %v1719, %v1720
      %v1722 = vsel %vm673, %v1652, 0.0
      %v1723 = vrot.slane %v1722, 4
      %v1724 = vadd.f32 %v1722, %v1723
      %v1725 = vrot.slane %v1724, 2
      %v1726 = vadd.f32 %v1724, %v1725
      %v1727 = vrot.slane %v1726, 1
      %v1728 = vadd.f32 %v1726, %v1727
      %v1729 = vsel %vm673, %v1653, 0.0
      %v1730 = vrot.slane %v1729, 4
      %v1731 = vadd.f32 %v1729, %v1730
      %v1732 = vrot.slane %v1731, 2
      %v1733 = vadd.f32 %v1731, %v1732
      %v1734 = vrot.slane %v1733, 1
      %v1735 = vadd.f32 %v1733, %v1734
      %v1736 = vsel %vm673, %v1654, 0.0
      %v1737 = vrot.slane %v1736, 4
      %v1738 = vadd.f32 %v1736, %v1737
      %v1739 = vrot.slane %v1738, 2
      %v1740 = vadd.f32 %v1738, %v1739
      %v1741 = vrot.slane %v1740, 1
      %v1742 = vadd.f32 %v1740, %v1741
      %v1743 = vsel %vm673, %v1655, 0.0
      %v1744 = vrot.slane %v1743, 4
      %v1745 = vadd.f32 %v1743, %v1744
      %v1746 = vrot.slane %v1745, 2
      %v1747 = vadd.f32 %v1745, %v1746
      %v1748 = vrot.slane %v1747, 1
      %v1749 = vadd.f32 %v1747, %v1748
      %v1750 = vsel %vm673, %v1656, 0.0
      %v1751 = vrot.slane %v1750, 4
      %v1752 = vadd.f32 %v1750, %v1751
      %v1753 = vrot.slane %v1752, 2
      %v1754 = vadd.f32 %v1752, %v1753
      %v1755 = vrot.slane %v1754, 1
      %v1756 = vadd.f32 %v1754, %v1755
      %v1757 = vsel %vm673, %v1657, 0.0
      %v1758 = vrot.slane %v1757, 4
      %v1759 = vadd.f32 %v1757, %v1758
      %v1760 = vrot.slane %v1759, 2
      %v1761 = vadd.f32 %v1759, %v1760
      %v1762 = vrot.slane %v1761, 1
      %v1763 = vadd.f32 %v1761, %v1762
      %v1764 = vsel %vm673, %v1658, 0.0
      %v1765 = vrot.slane %v1764, 4
      %v1766 = vadd.f32 %v1764, %v1765
      %v1767 = vrot.slane %v1766, 2
      %v1768 = vadd.f32 %v1766, %v1767
      %v1769 = vrot.slane %v1768, 1
      %v1770 = vadd.f32 %v1768, %v1769
      %v1771 = vrcp.pop %v1521
      %v1772 = vrcp.pop %v1524
      %v1773 = vrcp.pop %v1527
      %v1774 = vrcp.pop %v1530
      %v1779 = vrot.slane %v1771, 1
      %v1780 = vrot.slane %v1771, 2
      %v1781 = vrot.slane %v1771, 3
      %v1782 = vrot.slane %v1772, 1
      %v1783 = vrot.slane %v1772, 2
      %v1784 = vrot.slane %v1772, 3
      %v1785 = vrot.slane %v1773, 1
      %v1786 = vrot.slane %v1773, 2
      %v1787 = vrot.slane %v1773, 3
      %v1788 = vrot.slane %v1774, 1
      %v1789 = vrot.slane %v1774, 2
      %v1790 = vrot.slane %v1774, 3
      %v1807 = vmul.f32 %v1665, %v1771
      %v1808 = vmul.f32 %v1672, %v1779
      %v1809 = vmul.f32 %v1679, %v1780
      %v1810 = vmul.f32 %v1686, %v1781
      %v1811 = vmul.f32 %v1693, %v1772
      %v1812 = vmul.f32 %v1700, %v1782
      %v1813 = vmul.f32 %v1707, %v1783
      %v1814 = vmul.f32 %v1714, %v1784
      %v1815 = vmul.f32 %v1721, %v1773
      %v1816 = vmul.f32 %v1728, %v1785
      %v1817 = vmul.f32 %v1735, %v1786
      %v1818 = vmul.f32 %v1742, %v1787
      %v1819 = vmul.f32 %v1749, %v1774
      %v1820 = vmul.f32 %v1756, %v1788
      %v1821 = vmul.f32 %v1763, %v1789
      %v1822 = vmul.f32 %v1770, %v1790
      %v1823 = vlaneseq
      %v1824 = vshrl.u32 %v1823, 7
      %v1825 = vsub.s32 7, %v1824
      %v1826 = vrot.slane %v569, %v1825
      %v1827 = vadd.f32 %v1807, %v1826
      %v1828 = vadd.f32 %v1808, %v1826
      %v1829 = vadd.f32 %v1809, %v1826
      %v1830 = vadd.f32 %v1810, %v1826
      %v1831 = vadd.f32 %v1811, %v1826
      %v1832 = vadd.f32 %v1812, %v1826
      %v1833 = vadd.f32 %v1813, %v1826
      %v1834 = vadd.f32 %v1814, %v1826
      %v1835 = vadd.f32 %v1815, %v1826
      %v1836 = vadd.f32 %v1816, %v1826
      %v1837 = vadd.f32 %v1817, %v1826
      %v1838 = vadd.f32 %v1818, %v1826
      %v1839 = vadd.f32 %v1819, %v1826
      %v1840 = vadd.f32 %v1820, %v1826
      %v1841 = vadd.f32 %v1821, %v1826
      %v1842 = vadd.f32 %v1822, %v1826
      %v1843 = vmax.f32 %v1827, 0.0
      %v1844 = vmax.f32 %v1828, 0.0
      %v1845 = vmax.f32 %v1829, 0.0
      %v1846 = vmax.f32 %v1830, 0.0
      %v1847 = vmax.f32 %v1831, 0.0
      %v1848 = vmax.f32 %v1832, 0.0
      %v1849 = vmax.f32 %v1833, 0.0
      %v1850 = vmax.f32 %v1834, 0.0
      %v1851 = vmax.f32 %v1835, 0.0
      %v1852 = vmax.f32 %v1836, 0.0
      %v1853 = vmax.f32 %v1837, 0.0
      %v1854 = vmax.f32 %v1838, 0.0
      %v1855 = vmax.f32 %v1839, 0.0
      %v1856 = vmax.f32 %v1840, 0.0
      %v1857 = vmax.f32 %v1841, 0.0
      %v1858 = vmax.f32 %v1842, 0.0
      %v1875 = vrot.slane %v1844, 7
      %v1876 = vsel %vm726, %v1875, %v1843
      %v1877 = vrot.slane %v1845, 6
      %v1878 = vsel %vm727, %v1877, %v1876
      %v1879 = vrot.slane %v1846, 5
      %v1880 = vsel %vm729, %v1879, %v1878
      %v1881 = vrot.slane %v1847, 4
      %v1882 = vsel %vm1149, %v1881, %v1880
      %v1883 = vrot.slane %v1848, 3
      %v1884 = vsel %vm1152, %v1883, %v1882
      %v1885 = vrot.slane %v1849, 2
      %v1886 = vsel %vm1155, %v1885, %v1884
      %v1887 = vrot.slane %v1850, 1
      %v1888 = vsel %vm1158, %v1887, %v1886
      %v1889 = vrot.slane %v1852, 7
      %v1890 = vsel %vm726, %v1889, %v1851
      %v1891 = vrot.slane %v1853, 6
      %v1892 = vsel %vm727, %v1891, %v1890
      %v1893 = vrot.slane %v1854, 5
      %v1894 = vsel %vm729, %v1893, %v1892
      %v1895 = vrot.slane %v1855, 4
      %v1896 = vsel %vm1149, %v1895, %v1894
      %v1897 = vrot.slane %v1856, 3
      %v1898 = vsel %vm1152, %v1897, %v1896
      %v1899 = vrot.slane %v1857, 2
      %v1900 = vsel %vm1155, %v1899, %v1898
      %v1901 = vrot.slane %v1858, 1
      %v1902 = vsel %vm1158, %v1901, %v1900
      %v1905 = vsel %vm1176, %v1888, 0.0
      %v1906 = vsel %vm1176, %v1902, 0.0
      %v1907 = vadd.f32 %v1905, %v1906
      %v1908 = vrot.slane %v1907, 4
      %v1909 = vadd.f32 %v1907, %v1908
      %v1910 = vrot.slane %v1909, 2
      %v1911 = vadd.f32 %v1909, %v1910
      %v1912 = vrot.slane %v1911, 1
      %v1913 = vadd.f32 %v1911, %v1912
      %v1914 = vmul.f32 %v1913, %v1186
      %v1915 = vlaneseq
      %v1916 = vshrl.u32 %v1915, 7
      %v1917 = vsub.s32 0, %v1916
      %v1918 = vrot.slane %v1914, %v1917
      %v1919 = vsub.f32 %v1843, %v1918
      %v1920 = vsub.f32 %v1844, %v1918
      %v1921 = vsub.f32 %v1845, %v1918
      %v1922 = vsub.f32 %v1846, %v1918
      %v1923 = vsub.f32 %v1847, %v1918
      %v1924 = vsub.f32 %v1848, %v1918
      %v1925 = vsub.f32 %v1849, %v1918
      %v1926 = vsub.f32 %v1850, %v1918
      %v1927 = vsub.f32 %v1851, %v1918
      %v1928 = vsub.f32 %v1852, %v1918
      %v1929 = vsub.f32 %v1853, %v1918
      %v1930 = vsub.f32 %v1854, %v1918
      %v1931 = vsub.f32 %v1855, %v1918
      %v1932 = vsub.f32 %v1856, %v1918
      %v1933 = vsub.f32 %v1857, %v1918
      %v1934 = vsub.f32 %v1858, %v1918
      %v1935 = vmul.f32 %v1919, %v1919
      %v1936 = vmul.f32 %v1920, %v1920
      %v1937 = vmul.f32 %v1921, %v1921
      %v1938 = vmul.f32 %v1922, %v1922
      %v1939 = vmul.f32 %v1923, %v1923
      %v1940 = vmul.f32 %v1924, %v1924
      %v1941 = vmul.f32 %v1925, %v1925
      %v1942 = vmul.f32 %v1926, %v1926
      %v1943 = vmul.f32 %v1927, %v1927
      %v1944 = vmul.f32 %v1928, %v1928
      %v1945 = vmul.f32 %v1929, %v1929
      %v1946 = vmul.f32 %v1930, %v1930
      %v1947 = vmul.f32 %v1931, %v1931
      %v1948 = vmul.f32 %v1932, %v1932
      %v1949 = vmul.f32 %v1933, %v1933
      %v1950 = vmul.f32 %v1934, %v1934
      %v1967 = vrot.slane %v1936, 7
      %v1968 = vsel %vm726, %v1967, %v1935
      %v1969 = vrot.slane %v1937, 6
      %v1970 = vsel %vm727, %v1969, %v1968
      %v1971 = vrot.slane %v1938, 5
      %v1972 = vsel %vm729, %v1971, %v1970
      %v1973 = vrot.slane %v1939, 4
      %v1974 = vsel %vm1149, %v1973, %v1972
      %v1975 = vrot.slane %v1940, 3
      %v1976 = vsel %vm1152, %v1975, %v1974
      %v1977 = vrot.slane %v1941, 2
      %v1978 = vsel %vm1155, %v1977, %v1976
      %v1979 = vrot.slane %v1942, 1
      %v1980 = vsel %vm1158, %v1979, %v1978
      %v1981 = vrot.slane %v1944, 7
      %v1982 = vsel %vm726, %v1981, %v1943
      %v1983 = vrot.slane %v1945, 6
      %v1984 = vsel %vm727, %v1983, %v1982
      %v1985 = vrot.slane %v1946, 5
      %v1986 = vsel %vm729, %v1985, %v1984
      %v1987 = vrot.slane %v1947, 4
      %v1988 = vsel %vm1149, %v1987, %v1986
      %v1989 = vrot.slane %v1948, 3
      %v1990 = vsel %vm1152, %v1989, %v1988
      %v1991 = vrot.slane %v1949, 2
      %v1992 = vsel %vm1155, %v1991, %v1990
      %v1993 = vrot.slane %v1950, 1
      %v1994 = vsel %vm1158, %v1993, %v1992
      %v1997 = vsel %vm1176, %v1980, 0.0
      %v1998 = vsel %vm1176, %v1994, 0.0
      %v1999 = vadd.f32 %v1997, %v1998
      %v2000 = vrot.slane %v1999, 4
      %v2001 = vadd.f32 %v1999, %v2000
      %v2002 = vrot.slane %v2001, 2
      %v2003 = vadd.f32 %v2001, %v2002
      %v2004 = vrot.slane %v2003, 1
      %v2005 = vadd.f32 %v2003, %v2004
      %v2006 = vmul.f32 %v2005, %v1186
      %v2007 = vlaneseq
      %v2008 = vshrl.u32 %v2007, 7
      %v2009 = vsub.s32 2, %v2008
      %v2010 = vrot.slane %v570, %v2009
      %v2027 = vrot.slane %v1920, 7
      %v2028 = vsel %vm726, %v2027, %v1919
      %v2029 = vrot.slane %v1921, 6
      %v2030 = vsel %vm727, %v2029, %v2028
      %v2031 = vrot.slane %v1922, 5
      %v2032 = vsel %vm729, %v2031, %v2030
      %v2033 = vrot.slane %v1923, 4
      %v2034 = vsel %vm1149, %v2033, %v2032
      %v2035 = vrot.slane %v1924, 3
      %v2036 = vsel %vm1152, %v2035, %v2034
      %v2037 = vrot.slane %v1925, 2
      %v2038 = vsel %vm1155, %v2037, %v2036
      %v2039 = vrot.slane %v1926, 1
      %v2040 = vsel %vm1158, %v2039, %v2038
      %v2041 = vrot.slane %v1928, 7
      %v2042 = vsel %vm726, %v2041, %v1927
      %v2043 = vrot.slane %v1929, 6
      %v2044 = vsel %vm727, %v2043, %v2042
      %v2045 = vrot.slane %v1930, 5
      %v2046 = vsel %vm729, %v2045, %v2044
      %v2047 = vrot.slane %v1931, 4
      %v2048 = vsel %vm1149, %v2047, %v2046
      %v2049 = vrot.slane %v1932, 3
      %v2050 = vsel %vm1152, %v2049, %v2048
      %v2051 = vrot.slane %v1933, 2
      %v2052 = vsel %vm1155, %v2051, %v2050
      %v2053 = vrot.slane %v1934, 1
      %v2054 = vsel %vm1158, %v2053, %v2052
      %v2057 = vmul.f32 %v2010, %v2040
      %v2058 = vmul.f32 %v2010, %v2054
      %v2059 = vadd.f32 %v2006, 1e-05
      %v2060 = vrsqrt.pop %v2059
      %v2061 = vlaneseq
      %v2062 = vshrl.u32 %v2061, 7
      %v2063 = vsub.s32 0, %v2062
      %v2064 = vrot.slane %v2060, %v2063
      %v2065 = vmul.f32 %v2057, %v2064
      %v2066 = vmul.f32 %v2058, %v2064
      %v2067 = vlaneseq
      %v2068 = vshrl.u32 %v2067, 7
      %v2069 = vsub.s32 5, %v2068
      %v2070 = vrot.slane %v570, %v2069
      %v2071 = vadd.f32 %v2065, %v2070
      %v2072 = vadd.f32 %v2066, %v2070
      %v2073 = vpack.c.bf16 %v2072, %v2071
      %v2076 = vunpack.c.l.b16 %v567
      %v2077 = vunpack.c.l.b16 %v568
      %v2078 = vpack.c.b16 %v2077, %v2076
      %v2081 = vsel %vm1176, %v2073, 0
      %2083 = vmatprep.subr.bf16.mxu0 0
      %2084 = vmatpush1.bf16.msra.mxu0 %v2078
      %2085 = vmatprep.subr.bf16.mxu0 0
      %2086 = vmatpush1.bf16.msra.mxu0 0
      %2087 = vmatprep.subr.bf16.mxu0 0
      %2088 = vmatpush1.bf16.msra.mxu0 0
      %2089 = vmatprep.subr.bf16.mxu0 0
      %2090 = vmatpush1.bf16.msra.mxu0 0
      %2091 = vmatprep.subr.bf16.mxu0 0
      %2092 = vmatpush1.bf16.msra.mxu0 0
      %2093 = vmatprep.subr.bf16.mxu0 0
      %2094 = vmatpush1.bf16.msra.mxu0 0
      %2095 = vmatprep.subr.bf16.mxu0 0
      %2096 = vmatpush1.bf16.msra.mxu0 0
      %2097 = vmatprep.subr.bf16.mxu0 0
      %2098 = vmatpush1.bf16.msra.mxu0 0
      %2099 = vmatprep.subr.bf16.mxu0 0
      %2100 = vmatpush1.bf16.msra.mxu0 0
      %2101 = vmatprep.subr.bf16.mxu0 0
      %2102 = vmatpush1.bf16.msra.mxu0 0
      %2103 = vmatprep.subr.bf16.mxu0 0
      %2104 = vmatpush1.bf16.msra.mxu0 0
      %2105 = vmatprep.subr.bf16.mxu0 0
      %2106 = vmatpush1.bf16.msra.mxu0 0
      %2107 = vmatprep.subr.bf16.mxu0 0
      %2108 = vmatpush1.bf16.msra.mxu0 0
      %2109 = vmatprep.subr.bf16.mxu0 0
      %2110 = vmatpush1.bf16.msra.mxu0 0
      %2111 = vmatprep.subr.bf16.mxu0 0
      %2112 = vmatpush1.bf16.msra.mxu0 0
      %2113 = vmatprep.subr.bf16.mxu0 0
      %2114 = vmatpush1.bf16.msra.mxu0 0
      %2115 = vmatprep.mubr.bf16.mxu0 0
      %2116 = vmatmul.mubr.bf16.gmra.mrb[0].mxu0 %v2081
      %v2117 = vpop.f32.mrb[0].mxu0
      %v2118 = vadd.f32 0.0, %v2117
      %v2119 = vpop.f32.mrb[0].mxu0
      %v2120 = vpop.f32.mrb[0].mxu0
      %v2121 = vadd.f32 0.0, %v2120
      %v2122 = vpop.f32.mrb[0].mxu0
      %2123 = vdwg.mxu0
      %v2126 = vcombine.high %v2118, %v2118
      %v2127 = vcombine.high %v2121, %v2121
      %v2130 = vlaneseq
      %v2131 = vshrl.u32 %v2130, 7
      %v2132 = vsub.s32 5, %v2131
      %v2133 = vrot.slane %v569, %v2132
      %v2134 = vmul.f32 %v2118, %v2133
      %v2135 = vmul.f32 %v2126, %v2133
      %v2136 = vmul.f32 %v2121, %v2133
      %v2137 = vmul.f32 %v2127, %v2133
      %v2138 = vsel %vm673, %v2134, 0.0
      %2139 = vadd.xlane.f32.xlu0 %v2138
      %v2140 = vpop.xlane.xlu0 %2139
      %v2141 = vsel %vm673, %v2135, 0.0
      %2142 = vadd.xlane.f32.xlu0 %v2141
      %v2143 = vpop.xlane.xlu0 %2142
      %v2144 = vsel %vm673, %v2136, 0.0
      %2145 = vadd.xlane.f32.xlu0 %v2144
      %v2146 = vpop.xlane.xlu0 %2145
      %v2147 = vsel %vm673, %v2137, 0.0
      %2148 = vadd.xlane.f32.xlu0 %v2147
      %v2149 = vpop.xlane.xlu0 %2148
      %v2150 = vlaneseq
      %v2151 = vshrl.u32 %v2150, 7
      %v2152 = vsub.s32 2, %v2151
      %v2153 = vrot.slane %v569, %v2152
      %v2154 = vmul.f32 %v2118, %v2153
      %v2155 = vmul.f32 %v2126, %v2153
      %v2156 = vmul.f32 %v2121, %v2153
      %v2157 = vmul.f32 %v2127, %v2153
      %v2158 = vsel %vm673, %v2154, 0.0
      %2159 = vadd.xlane.f32.xlu0 %v2158
      %v2160 = vpop.xlane.xlu0 %2159
      %v2161 = vsel %vm673, %v2155, 0.0
      %2162 = vadd.xlane.f32.xlu0 %v2161
      %v2163 = vpop.xlane.xlu0 %2162
      %v2164 = vsel %vm673, %v2156, 0.0
      %2165 = vadd.xlane.f32.xlu0 %v2164
      %v2166 = vpop.xlane.xlu0 %2165
      %v2167 = vsel %vm673, %v2157, 0.0
      %2168 = vadd.xlane.f32.xlu0 %v2167
      %v2169 = vpop.xlane.xlu0 %2168
      %v2174 = vlaneseq
      %v2175 = vshrl.u32 %v2174, 7
      %v2176 = vsub.s32 %v575, %v2175
      %v2177 = vrot.slane %v2160, %v2176
      %v2178 = vlaneseq
      %v2179 = vshrl.u32 %v2178, 7
      %v2180 = vsub.s32 %v575, %v2179
      %v2181 = vrot.slane %v2163, %v2180
      %v2182 = vlaneseq
      %v2183 = vshrl.u32 %v2182, 7
      %v2184 = vsub.s32 %v575, %v2183
      %v2185 = vrot.slane %v2166, %v2184
      %v2186 = vlaneseq
      %v2187 = vshrl.u32 %v2186, 7
      %v2188 = vsub.s32 %v575, %v2187
      %v2189 = vrot.slane %v2169, %v2188
      %v2190 = vsel %vm727, %v2177, %v2177
      %v2191 = vsel %vm729, %v2177, %v2190
      %v2192 = vsel %vm727, %v2181, %v2181
      %v2193 = vsel %vm729, %v2181, %v2192
      %v2194 = vsel %vm727, %v2185, %v2185
      %v2195 = vsel %vm729, %v2185, %v2194
      %v2196 = vsel %vm727, %v2189, %v2189
      %v2197 = vsel %vm729, %v2189, %v2196
      %v2202 = vadd.f32 %v2140, %v2191
      %v2203 = vadd.f32 %v2143, %v2193
      %v2204 = vadd.f32 %v2146, %v2195
      %v2205 = vadd.f32 %v2149, %v2197
      %vm2206 = vcmp.gt.f32.partialorder %v2202, 0.0
      %vm2207 = vcmp.gt.f32.partialorder %v2203, 0.0
      %vm2208 = vcmp.gt.f32.partialorder %v2204, 0.0
      %vm2209 = vcmp.gt.f32.partialorder %v2205, 0.0
      %v2210 = vmul.f32 %v2202, 0.2
      %v2211 = vmul.f32 %v2203, 0.2
      %v2212 = vmul.f32 %v2204, 0.2
      %v2213 = vmul.f32 %v2205, 0.2
      %v2214 = vsel %vm2206, %v2202, %v2210
      %v2215 = vsel %vm2207, %v2203, %v2211
      %v2216 = vsel %vm2208, %v2204, %v2212
      %v2217 = vsel %vm2209, %v2205, %v2213
      %v2218 = vsel %vm583, %v2214, -1e+30
      %v2219 = vsel %vm584, %v2215, -1e+30
      %v2220 = vsel %vm585, %v2216, -1e+30
      %v2221 = vsel %vm586, %v2217, -1e+30
      %v2222 = vsel %vm761, %v2218, -inf
      %2223 = vmax.xlane.f32.xlu0 %v2222
      %v2224 = vpop.xlane.xlu0 %2223
      %v2225 = vsel %vm761, %v2219, -inf
      %2226 = vmax.xlane.f32.xlu0 %v2225
      %v2227 = vpop.xlane.xlu0 %2226
      %v2228 = vsel %vm761, %v2220, -inf
      %2229 = vmax.xlane.f32.xlu0 %v2228
      %v2230 = vpop.xlane.xlu0 %2229
      %v2231 = vsel %vm761, %v2221, -inf
      %2232 = vmax.xlane.f32.xlu0 %v2231
      %v2233 = vpop.xlane.xlu0 %2232
      %v2234 = vsub.f32 %v2218, %v2224
      %v2235 = vsub.f32 %v2219, %v2227
      %v2236 = vsub.f32 %v2220, %v2230
      %v2237 = vsub.f32 %v2221, %v2233
      %v2238 = vmul.f32 %v2234, 1.442695
      %v2239 = vpow.pop %v2238
      %v2240 = vmul.f32 %v2235, 1.442695
      %v2241 = vpow.pop %v2240
      %v2242 = vmul.f32 %v2236, 1.442695
      %v2243 = vpow.pop %v2242
      %v2244 = vmul.f32 %v2237, 1.442695
      %v2245 = vpow.pop %v2244
      %v2246 = vsel %vm761, %v2239, 0.0
      %2247 = vadd.xlane.f32.xlu0 %v2246
      %v2248 = vpop.xlane.xlu0 %2247
      %v2249 = vsel %vm761, %v2241, 0.0
      %2250 = vadd.xlane.f32.xlu0 %v2249
      %v2251 = vpop.xlane.xlu0 %2250
      %v2252 = vsel %vm761, %v2243, 0.0
      %2253 = vadd.xlane.f32.xlu0 %v2252
      %v2254 = vpop.xlane.xlu0 %2253
      %v2255 = vsel %vm761, %v2245, 0.0
      %2256 = vadd.xlane.f32.xlu0 %v2255
      %v2257 = vpop.xlane.xlu0 %2256
      %v2258 = vlaneseq
      %v2259 = vshrl.u32 %v2258, 7
      %v2260 = vsub.s32 0, %v2259
      %v2261 = vrot.slane %v2239, %v2260
      %2263 = vbcast.lane.b32.xlu0 %v2261, 256
      %v2264 = vpop.permute.xlu0 %2263
      %v2265 = vlaneseq
      %v2266 = vshrl.u32 %v2265, 7
      %v2267 = vsub.s32 1, %v2266
      %v2268 = vrot.slane %v2239, %v2267
      %2270 = vbcast.lane.b32.xlu0 %v2268, 256
      %v2271 = vpop.permute.xlu0 %2270
      %v2272 = vlaneseq
      %v2273 = vshrl.u32 %v2272, 7
      %v2274 = vsub.s32 2, %v2273
      %v2275 = vrot.slane %v2239, %v2274
      %2277 = vbcast.lane.b32.xlu0 %v2275, 256
      %v2278 = vpop.permute.xlu0 %2277
      %v2279 = vlaneseq
      %v2280 = vshrl.u32 %v2279, 7
      %v2281 = vsub.s32 3, %v2280
      %v2282 = vrot.slane %v2239, %v2281
      %2284 = vbcast.lane.b32.xlu0 %v2282, 256
      %v2285 = vpop.permute.xlu0 %2284
      %v2286 = vlaneseq
      %v2287 = vshrl.u32 %v2286, 7
      %v2288 = vsub.s32 0, %v2287
      %v2289 = vrot.slane %v2241, %v2288
      %2291 = vbcast.lane.b32.xlu0 %v2289, 256
      %v2292 = vpop.permute.xlu0 %2291
      %v2293 = vlaneseq
      %v2294 = vshrl.u32 %v2293, 7
      %v2295 = vsub.s32 1, %v2294
      %v2296 = vrot.slane %v2241, %v2295
      %2298 = vbcast.lane.b32.xlu0 %v2296, 256
      %v2299 = vpop.permute.xlu0 %2298
      %v2300 = vlaneseq
      %v2301 = vshrl.u32 %v2300, 7
      %v2302 = vsub.s32 2, %v2301
      %v2303 = vrot.slane %v2241, %v2302
      %2305 = vbcast.lane.b32.xlu0 %v2303, 256
      %v2306 = vpop.permute.xlu0 %2305
      %v2307 = vlaneseq
      %v2308 = vshrl.u32 %v2307, 7
      %v2309 = vsub.s32 3, %v2308
      %v2310 = vrot.slane %v2241, %v2309
      %2312 = vbcast.lane.b32.xlu0 %v2310, 256
      %v2313 = vpop.permute.xlu0 %2312
      %v2314 = vlaneseq
      %v2315 = vshrl.u32 %v2314, 7
      %v2316 = vsub.s32 0, %v2315
      %v2317 = vrot.slane %v2243, %v2316
      %2319 = vbcast.lane.b32.xlu0 %v2317, 256
      %v2320 = vpop.permute.xlu0 %2319
      %v2321 = vlaneseq
      %v2322 = vshrl.u32 %v2321, 7
      %v2323 = vsub.s32 1, %v2322
      %v2324 = vrot.slane %v2243, %v2323
      %2326 = vbcast.lane.b32.xlu0 %v2324, 256
      %v2327 = vpop.permute.xlu0 %2326
      %v2328 = vlaneseq
      %v2329 = vshrl.u32 %v2328, 7
      %v2330 = vsub.s32 2, %v2329
      %v2331 = vrot.slane %v2243, %v2330
      %2333 = vbcast.lane.b32.xlu0 %v2331, 256
      %v2334 = vpop.permute.xlu0 %2333
      %v2335 = vlaneseq
      %v2336 = vshrl.u32 %v2335, 7
      %v2337 = vsub.s32 3, %v2336
      %v2338 = vrot.slane %v2243, %v2337
      %2340 = vbcast.lane.b32.xlu0 %v2338, 256
      %v2341 = vpop.permute.xlu0 %2340
      %v2342 = vlaneseq
      %v2343 = vshrl.u32 %v2342, 7
      %v2344 = vsub.s32 0, %v2343
      %v2345 = vrot.slane %v2245, %v2344
      %2347 = vbcast.lane.b32.xlu0 %v2345, 256
      %v2348 = vpop.permute.xlu0 %2347
      %v2349 = vlaneseq
      %v2350 = vshrl.u32 %v2349, 7
      %v2351 = vsub.s32 1, %v2350
      %v2352 = vrot.slane %v2245, %v2351
      %2354 = vbcast.lane.b32.xlu0 %v2352, 256
      %v2355 = vpop.permute.xlu0 %2354
      %v2356 = vlaneseq
      %v2357 = vshrl.u32 %v2356, 7
      %v2358 = vsub.s32 2, %v2357
      %v2359 = vrot.slane %v2245, %v2358
      %2361 = vbcast.lane.b32.xlu0 %v2359, 256
      %v2362 = vpop.permute.xlu0 %2361
      %v2363 = vlaneseq
      %v2364 = vshrl.u32 %v2363, 7
      %v2365 = vsub.s32 3, %v2364
      %v2366 = vrot.slane %v2245, %v2365
      %2368 = vbcast.lane.b32.xlu0 %v2366, 256
      %v2369 = vpop.permute.xlu0 %2368
      %v2370 = vmul.f32 %v2264, %v2118
      %v2371 = vmul.f32 %v2271, %v2118
      %v2372 = vmul.f32 %v2278, %v2118
      %v2373 = vmul.f32 %v2285, %v2118
      %v2374 = vmul.f32 %v2292, %v2126
      %v2375 = vmul.f32 %v2299, %v2126
      %v2376 = vmul.f32 %v2306, %v2126
      %v2377 = vmul.f32 %v2313, %v2126
      %v2378 = vmul.f32 %v2320, %v2121
      %v2379 = vmul.f32 %v2327, %v2121
      %v2380 = vmul.f32 %v2334, %v2121
      %v2381 = vmul.f32 %v2341, %v2121
      %v2382 = vmul.f32 %v2348, %v2127
      %v2383 = vmul.f32 %v2355, %v2127
      %v2384 = vmul.f32 %v2362, %v2127
      %v2385 = vmul.f32 %v2369, %v2127
      %v2386 = vsel %vm673, %v2370, 0.0
      %v2387 = vrot.slane %v2386, 4
      %v2388 = vadd.f32 %v2386, %v2387
      %v2389 = vrot.slane %v2388, 2
      %v2390 = vadd.f32 %v2388, %v2389
      %v2391 = vrot.slane %v2390, 1
      %v2392 = vadd.f32 %v2390, %v2391
      %v2393 = vsel %vm673, %v2371, 0.0
      %v2394 = vrot.slane %v2393, 4
      %v2395 = vadd.f32 %v2393, %v2394
      %v2396 = vrot.slane %v2395, 2
      %v2397 = vadd.f32 %v2395, %v2396
      %v2398 = vrot.slane %v2397, 1
      %v2399 = vadd.f32 %v2397, %v2398
      %v2400 = vsel %vm673, %v2372, 0.0
      %v2401 = vrot.slane %v2400, 4
      %v2402 = vadd.f32 %v2400, %v2401
      %v2403 = vrot.slane %v2402, 2
      %v2404 = vadd.f32 %v2402, %v2403
      %v2405 = vrot.slane %v2404, 1
      %v2406 = vadd.f32 %v2404, %v2405
      %v2407 = vsel %vm673, %v2373, 0.0
      %v2408 = vrot.slane %v2407, 4
      %v2409 = vadd.f32 %v2407, %v2408
      %v2410 = vrot.slane %v2409, 2
      %v2411 = vadd.f32 %v2409, %v2410
      %v2412 = vrot.slane %v2411, 1
      %v2413 = vadd.f32 %v2411, %v2412
      %v2414 = vsel %vm673, %v2374, 0.0
      %v2415 = vrot.slane %v2414, 4
      %v2416 = vadd.f32 %v2414, %v2415
      %v2417 = vrot.slane %v2416, 2
      %v2418 = vadd.f32 %v2416, %v2417
      %v2419 = vrot.slane %v2418, 1
      %v2420 = vadd.f32 %v2418, %v2419
      %v2421 = vsel %vm673, %v2375, 0.0
      %v2422 = vrot.slane %v2421, 4
      %v2423 = vadd.f32 %v2421, %v2422
      %v2424 = vrot.slane %v2423, 2
      %v2425 = vadd.f32 %v2423, %v2424
      %v2426 = vrot.slane %v2425, 1
      %v2427 = vadd.f32 %v2425, %v2426
      %v2428 = vsel %vm673, %v2376, 0.0
      %v2429 = vrot.slane %v2428, 4
      %v2430 = vadd.f32 %v2428, %v2429
      %v2431 = vrot.slane %v2430, 2
      %v2432 = vadd.f32 %v2430, %v2431
      %v2433 = vrot.slane %v2432, 1
      %v2434 = vadd.f32 %v2432, %v2433
      %v2435 = vsel %vm673, %v2377, 0.0
      %v2436 = vrot.slane %v2435, 4
      %v2437 = vadd.f32 %v2435, %v2436
      %v2438 = vrot.slane %v2437, 2
      %v2439 = vadd.f32 %v2437, %v2438
      %v2440 = vrot.slane %v2439, 1
      %v2441 = vadd.f32 %v2439, %v2440
      %v2442 = vsel %vm673, %v2378, 0.0
      %v2443 = vrot.slane %v2442, 4
      %v2444 = vadd.f32 %v2442, %v2443
      %v2445 = vrot.slane %v2444, 2
      %v2446 = vadd.f32 %v2444, %v2445
      %v2447 = vrot.slane %v2446, 1
      %v2448 = vadd.f32 %v2446, %v2447
      %v2449 = vsel %vm673, %v2379, 0.0
      %v2450 = vrot.slane %v2449, 4
      %v2451 = vadd.f32 %v2449, %v2450
      %v2452 = vrot.slane %v2451, 2
      %v2453 = vadd.f32 %v2451, %v2452
      %v2454 = vrot.slane %v2453, 1
      %v2455 = vadd.f32 %v2453, %v2454
      %v2456 = vsel %vm673, %v2380, 0.0
      %v2457 = vrot.slane %v2456, 4
      %v2458 = vadd.f32 %v2456, %v2457
      %v2459 = vrot.slane %v2458, 2
      %v2460 = vadd.f32 %v2458, %v2459
      %v2461 = vrot.slane %v2460, 1
      %v2462 = vadd.f32 %v2460, %v2461
      %v2463 = vsel %vm673, %v2381, 0.0
      %v2464 = vrot.slane %v2463, 4
      %v2465 = vadd.f32 %v2463, %v2464
      %v2466 = vrot.slane %v2465, 2
      %v2467 = vadd.f32 %v2465, %v2466
      %v2468 = vrot.slane %v2467, 1
      %v2469 = vadd.f32 %v2467, %v2468
      %v2470 = vsel %vm673, %v2382, 0.0
      %v2471 = vrot.slane %v2470, 4
      %v2472 = vadd.f32 %v2470, %v2471
      %v2473 = vrot.slane %v2472, 2
      %v2474 = vadd.f32 %v2472, %v2473
      %v2475 = vrot.slane %v2474, 1
      %v2476 = vadd.f32 %v2474, %v2475
      %v2477 = vsel %vm673, %v2383, 0.0
      %v2478 = vrot.slane %v2477, 4
      %v2479 = vadd.f32 %v2477, %v2478
      %v2480 = vrot.slane %v2479, 2
      %v2481 = vadd.f32 %v2479, %v2480
      %v2482 = vrot.slane %v2481, 1
      %v2483 = vadd.f32 %v2481, %v2482
      %v2484 = vsel %vm673, %v2384, 0.0
      %v2485 = vrot.slane %v2484, 4
      %v2486 = vadd.f32 %v2484, %v2485
      %v2487 = vrot.slane %v2486, 2
      %v2488 = vadd.f32 %v2486, %v2487
      %v2489 = vrot.slane %v2488, 1
      %v2490 = vadd.f32 %v2488, %v2489
      %v2491 = vsel %vm673, %v2385, 0.0
      %v2492 = vrot.slane %v2491, 4
      %v2493 = vadd.f32 %v2491, %v2492
      %v2494 = vrot.slane %v2493, 2
      %v2495 = vadd.f32 %v2493, %v2494
      %v2496 = vrot.slane %v2495, 1
      %v2497 = vadd.f32 %v2495, %v2496
      %v2498 = vrcp.pop %v2248
      %v2499 = vrcp.pop %v2251
      %v2500 = vrcp.pop %v2254
      %v2501 = vrcp.pop %v2257
      %v2506 = vrot.slane %v2498, 1
      %v2507 = vrot.slane %v2498, 2
      %v2508 = vrot.slane %v2498, 3
      %v2509 = vrot.slane %v2499, 1
      %v2510 = vrot.slane %v2499, 2
      %v2511 = vrot.slane %v2499, 3
      %v2512 = vrot.slane %v2500, 1
      %v2513 = vrot.slane %v2500, 2
      %v2514 = vrot.slane %v2500, 3
      %v2515 = vrot.slane %v2501, 1
      %v2516 = vrot.slane %v2501, 2
      %v2517 = vrot.slane %v2501, 3
      %v2534 = vmul.f32 %v2392, %v2498
      %v2535 = vmul.f32 %v2399, %v2506
      %v2536 = vmul.f32 %v2406, %v2507
      %v2537 = vmul.f32 %v2413, %v2508
      %v2538 = vmul.f32 %v2420, %v2499
      %v2539 = vmul.f32 %v2427, %v2509
      %v2540 = vmul.f32 %v2434, %v2510
      %v2541 = vmul.f32 %v2441, %v2511
      %v2542 = vmul.f32 %v2448, %v2500
      %v2543 = vmul.f32 %v2455, %v2512
      %v2544 = vmul.f32 %v2462, %v2513
      %v2545 = vmul.f32 %v2469, %v2514
      %v2546 = vmul.f32 %v2476, %v2501
      %v2547 = vmul.f32 %v2483, %v2515
      %v2548 = vmul.f32 %v2490, %v2516
      %v2549 = vmul.f32 %v2497, %v2517
      %v2550 = vlaneseq
      %v2551 = vshrl.u32 %v2550, 7
      %v2552 = vsub.s32 0, %v2551
      %v2553 = vrot.slane %v570, %v2552
      %v2554 = vadd.f32 %v2534, %v2553
      %v2555 = vadd.f32 %v2535, %v2553
      %v2556 = vadd.f32 %v2536, %v2553
      %v2557 = vadd.f32 %v2537, %v2553
      %v2558 = vadd.f32 %v2538, %v2553
      %v2559 = vadd.f32 %v2539, %v2553
      %v2560 = vadd.f32 %v2540, %v2553
      %v2561 = vadd.f32 %v2541, %v2553
      %v2562 = vadd.f32 %v2542, %v2553
      %v2563 = vadd.f32 %v2543, %v2553
      %v2564 = vadd.f32 %v2544, %v2553
      %v2565 = vadd.f32 %v2545, %v2553
      %v2566 = vadd.f32 %v2546, %v2553
      %v2567 = vadd.f32 %v2547, %v2553
      %v2568 = vadd.f32 %v2548, %v2553
      %v2569 = vadd.f32 %v2549, %v2553
      %v2570 = vmax.f32 %v2554, 0.0
      %v2571 = vmax.f32 %v2555, 0.0
      %v2572 = vmax.f32 %v2556, 0.0
      %v2573 = vmax.f32 %v2557, 0.0
      %v2574 = vmax.f32 %v2558, 0.0
      %v2575 = vmax.f32 %v2559, 0.0
      %v2576 = vmax.f32 %v2560, 0.0
      %v2577 = vmax.f32 %v2561, 0.0
      %v2578 = vmax.f32 %v2562, 0.0
      %v2579 = vmax.f32 %v2563, 0.0
      %v2580 = vmax.f32 %v2564, 0.0
      %v2581 = vmax.f32 %v2565, 0.0
      %v2582 = vmax.f32 %v2566, 0.0
      %v2583 = vmax.f32 %v2567, 0.0
      %v2584 = vmax.f32 %v2568, 0.0
      %v2585 = vmax.f32 %v2569, 0.0
      %v2602 = vrot.slane %v2571, 7
      %v2603 = vsel %vm726, %v2602, %v2570
      %v2604 = vrot.slane %v2572, 6
      %v2605 = vsel %vm727, %v2604, %v2603
      %v2606 = vrot.slane %v2573, 5
      %v2607 = vsel %vm729, %v2606, %v2605
      %v2608 = vrot.slane %v2574, 4
      %v2609 = vsel %vm1149, %v2608, %v2607
      %v2610 = vrot.slane %v2575, 3
      %v2611 = vsel %vm1152, %v2610, %v2609
      %v2612 = vrot.slane %v2576, 2
      %v2613 = vsel %vm1155, %v2612, %v2611
      %v2614 = vrot.slane %v2577, 1
      %v2615 = vsel %vm1158, %v2614, %v2613
      %v2616 = vrot.slane %v2579, 7
      %v2617 = vsel %vm726, %v2616, %v2578
      %v2618 = vrot.slane %v2580, 6
      %v2619 = vsel %vm727, %v2618, %v2617
      %v2620 = vrot.slane %v2581, 5
      %v2621 = vsel %vm729, %v2620, %v2619
      %v2622 = vrot.slane %v2582, 4
      %v2623 = vsel %vm1149, %v2622, %v2621
      %v2624 = vrot.slane %v2583, 3
      %v2625 = vsel %vm1152, %v2624, %v2623
      %v2626 = vrot.slane %v2584, 2
      %v2627 = vsel %vm1155, %v2626, %v2625
      %v2628 = vrot.slane %v2585, 1
      %v2629 = vsel %vm1158, %v2628, %v2627
      %v2632 = vsel %vm1176, %v2615, 0.0
      %v2633 = vsel %vm1176, %v2629, 0.0
      %v2634 = vadd.f32 %v2632, %v2633
      %v2635 = vrot.slane %v2634, 4
      %v2636 = vadd.f32 %v2634, %v2635
      %v2637 = vrot.slane %v2636, 2
      %v2638 = vadd.f32 %v2636, %v2637
      %v2639 = vrot.slane %v2638, 1
      %v2640 = vadd.f32 %v2638, %v2639
      %v2641 = vmul.f32 %v2640, %v1186
      %v2642 = vlaneseq
      %v2643 = vshrl.u32 %v2642, 7
      %v2644 = vsub.s32 0, %v2643
      %v2645 = vrot.slane %v2641, %v2644
      %v2646 = vsub.f32 %v2570, %v2645
      %v2647 = vsub.f32 %v2571, %v2645
      %v2648 = vsub.f32 %v2572, %v2645
      %v2649 = vsub.f32 %v2573, %v2645
      %v2650 = vsub.f32 %v2574, %v2645
      %v2651 = vsub.f32 %v2575, %v2645
      %v2652 = vsub.f32 %v2576, %v2645
      %v2653 = vsub.f32 %v2577, %v2645
      %v2654 = vsub.f32 %v2578, %v2645
      %v2655 = vsub.f32 %v2579, %v2645
      %v2656 = vsub.f32 %v2580, %v2645
      %v2657 = vsub.f32 %v2581, %v2645
      %v2658 = vsub.f32 %v2582, %v2645
      %v2659 = vsub.f32 %v2583, %v2645
      %v2660 = vsub.f32 %v2584, %v2645
      %v2661 = vsub.f32 %v2585, %v2645
      %v2662 = vmul.f32 %v2646, %v2646
      %v2663 = vmul.f32 %v2647, %v2647
      %v2664 = vmul.f32 %v2648, %v2648
      %v2665 = vmul.f32 %v2649, %v2649
      %v2666 = vmul.f32 %v2650, %v2650
      %v2667 = vmul.f32 %v2651, %v2651
      %v2668 = vmul.f32 %v2652, %v2652
      %v2669 = vmul.f32 %v2653, %v2653
      %v2670 = vmul.f32 %v2654, %v2654
      %v2671 = vmul.f32 %v2655, %v2655
      %v2672 = vmul.f32 %v2656, %v2656
      %v2673 = vmul.f32 %v2657, %v2657
      %v2674 = vmul.f32 %v2658, %v2658
      %v2675 = vmul.f32 %v2659, %v2659
      %v2676 = vmul.f32 %v2660, %v2660
      %v2677 = vmul.f32 %v2661, %v2661
      %v2694 = vrot.slane %v2663, 7
      %v2695 = vsel %vm726, %v2694, %v2662
      %v2696 = vrot.slane %v2664, 6
      %v2697 = vsel %vm727, %v2696, %v2695
      %v2698 = vrot.slane %v2665, 5
      %v2699 = vsel %vm729, %v2698, %v2697
      %v2700 = vrot.slane %v2666, 4
      %v2701 = vsel %vm1149, %v2700, %v2699
      %v2702 = vrot.slane %v2667, 3
      %v2703 = vsel %vm1152, %v2702, %v2701
      %v2704 = vrot.slane %v2668, 2
      %v2705 = vsel %vm1155, %v2704, %v2703
      %v2706 = vrot.slane %v2669, 1
      %v2707 = vsel %vm1158, %v2706, %v2705
      %v2708 = vrot.slane %v2671, 7
      %v2709 = vsel %vm726, %v2708, %v2670
      %v2710 = vrot.slane %v2672, 6
      %v2711 = vsel %vm727, %v2710, %v2709
      %v2712 = vrot.slane %v2673, 5
      %v2713 = vsel %vm729, %v2712, %v2711
      %v2714 = vrot.slane %v2674, 4
      %v2715 = vsel %vm1149, %v2714, %v2713
      %v2716 = vrot.slane %v2675, 3
      %v2717 = vsel %vm1152, %v2716, %v2715
      %v2718 = vrot.slane %v2676, 2
      %v2719 = vsel %vm1155, %v2718, %v2717
      %v2720 = vrot.slane %v2677, 1
      %v2721 = vsel %vm1158, %v2720, %v2719
      %v2724 = vsel %vm1176, %v2707, 0.0
      %v2725 = vsel %vm1176, %v2721, 0.0
      %v2726 = vadd.f32 %v2724, %v2725
      %v2727 = vrot.slane %v2726, 4
      %v2728 = vadd.f32 %v2726, %v2727
      %v2729 = vrot.slane %v2728, 2
      %v2730 = vadd.f32 %v2728, %v2729
      %v2731 = vrot.slane %v2730, 1
      %v2732 = vadd.f32 %v2730, %v2731
      %v2733 = vmul.f32 %v2732, %v1186
      %v2734 = vlaneseq
      %v2735 = vshrl.u32 %v2734, 7
      %v2736 = vsub.s32 3, %v2735
      %v2737 = vrot.slane %v570, %v2736
      %v2754 = vrot.slane %v2647, 7
      %v2755 = vsel %vm726, %v2754, %v2646
      %v2756 = vrot.slane %v2648, 6
      %v2757 = vsel %vm727, %v2756, %v2755
      %v2758 = vrot.slane %v2649, 5
      %v2759 = vsel %vm729, %v2758, %v2757
      %v2760 = vrot.slane %v2650, 4
      %v2761 = vsel %vm1149, %v2760, %v2759
      %v2762 = vrot.slane %v2651, 3
      %v2763 = vsel %vm1152, %v2762, %v2761
      %v2764 = vrot.slane %v2652, 2
      %v2765 = vsel %vm1155, %v2764, %v2763
      %v2766 = vrot.slane %v2653, 1
      %v2767 = vsel %vm1158, %v2766, %v2765
      %v2768 = vrot.slane %v2655, 7
      %v2769 = vsel %vm726, %v2768, %v2654
      %v2770 = vrot.slane %v2656, 6
      %v2771 = vsel %vm727, %v2770, %v2769
      %v2772 = vrot.slane %v2657, 5
      %v2773 = vsel %vm729, %v2772, %v2771
      %v2774 = vrot.slane %v2658, 4
      %v2775 = vsel %vm1149, %v2774, %v2773
      %v2776 = vrot.slane %v2659, 3
      %v2777 = vsel %vm1152, %v2776, %v2775
      %v2778 = vrot.slane %v2660, 2
      %v2779 = vsel %vm1155, %v2778, %v2777
      %v2780 = vrot.slane %v2661, 1
      %v2781 = vsel %vm1158, %v2780, %v2779
      %v2784 = vmul.f32 %v2737, %v2767
      %v2785 = vmul.f32 %v2737, %v2781
      %v2786 = vadd.f32 %v2733, 1e-05
      %v2787 = vrsqrt.pop %v2786
      %v2788 = vlaneseq
      %v2789 = vshrl.u32 %v2788, 7
      %v2790 = vsub.s32 0, %v2789
      %v2791 = vrot.slane %v2787, %v2790
      %v2792 = vmul.f32 %v2784, %v2791
      %v2793 = vmul.f32 %v2785, %v2791
      %v2794 = vlaneseq
      %v2795 = vshrl.u32 %v2794, 7
      %v2796 = vsub.s32 6, %v2795
      %v2797 = vrot.slane %v570, %v2796
      %v2798 = vadd.f32 %v2792, %v2797
      %v2799 = vadd.f32 %v2793, %v2797
      %2802 = vrot.lane.b32.xlu0 %v2071, 16
      %v2803 = vpop.permute.xlu0 %2802
      %2804 = vrot.lane.b32.xlu0 %v2072, 16
      %v2805 = vpop.permute.xlu0 %2804
      %2810 = vrot.lane.b32.xlu0 %v2798, 32
      %v2811 = vpop.permute.xlu0 %2810
      %2812 = vrot.lane.b32.xlu0 %v2799, 32
      %v2813 = vpop.permute.xlu0 %2812
      %v2816 = vsel %vm1176, %v1344, %v2803
      %v2817 = vsel %vm1176, %v1345, %v2805
      %vm2818 = vcmask 261120
      %v2819 = vsel %vm2818, %v2816, %v2811
      %v2820 = vsel %vm2818, %v2817, %v2813
      %v2823 = vcombine.high %v2819, %v2819
      %v2824 = vcombine.high %v2820, %v2820
      %v2827 = vlaneseq
      %v2828 = vshrl.u32 %v2827, 7
      %v2829 = vsub.s32 0, %v2828
      %v2830 = vrot.slane %v555, %v2829
      %2832 = vbcast.lane.b32.xlu0 %v2830, 256
      %v2833 = vpop.permute.xlu0 %2832
      %v2834 = vlaneseq
      %v2835 = vshrl.u32 %v2834, 7
      %v2836 = vsub.s32 1, %v2835
      %v2837 = vrot.slane %v555, %v2836
      %2839 = vbcast.lane.b32.xlu0 %v2837, 256
      %v2840 = vpop.permute.xlu0 %2839
      %v2841 = vlaneseq
      %v2842 = vshrl.u32 %v2841, 7
      %v2843 = vsub.s32 2, %v2842
      %v2844 = vrot.slane %v555, %v2843
      %2846 = vbcast.lane.b32.xlu0 %v2844, 256
      %v2847 = vpop.permute.xlu0 %2846
      %v2848 = vlaneseq
      %v2849 = vshrl.u32 %v2848, 7
      %v2850 = vsub.s32 3, %v2849
      %v2851 = vrot.slane %v555, %v2850
      %2853 = vbcast.lane.b32.xlu0 %v2851, 256
      %v2854 = vpop.permute.xlu0 %2853
      %v2855 = vlaneseq
      %v2856 = vshrl.u32 %v2855, 7
      %v2857 = vsub.s32 0, %v2856
      %v2858 = vrot.slane %v556, %v2857
      %2860 = vbcast.lane.b32.xlu0 %v2858, 256
      %v2861 = vpop.permute.xlu0 %2860
      %v2862 = vlaneseq
      %v2863 = vshrl.u32 %v2862, 7
      %v2864 = vsub.s32 1, %v2863
      %v2865 = vrot.slane %v556, %v2864
      %2867 = vbcast.lane.b32.xlu0 %v2865, 256
      %v2868 = vpop.permute.xlu0 %2867
      %v2869 = vlaneseq
      %v2870 = vshrl.u32 %v2869, 7
      %v2871 = vsub.s32 2, %v2870
      %v2872 = vrot.slane %v556, %v2871
      %2874 = vbcast.lane.b32.xlu0 %v2872, 256
      %v2875 = vpop.permute.xlu0 %2874
      %v2876 = vlaneseq
      %v2877 = vshrl.u32 %v2876, 7
      %v2878 = vsub.s32 3, %v2877
      %v2879 = vrot.slane %v556, %v2878
      %2881 = vbcast.lane.b32.xlu0 %v2879, 256
      %v2882 = vpop.permute.xlu0 %2881
      %v2883 = vlaneseq
      %v2884 = vshrl.u32 %v2883, 7
      %v2885 = vsub.s32 0, %v2884
      %v2886 = vrot.slane %v557, %v2885
      %2888 = vbcast.lane.b32.xlu0 %v2886, 256
      %v2889 = vpop.permute.xlu0 %2888
      %v2890 = vlaneseq
      %v2891 = vshrl.u32 %v2890, 7
      %v2892 = vsub.s32 1, %v2891
      %v2893 = vrot.slane %v557, %v2892
      %2895 = vbcast.lane.b32.xlu0 %v2893, 256
      %v2896 = vpop.permute.xlu0 %2895
      %v2897 = vlaneseq
      %v2898 = vshrl.u32 %v2897, 7
      %v2899 = vsub.s32 2, %v2898
      %v2900 = vrot.slane %v557, %v2899
      %2902 = vbcast.lane.b32.xlu0 %v2900, 256
      %v2903 = vpop.permute.xlu0 %2902
      %v2904 = vlaneseq
      %v2905 = vshrl.u32 %v2904, 7
      %v2906 = vsub.s32 3, %v2905
      %v2907 = vrot.slane %v557, %v2906
      %2909 = vbcast.lane.b32.xlu0 %v2907, 256
      %v2910 = vpop.permute.xlu0 %2909
      %v2911 = vlaneseq
      %v2912 = vshrl.u32 %v2911, 7
      %v2913 = vsub.s32 0, %v2912
      %v2914 = vrot.slane %v558, %v2913
      %2916 = vbcast.lane.b32.xlu0 %v2914, 256
      %v2917 = vpop.permute.xlu0 %2916
      %v2918 = vlaneseq
      %v2919 = vshrl.u32 %v2918, 7
      %v2920 = vsub.s32 1, %v2919
      %v2921 = vrot.slane %v558, %v2920
      %2923 = vbcast.lane.b32.xlu0 %v2921, 256
      %v2924 = vpop.permute.xlu0 %2923
      %v2925 = vlaneseq
      %v2926 = vshrl.u32 %v2925, 7
      %v2927 = vsub.s32 2, %v2926
      %v2928 = vrot.slane %v558, %v2927
      %2930 = vbcast.lane.b32.xlu0 %v2928, 256
      %v2931 = vpop.permute.xlu0 %2930
      %v2932 = vlaneseq
      %v2933 = vshrl.u32 %v2932, 7
      %v2934 = vsub.s32 3, %v2933
      %v2935 = vrot.slane %v558, %v2934
      %2937 = vbcast.lane.b32.xlu0 %v2935, 256
      %v2938 = vpop.permute.xlu0 %2937
      %v2939 = vmul.f32 %v2833, %v2819
      %v2940 = vmul.f32 %v2840, %v2819
      %v2941 = vmul.f32 %v2847, %v2819
      %v2942 = vmul.f32 %v2854, %v2819
      %v2943 = vmul.f32 %v2861, %v2823
      %v2944 = vmul.f32 %v2868, %v2823
      %v2945 = vmul.f32 %v2875, %v2823
      %v2946 = vmul.f32 %v2882, %v2823
      %v2947 = vmul.f32 %v2889, %v2820
      %v2948 = vmul.f32 %v2896, %v2820
      %v2949 = vmul.f32 %v2903, %v2820
      %v2950 = vmul.f32 %v2910, %v2820
      %v2951 = vmul.f32 %v2917, %v2824
      %v2952 = vmul.f32 %v2924, %v2824
      %v2953 = vmul.f32 %v2931, %v2824
      %v2954 = vmul.f32 %v2938, %v2824
      %v2955 = vsel %vm433, %v2939, 0.0
      %v2956 = vrot.slane %v2955, 4
      %v2957 = vadd.f32 %v2955, %v2956
      %v2958 = vrot.slane %v2957, 2
      %v2959 = vadd.f32 %v2957, %v2958
      %v2960 = vrot.slane %v2959, 1
      %v2961 = vadd.f32 %v2959, %v2960
      %v2962 = vsel %vm433, %v2940, 0.0
      %v2963 = vrot.slane %v2962, 4
      %v2964 = vadd.f32 %v2962, %v2963
      %v2965 = vrot.slane %v2964, 2
      %v2966 = vadd.f32 %v2964, %v2965
      %v2967 = vrot.slane %v2966, 1
      %v2968 = vadd.f32 %v2966, %v2967
      %v2969 = vsel %vm433, %v2941, 0.0
      %v2970 = vrot.slane %v2969, 4
      %v2971 = vadd.f32 %v2969, %v2970
      %v2972 = vrot.slane %v2971, 2
      %v2973 = vadd.f32 %v2971, %v2972
      %v2974 = vrot.slane %v2973, 1
      %v2975 = vadd.f32 %v2973, %v2974
      %v2976 = vsel %vm433, %v2942, 0.0
      %v2977 = vrot.slane %v2976, 4
      %v2978 = vadd.f32 %v2976, %v2977
      %v2979 = vrot.slane %v2978, 2
      %v2980 = vadd.f32 %v2978, %v2979
      %v2981 = vrot.slane %v2980, 1
      %v2982 = vadd.f32 %v2980, %v2981
      %v2983 = vsel %vm433, %v2943, 0.0
      %v2984 = vrot.slane %v2983, 4
      %v2985 = vadd.f32 %v2983, %v2984
      %v2986 = vrot.slane %v2985, 2
      %v2987 = vadd.f32 %v2985, %v2986
      %v2988 = vrot.slane %v2987, 1
      %v2989 = vadd.f32 %v2987, %v2988
      %v2990 = vsel %vm433, %v2944, 0.0
      %v2991 = vrot.slane %v2990, 4
      %v2992 = vadd.f32 %v2990, %v2991
      %v2993 = vrot.slane %v2992, 2
      %v2994 = vadd.f32 %v2992, %v2993
      %v2995 = vrot.slane %v2994, 1
      %v2996 = vadd.f32 %v2994, %v2995
      %v2997 = vsel %vm433, %v2945, 0.0
      %v2998 = vrot.slane %v2997, 4
      %v2999 = vadd.f32 %v2997, %v2998
      %v3000 = vrot.slane %v2999, 2
      %v3001 = vadd.f32 %v2999, %v3000
      %v3002 = vrot.slane %v3001, 1
      %v3003 = vadd.f32 %v3001, %v3002
      %v3004 = vsel %vm433, %v2946, 0.0
      %v3005 = vrot.slane %v3004, 4
      %v3006 = vadd.f32 %v3004, %v3005
      %v3007 = vrot.slane %v3006, 2
      %v3008 = vadd.f32 %v3006, %v3007
      %v3009 = vrot.slane %v3008, 1
      %v3010 = vadd.f32 %v3008, %v3009
      %v3011 = vsel %vm433, %v2947, 0.0
      %v3012 = vrot.slane %v3011, 4
      %v3013 = vadd.f32 %v3011, %v3012
      %v3014 = vrot.slane %v3013, 2
      %v3015 = vadd.f32 %v3013, %v3014
      %v3016 = vrot.slane %v3015, 1
      %v3017 = vadd.f32 %v3015, %v3016
      %v3018 = vsel %vm433, %v2948, 0.0
      %v3019 = vrot.slane %v3018, 4
      %v3020 = vadd.f32 %v3018, %v3019
      %v3021 = vrot.slane %v3020, 2
      %v3022 = vadd.f32 %v3020, %v3021
      %v3023 = vrot.slane %v3022, 1
      %v3024 = vadd.f32 %v3022, %v3023
      %v3025 = vsel %vm433, %v2949, 0.0
      %v3026 = vrot.slane %v3025, 4
      %v3027 = vadd.f32 %v3025, %v3026
      %v3028 = vrot.slane %v3027, 2
      %v3029 = vadd.f32 %v3027, %v3028
      %v3030 = vrot.slane %v3029, 1
      %v3031 = vadd.f32 %v3029, %v3030
      %v3032 = vsel %vm433, %v2950, 0.0
      %v3033 = vrot.slane %v3032, 4
      %v3034 = vadd.f32 %v3032, %v3033
      %v3035 = vrot.slane %v3034, 2
      %v3036 = vadd.f32 %v3034, %v3035
      %v3037 = vrot.slane %v3036, 1
      %v3038 = vadd.f32 %v3036, %v3037
      %v3039 = vsel %vm433, %v2951, 0.0
      %v3040 = vrot.slane %v3039, 4
      %v3041 = vadd.f32 %v3039, %v3040
      %v3042 = vrot.slane %v3041, 2
      %v3043 = vadd.f32 %v3041, %v3042
      %v3044 = vrot.slane %v3043, 1
      %v3045 = vadd.f32 %v3043, %v3044
      %v3046 = vsel %vm433, %v2952, 0.0
      %v3047 = vrot.slane %v3046, 4
      %v3048 = vadd.f32 %v3046, %v3047
      %v3049 = vrot.slane %v3048, 2
      %v3050 = vadd.f32 %v3048, %v3049
      %v3051 = vrot.slane %v3050, 1
      %v3052 = vadd.f32 %v3050, %v3051
      %v3053 = vsel %vm433, %v2953, 0.0
      %v3054 = vrot.slane %v3053, 4
      %v3055 = vadd.f32 %v3053, %v3054
      %v3056 = vrot.slane %v3055, 2
      %v3057 = vadd.f32 %v3055, %v3056
      %v3058 = vrot.slane %v3057, 1
      %v3059 = vadd.f32 %v3057, %v3058
      %v3060 = vsel %vm433, %v2954, 0.0
      %v3061 = vrot.slane %v3060, 4
      %v3062 = vadd.f32 %v3060, %v3061
      %v3063 = vrot.slane %v3062, 2
      %v3064 = vadd.f32 %v3062, %v3063
      %v3065 = vrot.slane %v3064, 1
      %v3066 = vadd.f32 %v3064, %v3065
      %v3067 = vlaneseq
      %v3068 = vshrl.u32 %v3067, 7
      %v3069 = vsub.s32 7, %v3068
      %v3070 = vrot.slane %v570, %v3069
      %v3071 = vmul.f32 %v2961, %v3070
      %v3072 = vmul.f32 %v2968, %v3070
      %v3073 = vmul.f32 %v2975, %v3070
      %v3074 = vmul.f32 %v2982, %v3070
      %v3075 = vmul.f32 %v2989, %v3070
      %v3076 = vmul.f32 %v2996, %v3070
      %v3077 = vmul.f32 %v3003, %v3070
      %v3078 = vmul.f32 %v3010, %v3070
      %v3079 = vmul.f32 %v3017, %v3070
      %v3080 = vmul.f32 %v3024, %v3070
      %v3081 = vmul.f32 %v3031, %v3070
      %v3082 = vmul.f32 %v3038, %v3070
      %v3083 = vmul.f32 %v3045, %v3070
      %v3084 = vmul.f32 %v3052, %v3070
      %v3085 = vmul.f32 %v3059, %v3070
      %v3086 = vmul.f32 %v3066, %v3070
      %v3103 = vrot.slane %v3072, 7
      %v3104 = vsel %vm726, %v3103, %v3071
      %v3105 = vrot.slane %v3073, 6
      %v3106 = vsel %vm727, %v3105, %v3104
      %v3107 = vrot.slane %v3074, 5
      %v3108 = vsel %vm729, %v3107, %v3106
      %v3109 = vrot.slane %v3076, 7
      %v3110 = vsel %vm726, %v3109, %v3075
      %v3111 = vrot.slane %v3077, 6
      %v3112 = vsel %vm727, %v3111, %v3110
      %v3113 = vrot.slane %v3078, 5
      %v3114 = vsel %vm729, %v3113, %v3112
      %v3115 = vrot.slane %v3080, 7
      %v3116 = vsel %vm726, %v3115, %v3079
      %v3117 = vrot.slane %v3081, 6
      %v3118 = vsel %vm727, %v3117, %v3116
      %v3119 = vrot.slane %v3082, 5
      %v3120 = vsel %vm729, %v3119, %v3118
      %v3121 = vrot.slane %v3084, 7
      %v3122 = vsel %vm726, %v3121, %v3083
      %v3123 = vrot.slane %v3085, 6
      %v3124 = vsel %vm727, %v3123, %v3122
      %v3125 = vrot.slane %v3086, 5
      %v3126 = vsel %vm729, %v3125, %v3124
      %v3131 = vsel %vm433, %v3108, 0.0
      %3132 = vadd.xlane.f32.xlu0 %v3131
      %v3133 = vpop.xlane.xlu0 %3132
      %v3134 = vsel %vm433, %v3114, 0.0
      %3135 = vadd.xlane.f32.xlu0 %v3134
      %v3136 = vpop.xlane.xlu0 %3135
      %v3137 = vsel %vm433, %v3120, 0.0
      %3138 = vadd.xlane.f32.xlu0 %v3137
      %v3139 = vpop.xlane.xlu0 %3138
      %v3140 = vsel %vm433, %v3126, 0.0
      %3141 = vadd.xlane.f32.xlu0 %v3140
      %v3142 = vpop.xlane.xlu0 %3141
      %v3143 = vlaneseq
      %v3144 = vshrl.u32 %v3143, 7
      %v3145 = vsub.s32 0, %v3144
      %v3146 = vrot.slane %v571, %v3145
      %v3147 = vmul.f32 %v2819, %v3146
      %v3148 = vmul.f32 %v2823, %v3146
      %v3149 = vmul.f32 %v2820, %v3146
      %v3150 = vmul.f32 %v2824, %v3146
      %v3151 = vsel %vm433, %v3147, 0.0
      %3152 = vadd.xlane.f32.xlu0 %v3151
      %v3153 = vpop.xlane.xlu0 %3152
      %v3154 = vsel %vm433, %v3148, 0.0
      %3155 = vadd.xlane.f32.xlu0 %v3154
      %v3156 = vpop.xlane.xlu0 %3155
      %v3157 = vsel %vm433, %v3149, 0.0
      %3158 = vadd.xlane.f32.xlu0 %v3157
      %v3159 = vpop.xlane.xlu0 %3158
      %v3160 = vsel %vm433, %v3150, 0.0
      %3161 = vadd.xlane.f32.xlu0 %v3160
      %v3162 = vpop.xlane.xlu0 %3161
      %v3163 = vadd.f32 %v3133, %v3153
      %v3164 = vadd.f32 %v3136, %v3156
      %v3165 = vadd.f32 %v3139, %v3159
      %v3166 = vadd.f32 %v3142, %v3162
      %v3168 = vrot.slane %v571, 1
      %s3169 = vtos %v3168
      %v3170 = vstv %s3169
      %v3172 = vadd.f32 %v3163, %v3170
      %v3173 = vadd.f32 %v3164, %v3170
      %v3174 = vadd.f32 %v3165, %v3170
      %v3175 = vadd.f32 %v3166, %v3170
      %v3176 = vtanh.pop %v3172
      %v3177 = vtanh.pop %v3173
      %v3178 = vtanh.pop %v3174
      %v3179 = vtanh.pop %v3175
      %v3180 = vsel %vm614, %v2819, %v3176
      %v3181 = vsel %vm614, %v2823, %v3177
      %v3182 = vsel %vm614, %v2820, %v3178
      %v3183 = vsel %vm614, %v2824, %v3179
      %vm3184 = vcmask 400384
      %v3185 = vsel %vm3184, %v3180, 0.0
      %v3186 = vsel %vm3184, %v3181, 0.0
      %v3187 = vsel %vm3184, %v3182, 0.0
      %v3188 = vsel %vm3184, %v3183, 0.0
      %3189 = vst [vmem:[%s398] sm:$0xf] %v3185
      %3190 = vst [vmem:[%s398 + $0x4] sm:$0xf] %v3186
      %3191 = vst [vmem:[%s398 + $0x8] sm:$0xf] %v3187
      %3192 = vst [vmem:[%s398 + $0xc] sm:$0xf] %v3188
      %p3193 = scmp.lt.s32.totalorder %s18, 2
      %s3194 = scalar_select %p3193, %s18, 2
      %s3195 = smul.addr %s3194, 4
      %s3196 = smul.addr %s3195, 4
      %s3197 = scalar_lea.vmem %s7, %s3196
      // Predicated region
      $region49: #{multi_graph_convolution.5} parent=47 // pred_check
        %p3198 = pneg %p218
      $region50: #{multi_graph_convolution.5} parent=47 // pred_check_branch
        %3200 = sbr.rel (%p3198) target = $region52
      $region51: #{multi_graph_convolution.5} parent=47 // pred_region
        _
      $region52: #{multi_graph_convolution.5} parent=47 // pred_fallthru
        _
    $region48: #{multi_graph_convolution.5} parent=5 // pred_fallthru
      _
    %p3201 = scmp.le.s32.totalorder 2, %s13
    // Predicated region
    $region53: #{multi_graph_convolution.5} parent=5 // pred_check
      %p3202 = pneg %p3201
    $region54: #{multi_graph_convolution.5} parent=5 // pred_check_branch
      %3204 = sbr.rel (%p3202) target = $region56
    $region55: #{multi_graph_convolution.5} parent=5 // pred_region
      %s3205 = ssub.s32 %s13, 2
      // Predicated region
      $region57: #{multi_graph_convolution.5} parent=55 // pred_check
        %p3206 = pneg %p224
      $region58: #{multi_graph_convolution.5} parent=55 // pred_check_branch
        %3208 = sbr.rel (%p3206) target = $region60
      $region59: #{multi_graph_convolution.5} parent=55 // pred_region
        %p3209 = scmp.lt.s32.totalorder %s19, 2
        %s3210 = scalar_select %p3209, %s19, 2
        %s3211 = smul.addr %s3210, 4
        %s3212 = smul.addr %s3211, 4
        %s3213 = scalar_lea.vmem %s7, %s3212
      $region60: #{multi_graph_convolution.5} parent=55 // pred_fallthru
        _
    $region56: #{multi_graph_convolution.5} parent=5 // pred_fallthru
      _
  $region6: #{multi_graph_convolution.5} parent=0 // loop_footer
    %s17 = sadd.s32 1, %s13
  $region7: #{multi_graph_convolution.5} parent=0 // loop_footer_branch
    %12 = sbr.rel target = $region3
  $region8: #{multi_graph_convolution.5} parent=0 // loop_exit
    _

// kernel: multi_graph_convolution.6
$region0: #{multi_graph_convolution.6}
  #allocation0 [shape = 'u32[]', space=smem, size = 0x4, offset = 0x4, fixed_abs, tag = 'smem constant byte address 0x4 - core index']
  #allocation1 [shape = 'u32[144,128]{1,0:T(1,128)}', space=vmem, size = 0x12000, scoped, tag = 'internal scratch']
  %s0 = inlined_call_operand.vmem [shape: f32[3,4,2,48], index: 0, kind: input, shape index: {}]
  %s1 = inlined_call_operand.vmem [shape: f32[3,4,2,1], index: 1, kind: input, shape index: {}]
  %s2 = inlined_call_operand.vmem [shape: f32[3,21,48], index: 2, kind: input, shape index: {}]
  %s3 = inlined_call_operand.vmem [shape: bf16[3,48,64], index: 3, kind: input, shape index: {}]
  %s4 = inlined_call_operand.vmem [shape: bf16[3,64,32], index: 4, kind: input, shape index: {}]
  %s5 = inlined_call_operand.vmem [shape: f32[3,6,64], index: 5, kind: input, shape index: {}]
  %s6 = inlined_call_operand.vmem [shape: f32[3,4,128], index: 6, kind: output, shape index: {}]
  %s7 = sld [smem:[#allocation0]]
  $region57: #{multi_graph_convolution.6} parent=0
    _
  %s9 = ssub.s32 1, %s7
  %s10 = scalar_select 0, %s9, %s7
  loop: start=0, step=1, limit=5
  $region2: #{multi_graph_convolution.6} parent=0 // loop_pre_header
    _
  $region3: #{multi_graph_convolution.6} parent=0 // loop_header
    %s12 = sphi 0, %s16
    %p13 = scmp.ge.s32.totalorder %s12, 5
    %s22 = sphi 0, %s24
    %s25 = sphi 0, %s22
    %s26 = sphi 0, %s25
    %s42 = sphi 0, %s26
    %s48 = sphi 0, %s50
    %s51 = sphi 0, %s48
    %s52 = sphi 0, %s51
    %s68 = sphi 0, %s52
    %s74 = sphi 0, %s76
    %s77 = sphi 0, %s74
    %s78 = sphi 0, %s77
    %s94 = sphi 0, %s78
    %s100 = sphi 0, %s102
    %s103 = sphi 0, %s100
    %s104 = sphi 0, %s103
    %s120 = sphi 0, %s104
    %s126 = sphi 0, %s128
    %s129 = sphi 0, %s126
    %s130 = sphi 0, %s129
    %s146 = sphi 0, %s130
    %s152 = sphi 0, %s154
    %s155 = sphi 0, %s152
    %s156 = sphi 0, %s155
    %s172 = sphi 0, %s156
    %s178 = sphi 0, %s180
    %s181 = sphi 0, %s178
    %s182 = sphi 0, %s181
    %s198 = sphi 0, %s182
  $region4: #{multi_graph_convolution.6} parent=0 // loop_header_branch
    %15 = sbr.rel (%p13) target = $region8
  $region5: #{multi_graph_convolution.6} parent=0 // loop_body
    %s17 = ssub.s32 %s12, 1
    %s18 = ssub.s32 %s12, 2
    %s19 = sadd.s32 %s12, 1
    %s20 = ssub.s32 %s12, %s19
    %p21 = scmp.eq.s32.totalorder %s20, 0
    %s23 = sadd.s32 %s22, 1
    %s24 = scalar_select %p21, %s22, %s23
    %p27 = pneg %p21
    %p28 = scmp.eq.s32.totalorder %s12, 2
    %p29 = por %p27, %p28
    %p30 = scmp.ne.s32.totalorder %s22, %s25
    %p31 = scmp.eq.s32.totalorder %s12, 0
    %p32 = por %p30, %p31
    %p33 = scmp.ne.s32.totalorder %s22, %s25
    %p34 = scmp.eq.s32.totalorder %s17, 2
    %p35 = por %p33, %p34
    %p36 = scmp.ne.s32.totalorder %s25, %s26
    %p37 = scmp.eq.s32.totalorder %s17, 0
    %p38 = por %p36, %p37
    %p39 = scmp.ne.s32.totalorder %s25, %s26
    %p40 = scmp.eq.s32.totalorder %s18, 2
    %p41 = por %p39, %p40
    %p43 = scmp.ne.s32.totalorder %s26, %s42
    %p44 = scmp.eq.s32.totalorder %s18, 0
    %p45 = por %p43, %p44
    %s46 = ssub.s32 %s12, %s19
    %p47 = scmp.eq.s32.totalorder %s46, 0
    %s49 = sadd.s32 %s48, 1
    %s50 = scalar_select %p47, %s48, %s49
    %p53 = pneg %p47
    %p54 = scmp.eq.s32.totalorder %s12, 2
    %p55 = por %p53, %p54
    %p56 = scmp.ne.s32.totalorder %s48, %s51
    %p57 = scmp.eq.s32.totalorder %s12, 0
    %p58 = por %p56, %p57
    %p59 = scmp.ne.s32.totalorder %s48, %s51
    %p60 = scmp.eq.s32.totalorder %s17, 2
    %p61 = por %p59, %p60
    %p62 = scmp.ne.s32.totalorder %s51, %s52
    %p63 = scmp.eq.s32.totalorder %s17, 0
    %p64 = por %p62, %p63
    %p65 = scmp.ne.s32.totalorder %s51, %s52
    %p66 = scmp.eq.s32.totalorder %s18, 2
    %p67 = por %p65, %p66
    %p69 = scmp.ne.s32.totalorder %s52, %s68
    %p70 = scmp.eq.s32.totalorder %s18, 0
    %p71 = por %p69, %p70
    %s72 = ssub.s32 %s12, %s19
    %p73 = scmp.eq.s32.totalorder %s72, 0
    %s75 = sadd.s32 %s74, 1
    %s76 = scalar_select %p73, %s74, %s75
    %p79 = pneg %p73
    %p80 = scmp.eq.s32.totalorder %s12, 2
    %p81 = por %p79, %p80
    %p82 = scmp.ne.s32.totalorder %s74, %s77
    %p83 = scmp.eq.s32.totalorder %s12, 0
    %p84 = por %p82, %p83
    %p85 = scmp.ne.s32.totalorder %s74, %s77
    %p86 = scmp.eq.s32.totalorder %s17, 2
    %p87 = por %p85, %p86
    %p88 = scmp.ne.s32.totalorder %s77, %s78
    %p89 = scmp.eq.s32.totalorder %s17, 0
    %p90 = por %p88, %p89
    %p91 = scmp.ne.s32.totalorder %s77, %s78
    %p92 = scmp.eq.s32.totalorder %s18, 2
    %p93 = por %p91, %p92
    %p95 = scmp.ne.s32.totalorder %s78, %s94
    %p96 = scmp.eq.s32.totalorder %s18, 0
    %p97 = por %p95, %p96
    %s98 = ssub.s32 %s12, %s19
    %p99 = scmp.eq.s32.totalorder %s98, 0
    %s101 = sadd.s32 %s100, 1
    %s102 = scalar_select %p99, %s100, %s101
    %p105 = pneg %p99
    %p106 = scmp.eq.s32.totalorder %s12, 2
    %p107 = por %p105, %p106
    %p108 = scmp.ne.s32.totalorder %s100, %s103
    %p109 = scmp.eq.s32.totalorder %s12, 0
    %p110 = por %p108, %p109
    %p111 = scmp.ne.s32.totalorder %s100, %s103
    %p112 = scmp.eq.s32.totalorder %s17, 2
    %p113 = por %p111, %p112
    %p114 = scmp.ne.s32.totalorder %s103, %s104
    %p115 = scmp.eq.s32.totalorder %s17, 0
    %p116 = por %p114, %p115
    %p117 = scmp.ne.s32.totalorder %s103, %s104
    %p118 = scmp.eq.s32.totalorder %s18, 2
    %p119 = por %p117, %p118
    %p121 = scmp.ne.s32.totalorder %s104, %s120
    %p122 = scmp.eq.s32.totalorder %s18, 0
    %p123 = por %p121, %p122
    %s124 = ssub.s32 %s12, %s19
    %p125 = scmp.eq.s32.totalorder %s124, 0
    %s127 = sadd.s32 %s126, 1
    %s128 = scalar_select %p125, %s126, %s127
    %p131 = pneg %p125
    %p132 = scmp.eq.s32.totalorder %s12, 2
    %p133 = por %p131, %p132
    %p134 = scmp.ne.s32.totalorder %s126, %s129
    %p135 = scmp.eq.s32.totalorder %s12, 0
    %p136 = por %p134, %p135
    %p137 = scmp.ne.s32.totalorder %s126, %s129
    %p138 = scmp.eq.s32.totalorder %s17, 2
    %p139 = por %p137, %p138
    %p140 = scmp.ne.s32.totalorder %s129, %s130
    %p141 = scmp.eq.s32.totalorder %s17, 0
    %p142 = por %p140, %p141
    %p143 = scmp.ne.s32.totalorder %s129, %s130
    %p144 = scmp.eq.s32.totalorder %s18, 2
    %p145 = por %p143, %p144
    %p147 = scmp.ne.s32.totalorder %s130, %s146
    %p148 = scmp.eq.s32.totalorder %s18, 0
    %p149 = por %p147, %p148
    %s150 = ssub.s32 %s12, %s19
    %p151 = scmp.eq.s32.totalorder %s150, 0
    %s153 = sadd.s32 %s152, 1
    %s154 = scalar_select %p151, %s152, %s153
    %p157 = pneg %p151
    %p158 = scmp.eq.s32.totalorder %s12, 2
    %p159 = por %p157, %p158
    %p160 = scmp.ne.s32.totalorder %s152, %s155
    %p161 = scmp.eq.s32.totalorder %s12, 0
    %p162 = por %p160, %p161
    %p163 = scmp.ne.s32.totalorder %s152, %s155
    %p164 = scmp.eq.s32.totalorder %s17, 2
    %p165 = por %p163, %p164
    %p166 = scmp.ne.s32.totalorder %s155, %s156
    %p167 = scmp.eq.s32.totalorder %s17, 0
    %p168 = por %p166, %p167
    %p169 = scmp.ne.s32.totalorder %s155, %s156
    %p170 = scmp.eq.s32.totalorder %s18, 2
    %p171 = por %p169, %p170
    %p173 = scmp.ne.s32.totalorder %s156, %s172
    %p174 = scmp.eq.s32.totalorder %s18, 0
    %p175 = por %p173, %p174
    %s176 = ssub.s32 %s12, %s19
    %p177 = scmp.eq.s32.totalorder %s176, 0
    %s179 = sadd.s32 %s178, 1
    %s180 = scalar_select %p177, %s178, %s179
    %p183 = pneg %p177
    %p184 = scmp.eq.s32.totalorder %s12, 2
    %p185 = por %p183, %p184
    %p186 = scmp.ne.s32.totalorder %s178, %s181
    %p187 = scmp.eq.s32.totalorder %s12, 0
    %p188 = por %p186, %p187
    %p189 = scmp.ne.s32.totalorder %s178, %s181
    %p190 = scmp.eq.s32.totalorder %s17, 2
    %p191 = por %p189, %p190
    %p192 = scmp.ne.s32.totalorder %s181, %s182
    %p193 = scmp.eq.s32.totalorder %s17, 0
    %p194 = por %p192, %p193
    %p195 = scmp.ne.s32.totalorder %s181, %s182
    %p196 = scmp.eq.s32.totalorder %s18, 2
    %p197 = por %p195, %p196
    %p199 = scmp.ne.s32.totalorder %s182, %s198
    %p200 = scmp.eq.s32.totalorder %s18, 0
    %p201 = por %p199, %p200
    %p202 = scmp.le.s32.totalorder 1, %s12
    %p203 = scmp.lt.s32.totalorder %s12, 4
    %p204 = pnand %p202, %p203
    %p205 = pneg %p204
    // Predicated region
    $region9: #{multi_graph_convolution.6} parent=5 // pred_check
      _
    $region10: #{multi_graph_convolution.6} parent=5 // pred_check_branch
      %207 = sbr.rel (%p204) target = $region12
    $region11: #{multi_graph_convolution.6} parent=5 // pred_region
      %s208 = ssub.s32 %s12, 1
    $region12: #{multi_graph_convolution.6} parent=5 // pred_fallthru
      _
    %p209 = scmp.lt.s32.totalorder %s12, 3
    // Predicated region
    $region13: #{multi_graph_convolution.6} parent=5 // pred_check
      %p210 = pneg %p209
    $region14: #{multi_graph_convolution.6} parent=5 // pred_check_branch
      %212 = sbr.rel (%p210) target = $region16
    $region15: #{multi_graph_convolution.6} parent=5 // pred_region
      // Predicated region
      $region17: #{multi_graph_convolution.6} parent=15 // pred_check
        %p213 = pneg %p32
      $region18: #{multi_graph_convolution.6} parent=15 // pred_check_branch
        %215 = sbr.rel (%p213) target = $region20
      $region19: #{multi_graph_convolution.6} parent=15 // pred_region
        %p216 = scmp.lt.s32.totalorder %s12, 2
        %s217 = scalar_select %p216, %s12, 2
        %s218 = smul.addr %s217, 4
        %s219 = smul.addr %s218, 2
        %s220 = scalar_lea.vmem %s0, %s219
      $region20: #{multi_graph_convolution.6} parent=15 // pred_fallthru
        _
      // Predicated region
      $region21: #{multi_graph_convolution.6} parent=15 // pred_check
        %p221 = pneg %p58
      $region22: #{multi_graph_convolution.6} parent=15 // pred_check_branch
        %223 = sbr.rel (%p221) target = $region24
      $region23: #{multi_graph_convolution.6} parent=15 // pred_region
        %p224 = scmp.lt.s32.totalorder %s12, 2
        %s225 = scalar_select %p224, %s12, 2
        %s226 = smul.addr %s225, 4
        %s227 = smul.addr %s226, 2
        %s228 = scalar_lea.vmem %s1, %s227
      $region24: #{multi_graph_convolution.6} parent=15 // pred_fallthru
        _
      // Predicated region
      $region25: #{multi_graph_convolution.6} parent=15 // pred_check
        %p229 = pneg %p84
      $region26: #{multi_graph_convolution.6} parent=15 // pred_check_branch
        %231 = sbr.rel (%p229) target = $region28
      $region27: #{multi_graph_convolution.6} parent=15 // pred_region
        %p232 = scmp.lt.s32.totalorder %s12, 2
        %s233 = scalar_select %p232, %s12, 2
        %s234 = smul.addr %s233, 3
        %s235 = smul.addr %s234, 8
        %s236 = scalar_lea.vmem %s2, %s235
      $region28: #{multi_graph_convolution.6} parent=15 // pred_fallthru
        _
      // Predicated region
      $region29: #{multi_graph_convolution.6} parent=15 // pred_check
        %p237 = pneg %p110
      $region30: #{multi_graph_convolution.6} parent=15 // pred_check_branch
        %239 = sbr.rel (%p237) target = $region32
      $region31: #{multi_graph_convolution.6} parent=15 // pred_region
        %p240 = scmp.lt.s32.totalorder %s12, 2
        %s241 = scalar_select %p240, %s12, 2
        %s242 = smul.addr %s241, 6
        %s243 = smul.addr %s242, 4
        %s244 = scalar_lea.vmem %s3, %s243
      $region32: #{multi_graph_convolution.6} parent=15 // pred_fallthru
        _
      // Predicated region
      $region33: #{multi_graph_convolution.6} parent=15 // pred_check
        %p245 = pneg %p136
      $region34: #{multi_graph_convolution.6} parent=15 // pred_check_branch
        %247 = sbr.rel (%p245) target = $region36
      $region35: #{multi_graph_convolution.6} parent=15 // pred_region
        %p248 = scmp.lt.s32.totalorder %s12, 2
        %s249 = scalar_select %p248, %s12, 2
        %s250 = smul.addr %s249, 8
        %s251 = smul.addr %s250, 4
        %s252 = scalar_lea.vmem %s4, %s251
      $region36: #{multi_graph_convolution.6} parent=15 // pred_fallthru
        _
      // Predicated region
      $region37: #{multi_graph_convolution.6} parent=15 // pred_check
        %p253 = pneg %p162
      $region38: #{multi_graph_convolution.6} parent=15 // pred_check_branch
        %255 = sbr.rel (%p253) target = $region40
      $region39: #{multi_graph_convolution.6} parent=15 // pred_region
        %p256 = scmp.lt.s32.totalorder %s12, 2
        %s257 = scalar_select %p256, %s12, 2
        %s258 = smul.addr %s257, 8
        %s259 = scalar_lea.vmem %s5, %s258
      $region40: #{multi_graph_convolution.6} parent=15 // pred_fallthru
        _
    $region16: #{multi_graph_convolution.6} parent=5 // pred_fallthru
      _
    %p260 = scmp.le.s32.totalorder 1, %s12
    %p261 = scmp.lt.s32.totalorder %s12, 4
    %p262 = pnand %p260, %p261
    %p263 = pneg %p262
    // Predicated region
    $region41: #{multi_graph_convolution.6} parent=5 // pred_check
      _
    $region42: #{multi_graph_convolution.6} parent=5 // pred_check_branch
      %265 = sbr.rel (%p262) target = $region44
    $region43: #{multi_graph_convolution.6} parent=5 // pred_region
      %s266 = ssub.s32 %s12, 1
      %p267 = scmp.lt.s32.totalorder %s17, 2
      %s268 = scalar_select %p267, %s17, 2
      %s269 = smul.addr %s268, 4
      %s270 = smul.addr %s269, 2
      %s271 = scalar_lea.vmem %s0, %s270
      %p272 = pneg %p38
      %p273 = pneg %p35
      %p274 = scmp.lt.s32.totalorder %s17, 2
      %s275 = scalar_select %p274, %s17, 2
      %s276 = smul.addr %s275, 4
      %s277 = smul.addr %s276, 2
      %s278 = scalar_lea.vmem %s1, %s277
      %p279 = pneg %p64
      %p280 = pneg %p61
      %p281 = scmp.lt.s32.totalorder %s17, 2
      %s282 = scalar_select %p281, %s17, 2
      %s283 = smul.addr %s282, 3
      %s284 = smul.addr %s283, 8
      %s285 = scalar_lea.vmem %s2, %s284
      %p286 = pneg %p90
      %p287 = pneg %p87
      %p288 = scmp.lt.s32.totalorder %s17, 2
      %s289 = scalar_select %p288, %s17, 2
      %s290 = smul.addr %s289, 6
      %s291 = smul.addr %s290, 4
      %s292 = scalar_lea.vmem %s3, %s291
      %p293 = pneg %p116
      %p294 = pneg %p113
      %p295 = scmp.lt.s32.totalorder %s17, 2
      %s296 = scalar_select %p295, %s17, 2
      %s297 = smul.addr %s296, 8
      %s298 = smul.addr %s297, 4
      %s299 = scalar_lea.vmem %s4, %s298
      %p300 = pneg %p142
      %p301 = pneg %p139
      %p302 = scmp.lt.s32.totalorder %s17, 2
      %s303 = scalar_select %p302, %s17, 2
      %s304 = smul.addr %s303, 8
      %s305 = scalar_lea.vmem %s5, %s304
      %p306 = pneg %p168
      %p307 = pneg %p165
      %p308 = pneg %p194
      %p309 = pneg %p191
      %p310 = scmp.lt.s32.totalorder %s17, 2
      %s311 = scalar_select %p310, %s17, 2
      %s312 = smul.addr %s311, 4
      %s313 = scalar_lea.vmem %s6, %s312
      %p314 = scmp.lt.s32.totalorder %s17, 2
      %s315 = scalar_select %p314, %s17, 2
      %s316 = smul.addr %s315, 4
      %s317 = smul.addr %s316, 2
      %s318 = scalar_lea.vmem %s0, %s317
      %p319 = scmp.lt.s32.totalorder %s17, 2
      %s320 = scalar_select %p319, %s17, 2
      %s321 = smul.addr %s320, 4
      %s322 = smul.addr %s321, 2
      %s323 = scalar_lea.vmem %s1, %s322
      %p324 = scmp.lt.s32.totalorder %s17, 2
      %s325 = scalar_select %p324, %s17, 2
      %s326 = smul.addr %s325, 3
      %s327 = smul.addr %s326, 8
      %s328 = scalar_lea.vmem %s2, %s327
      %p329 = scmp.lt.s32.totalorder %s17, 2
      %s330 = scalar_select %p329, %s17, 2
      %s331 = smul.addr %s330, 6
      %s332 = smul.addr %s331, 4
      %s333 = scalar_lea.vmem %s3, %s332
      %p334 = scmp.lt.s32.totalorder %s17, 2
      %s335 = scalar_select %p334, %s17, 2
      %s336 = smul.addr %s335, 8
      %s337 = smul.addr %s336, 4
      %s338 = scalar_lea.vmem %s4, %s337
      %p339 = scmp.lt.s32.totalorder %s17, 2
      %s340 = scalar_select %p339, %s17, 2
      %s341 = smul.addr %s340, 8
      %s342 = scalar_lea.vmem %s5, %s341
      %p343 = scmp.lt.s32.totalorder %s17, 2
      %s344 = scalar_select %p343, %s17, 2
      %s345 = smul.addr %s344, 4
      %s346 = scalar_lea.vmem %s6, %s345
      %v348 = vld [vmem:[%s328 + $0x10] sm:$0x1f]
      %v349 = vld [vmem:[%s318] sm:$0x3]
      %v350 = vld [vmem:[%s318 + $0x2] sm:$0x3]
      %v351 = vld [vmem:[%s318 + $0x4] sm:$0x3]
      %v352 = vld [vmem:[%s318 + $0x6] sm:$0x3]
      %v353 = vld [vmem:[%s323] sm:$0x3]
      %v354 = vld [vmem:[%s323 + $0x2] sm:$0x3]
      %v355 = vld [vmem:[%s323 + $0x4] sm:$0x3]
      %v356 = vld [vmem:[%s323 + $0x6] sm:$0x3]
      %358 = vset.pattern.permute.xlu0 0
      %359 = vperm.xlu0 %358, %v353
      %v360 = vpop.permute.xlu0 %359
      %363 = vset.pattern.permute.xlu0 0
      %364 = vperm.xlu0 %363, %v354
      %v365 = vpop.permute.xlu0 %364
      %368 = vset.pattern.permute.xlu0 0
      %369 = vperm.xlu0 %368, %v355
      %v370 = vpop.permute.xlu0 %369
      %373 = vset.pattern.permute.xlu0 0
      %374 = vperm.xlu0 %373, %v356
      %v375 = vpop.permute.xlu0 %374
      %v377 = vmul.f32 %v349, %v360
      %v378 = vmul.f32 %v350, %v365
      %v379 = vmul.f32 %v351, %v370
      %v380 = vmul.f32 %v352, %v375
      %vm381 = vcmask 386048
      %v382 = vsel %vm381, %v377, 0.0
      %v383 = vrot.slane %v382, 4
      %v384 = vadd.f32 %v382, %v383
      %v385 = vrot.slane %v384, 2
      %v386 = vadd.f32 %v384, %v385
      %v387 = vrot.slane %v386, 1
      %v388 = vadd.f32 %v386, %v387
      %v389 = vsel %vm381, %v378, 0.0
      %v390 = vrot.slane %v389, 4
      %v391 = vadd.f32 %v389, %v390
      %v392 = vrot.slane %v391, 2
      %v393 = vadd.f32 %v391, %v392
      %v394 = vrot.slane %v393, 1
      %v395 = vadd.f32 %v393, %v394
      %v396 = vsel %vm381, %v379, 0.0
      %v397 = vrot.slane %v396, 4
      %v398 = vadd.f32 %v396, %v397
      %v399 = vrot.slane %v398, 2
      %v400 = vadd.f32 %v398, %v399
      %v401 = vrot.slane %v400, 1
      %v402 = vadd.f32 %v400, %v401
      %v403 = vsel %vm381, %v380, 0.0
      %v404 = vrot.slane %v403, 4
      %v405 = vadd.f32 %v403, %v404
      %v406 = vrot.slane %v405, 2
      %v407 = vadd.f32 %v405, %v406
      %v408 = vrot.slane %v407, 1
      %v409 = vadd.f32 %v407, %v408
      %v410 = vrcp.pop 2.0
      %v411 = vmul.f32 %v388, %v410
      %v412 = vmul.f32 %v395, %v410
      %v413 = vmul.f32 %v402, %v410
      %v414 = vmul.f32 %v409, %v410
      %v415 = vmul.f32 %v411, %v348
      %v416 = vmul.f32 %v412, %v348
      %v417 = vmul.f32 %v413, %v348
      %v418 = vmul.f32 %v414, %v348
      %v419 = vlaneseq
      %v420 = vshrl.u32 %v419, 7
      %v421 = vsub.s32 4, %v420
      %v422 = vrot.slane %v415, %v421
      %v423 = vlaneseq
      %v424 = vshrl.u32 %v423, 7
      %v425 = vsub.s32 4, %v424
      %v426 = vrot.slane %v416, %v425
      %v427 = vlaneseq
      %v428 = vshrl.u32 %v427, 7
      %v429 = vsub.s32 4, %v428
      %v430 = vrot.slane %v417, %v429
      %v431 = vlaneseq
      %v432 = vshrl.u32 %v431, 7
      %v433 = vsub.s32 4, %v432
      %v434 = vrot.slane %v418, %v433
      %v435 = vsub.f32 %v377, %v422
      %v436 = vsub.f32 %v378, %v426
      %v437 = vsub.f32 %v379, %v430
      %v438 = vsub.f32 %v380, %v434
      %v439 = vmul.f32 %v435, %v435
      %v440 = vmul.f32 %v436, %v436
      %v441 = vmul.f32 %v437, %v437
      %v442 = vmul.f32 %v438, %v438
      %v443 = vsel %vm381, %v439, 0.0
      %v444 = vrot.slane %v443, 4
      %v445 = vadd.f32 %v443, %v444
      %v446 = vrot.slane %v445, 2
      %v447 = vadd.f32 %v445, %v446
      %v448 = vrot.slane %v447, 1
      %v449 = vadd.f32 %v447, %v448
      %v450 = vsel %vm381, %v440, 0.0
      %v451 = vrot.slane %v450, 4
      %v452 = vadd.f32 %v450, %v451
      %v453 = vrot.slane %v452, 2
      %v454 = vadd.f32 %v452, %v453
      %v455 = vrot.slane %v454, 1
      %v456 = vadd.f32 %v454, %v455
      %v457 = vsel %vm381, %v441, 0.0
      %v458 = vrot.slane %v457, 4
      %v459 = vadd.f32 %v457, %v458
      %v460 = vrot.slane %v459, 2
      %v461 = vadd.f32 %v459, %v460
      %v462 = vrot.slane %v461, 1
      %v463 = vadd.f32 %v461, %v462
      %v464 = vsel %vm381, %v442, 0.0
      %v465 = vrot.slane %v464, 4
      %v466 = vadd.f32 %v464, %v465
      %v467 = vrot.slane %v466, 2
      %v468 = vadd.f32 %v466, %v467
      %v469 = vrot.slane %v468, 1
      %v470 = vadd.f32 %v468, %v469
      %v471 = vmul.f32 %v449, %v410
      %v472 = vmul.f32 %v456, %v410
      %v473 = vmul.f32 %v463, %v410
      %v474 = vmul.f32 %v470, %v410
      %v475 = vlaneseq
      %v476 = vshrl.u32 %v475, 7
      %v477 = vsub.s32 2, %v476
      %v478 = vrot.slane %v348, %v477
      %v479 = vmul.f32 %v478, %v435
      %v480 = vmul.f32 %v478, %v436
      %v481 = vmul.f32 %v478, %v437
      %v482 = vmul.f32 %v478, %v438
      %v483 = vadd.f32 %v471, 1e-05
      %v484 = vadd.f32 %v472, 1e-05
      %v485 = vadd.f32 %v473, 1e-05
      %v486 = vadd.f32 %v474, 1e-05
      %v487 = vrsqrt.pop %v483
      %v488 = vrsqrt.pop %v484
      %v489 = vrsqrt.pop %v485
      %v490 = vrsqrt.pop %v486
      %v491 = vmul.f32 %v479, %v487
      %v492 = vmul.f32 %v480, %v488
      %v493 = vmul.f32 %v481, %v489
      %v494 = vmul.f32 %v482, %v490
      %v495 = vlaneseq
      %v496 = vshrl.u32 %v495, 7
      %v497 = vsub.s32 3, %v496
      %v498 = vrot.slane %v348, %v497
      %v499 = vadd.f32 %v491, %v498
      %v500 = vadd.f32 %v492, %v498
      %v501 = vadd.f32 %v493, %v498
      %v502 = vadd.f32 %v494, %v498
      %v503 = vsel %vm381, %v499, 0.0
      %v504 = vrot.slane %v503, 4
      %v505 = vadd.f32 %v503, %v504
      %v506 = vrot.slane %v505, 2
      %v507 = vadd.f32 %v505, %v506
      %v508 = vrot.slane %v507, 1
      %v509 = vadd.f32 %v507, %v508
      %v510 = vsel %vm381, %v500, 0.0
      %v511 = vrot.slane %v510, 4
      %v512 = vadd.f32 %v510, %v511
      %v513 = vrot.slane %v512, 2
      %v514 = vadd.f32 %v512, %v513
      %v515 = vrot.slane %v514, 1
      %v516 = vadd.f32 %v514, %v515
      %v517 = vsel %vm381, %v501, 0.0
      %v518 = vrot.slane %v517, 4
      %v519 = vadd.f32 %v517, %v518
      %v520 = vrot.slane %v519, 2
      %v521 = vadd.f32 %v519, %v520
      %v522 = vrot.slane %v521, 1
      %v523 = vadd.f32 %v521, %v522
      %v524 = vsel %vm381, %v502, 0.0
      %v525 = vrot.slane %v524, 4
      %v526 = vadd.f32 %v524, %v525
      %v527 = vrot.slane %v526, 2
      %v528 = vadd.f32 %v526, %v527
      %v529 = vrot.slane %v528, 1
      %v530 = vadd.f32 %v528, %v529
      %v531 = vmul.f32 %v509, %v410
      %v532 = vmul.f32 %v516, %v410
      %v533 = vmul.f32 %v523, %v410
      %v534 = vmul.f32 %v530, %v410
      %v535 = vld [vmem:[%s342] sm:$0x3f]
      %v536 = vpack.c.bf16 %v531, %v531
      %v537 = vpack.c.bf16 %v532, %v532
      %v538 = vpack.c.bf16 %v533, %v533
      %v539 = vpack.c.bf16 %v534, %v534
      %v540 = vld [vmem:[%s333] sm:$0xf]
      %v541 = vld [vmem:[%s333 + $0x4] sm:$0xf]
      %v542 = vld [vmem:[%s333 + $0x8] sm:$0xf]
      %v543 = vld [vmem:[%s333 + $0xc] sm:$0xf]
      %v544 = vld [vmem:[%s333 + $0x10] sm:$0xf]
      %v545 = vld [vmem:[%s333 + $0x14] sm:$0xf]
      %v546 = vlaneseq
      %v547 = vshrl.u32 %v546, 7
      %v548 = vsub.s32 0, %v547
      %v549 = vrot.slane %v535, %v548
      %v554 = vunpack.c.l.b16 %v536
      %v555 = vunpack.c.l.b16 %v537
      %v556 = vunpack.c.l.b16 %v538
      %v557 = vunpack.c.l.b16 %v539
      %vm558 = vcmask 1041409
      %v559 = vsel %vm558, %v555, %v554
      %vm560 = vcmask 1042434
      %v561 = vsel %vm560, %v556, %v559
      %vm562 = vcmask 1043459
      %v563 = vsel %vm562, %v557, %v561
      %v564 = vpack.c.b16 %v563, %v563
      %v571 = vunpack.c.l.b16 %v540
      %v572 = vunpack.c.l.b16 %v541
      %v573 = vunpack.c.l.b16 %v542
      %v574 = vunpack.c.l.b16 %v543
      %v575 = vunpack.c.l.b16 %v544
      %v576 = vunpack.c.l.b16 %v545
      %v577 = vpack.c.b16 %v572, %v571
      %v578 = vpack.c.b16 %v574, %v573
      %v579 = vpack.c.b16 %v576, %v575
      %vm583 = vcmask 392192
      %v585 = vsel %vm583, %v564, 0
      %587 = vmatprep.subr.bf16.mxu0 0
      %588 = vmatpush1.bf16.msra.mxu0 %v577
      %589 = vmatprep.subr.bf16.mxu0 0
      %590 = vmatpush1.bf16.msra.mxu0 %v578
      %591 = vmatprep.subr.bf16.mxu0 0
      %592 = vmatpush1.bf16.msra.mxu0 %v579
      %593 = vmatprep.subr.bf16.mxu0 0
      %594 = vmatpush1.bf16.msra.mxu0 0
      %595 = vmatprep.subr.bf16.mxu0 0
      %596 = vmatpush1.bf16.msra.mxu0 0
      %597 = vmatprep.subr.bf16.mxu0 0
      %598 = vmatpush1.bf16.msra.mxu0 0
      %599 = vmatprep.subr.bf16.mxu0 0
      %600 = vmatpush1.bf16.msra.mxu0 0
      %601 = vmatprep.subr.bf16.mxu0 0
      %602 = vmatpush1.bf16.msra.mxu0 0
      %603 = vmatprep.subr.bf16.mxu0 0
      %604 = vmatpush1.bf16.msra.mxu0 0
      %605 = vmatprep.subr.bf16.mxu0 0
      %606 = vmatpush1.bf16.msra.mxu0 0
      %607 = vmatprep.subr.bf16.mxu0 0
      %608 = vmatpush1.bf16.msra.mxu0 0
      %609 = vmatprep.subr.bf16.mxu0 0
      %610 = vmatpush1.bf16.msra.mxu0 0
      %611 = vmatprep.subr.bf16.mxu0 0
      %612 = vmatpush1.bf16.msra.mxu0 0
      %613 = vmatprep.subr.bf16.mxu0 0
      %614 = vmatpush1.bf16.msra.mxu0 0
      %615 = vmatprep.subr.bf16.mxu0 0
      %616 = vmatpush1.bf16.msra.mxu0 0
      %617 = vmatprep.subr.bf16.mxu0 0
      %618 = vmatpush1.bf16.msra.mxu0 0
      %619 = vmatprep.mubr.bf16.mxu0 0
      %620 = vmatmul.mubr.bf16.gmra.mrb[0].mxu0 %v585
      %v621 = vpop.f32.mrb[0].mxu0
      %v622 = vadd.f32 %v549, %v621
      %v623 = vpop.f32.mrb[0].mxu0
      %v624 = vpop.f32.mrb[0].mxu0
      %v625 = vpop.f32.mrb[0].mxu0
      %626 = vdwg.mxu0
      %v627 = vmax.f32 %v622, 0.0
      %vm628 = vcmask 519168
      %v629 = vsel %vm628, %v627, 0.0
      %v630 = vrot.slane %v629, 4
      %v631 = vadd.f32 %v629, %v630
      %v632 = vrot.slane %v631, 2
      %v633 = vadd.f32 %v631, %v632
      %v634 = vrot.slane %v633, 1
      %v635 = vadd.f32 %v633, %v634
      %v636 = vrcp.pop 4.0
      %v637 = vmul.f32 %v635, %v636
      %v638 = vsub.f32 %v627, %v637
      %v639 = vmul.f32 %v638, %v638
      %v640 = vsel %vm628, %v639, 0.0
      %v641 = vrot.slane %v640, 4
      %v642 = vadd.f32 %v640, %v641
      %v643 = vrot.slane %v642, 2
      %v644 = vadd.f32 %v642, %v643
      %v645 = vrot.slane %v644, 1
      %v646 = vadd.f32 %v644, %v645
      %v647 = vmul.f32 %v646, %v636
      %v648 = vlaneseq
      %v649 = vshrl.u32 %v648, 7
      %v650 = vsub.s32 1, %v649
      %v651 = vrot.slane %v535, %v650
      %v652 = vmul.f32 %v651, %v638
      %v653 = vadd.f32 %v647, 1e-05
      %v654 = vrsqrt.pop %v653
      %v655 = vmul.f32 %v652, %v654
      %v656 = vlaneseq
      %v657 = vshrl.u32 %v656, 7
      %v658 = vsub.s32 2, %v657
      %v659 = vrot.slane %v535, %v658
      %v660 = vadd.f32 %v655, %v659
      %v661 = vpack.c.bf16 %v660, %v660
      %v662 = vld [vmem:[%s338] sm:$0xf]
      %v663 = vld [vmem:[%s338 + $0x4] sm:$0xf]
      %v664 = vld [vmem:[%s338 + $0x8] sm:$0xf]
      %v665 = vld [vmem:[%s338 + $0xc] sm:$0xf]
      %v666 = vld [vmem:[%s338 + $0x10] sm:$0xf]
      %v667 = vld [vmem:[%s338 + $0x14] sm:$0xf]
      %v668 = vld [vmem:[%s338 + $0x18] sm:$0xf]
      %v669 = vld [vmem:[%s338 + $0x1c] sm:$0xf]
      %v670 = vlaneseq
      %v671 = vshrl.u32 %v670, 7
      %v672 = vsub.s32 3, %v671
      %v673 = vrot.slane %v535, %v672
      %v682 = vunpack.c.l.b16 %v662
      %v683 = vunpack.c.l.b16 %v663
      %v684 = vunpack.c.l.b16 %v664
      %v685 = vunpack.c.l.b16 %v665
      %v686 = vunpack.c.l.b16 %v666
      %v687 = vunpack.c.l.b16 %v667
      %v688 = vunpack.c.l.b16 %v668
      %v689 = vunpack.c.l.b16 %v669
      %v690 = vpack.c.b16 %v683, %v682
      %v691 = vpack.c.b16 %v685, %v684
      %v692 = vpack.c.b16 %v687, %v686
      %v693 = vpack.c.b16 %v689, %v688
      %vm698 = vcmask 523264
      %v700 = vsel %vm698, %v661, 0
      %702 = vmatprep.subr.bf16.mxu0 0
      %703 = vmatpush1.bf16.msra.mxu0 %v690
      %704 = vmatprep.subr.bf16.mxu0 0
      %705 = vmatpush1.bf16.msra.mxu0 %v691
      %706 = vmatprep.subr.bf16.mxu0 0
      %707 = vmatpush1.bf16.msra.mxu0 %v692
      %708 = vmatprep.subr.bf16.mxu0 0
      %709 = vmatpush1.bf16.msra.mxu0 %v693
      %710 = vmatprep.subr.bf16.mxu0 0
      %711 = vmatpush1.bf16.msra.mxu0 0
      %712 = vmatprep.subr.bf16.mxu0 0
      %713 = vmatpush1.bf16.msra.mxu0 0
      %714 = vmatprep.subr.bf16.mxu0 0
      %715 = vmatpush1.bf16.msra.mxu0 0
      %716 = vmatprep.subr.bf16.mxu0 0
      %717 = vmatpush1.bf16.msra.mxu0 0
      %718 = vmatprep.subr.bf16.mxu0 0
      %719 = vmatpush1.bf16.msra.mxu0 0
      %720 = vmatprep.subr.bf16.mxu0 0
      %721 = vmatpush1.bf16.msra.mxu0 0
      %722 = vmatprep.subr.bf16.mxu0 0
      %723 = vmatpush1.bf16.msra.mxu0 0
      %724 = vmatprep.subr.bf16.mxu0 0
      %725 = vmatpush1.bf16.msra.mxu0 0
      %726 = vmatprep.subr.bf16.mxu0 0
      %727 = vmatpush1.bf16.msra.mxu0 0
      %728 = vmatprep.subr.bf16.mxu0 0
      %729 = vmatpush1.bf16.msra.mxu0 0
      %730 = vmatprep.subr.bf16.mxu0 0
      %731 = vmatpush1.bf16.msra.mxu0 0
      %732 = vmatprep.subr.bf16.mxu0 0
      %733 = vmatpush1.bf16.msra.mxu0 0
      %734 = vmatprep.mubr.bf16.mxu0 0
      %735 = vmatmul.mubr.bf16.gmra.mrb[0].mxu0 %v700
      %v736 = vpop.f32.mrb[0].mxu0
      %v737 = vadd.f32 %v673, %v736
      %v738 = vpop.f32.mrb[0].mxu0
      %v739 = vpop.f32.mrb[0].mxu0
      %v740 = vpop.f32.mrb[0].mxu0
      %741 = vdwg.mxu0
      %v742 = vmax.f32 %v737, 0.0
      %vm743 = vcmask 257024
      %v744 = vsel %vm743, %v742, 0.0
      %v745 = vrot.slane %v744, 4
      %v746 = vadd.f32 %v744, %v745
      %v747 = vrot.slane %v746, 2
      %v748 = vadd.f32 %v746, %v747
      %v749 = vrot.slane %v748, 1
      %v750 = vadd.f32 %v748, %v749
      %v751 = vmul.f32 %v750, %v636
      %v752 = vsub.f32 %v742, %v751
      %v753 = vmul.f32 %v752, %v752
      %v754 = vsel %vm743, %v753, 0.0
      %v755 = vrot.slane %v754, 4
      %v756 = vadd.f32 %v754, %v755
      %v757 = vrot.slane %v756, 2
      %v758 = vadd.f32 %v756, %v757
      %v759 = vrot.slane %v758, 1
      %v760 = vadd.f32 %v758, %v759
      %v761 = vmul.f32 %v760, %v636
      %v762 = vlaneseq
      %v763 = vshrl.u32 %v762, 7
      %v764 = vsub.s32 4, %v763
      %v765 = vrot.slane %v535, %v764
      %v766 = vmul.f32 %v765, %v752
      %v767 = vadd.f32 %v761, 1e-05
      %v768 = vrsqrt.pop %v767
      %v769 = vmul.f32 %v766, %v768
      %v770 = vlaneseq
      %v771 = vshrl.u32 %v770, 7
      %v772 = vsub.s32 5, %v771
      %v773 = vrot.slane %v535, %v772
      %v774 = vadd.f32 %v769, %v773
      %vm775 = vcmask 261120
      %v776 = vsel %vm775, %v774, 0.0
      %777 = vst [vmem:[%s346] sm:$0xf] %v776
      %p778 = scmp.lt.s32.totalorder %s17, 2
      %s779 = scalar_select %p778, %s17, 2
      %s780 = smul.addr %s779, 4
      %s781 = scalar_lea.vmem %s6, %s780
      // Predicated region
      $region45: #{multi_graph_convolution.6} parent=43 // pred_check
        %p782 = pneg %p191
      $region46: #{multi_graph_convolution.6} parent=43 // pred_check_branch
        %784 = sbr.rel (%p782) target = $region48
      $region47: #{multi_graph_convolution.6} parent=43 // pred_region
        _
      $region48: #{multi_graph_convolution.6} parent=43 // pred_fallthru
        _
    $region44: #{multi_graph_convolution.6} parent=5 // pred_fallthru
      _
    %p785 = scmp.le.s32.totalorder 2, %s12
    // Predicated region
    $region49: #{multi_graph_convolution.6} parent=5 // pred_check
      %p786 = pneg %p785
    $region50: #{multi_graph_convolution.6} parent=5 // pred_check_branch
      %788 = sbr.rel (%p786) target = $region52
    $region51: #{multi_graph_convolution.6} parent=5 // pred_region
      %s789 = ssub.s32 %s12, 2
      // Predicated region
      $region53: #{multi_graph_convolution.6} parent=51 // pred_check
        %p790 = pneg %p197
      $region54: #{multi_graph_convolution.6} parent=51 // pred_check_branch
        %792 = sbr.rel (%p790) target = $region56
      $region55: #{multi_graph_convolution.6} parent=51 // pred_region
        %p793 = scmp.lt.s32.totalorder %s18, 2
        %s794 = scalar_select %p793, %s18, 2
        %s795 = smul.addr %s794, 4
        %s796 = scalar_lea.vmem %s6, %s795
      $region56: #{multi_graph_convolution.6} parent=51 // pred_fallthru
        _
    $region52: #{multi_graph_convolution.6} parent=5 // pred_fallthru
      _
  $region6: #{multi_graph_convolution.6} parent=0 // loop_footer
    %s16 = sadd.s32 1, %s12
  $region7: #{multi_graph_convolution.6} parent=0 // loop_footer_branch
    %11 = sbr.rel target = $region3
  $region8: #{multi_graph_convolution.6} parent=0 // loop_exit
    _

// kernel: multi_graph_convolution.7
$region0: #{multi_graph_convolution.7}
  #allocation0 [shape = 'u32[]', space=smem, size = 0x4, offset = 0x4, fixed_abs, tag = 'smem constant byte address 0x4 - core index']
  #allocation1 [shape = 'u32[144,128]{1,0:T(1,128)}', space=vmem, size = 0x12000, scoped, tag = 'internal scratch']
  %s0 = inlined_call_operand.vmem [shape: f32[4,96], index: 0, kind: input, shape index: {}]
  %s1 = inlined_call_operand.vmem [shape: bf16[96,16], index: 1, kind: input, shape index: {}]
  %s2 = inlined_call_operand.vmem [shape: f32[1,16], index: 2, kind: input, shape index: {}]
  %s3 = inlined_call_operand.vmem [shape: f32[1,16], index: 3, kind: input, shape index: {}]
  %s4 = inlined_call_operand.vmem [shape: f32[1,16], index: 4, kind: input, shape index: {}]
  %s5 = inlined_call_operand.vmem [shape: bf16[16,3], index: 5, kind: input, shape index: {}]
  %s6 = inlined_call_operand.vmem [shape: f32[1,3], index: 6, kind: input, shape index: {}]
  %s7 = inlined_call_operand.hbm [shape: f32[4,3], index: 7, kind: output, shape index: {}]
  %s8 = sld [smem:[#allocation0]]
  $region38: #{multi_graph_convolution.7} parent=0
    _
  %s10 = ssub.s32 1, %s8
  %s11 = scalar_select 0, %s10, %s8
  $region1: #{multi_graph_convolution.7} parent=0
    #allocation2 [shape = 'u8[2048]{0}', space=vmem, size = 0x800, scoped, tag = 'output window, operand 0, single buffered']
    #allocation3 [shape = 's32[1]{0}', space=sflag, size = 0x4, scoped, tag = 'scoped memory for multi_graph_convolution.7']
    %12 = vsyncpa [#allocation3], 0
    // Predicated region
    $region2: #{multi_graph_convolution.7} parent=1 // pred_check
      _
    $region3: #{multi_graph_convolution.7} parent=1 // pred_check_branch
      %14 = sbr.rel (0) target = $region5
    $region4: #{multi_graph_convolution.7} parent=1 // pred_region
      _
    $region5: #{multi_graph_convolution.7} parent=1 // pred_fallthru
      _
    // Predicated region
    $region6: #{multi_graph_convolution.7} parent=1 // pred_check
      _
    $region7: #{multi_graph_convolution.7} parent=1 // pred_check_branch
      %16 = sbr.rel (0) target = $region9
    $region8: #{multi_graph_convolution.7} parent=1 // pred_region
      _
    $region9: #{multi_graph_convolution.7} parent=1 // pred_fallthru
      _
    // Predicated region
    $region10: #{multi_graph_convolution.7} parent=1 // pred_check
      _
    $region11: #{multi_graph_convolution.7} parent=1 // pred_check_branch
      %18 = sbr.rel (0) target = $region13
    $region12: #{multi_graph_convolution.7} parent=1 // pred_region
      _
    $region13: #{multi_graph_convolution.7} parent=1 // pred_fallthru
      _
    // Predicated region
    $region14: #{multi_graph_convolution.7} parent=1 // pred_check
      _
    $region15: #{multi_graph_convolution.7} parent=1 // pred_check_branch
      %20 = sbr.rel (0) target = $region17
    $region16: #{multi_graph_convolution.7} parent=1 // pred_region
      _
    $region17: #{multi_graph_convolution.7} parent=1 // pred_fallthru
      _
    // Predicated region
    $region18: #{multi_graph_convolution.7} parent=1 // pred_check
      _
    $region19: #{multi_graph_convolution.7} parent=1 // pred_check_branch
      %22 = sbr.rel (0) target = $region21
    $region20: #{multi_graph_convolution.7} parent=1 // pred_region
      _
    $region21: #{multi_graph_convolution.7} parent=1 // pred_fallthru
      _
    // Predicated region
    $region22: #{multi_graph_convolution.7} parent=1 // pred_check
      _
    $region23: #{multi_graph_convolution.7} parent=1 // pred_check_branch
      %24 = sbr.rel (0) target = $region25
    $region24: #{multi_graph_convolution.7} parent=1 // pred_region
      _
    $region25: #{multi_graph_convolution.7} parent=1 // pred_fallthru
      _
    // Predicated region
    $region26: #{multi_graph_convolution.7} parent=1 // pred_check
      _
    $region27: #{multi_graph_convolution.7} parent=1 // pred_check_branch
      %26 = sbr.rel (0) target = $region29
    $region28: #{multi_graph_convolution.7} parent=1 // pred_region
      _
    $region29: #{multi_graph_convolution.7} parent=1 // pred_fallthru
      _
    %v28 = vld [vmem:[%s0] sm:$0xf]
    %v29 = vpack.c.bf16 %v28, %v28
    %v30 = vld [vmem:[%s1] sm:$0xf]
    %v31 = vld [vmem:[%s1 + $0x4] sm:$0xf]
    %v32 = vld [vmem:[%s1 + $0x8] sm:$0xf]
    %v33 = vld [vmem:[%s1 + $0xc] sm:$0xf]
    %v34 = vld [vmem:[%s1 + $0x10] sm:$0xf]
    %v35 = vld [vmem:[%s1 + $0x14] sm:$0xf]
    %v36 = vld [vmem:[%s1 + $0x18] sm:$0xf]
    %v37 = vld [vmem:[%s1 + $0x1c] sm:$0xf]
    %v38 = vld [vmem:[%s1 + $0x20] sm:$0xf]
    %v39 = vld [vmem:[%s1 + $0x24] sm:$0xf]
    %v40 = vld [vmem:[%s1 + $0x28] sm:$0xf]
    %v41 = vld [vmem:[%s1 + $0x2c] sm:$0xf]
    %v42 = vld [vmem:[%s2] sm:$0x1]
    %v44 = vlaneseq
    %v45 = vshrl.u32 %v44, 7
    %v46 = vsub.s32 0, %v45
    %v47 = vrot.slane %v42, %v46
    %v61 = vunpack.c.l.b16 %v30
    %v62 = vunpack.c.l.b16 %v31
    %v63 = vunpack.c.l.b16 %v32
    %v64 = vunpack.c.l.b16 %v33
    %v65 = vunpack.c.l.b16 %v34
    %v66 = vunpack.c.l.b16 %v35
    %v67 = vunpack.c.l.b16 %v36
    %v68 = vunpack.c.l.b16 %v37
    %v69 = vunpack.c.l.b16 %v38
    %v70 = vunpack.c.l.b16 %v39
    %v71 = vunpack.c.l.b16 %v40
    %v72 = vunpack.c.l.b16 %v41
    %v73 = vpack.c.b16 %v62, %v61
    %v74 = vpack.c.b16 %v64, %v63
    %v75 = vpack.c.b16 %v66, %v65
    %v76 = vpack.c.b16 %v68, %v67
    %v77 = vpack.c.b16 %v70, %v69
    %v78 = vpack.c.b16 %v72, %v71
    %vm85 = vcmask 785408
    %v87 = vsel %vm85, %v29, 0
    %89 = vmatprep.subr.bf16.mxu0 0
    %90 = vmatpush1.bf16.msra.mxu0 %v73
    %91 = vmatprep.subr.bf16.mxu0 0
    %92 = vmatpush1.bf16.msra.mxu0 %v74
    %93 = vmatprep.subr.bf16.mxu0 0
    %94 = vmatpush1.bf16.msra.mxu0 %v75
    %95 = vmatprep.subr.bf16.mxu0 0
    %96 = vmatpush1.bf16.msra.mxu0 %v76
    %97 = vmatprep.subr.bf16.mxu0 0
    %98 = vmatpush1.bf16.msra.mxu0 %v77
    %99 = vmatprep.subr.bf16.mxu0 0
    %100 = vmatpush1.bf16.msra.mxu0 %v78
    %101 = vmatprep.subr.bf16.mxu0 0
    %102 = vmatpush1.bf16.msra.mxu0 0
    %103 = vmatprep.subr.bf16.mxu0 0
    %104 = vmatpush1.bf16.msra.mxu0 0
    %105 = vmatprep.subr.bf16.mxu0 0
    %106 = vmatpush1.bf16.msra.mxu0 0
    %107 = vmatprep.subr.bf16.mxu0 0
    %108 = vmatpush1.bf16.msra.mxu0 0
    %109 = vmatprep.subr.bf16.mxu0 0
    %110 = vmatpush1.bf16.msra.mxu0 0
    %111 = vmatprep.subr.bf16.mxu0 0
    %112 = vmatpush1.bf16.msra.mxu0 0
    %113 = vmatprep.subr.bf16.mxu0 0
    %114 = vmatpush1.bf16.msra.mxu0 0
    %115 = vmatprep.subr.bf16.mxu0 0
    %116 = vmatpush1.bf16.msra.mxu0 0
    %117 = vmatprep.subr.bf16.mxu0 0
    %118 = vmatpush1.bf16.msra.mxu0 0
    %119 = vmatprep.subr.bf16.mxu0 0
    %120 = vmatpush1.bf16.msra.mxu0 0
    %121 = vmatprep.mubr.bf16.mxu0 0
    %122 = vmatmul.mubr.bf16.gmra.mrb[0].mxu0 %v87
    %v123 = vpop.f32.mrb[0].mxu0
    %v124 = vadd.f32 %v47, %v123
    %v125 = vpop.f32.mrb[0].mxu0
    %v126 = vpop.f32.mrb[0].mxu0
    %v127 = vpop.f32.mrb[0].mxu0
    %128 = vdwg.mxu0
    %v129 = vld [vmem:[%s3] sm:$0x1]
    %v130 = vld [vmem:[%s4] sm:$0x1]
    %v131 = vmax.f32 %v124, 0.0
    %vm132 = vcmask 125952
    %v133 = vsel %vm132, %v131, 0.0
    %v134 = vrot.slane %v133, 4
    %v135 = vadd.f32 %v133, %v134
    %v136 = vrot.slane %v135, 2
    %v137 = vadd.f32 %v135, %v136
    %v138 = vrot.slane %v137, 1
    %v139 = vadd.f32 %v137, %v138
    %v140 = vrcp.pop 4.0
    %v141 = vmul.f32 %v139, %v140
    %v142 = vsub.f32 %v131, %v141
    %v143 = vmul.f32 %v142, %v142
    %v144 = vsel %vm132, %v143, 0.0
    %v145 = vrot.slane %v144, 4
    %v146 = vadd.f32 %v144, %v145
    %v147 = vrot.slane %v146, 2
    %v148 = vadd.f32 %v146, %v147
    %v149 = vrot.slane %v148, 1
    %v150 = vadd.f32 %v148, %v149
    %v151 = vmul.f32 %v150, %v140
    %v153 = vlaneseq
    %v154 = vshrl.u32 %v153, 7
    %v155 = vsub.s32 0, %v154
    %v156 = vrot.slane %v129, %v155
    %v158 = vmul.f32 %v156, %v142
    %v159 = vadd.f32 %v151, 1e-05
    %v160 = vrsqrt.pop %v159
    %v161 = vmul.f32 %v158, %v160
    %v163 = vlaneseq
    %v164 = vshrl.u32 %v163, 7
    %v165 = vsub.s32 0, %v164
    %v166 = vrot.slane %v130, %v165
    %v168 = vadd.f32 %v161, %v166
    %v169 = vpack.c.bf16 %v168, %v168
    %v170 = vld [vmem:[%s5] sm:$0xf]
    %v171 = vld [vmem:[%s5 + $0x4] sm:$0xf]
    %v172 = vld [vmem:[%s6] sm:$0x1]
    %v174 = vlaneseq
    %v175 = vshrl.u32 %v174, 7
    %v176 = vsub.s32 0, %v175
    %v177 = vrot.slane %v172, %v176
    %v181 = vunpack.c.l.b16 %v170
    %v182 = vunpack.c.l.b16 %v171
    %v183 = vpack.c.b16 %v182, %v181
    %vm185 = vcmask 130048
    %v187 = vsel %vm185, %v169, 0
    %189 = vmatprep.subr.bf16.mxu0 0
    %190 = vmatpush1.bf16.msra.mxu0 %v183
    %191 = vmatprep.subr.bf16.mxu0 0
    %192 = vmatpush1.bf16.msra.mxu0 0
    %193 = vmatprep.subr.bf16.mxu0 0
    %194 = vmatpush1.bf16.msra.mxu0 0
    %195 = vmatprep.subr.bf16.mxu0 0
    %196 = vmatpush1.bf16.msra.mxu0 0
    %197 = vmatprep.subr.bf16.mxu0 0
    %198 = vmatpush1.bf16.msra.mxu0 0
    %199 = vmatprep.subr.bf16.mxu0 0
    %200 = vmatpush1.bf16.msra.mxu0 0
    %201 = vmatprep.subr.bf16.mxu0 0
    %202 = vmatpush1.bf16.msra.mxu0 0
    %203 = vmatprep.subr.bf16.mxu0 0
    %204 = vmatpush1.bf16.msra.mxu0 0
    %205 = vmatprep.subr.bf16.mxu0 0
    %206 = vmatpush1.bf16.msra.mxu0 0
    %207 = vmatprep.subr.bf16.mxu0 0
    %208 = vmatpush1.bf16.msra.mxu0 0
    %209 = vmatprep.subr.bf16.mxu0 0
    %210 = vmatpush1.bf16.msra.mxu0 0
    %211 = vmatprep.subr.bf16.mxu0 0
    %212 = vmatpush1.bf16.msra.mxu0 0
    %213 = vmatprep.subr.bf16.mxu0 0
    %214 = vmatpush1.bf16.msra.mxu0 0
    %215 = vmatprep.subr.bf16.mxu0 0
    %216 = vmatpush1.bf16.msra.mxu0 0
    %217 = vmatprep.subr.bf16.mxu0 0
    %218 = vmatpush1.bf16.msra.mxu0 0
    %219 = vmatprep.subr.bf16.mxu0 0
    %220 = vmatpush1.bf16.msra.mxu0 0
    %221 = vmatprep.mubr.bf16.mxu0 0
    %222 = vmatmul.mubr.bf16.gmra.mrb[0].mxu0 %v187
    %v223 = vpop.f32.mrb[0].mxu0
    %v224 = vadd.f32 %v177, %v223
    %v225 = vpop.f32.mrb[0].mxu0
    %v226 = vpop.f32.mrb[0].mxu0
    %v227 = vpop.f32.mrb[0].mxu0
    %228 = vdwg.mxu0
    %vm229 = vcmask 19456
    %230 = vst.msk [vmem:[#allocation2] sm:$0xf] %vm229, %v224
    // Predicated region
    $region30: #{multi_graph_convolution.7} parent=1 // pred_check
      _
    $region31: #{multi_graph_convolution.7} parent=1 // pred_check_branch
      %232 = sbr.rel (0) target = $region33
    $region32: #{multi_graph_convolution.7} parent=1 // pred_region
      %s234 = ssub.s32 64, 64
      %235 = vsyncadd [#allocation3], %s234
      %s237 = sshll.u32 [#allocation2], 4
      %s238 = int_to_ptr.vmem [resolvable:$true] %s237
      %240 = dma.vmem_to_hbm [thread:$0]  %s238, 64, %s7, [#allocation3]
    $region33: #{multi_graph_convolution.7} parent=1 // pred_fallthru
      _
    // Predicated region
    $region34: #{multi_graph_convolution.7} parent=1 // pred_check
      _
    $region35: #{multi_graph_convolution.7} parent=1 // pred_check_branch
      %242 = sbr.rel (0) target = $region37
    $region36: #{multi_graph_convolution.7} parent=1 // pred_region
      %243 = dma.done [#allocation3], 64
    $region37: #{multi_graph_convolution.7} parent=1 // pred_fallthru
      _
    %244 = vsyncpa [#allocation3], 1

</llo_original>
